<compile_context>
chip_gen: v6e
topology: v6e:2x2x1
jax: 0.10.0
libtpu: 0.0.40
codegen_flags: <defaults>
</compile_context>

<pallas_src>
import functools

import jax
import jax.numpy as jnp
from jax.experimental import pallas as pl
from jax.experimental.pallas import tpu as pltpu


def _round_up(x, m):
    return ((x + m - 1) // m) * m


def _encoder_kernel(taps_ref, w_ref, out_ref):
    """One (L-tile, batch) step.

    taps_ref: (K_pad, TL)  tap planes (zero-padded K), frame index L on lanes.
    w_ref:    (E, K_pad)   conv weight (PyTorch [E, 1, W] squeezed, zero-padded K).
    out_ref:  (E, TL)      output tile of [B, E, L], L on lanes (lane-dense).

    out[e, l] = relu(sum_k w[e, k] * taps[k, l])   -- MXU matmul, K tiny.
    """
    acc = jnp.dot(
        w_ref[...], taps_ref[...],
        preferred_element_type=jnp.float32,
        precision=jax.lax.Precision.HIGHEST,
    )
    out_ref[...] = jnp.maximum(acc, 0.0).astype(out_ref.dtype)


@functools.partial(jax.jit,
                   static_argnames=("W_k", "E", "lane_tile", "out_dtype"))
def encoder_forward(mixture, weight, *, W_k, E, lane_tile=4096,
                    out_dtype=jnp.float32):
    """mixture: [B, 1, T] float32, weight: [E, 1, W_k] (PyTorch Conv1d layout).

    Returns mixture_w: [B, E, L] = relu(conv1d(mixture, weight, stride=W_k//2)),
    L = (T - W_k) // (W_k // 2) + 1, written directly in the PyTorch layout.
    """
    B, C, T = mixture.shape
    assert C == 1
    stride = W_k // 2
    L = (T - W_k) // stride + 1

    x = mixture[:, 0, :]                                        # [B, T]

    # Lane-dense tap planes: taps[b, w, l] = x[b, l*stride + w]  -> [B, W_k, L].
    # W_k cheap strided slices over the tiny raw signal (HBM traffic negligible
    # vs. the E-expanded [B, E, L] output).
    taps = jnp.stack(
        [jax.lax.slice(x, (0, w), (B, w + (L - 1) * stride + 1), (1, stride))
         for w in range(W_k)],
        axis=1)                                                 # [B, W_k, L]

    w_mat = weight[:, 0, :].astype(jnp.float32)                 # [E, W_k]

    # Zero-pad the contraction dim K=W_k up to a multiple of 8 so the taps
    # sublane dim is tile-aligned and the MXU K-padding is explicit/exact.
    K_pad = _round_up(max(W_k, 8), 8)
    if K_pad != W_k:
        taps = jnp.pad(taps, ((0, 0), (0, K_pad - W_k), (0, 0)))
        w_mat = jnp.pad(w_mat, ((0, 0), (0, K_pad - W_k)))

    # Lane tile: large (default 4096 lanes), multiple of 128; cdiv grid, Pallas
    # masks the partial edge block on write (no padding of any large array).
    TL = _round_up(min(lane_tile, _round_up(L, 128)), 128)
    grid = (pl.cdiv(L, TL), B)          # big L-tile axis leads -> megacore split

    # VMEM estimate (double-buffered out + taps, resident weight).  Only raise
    # the scoped-VMEM limit if someone pushes lane_tile past the v5e default.
    out_itemsize = jnp.dtype(out_dtype).itemsize
    vmem_est = (2 * E * TL * out_itemsize
                + 2 * K_pad * TL * 4
                + 2 * E * K_pad * 4)
    cp_kwargs = dict(dimension_semantics=("parallel", "parallel"))
    if vmem_est > 14 * 1024 * 1024:
        cp_kwargs["vmem_limit_bytes"] = int(vmem_est * 3 // 2)

    out = pl.pallas_call(
        _encoder_kernel,
        out_shape=jax.ShapeDtypeStruct((B, E, L), out_dtype),
        grid_spec=pltpu.PrefetchScalarGridSpec(
            num_scalar_prefetch=0,
            grid=grid,
            in_specs=[
                # taps: squeeze batch dim, (K_pad, TL) tile, L on lanes.
                pl.BlockSpec((None, K_pad, TL), lambda j, b: (b, 0, j)),
                # weight: full (E, K_pad), resident across all grid steps.
                pl.BlockSpec((E, K_pad), lambda j, b: (0, 0)),
            ],
            # Output tile (E, TL) of [B, E, L]: lane-dense, PyTorch layout.
            out_specs=pl.BlockSpec((None, E, TL), lambda j, b: (b, 0, j)),
        ),
        compiler_params=pltpu.CompilerParams(**cp_kwargs),
    )(taps, w_mat)
    return out


def _reference_forward(mixture, weight, *, W_k, E):
    # Pure-JAX reference of F.relu(conv1d(mixture, weight, stride=W//2)).
    stride = W_k // 2
    out = jax.lax.conv_general_dilated(
        mixture, weight, window_strides=(stride,), padding="VALID",
        dimension_numbers=("NCH", "OIH", "NCH"),
        precision=jax.lax.Precision.HIGHEST)
    return jnp.maximum(out, 0.0)


if __name__ == "__main__":
    # Small demo/correctness shapes.  NOTE: tuning decisions (TL, buffering,
    # MXU vs VPU) should be benchmarked at production shapes (T ~ 64k), where
    # the grid has many steps and the pipeline actually engages.
    root = jax.random.PRNGKey(0)

    cases = [
        # FaSNet_base defaults (win_len=4, enc_dim=256): single full L-tile.
        dict(B=2, T=2050, W_k=4, E=256, lane_tile=4096),   # L = 1024
        # Multi-tile + ragged edge path (L = 324 = 2*128 + 68), K padding on.
        dict(B=2, T=650, W_k=4, E=256, lane_tile=128),
        # Different kernel width / enc dim, ragged edge (L = 224 = 128 + 96).
        dict(B=1, T=900, W_k=8, E=64, lane_tile=128),
    ]

    for i, c in enumerate(cases):
        k_x, k_w = jax.random.split(jax.random.fold_in(root, i))
        mixture = jax.random.normal(k_x, (c["B"], 1, c["T"]), dtype=jnp.float32)
        # PyTorch Conv1d weight layout: [out_channels=E, in_channels=1, kernel=W]
        weight = jax.random.normal(
            k_w, (c["E"], 1, c["W_k"]), dtype=jnp.float32) * 0.1

        out = encoder_forward(mixture, weight, W_k=c["W_k"], E=c["E"],
                              lane_tile=c["lane_tile"])
        out = jax.block_until_ready(out)

        ref = _reference_forward(mixture, weight, W_k=c["W_k"], E=c["E"])
        stride = c["W_k"] // 2
        L = (c["T"] - c["W_k"]) // stride + 1
        assert out.shape == (c["B"], c["E"], L), (i, out.shape)
        assert jnp.allclose(out, ref, atol=1e-3, rtol=1e-3), \
            f"mismatch vs reference in case {i}"

    print("KERNEL_OK")
</pallas_src>

<mosaic_0001>
module attributes {stable_mosaic.version = 11 : i64} {
  func.func @_encoder_kernel(%arg0: i32, %arg1: i32, %arg2: memref<1x8x1024xf32, #tpu.memory_space<vmem>>, %arg3: memref<256x8xf32, #tpu.memory_space<vmem>>, %arg4: memref<1x256x1024xf32, #tpu.memory_space<vmem>>) attributes {dimension_semantics = [#tpu.dimension_semantics<parallel>, #tpu.dimension_semantics<parallel>], iteration_bounds = array<i64: 1, 2>, scalar_prefetch = 0 : i64, scratch_operands = 0 : i64, tpu.core_type = #tpu.core_type<tc>, window_params = [{transform_indices = @transform_0, window_bounds = array<i64: 1, 8, 1024>}, {pipeline_mode = #tpu.pipeline_mode<synchronous>, transform_indices = @transform_1, window_bounds = array<i64: 256, 8>}, {transform_indices = @transform_2, window_bounds = array<i64: 1, 256, 1024>}]} {
    %c0 = arith.constant 0 : index
    %c0_0 = arith.constant 0 : index
    %0 = vector.load %arg3[%c0, %c0_0] : memref<256x8xf32, #tpu.memory_space<vmem>>, vector<256x8xf32>
    %c0_1 = arith.constant 0 : index
    %c0_2 = arith.constant 0 : index
    %c0_3 = arith.constant 0 : index
    %1 = vector.load %arg2[%c0_1, %c0_2, %c0_3] : memref<1x8x1024xf32, #tpu.memory_space<vmem>>, vector<1x8x1024xf32>
    %2 = vector.shape_cast %1 : vector<1x8x1024xf32> to vector<8x1024xf32>
    %cst = arith.constant dense<0.000000e+00> : vector<256x1024xf32>
    %3 = tpu.matmul %0, %2, %cst {dimension_numbers = #tpu.dot_dimension_numbers<[1], [0], [0], [1], [0, 0, 1, 1], [], []>, precision = #tpu.contract_precision<fp32>} : vector<256x8xf32>, vector<8x1024xf32>, vector<256x1024xf32> -> vector<256x1024xf32>
    %cst_4 = arith.constant 0.000000e+00 : f32
    %4 = vector.broadcast %cst_4 : f32 to vector<256x1024xf32>
    %5 = arith.maximumf %3, %4 : vector<256x1024xf32>
    %c0_5 = arith.constant 0 : index
    %c0_6 = arith.constant 0 : index
    %c0_7 = arith.constant 0 : index
    %6 = vector.load %arg4[%c0_5, %c0_6, %c0_7] : memref<1x256x1024xf32, #tpu.memory_space<vmem>>, vector<1x256x1024xf32>
    %7 = vector.shape_cast %6 : vector<1x256x1024xf32> to vector<256x1024xf32>
    %8 = vector.shape_cast %5 : vector<256x1024xf32> to vector<1x256x1024xf32>
    tpu.vector_store %arg4[%c0_5, %c0_6, %c0_7], %8 {strides = array<i32>} : memref<1x256x1024xf32, #tpu.memory_space<vmem>>, vector<1x256x1024xf32>,
    return
  }
  func.func @transform_0(%arg0: i32, %arg1: i32) -> (i32, i32, i32) {
    %c0_i32 = arith.constant 0 : i32
    %c0_i32_0 = arith.constant 0 : i32
    return %arg1, %c0_i32, %arg0 : i32, i32, i32
  }
  func.func @transform_1(%arg0: i32, %arg1: i32) -> (i32, i32) {
    %c0_i32 = arith.constant 0 : i32
    %c0_i32_0 = arith.constant 0 : i32
    %c0_i32_1 = arith.constant 0 : i32
    return %c0_i32, %c0_i32_0 : i32, i32
  }
  func.func @transform_2(%arg0: i32, %arg1: i32) -> (i32, i32, i32) {
    %c0_i32 = arith.constant 0 : i32
    %c0_i32_0 = arith.constant 0 : i32
    return %arg1, %c0_i32, %arg0 : i32, i32, i32
  }
}

</mosaic_0001>

<llo_original>
// kernel: encoder_forward.1
$region0: #{encoder_forward.1}
  #allocation0 [shape = 'u32[]', space=smem, size = 0x4, offset = 0x4, fixed_abs, tag = 'smem constant byte address 0x4 - core index']
  #allocation1 [shape = 'u32[144,128]{1,0:T(1,128)}', space=vmem, size = 0x12000, scoped, tag = 'internal scratch']
  %s0 = inlined_call_operand.vmem [shape: f32[2,8,1024], index: 0, kind: input, shape index: {}]
  %s1 = inlined_call_operand.vmem [shape: f32[256,8], index: 1, kind: input, shape index: {}]
  %s2 = inlined_call_operand.hbm [shape: f32[2,256,1024], index: 2, kind: output, shape index: {}]
  %s3 = sld [smem:[#allocation0]]
  $region41: #{encoder_forward.1} parent=0
    _
  %s5 = ssub.s32 1, %s3
  %s6 = scalar_select 0, %s5, %s3
  $region1: #{encoder_forward.1} parent=0
    #allocation2 [shape = 'u8[2097152]{0}', space=vmem, size = 0x200000, scoped, tag = 'output window, operand 0']
    #allocation3 [shape = 's32[2]{0}', space=sflag, size = 0x8, scoped, tag = 'scoped memory for encoder_forward.1']
    %7 = vsyncpa [#allocation3], 0
    %s8 = scalar_lea.sflag [#allocation3], 1
    %9 = vsyncpa %s8, 0
    loop: start=0, step=1, limit=4
    $region2: #{encoder_forward.1} parent=1 // loop_pre_header
      _
    $region3: #{encoder_forward.1} parent=1 // loop_header
      %s11 = sphi 0, %s15
      %p12 = scmp.ge.s32.totalorder %s11, 4
      %s18 = sphi 0, %s30
      %s19 = sphi 0, %s26
      %s20 = sphi 0, %s18
      %s21 = sphi 0, %s19
      %s22 = sphi 0, %s20
      %s23 = sphi 0, %s21
      %s35 = sphi 0, %s37
      %s38 = sphi 0, %s35
      %s39 = sphi 0, %s38
      %s55 = sphi 0, %s39
      %s59 = sphi 0, %s59
      %s61 = sphi 0, %s59
      %s62 = sphi 0, %s61
      %s76 = sphi 0, %s62
      %s84 = sphi 0, %s86
      %s87 = sphi 0, %s84
      %s88 = sphi 0, %s87
      %s104 = sphi 0, %s88
    $region4: #{encoder_forward.1} parent=1 // loop_header_branch
      %14 = sbr.rel (%p12) target = $region8
    $region5: #{encoder_forward.1} parent=1 // loop_body
      %s16 = ssub.s32 %s11, 1
      %s17 = ssub.s32 %s11, 2
      %s24 = sadd.s32 1, %s19
      %p25 = scmp.ge.s32.totalorder %s24, 2
      %s26 = scalar_select %p25, 0, %s24
      %s27 = sadd.s32 1, %s18
      %s28 = scalar_select %p25, %s27, %s18
      %p29 = scmp.ge.s32.totalorder %s28, 1
      %s30 = scalar_select %p29, 0, %s28
      %s31 = ssub.s32 %s19, %s26
      %s32 = ssub.s32 %s18, %s30
      %s33 = sor.u32 %s31, %s32
      %p34 = scmp.eq.s32.totalorder %s33, 0
      %s36 = sadd.s32 %s35, 1
      %s37 = scalar_select %p34, %s35, %s36
      %p40 = pneg %p34
      %p41 = scmp.eq.s32.totalorder %s11, 1
      %p42 = por %p40, %p41
      %p43 = scmp.ne.s32.totalorder %s35, %s38
      %p44 = scmp.eq.s32.totalorder %s11, 0
      %p45 = por %p43, %p44
      %p46 = scmp.ne.s32.totalorder %s35, %s38
      %p47 = scmp.eq.s32.totalorder %s16, 1
      %p48 = por %p46, %p47
      %p49 = scmp.ne.s32.totalorder %s38, %s39
      %p50 = scmp.eq.s32.totalorder %s16, 0
      %p51 = por %p49, %p50
      %p52 = scmp.ne.s32.totalorder %s38, %s39
      %p53 = scmp.eq.s32.totalorder %s17, 1
      %p54 = por %p52, %p53
      %p56 = scmp.ne.s32.totalorder %s39, %s55
      %p57 = scmp.eq.s32.totalorder %s17, 0
      %p58 = por %p56, %p57
      %s60 = sadd.s32 %s59, 1
      %p63 = scmp.eq.s32.totalorder %s11, 1
      %p64 = scmp.ne.s32.totalorder %s59, %s61
      %p65 = scmp.eq.s32.totalorder %s11, 0
      %p66 = por %p64, %p65
      %p67 = scmp.ne.s32.totalorder %s59, %s61
      %p68 = scmp.eq.s32.totalorder %s16, 1
      %p69 = por %p67, %p68
      %p70 = scmp.ne.s32.totalorder %s61, %s62
      %p71 = scmp.eq.s32.totalorder %s16, 0
      %p72 = por %p70, %p71
      %p73 = scmp.ne.s32.totalorder %s61, %s62
      %p74 = scmp.eq.s32.totalorder %s17, 1
      %p75 = por %p73, %p74
      %p77 = scmp.ne.s32.totalorder %s62, %s76
      %p78 = scmp.eq.s32.totalorder %s17, 0
      %p79 = por %p77, %p78
      %s80 = ssub.s32 %s19, %s26
      %s81 = ssub.s32 %s18, %s30
      %s82 = sor.u32 %s80, %s81
      %p83 = scmp.eq.s32.totalorder %s82, 0
      %s85 = sadd.s32 %s84, 1
      %s86 = scalar_select %p83, %s84, %s85
      %p89 = pneg %p83
      %p90 = scmp.eq.s32.totalorder %s11, 1
      %p91 = por %p89, %p90
      %p92 = scmp.ne.s32.totalorder %s84, %s87
      %p93 = scmp.eq.s32.totalorder %s11, 0
      %p94 = por %p92, %p93
      %p95 = scmp.ne.s32.totalorder %s84, %s87
      %p96 = scmp.eq.s32.totalorder %s16, 1
      %p97 = por %p95, %p96
      %p98 = scmp.ne.s32.totalorder %s87, %s88
      %p99 = scmp.eq.s32.totalorder %s16, 0
      %p100 = por %p98, %p99
      %p101 = scmp.ne.s32.totalorder %s87, %s88
      %p102 = scmp.eq.s32.totalorder %s17, 1
      %p103 = por %p101, %p102
      %p105 = scmp.ne.s32.totalorder %s88, %s104
      %p106 = scmp.eq.s32.totalorder %s17, 0
      %p107 = por %p105, %p106
      %p108 = scmp.le.s32.totalorder 1, %s11
      %p109 = scmp.lt.s32.totalorder %s11, 3
      %p110 = pnand %p108, %p109
      %p111 = pneg %p110
      // Predicated region
      $region9: #{encoder_forward.1} parent=5 // pred_check
        _
      $region10: #{encoder_forward.1} parent=5 // pred_check_branch
        %113 = sbr.rel (%p110) target = $region12
      $region11: #{encoder_forward.1} parent=5 // pred_region
        %s114 = ssub.s32 %s11, 1
        // Predicated region
        $region13: #{encoder_forward.1} parent=11 // pred_check
          %p115 = pneg %p72
        $region14: #{encoder_forward.1} parent=11 // pred_check_branch
          %117 = sbr.rel (%p115) target = $region16
        $region15: #{encoder_forward.1} parent=11 // pred_region
          _
        $region16: #{encoder_forward.1} parent=11 // pred_fallthru
          _
      $region12: #{encoder_forward.1} parent=5 // pred_fallthru
        _
      %p118 = scmp.lt.s32.totalorder %s11, 2
      // Predicated region
      $region17: #{encoder_forward.1} parent=5 // pred_check
        %p119 = pneg %p118
      $region18: #{encoder_forward.1} parent=5 // pred_check_branch
        %121 = sbr.rel (%p119) target = $region20
      $region19: #{encoder_forward.1} parent=5 // pred_region
        // Predicated region
        $region21: #{encoder_forward.1} parent=19 // pred_check
          %p122 = pneg %p45
        $region22: #{encoder_forward.1} parent=19 // pred_check_branch
          %124 = sbr.rel (%p122) target = $region24
        $region23: #{encoder_forward.1} parent=19 // pred_region
          %s125 = smul.u32 8, %s18
          %p126 = scmp.lt.s32.totalorder %s19, 1
          %s127 = scalar_select %p126, %s19, 1
          %p128 = scmp.lt.s32.totalorder %s125, 7
          %s129 = scalar_select %p128, %s125, 7
          %s130 = smul.addr %s127, 8
          %s131 = sadd.s32 %s129, %s130
          %s132 = smul.addr %s131, 8
          %s133 = scalar_lea.vmem %s0, %s132
          %s134 = smul.u32 8, %s18
        $region24: #{encoder_forward.1} parent=19 // pred_fallthru
          _
      $region20: #{encoder_forward.1} parent=5 // pred_fallthru
        _
      %p135 = scmp.le.s32.totalorder 1, %s11
      %p136 = scmp.lt.s32.totalorder %s11, 3
      %p137 = pnand %p135, %p136
      %p138 = pneg %p137
      // Predicated region
      $region25: #{encoder_forward.1} parent=5 // pred_check
        _
      $region26: #{encoder_forward.1} parent=5 // pred_check_branch
        %140 = sbr.rel (%p137) target = $region28
      $region27: #{encoder_forward.1} parent=5 // pred_region
        %s141 = ssub.s32 %s11, 1
        %s142 = smul.u32 8, %s20
        %p143 = scmp.lt.s32.totalorder %s21, 1
        %s144 = scalar_select %p143, %s21, 1
        %p145 = scmp.lt.s32.totalorder %s142, 7
        %s146 = scalar_select %p145, %s142, 7
        %s147 = smul.addr %s144, 8
        %s148 = sadd.s32 %s146, %s147
        %s149 = smul.addr %s148, 8
        %s150 = scalar_lea.vmem %s0, %s149
        %p151 = pneg %p51
        %p152 = pneg %p48
        %p153 = pneg %p72
        %p154 = pneg %p69
        %p155 = pneg %p100
        %p156 = pneg %p97
        %s157 = sand.u32 %s87, 1
        %s158 = scalar_lea.sflag [#allocation3], %s157
        %s159 = sand.u32 %s87, 1
        %s160 = smul.addr %s159, 2048
        %s161 = scalar_lea.vmem [#allocation2], %s160
        %s162 = smul.u32 8, %s20
        %p163 = scmp.lt.s32.totalorder %s21, 1
        %s164 = scalar_select %p163, %s21, 1
        %p165 = scmp.lt.s32.totalorder %s162, 7
        %s166 = scalar_select %p165, %s162, 7
        %s167 = smul.addr %s164, 8
        %s168 = sadd.s32 %s166, %s167
        %s169 = smul.addr %s168, 8
        %s170 = scalar_lea.vmem %s0, %s169
        %s171 = smul.u32 8, %s20
        %s172 = smul.u32 8, %s20
        %v173 = vld [vmem:[%s1] sm:$0xff]
        %v174 = vld [vmem:[%s1 + $0x8] sm:$0xff]
        %v175 = vld [vmem:[%s1 + $0x10] sm:$0xff]
        %v176 = vld [vmem:[%s1 + $0x18] sm:$0xff]
        %v177 = vld [vmem:[%s1 + $0x20] sm:$0xff]
        %v178 = vld [vmem:[%s1 + $0x28] sm:$0xff]
        %v179 = vld [vmem:[%s1 + $0x30] sm:$0xff]
        %v180 = vld [vmem:[%s1 + $0x38] sm:$0xff]
        %v181 = vld [vmem:[%s1 + $0x40] sm:$0xff]
        %v182 = vld [vmem:[%s1 + $0x48] sm:$0xff]
        %v183 = vld [vmem:[%s1 + $0x50] sm:$0xff]
        %v184 = vld [vmem:[%s1 + $0x58] sm:$0xff]
        %v185 = vld [vmem:[%s1 + $0x60] sm:$0xff]
        %v186 = vld [vmem:[%s1 + $0x68] sm:$0xff]
        %v187 = vld [vmem:[%s1 + $0x70] sm:$0xff]
        %v188 = vld [vmem:[%s1 + $0x78] sm:$0xff]
        %v189 = vld [vmem:[%s1 + $0x80] sm:$0xff]
        %v190 = vld [vmem:[%s1 + $0x88] sm:$0xff]
        %v191 = vld [vmem:[%s1 + $0x90] sm:$0xff]
        %v192 = vld [vmem:[%s1 + $0x98] sm:$0xff]
        %v193 = vld [vmem:[%s1 + $0xa0] sm:$0xff]
        %v194 = vld [vmem:[%s1 + $0xa8] sm:$0xff]
        %v195 = vld [vmem:[%s1 + $0xb0] sm:$0xff]
        %v196 = vld [vmem:[%s1 + $0xb8] sm:$0xff]
        %v197 = vld [vmem:[%s1 + $0xc0] sm:$0xff]
        %v198 = vld [vmem:[%s1 + $0xc8] sm:$0xff]
        %v199 = vld [vmem:[%s1 + $0xd0] sm:$0xff]
        %v200 = vld [vmem:[%s1 + $0xd8] sm:$0xff]
        %v201 = vld [vmem:[%s1 + $0xe0] sm:$0xff]
        %v202 = vld [vmem:[%s1 + $0xe8] sm:$0xff]
        %v203 = vld [vmem:[%s1 + $0xf0] sm:$0xff]
        %v204 = vld [vmem:[%s1 + $0xf8] sm:$0xff]
        %v205 = vld [vmem:[%s170] sm:$0xff]
        %v206 = vld [vmem:[%s170 + $0x8] sm:$0xff]
        %v207 = vld [vmem:[%s170 + $0x10] sm:$0xff]
        %v208 = vld [vmem:[%s170 + $0x18] sm:$0xff]
        %v209 = vld [vmem:[%s170 + $0x20] sm:$0xff]
        %v210 = vld [vmem:[%s170 + $0x28] sm:$0xff]
        %v211 = vld [vmem:[%s170 + $0x30] sm:$0xff]
        %v212 = vld [vmem:[%s170 + $0x38] sm:$0xff]
        %vm213 = vcmask 64512
        %v215 = vsel %vm213, %v173, 0
        %v218 = vsel %vm213, %v174, 0
        %v221 = vsel %vm213, %v175, 0
        %v224 = vsel %vm213, %v176, 0
        %v227 = vsel %vm213, %v177, 0
        %v230 = vsel %vm213, %v178, 0
        %v233 = vsel %vm213, %v179, 0
        %v236 = vsel %vm213, %v180, 0
        %v239 = vsel %vm213, %v181, 0
        %v242 = vsel %vm213, %v182, 0
        %v245 = vsel %vm213, %v183, 0
        %v248 = vsel %vm213, %v184, 0
        %v251 = vsel %vm213, %v185, 0
        %v254 = vsel %vm213, %v186, 0
        %v257 = vsel %vm213, %v187, 0
        %v260 = vsel %vm213, %v188, 0
        %v263 = vsel %vm213, %v189, 0
        %v266 = vsel %vm213, %v190, 0
        %v269 = vsel %vm213, %v191, 0
        %v272 = vsel %vm213, %v192, 0
        %v275 = vsel %vm213, %v193, 0
        %v278 = vsel %vm213, %v194, 0
        %v281 = vsel %vm213, %v195, 0
        %v284 = vsel %vm213, %v196, 0
        %v287 = vsel %vm213, %v197, 0
        %v290 = vsel %vm213, %v198, 0
        %v293 = vsel %vm213, %v199, 0
        %v296 = vsel %vm213, %v200, 0
        %v299 = vsel %vm213, %v201, 0
        %v302 = vsel %vm213, %v202, 0
        %v305 = vsel %vm213, %v203, 0
        %v308 = vsel %vm213, %v204, 0
        %310 = vmatprep.subr.mxu0 0.0
        %311 = vmatpush1.msra.mxu0 0.0
        %312 = vmatprep.subr.mxu0 0.0
        %313 = vmatpush1.msra.mxu0 0.0
        %314 = vmatprep.subr.mxu0 0.0
        %315 = vmatpush1.msra.mxu0 0.0
        %316 = vmatprep.subr.mxu0 0.0
        %317 = vmatpush1.msra.mxu0 0.0
        %318 = vmatprep.subr.mxu0 0.0
        %319 = vmatpush1.msra.mxu0 0.0
        %320 = vmatprep.subr.mxu0 0.0
        %321 = vmatpush1.msra.mxu0 0.0
        %322 = vmatprep.subr.mxu0 0.0
        %323 = vmatpush1.msra.mxu0 0.0
        %324 = vmatprep.subr.mxu0 0.0
        %325 = vmatpush1.msra.mxu0 0.0
        %326 = vmatprep.subr.mxu0 0.0
        %327 = vmatpush1.msra.mxu0 0.0
        %328 = vmatprep.subr.mxu0 0.0
        %329 = vmatpush1.msra.mxu0 0.0
        %330 = vmatprep.subr.mxu0 0.0
        %331 = vmatpush1.msra.mxu0 0.0
        %332 = vmatprep.subr.mxu0 0.0
        %333 = vmatpush1.msra.mxu0 0.0
        %334 = vmatprep.subr.mxu0 0.0
        %335 = vmatpush1.msra.mxu0 0.0
        %336 = vmatprep.subr.mxu0 0.0
        %337 = vmatpush1.msra.mxu0 0.0
        %338 = vmatprep.subr.mxu0 0.0
        %339 = vmatpush1.msra.mxu0 0.0
        %v340 = vand.u32 %v206, 4294901760
        %341 = vmatprep.subr.mxu0 %v340
        %v342 = vand.u32 %v205, 4294901760
        %343 = vmatpush1.msra.mxu0 %v342
        %344 = vmatprep.subr.mxu0 0.0
        %345 = vmatpush2.msra.mxu0 0.0
        %346 = vmatprep.subr.mxu0 0.0
        %347 = vmatpush2.msra.mxu0 0.0
        %348 = vmatprep.subr.mxu0 0.0
        %349 = vmatpush2.msra.mxu0 0.0
        %350 = vmatprep.subr.mxu0 0.0
        %351 = vmatpush2.msra.mxu0 0.0
        %352 = vmatprep.subr.mxu0 0.0
        %353 = vmatpush2.msra.mxu0 0.0
        %354 = vmatprep.subr.mxu0 0.0
        %355 = vmatpush2.msra.mxu0 0.0
        %356 = vmatprep.subr.mxu0 0.0
        %357 = vmatpush2.msra.mxu0 0.0
        %358 = vmatprep.subr.mxu0 0.0
        %359 = vmatpush2.msra.mxu0 0.0
        %360 = vmatprep.subr.mxu0 0.0
        %361 = vmatpush2.msra.mxu0 0.0
        %362 = vmatprep.subr.mxu0 0.0
        %363 = vmatpush2.msra.mxu0 0.0
        %364 = vmatprep.subr.mxu0 0.0
        %365 = vmatpush2.msra.mxu0 0.0
        %366 = vmatprep.subr.mxu0 0.0
        %367 = vmatpush2.msra.mxu0 0.0
        %368 = vmatprep.subr.mxu0 0.0
        %369 = vmatpush2.msra.mxu0 0.0
        %370 = vmatprep.subr.mxu0 0.0
        %371 = vmatpush2.msra.mxu0 0.0
        %372 = vmatprep.subr.mxu0 0.0
        %373 = vmatpush2.msra.mxu0 0.0
        %374 = vmatprep.subr.mxu0 0.0
        %375 = vmatpush2.msra.mxu0 0.0
        %376 = vmatprep.mubr.f32.mxu0 0.0
        %v377 = vand.u32 %v215, 4294901760
        %v378 = vsub.f32 %v215, %v377
        %v379 = vand.u32 %v378, 4294901760
        %v380 = vsub.f32 %v378, %v379
        %v381 = vand.u32 %v380, 4294901760
        %382 = vmatmul.mubr.f32.gmra.mxu0 %v381
        %v383 = vpop.f32.mrf.mxu0
        %v384 = vadd.f32 0.0, %v383
        %v385 = vpop.f32.mrf.mxu0
        %v386 = vadd.f32 0.0, %v385
        %387 = vmatprep.mubr.f32.mxu0 0.0
        %v388 = vand.u32 %v218, 4294901760
        %v389 = vsub.f32 %v218, %v388
        %v390 = vand.u32 %v389, 4294901760
        %v391 = vsub.f32 %v389, %v390
        %v392 = vand.u32 %v391, 4294901760
        %393 = vmatmul.mubr.f32.gmra.mxu0 %v392
        %v394 = vpop.f32.mrf.mxu0
        %v395 = vadd.f32 0.0, %v394
        %v396 = vpop.f32.mrf.mxu0
        %v397 = vadd.f32 0.0, %v396
        %398 = vmatprep.mubr.f32.mxu0 0.0
        %v399 = vand.u32 %v221, 4294901760
        %v400 = vsub.f32 %v221, %v399
        %v401 = vand.u32 %v400, 4294901760
        %v402 = vsub.f32 %v400, %v401
        %v403 = vand.u32 %v402, 4294901760
        %404 = vmatmul.mubr.f32.gmra.mxu0 %v403
        %v405 = vpop.f32.mrf.mxu0
        %v406 = vadd.f32 0.0, %v405
        %v407 = vpop.f32.mrf.mxu0
        %v408 = vadd.f32 0.0, %v407
        %409 = vmatprep.mubr.f32.mxu0 0.0
        %v410 = vand.u32 %v224, 4294901760
        %v411 = vsub.f32 %v224, %v410
        %v412 = vand.u32 %v411, 4294901760
        %v413 = vsub.f32 %v411, %v412
        %v414 = vand.u32 %v413, 4294901760
        %415 = vmatmul.mubr.f32.gmra.mxu0 %v414
        %v416 = vpop.f32.mrf.mxu0
        %v417 = vadd.f32 0.0, %v416
        %v418 = vpop.f32.mrf.mxu0
        %v419 = vadd.f32 0.0, %v418
        %420 = vmatprep.mubr.f32.mxu0 0.0
        %v421 = vand.u32 %v227, 4294901760
        %v422 = vsub.f32 %v227, %v421
        %v423 = vand.u32 %v422, 4294901760
        %v424 = vsub.f32 %v422, %v423
        %v425 = vand.u32 %v424, 4294901760
        %426 = vmatmul.mubr.f32.gmra.mxu0 %v425
        %v427 = vpop.f32.mrf.mxu0
        %v428 = vadd.f32 0.0, %v427
        %v429 = vpop.f32.mrf.mxu0
        %v430 = vadd.f32 0.0, %v429
        %431 = vmatprep.mubr.f32.mxu0 0.0
        %v432 = vand.u32 %v230, 4294901760
        %v433 = vsub.f32 %v230, %v432
        %v434 = vand.u32 %v433, 4294901760
        %v435 = vsub.f32 %v433, %v434
        %v436 = vand.u32 %v435, 4294901760
        %437 = vmatmul.mubr.f32.gmra.mxu0 %v436
        %v438 = vpop.f32.mrf.mxu0
        %v439 = vadd.f32 0.0, %v438
        %v440 = vpop.f32.mrf.mxu0
        %v441 = vadd.f32 0.0, %v440
        %442 = vmatprep.mubr.f32.mxu0 0.0
        %v443 = vand.u32 %v233, 4294901760
        %v444 = vsub.f32 %v233, %v443
        %v445 = vand.u32 %v444, 4294901760
        %v446 = vsub.f32 %v444, %v445
        %v447 = vand.u32 %v446, 4294901760
        %448 = vmatmul.mubr.f32.gmra.mxu0 %v447
        %v449 = vpop.f32.mrf.mxu0
        %v450 = vadd.f32 0.0, %v449
        %v451 = vpop.f32.mrf.mxu0
        %v452 = vadd.f32 0.0, %v451
        %453 = vmatprep.mubr.f32.mxu0 0.0
        %v454 = vand.u32 %v236, 4294901760
        %v455 = vsub.f32 %v236, %v454
        %v456 = vand.u32 %v455, 4294901760
        %v457 = vsub.f32 %v455, %v456
        %v458 = vand.u32 %v457, 4294901760
        %459 = vmatmul.mubr.f32.gmra.mxu0 %v458
        %v460 = vpop.f32.mrf.mxu0
        %v461 = vadd.f32 0.0, %v460
        %v462 = vpop.f32.mrf.mxu0
        %v463 = vadd.f32 0.0, %v462
        %464 = vmatprep.mubr.f32.mxu0 0.0
        %v465 = vand.u32 %v239, 4294901760
        %v466 = vsub.f32 %v239, %v465
        %v467 = vand.u32 %v466, 4294901760
        %v468 = vsub.f32 %v466, %v467
        %v469 = vand.u32 %v468, 4294901760
        %470 = vmatmul.mubr.f32.gmra.mxu0 %v469
        %v471 = vpop.f32.mrf.mxu0
        %v472 = vadd.f32 0.0, %v471
        %v473 = vpop.f32.mrf.mxu0
        %v474 = vadd.f32 0.0, %v473
        %475 = vmatprep.mubr.f32.mxu0 0.0
        %v476 = vand.u32 %v242, 4294901760
        %v477 = vsub.f32 %v242, %v476
        %v478 = vand.u32 %v477, 4294901760
        %v479 = vsub.f32 %v477, %v478
        %v480 = vand.u32 %v479, 4294901760
        %481 = vmatmul.mubr.f32.gmra.mxu0 %v480
        %v482 = vpop.f32.mrf.mxu0
        %v483 = vadd.f32 0.0, %v482
        %v484 = vpop.f32.mrf.mxu0
        %v485 = vadd.f32 0.0, %v484
        %486 = vmatprep.mubr.f32.mxu0 0.0
        %v487 = vand.u32 %v245, 4294901760
        %v488 = vsub.f32 %v245, %v487
        %v489 = vand.u32 %v488, 4294901760
        %v490 = vsub.f32 %v488, %v489
        %v491 = vand.u32 %v490, 4294901760
        %492 = vmatmul.mubr.f32.gmra.mxu0 %v491
        %v493 = vpop.f32.mrf.mxu0
        %v494 = vadd.f32 0.0, %v493
        %v495 = vpop.f32.mrf.mxu0
        %v496 = vadd.f32 0.0, %v495
        %497 = vmatprep.mubr.f32.mxu0 0.0
        %v498 = vand.u32 %v248, 4294901760
        %v499 = vsub.f32 %v248, %v498
        %v500 = vand.u32 %v499, 4294901760
        %v501 = vsub.f32 %v499, %v500
        %v502 = vand.u32 %v501, 4294901760
        %503 = vmatmul.mubr.f32.gmra.mxu0 %v502
        %v504 = vpop.f32.mrf.mxu0
        %v505 = vadd.f32 0.0, %v504
        %v506 = vpop.f32.mrf.mxu0
        %v507 = vadd.f32 0.0, %v506
        %508 = vmatprep.mubr.f32.mxu0 0.0
        %v509 = vand.u32 %v251, 4294901760
        %v510 = vsub.f32 %v251, %v509
        %v511 = vand.u32 %v510, 4294901760
        %v512 = vsub.f32 %v510, %v511
        %v513 = vand.u32 %v512, 4294901760
        %514 = vmatmul.mubr.f32.gmra.mxu0 %v513
        %v515 = vpop.f32.mrf.mxu0
        %v516 = vadd.f32 0.0, %v515
        %v517 = vpop.f32.mrf.mxu0
        %v518 = vadd.f32 0.0, %v517
        %519 = vmatprep.mubr.f32.mxu0 0.0
        %v520 = vand.u32 %v254, 4294901760
        %v521 = vsub.f32 %v254, %v520
        %v522 = vand.u32 %v521, 4294901760
        %v523 = vsub.f32 %v521, %v522
        %v524 = vand.u32 %v523, 4294901760
        %525 = vmatmul.mubr.f32.gmra.mxu0 %v524
        %v526 = vpop.f32.mrf.mxu0
        %v527 = vadd.f32 0.0, %v526
        %v528 = vpop.f32.mrf.mxu0
        %v529 = vadd.f32 0.0, %v528
        %530 = vmatprep.mubr.f32.mxu0 0.0
        %v531 = vand.u32 %v257, 4294901760
        %v532 = vsub.f32 %v257, %v531
        %v533 = vand.u32 %v532, 4294901760
        %v534 = vsub.f32 %v532, %v533
        %v535 = vand.u32 %v534, 4294901760
        %536 = vmatmul.mubr.f32.gmra.mxu0 %v535
        %v537 = vpop.f32.mrf.mxu0
        %v538 = vadd.f32 0.0, %v537
        %v539 = vpop.f32.mrf.mxu0
        %v540 = vadd.f32 0.0, %v539
        %541 = vmatprep.mubr.f32.mxu0 0.0
        %v542 = vand.u32 %v260, 4294901760
        %v543 = vsub.f32 %v260, %v542
        %v544 = vand.u32 %v543, 4294901760
        %v545 = vsub.f32 %v543, %v544
        %v546 = vand.u32 %v545, 4294901760
        %547 = vmatmul.mubr.f32.gmra.mxu0 %v546
        %v548 = vpop.f32.mrf.mxu0
        %v549 = vadd.f32 0.0, %v548
        %v550 = vpop.f32.mrf.mxu0
        %v551 = vadd.f32 0.0, %v550
        %552 = vmatprep.mubr.f32.mxu0 0.0
        %v553 = vand.u32 %v263, 4294901760
        %v554 = vsub.f32 %v263, %v553
        %v555 = vand.u32 %v554, 4294901760
        %v556 = vsub.f32 %v554, %v555
        %v557 = vand.u32 %v556, 4294901760
        %558 = vmatmul.mubr.f32.gmra.mxu0 %v557
        %v559 = vpop.f32.mrf.mxu0
        %v560 = vadd.f32 0.0, %v559
        %v561 = vpop.f32.mrf.mxu0
        %v562 = vadd.f32 0.0, %v561
        %563 = vmatprep.mubr.f32.mxu0 0.0
        %v564 = vand.u32 %v266, 4294901760
        %v565 = vsub.f32 %v266, %v564
        %v566 = vand.u32 %v565, 4294901760
        %v567 = vsub.f32 %v565, %v566
        %v568 = vand.u32 %v567, 4294901760
        %569 = vmatmul.mubr.f32.gmra.mxu0 %v568
        %v570 = vpop.f32.mrf.mxu0
        %v571 = vadd.f32 0.0, %v570
        %v572 = vpop.f32.mrf.mxu0
        %v573 = vadd.f32 0.0, %v572
        %574 = vmatprep.mubr.f32.mxu0 0.0
        %v575 = vand.u32 %v269, 4294901760
        %v576 = vsub.f32 %v269, %v575
        %v577 = vand.u32 %v576, 4294901760
        %v578 = vsub.f32 %v576, %v577
        %v579 = vand.u32 %v578, 4294901760
        %580 = vmatmul.mubr.f32.gmra.mxu0 %v579
        %v581 = vpop.f32.mrf.mxu0
        %v582 = vadd.f32 0.0, %v581
        %v583 = vpop.f32.mrf.mxu0
        %v584 = vadd.f32 0.0, %v583
        %585 = vmatprep.mubr.f32.mxu0 0.0
        %v586 = vand.u32 %v272, 4294901760
        %v587 = vsub.f32 %v272, %v586
        %v588 = vand.u32 %v587, 4294901760
        %v589 = vsub.f32 %v587, %v588
        %v590 = vand.u32 %v589, 4294901760
        %591 = vmatmul.mubr.f32.gmra.mxu0 %v590
        %v592 = vpop.f32.mrf.mxu0
        %v593 = vadd.f32 0.0, %v592
        %v594 = vpop.f32.mrf.mxu0
        %v595 = vadd.f32 0.0, %v594
        %596 = vmatprep.mubr.f32.mxu0 0.0
        %v597 = vand.u32 %v275, 4294901760
        %v598 = vsub.f32 %v275, %v597
        %v599 = vand.u32 %v598, 4294901760
        %v600 = vsub.f32 %v598, %v599
        %v601 = vand.u32 %v600, 4294901760
        %602 = vmatmul.mubr.f32.gmra.mxu0 %v601
        %v603 = vpop.f32.mrf.mxu0
        %v604 = vadd.f32 0.0, %v603
        %v605 = vpop.f32.mrf.mxu0
        %v606 = vadd.f32 0.0, %v605
        %607 = vmatprep.mubr.f32.mxu0 0.0
        %v608 = vand.u32 %v278, 4294901760
        %v609 = vsub.f32 %v278, %v608
        %v610 = vand.u32 %v609, 4294901760
        %v611 = vsub.f32 %v609, %v610
        %v612 = vand.u32 %v611, 4294901760
        %613 = vmatmul.mubr.f32.gmra.mxu0 %v612
        %v614 = vpop.f32.mrf.mxu0
        %v615 = vadd.f32 0.0, %v614
        %v616 = vpop.f32.mrf.mxu0
        %v617 = vadd.f32 0.0, %v616
        %618 = vmatprep.mubr.f32.mxu0 0.0
        %v619 = vand.u32 %v281, 4294901760
        %v620 = vsub.f32 %v281, %v619
        %v621 = vand.u32 %v620, 4294901760
        %v622 = vsub.f32 %v620, %v621
        %v623 = vand.u32 %v622, 4294901760
        %624 = vmatmul.mubr.f32.gmra.mxu0 %v623
        %v625 = vpop.f32.mrf.mxu0
        %v626 = vadd.f32 0.0, %v625
        %v627 = vpop.f32.mrf.mxu0
        %v628 = vadd.f32 0.0, %v627
        %629 = vmatprep.mubr.f32.mxu0 0.0
        %v630 = vand.u32 %v284, 4294901760
        %v631 = vsub.f32 %v284, %v630
        %v632 = vand.u32 %v631, 4294901760
        %v633 = vsub.f32 %v631, %v632
        %v634 = vand.u32 %v633, 4294901760
        %635 = vmatmul.mubr.f32.gmra.mxu0 %v634
        %v636 = vpop.f32.mrf.mxu0
        %v637 = vadd.f32 0.0, %v636
        %v638 = vpop.f32.mrf.mxu0
        %v639 = vadd.f32 0.0, %v638
        %640 = vmatprep.mubr.f32.mxu0 0.0
        %v641 = vand.u32 %v287, 4294901760
        %v642 = vsub.f32 %v287, %v641
        %v643 = vand.u32 %v642, 4294901760
        %v644 = vsub.f32 %v642, %v643
        %v645 = vand.u32 %v644, 4294901760
        %646 = vmatmul.mubr.f32.gmra.mxu0 %v645
        %v647 = vpop.f32.mrf.mxu0
        %v648 = vadd.f32 0.0, %v647
        %v649 = vpop.f32.mrf.mxu0
        %v650 = vadd.f32 0.0, %v649
        %651 = vmatprep.mubr.f32.mxu0 0.0
        %v652 = vand.u32 %v290, 4294901760
        %v653 = vsub.f32 %v290, %v652
        %v654 = vand.u32 %v653, 4294901760
        %v655 = vsub.f32 %v653, %v654
        %v656 = vand.u32 %v655, 4294901760
        %657 = vmatmul.mubr.f32.gmra.mxu0 %v656
        %v658 = vpop.f32.mrf.mxu0
        %v659 = vadd.f32 0.0, %v658
        %v660 = vpop.f32.mrf.mxu0
        %v661 = vadd.f32 0.0, %v660
        %662 = vmatprep.mubr.f32.mxu0 0.0
        %v663 = vand.u32 %v293, 4294901760
        %v664 = vsub.f32 %v293, %v663
        %v665 = vand.u32 %v664, 4294901760
        %v666 = vsub.f32 %v664, %v665
        %v667 = vand.u32 %v666, 4294901760
        %668 = vmatmul.mubr.f32.gmra.mxu0 %v667
        %v669 = vpop.f32.mrf.mxu0
        %v670 = vadd.f32 0.0, %v669
        %v671 = vpop.f32.mrf.mxu0
        %v672 = vadd.f32 0.0, %v671
        %673 = vmatprep.mubr.f32.mxu0 0.0
        %v674 = vand.u32 %v296, 4294901760
        %v675 = vsub.f32 %v296, %v674
        %v676 = vand.u32 %v675, 4294901760
        %v677 = vsub.f32 %v675, %v676
        %v678 = vand.u32 %v677, 4294901760
        %679 = vmatmul.mubr.f32.gmra.mxu0 %v678
        %v680 = vpop.f32.mrf.mxu0
        %v681 = vadd.f32 0.0, %v680
        %v682 = vpop.f32.mrf.mxu0
        %v683 = vadd.f32 0.0, %v682
        %684 = vmatprep.mubr.f32.mxu0 0.0
        %v685 = vand.u32 %v299, 4294901760
        %v686 = vsub.f32 %v299, %v685
        %v687 = vand.u32 %v686, 4294901760
        %v688 = vsub.f32 %v686, %v687
        %v689 = vand.u32 %v688, 4294901760
        %690 = vmatmul.mubr.f32.gmra.mxu0 %v689
        %v691 = vpop.f32.mrf.mxu0
        %v692 = vadd.f32 0.0, %v691
        %v693 = vpop.f32.mrf.mxu0
        %v694 = vadd.f32 0.0, %v693
        %695 = vmatprep.mubr.f32.mxu0 0.0
        %v696 = vand.u32 %v302, 4294901760
        %v697 = vsub.f32 %v302, %v696
        %v698 = vand.u32 %v697, 4294901760
        %v699 = vsub.f32 %v697, %v698
        %v700 = vand.u32 %v699, 4294901760
        %701 = vmatmul.mubr.f32.gmra.mxu0 %v700
        %v702 = vpop.f32.mrf.mxu0
        %v703 = vadd.f32 0.0, %v702
        %v704 = vpop.f32.mrf.mxu0
        %v705 = vadd.f32 0.0, %v704
        %706 = vmatprep.mubr.f32.mxu0 0.0
        %v707 = vand.u32 %v305, 4294901760
        %v708 = vsub.f32 %v305, %v707
        %v709 = vand.u32 %v708, 4294901760
        %v710 = vsub.f32 %v708, %v709
        %v711 = vand.u32 %v710, 4294901760
        %712 = vmatmul.mubr.f32.gmra.mxu0 %v711
        %v713 = vpop.f32.mrf.mxu0
        %v714 = vadd.f32 0.0, %v713
        %v715 = vpop.f32.mrf.mxu0
        %v716 = vadd.f32 0.0, %v715
        %717 = vmatprep.mubr.f32.mxu0 0.0
        %v718 = vand.u32 %v308, 4294901760
        %v719 = vsub.f32 %v308, %v718
        %v720 = vand.u32 %v719, 4294901760
        %v721 = vsub.f32 %v719, %v720
        %v722 = vand.u32 %v721, 4294901760
        %723 = vmatmul.mubr.f32.gmra.mxu0 %v722
        %v724 = vpop.f32.mrf.mxu0
        %v725 = vadd.f32 0.0, %v724
        %v726 = vpop.f32.mrf.mxu0
        %v727 = vadd.f32 0.0, %v726
        %728 = vdwg.mxu0
        %729 = vmatprep.subr.mxu0 0.0
        %730 = vmatpush1.msra.mxu0 0.0
        %731 = vmatprep.subr.mxu0 0.0
        %732 = vmatpush1.msra.mxu0 0.0
        %733 = vmatprep.subr.mxu0 0.0
        %734 = vmatpush1.msra.mxu0 0.0
        %735 = vmatprep.subr.mxu0 0.0
        %736 = vmatpush1.msra.mxu0 0.0
        %737 = vmatprep.subr.mxu0 0.0
        %738 = vmatpush1.msra.mxu0 0.0
        %739 = vmatprep.subr.mxu0 0.0
        %740 = vmatpush1.msra.mxu0 0.0
        %741 = vmatprep.subr.mxu0 0.0
        %742 = vmatpush1.msra.mxu0 0.0
        %743 = vmatprep.subr.mxu0 0.0
        %744 = vmatpush1.msra.mxu0 0.0
        %745 = vmatprep.subr.mxu0 0.0
        %746 = vmatpush1.msra.mxu0 0.0
        %747 = vmatprep.subr.mxu0 0.0
        %748 = vmatpush1.msra.mxu0 0.0
        %749 = vmatprep.subr.mxu0 0.0
        %750 = vmatpush1.msra.mxu0 0.0
        %751 = vmatprep.subr.mxu0 0.0
        %752 = vmatpush1.msra.mxu0 0.0
        %753 = vmatprep.subr.mxu0 0.0
        %754 = vmatpush1.msra.mxu0 0.0
        %755 = vmatprep.subr.mxu0 0.0
        %756 = vmatpush1.msra.mxu0 0.0
        %757 = vmatprep.subr.mxu0 0.0
        %758 = vmatpush1.msra.mxu0 0.0
        %v759 = vand.u32 %v206, 4294901760
        %v760 = vsub.f32 %v206, %v759
        %v761 = vand.u32 %v760, 4294901760
        %v762 = vsub.f32 %v760, %v761
        %v763 = vand.u32 %v762, 4294901760
        %764 = vmatprep.subr.mxu0 %v763
        %v765 = vand.u32 %v205, 4294901760
        %v766 = vsub.f32 %v205, %v765
        %v767 = vand.u32 %v766, 4294901760
        %v768 = vsub.f32 %v766, %v767
        %v769 = vand.u32 %v768, 4294901760
        %770 = vmatpush1.msra.mxu0 %v769
        %771 = vmatprep.subr.mxu0 0.0
        %772 = vmatpush2.msra.mxu0 0.0
        %773 = vmatprep.subr.mxu0 0.0
        %774 = vmatpush2.msra.mxu0 0.0
        %775 = vmatprep.subr.mxu0 0.0
        %776 = vmatpush2.msra.mxu0 0.0
        %777 = vmatprep.subr.mxu0 0.0
        %778 = vmatpush2.msra.mxu0 0.0
        %779 = vmatprep.subr.mxu0 0.0
        %780 = vmatpush2.msra.mxu0 0.0
        %781 = vmatprep.subr.mxu0 0.0
        %782 = vmatpush2.msra.mxu0 0.0
        %783 = vmatprep.subr.mxu0 0.0
        %784 = vmatpush2.msra.mxu0 0.0
        %785 = vmatprep.subr.mxu0 0.0
        %786 = vmatpush2.msra.mxu0 0.0
        %787 = vmatprep.subr.mxu0 0.0
        %788 = vmatpush2.msra.mxu0 0.0
        %789 = vmatprep.subr.mxu0 0.0
        %790 = vmatpush2.msra.mxu0 0.0
        %791 = vmatprep.subr.mxu0 0.0
        %792 = vmatpush2.msra.mxu0 0.0
        %793 = vmatprep.subr.mxu0 0.0
        %794 = vmatpush2.msra.mxu0 0.0
        %795 = vmatprep.subr.mxu0 0.0
        %796 = vmatpush2.msra.mxu0 0.0
        %797 = vmatprep.subr.mxu0 0.0
        %798 = vmatpush2.msra.mxu0 0.0
        %799 = vmatprep.subr.mxu0 0.0
        %800 = vmatpush2.msra.mxu0 0.0
        %801 = vmatprep.subr.mxu0 0.0
        %802 = vmatpush2.msra.mxu0 0.0
        %803 = vmatprep.mubr.f32.mxu0 0.0
        %v804 = vand.u32 %v215, 4294901760
        %805 = vmatmul.mubr.f32.gmra.mxu0 %v804
        %v806 = vpop.f32.mrf.mxu0
        %v807 = vadd.f32 %v384, %v806
        %v808 = vpop.f32.mrf.mxu0
        %v809 = vadd.f32 %v386, %v808
        %810 = vmatprep.mubr.f32.mxu0 0.0
        %v811 = vand.u32 %v218, 4294901760
        %812 = vmatmul.mubr.f32.gmra.mxu0 %v811
        %v813 = vpop.f32.mrf.mxu0
        %v814 = vadd.f32 %v395, %v813
        %v815 = vpop.f32.mrf.mxu0
        %v816 = vadd.f32 %v397, %v815
        %817 = vmatprep.mubr.f32.mxu0 0.0
        %v818 = vand.u32 %v221, 4294901760
        %819 = vmatmul.mubr.f32.gmra.mxu0 %v818
        %v820 = vpop.f32.mrf.mxu0
        %v821 = vadd.f32 %v406, %v820
        %v822 = vpop.f32.mrf.mxu0
        %v823 = vadd.f32 %v408, %v822
        %824 = vmatprep.mubr.f32.mxu0 0.0
        %v825 = vand.u32 %v224, 4294901760
        %826 = vmatmul.mubr.f32.gmra.mxu0 %v825
        %v827 = vpop.f32.mrf.mxu0
        %v828 = vadd.f32 %v417, %v827
        %v829 = vpop.f32.mrf.mxu0
        %v830 = vadd.f32 %v419, %v829
        %831 = vmatprep.mubr.f32.mxu0 0.0
        %v832 = vand.u32 %v227, 4294901760
        %833 = vmatmul.mubr.f32.gmra.mxu0 %v832
        %v834 = vpop.f32.mrf.mxu0
        %v835 = vadd.f32 %v428, %v834
        %v836 = vpop.f32.mrf.mxu0
        %v837 = vadd.f32 %v430, %v836
        %838 = vmatprep.mubr.f32.mxu0 0.0
        %v839 = vand.u32 %v230, 4294901760
        %840 = vmatmul.mubr.f32.gmra.mxu0 %v839
        %v841 = vpop.f32.mrf.mxu0
        %v842 = vadd.f32 %v439, %v841
        %v843 = vpop.f32.mrf.mxu0
        %v844 = vadd.f32 %v441, %v843
        %845 = vmatprep.mubr.f32.mxu0 0.0
        %v846 = vand.u32 %v233, 4294901760
        %847 = vmatmul.mubr.f32.gmra.mxu0 %v846
        %v848 = vpop.f32.mrf.mxu0
        %v849 = vadd.f32 %v450, %v848
        %v850 = vpop.f32.mrf.mxu0
        %v851 = vadd.f32 %v452, %v850
        %852 = vmatprep.mubr.f32.mxu0 0.0
        %v853 = vand.u32 %v236, 4294901760
        %854 = vmatmul.mubr.f32.gmra.mxu0 %v853
        %v855 = vpop.f32.mrf.mxu0
        %v856 = vadd.f32 %v461, %v855
        %v857 = vpop.f32.mrf.mxu0
        %v858 = vadd.f32 %v463, %v857
        %859 = vmatprep.mubr.f32.mxu0 0.0
        %v860 = vand.u32 %v239, 4294901760
        %861 = vmatmul.mubr.f32.gmra.mxu0 %v860
        %v862 = vpop.f32.mrf.mxu0
        %v863 = vadd.f32 %v472, %v862
        %v864 = vpop.f32.mrf.mxu0
        %v865 = vadd.f32 %v474, %v864
        %866 = vmatprep.mubr.f32.mxu0 0.0
        %v867 = vand.u32 %v242, 4294901760
        %868 = vmatmul.mubr.f32.gmra.mxu0 %v867
        %v869 = vpop.f32.mrf.mxu0
        %v870 = vadd.f32 %v483, %v869
        %v871 = vpop.f32.mrf.mxu0
        %v872 = vadd.f32 %v485, %v871
        %873 = vmatprep.mubr.f32.mxu0 0.0
        %v874 = vand.u32 %v245, 4294901760
        %875 = vmatmul.mubr.f32.gmra.mxu0 %v874
        %v876 = vpop.f32.mrf.mxu0
        %v877 = vadd.f32 %v494, %v876
        %v878 = vpop.f32.mrf.mxu0
        %v879 = vadd.f32 %v496, %v878
        %880 = vmatprep.mubr.f32.mxu0 0.0
        %v881 = vand.u32 %v248, 4294901760
        %882 = vmatmul.mubr.f32.gmra.mxu0 %v881
        %v883 = vpop.f32.mrf.mxu0
        %v884 = vadd.f32 %v505, %v883
        %v885 = vpop.f32.mrf.mxu0
        %v886 = vadd.f32 %v507, %v885
        %887 = vmatprep.mubr.f32.mxu0 0.0
        %v888 = vand.u32 %v251, 4294901760
        %889 = vmatmul.mubr.f32.gmra.mxu0 %v888
        %v890 = vpop.f32.mrf.mxu0
        %v891 = vadd.f32 %v516, %v890
        %v892 = vpop.f32.mrf.mxu0
        %v893 = vadd.f32 %v518, %v892
        %894 = vmatprep.mubr.f32.mxu0 0.0
        %v895 = vand.u32 %v254, 4294901760
        %896 = vmatmul.mubr.f32.gmra.mxu0 %v895
        %v897 = vpop.f32.mrf.mxu0
        %v898 = vadd.f32 %v527, %v897
        %v899 = vpop.f32.mrf.mxu0
        %v900 = vadd.f32 %v529, %v899
        %901 = vmatprep.mubr.f32.mxu0 0.0
        %v902 = vand.u32 %v257, 4294901760
        %903 = vmatmul.mubr.f32.gmra.mxu0 %v902
        %v904 = vpop.f32.mrf.mxu0
        %v905 = vadd.f32 %v538, %v904
        %v906 = vpop.f32.mrf.mxu0
        %v907 = vadd.f32 %v540, %v906
        %908 = vmatprep.mubr.f32.mxu0 0.0
        %v909 = vand.u32 %v260, 4294901760
        %910 = vmatmul.mubr.f32.gmra.mxu0 %v909
        %v911 = vpop.f32.mrf.mxu0
        %v912 = vadd.f32 %v549, %v911
        %v913 = vpop.f32.mrf.mxu0
        %v914 = vadd.f32 %v551, %v913
        %915 = vmatprep.mubr.f32.mxu0 0.0
        %v916 = vand.u32 %v263, 4294901760
        %917 = vmatmul.mubr.f32.gmra.mxu0 %v916
        %v918 = vpop.f32.mrf.mxu0
        %v919 = vadd.f32 %v560, %v918
        %v920 = vpop.f32.mrf.mxu0
        %v921 = vadd.f32 %v562, %v920
        %922 = vmatprep.mubr.f32.mxu0 0.0
        %v923 = vand.u32 %v266, 4294901760
        %924 = vmatmul.mubr.f32.gmra.mxu0 %v923
        %v925 = vpop.f32.mrf.mxu0
        %v926 = vadd.f32 %v571, %v925
        %v927 = vpop.f32.mrf.mxu0
        %v928 = vadd.f32 %v573, %v927
        %929 = vmatprep.mubr.f32.mxu0 0.0
        %v930 = vand.u32 %v269, 4294901760
        %931 = vmatmul.mubr.f32.gmra.mxu0 %v930
        %v932 = vpop.f32.mrf.mxu0
        %v933 = vadd.f32 %v582, %v932
        %v934 = vpop.f32.mrf.mxu0
        %v935 = vadd.f32 %v584, %v934
        %936 = vmatprep.mubr.f32.mxu0 0.0
        %v937 = vand.u32 %v272, 4294901760
        %938 = vmatmul.mubr.f32.gmra.mxu0 %v937
        %v939 = vpop.f32.mrf.mxu0
        %v940 = vadd.f32 %v593, %v939
        %v941 = vpop.f32.mrf.mxu0
        %v942 = vadd.f32 %v595, %v941
        %943 = vmatprep.mubr.f32.mxu0 0.0
        %v944 = vand.u32 %v275, 4294901760
        %945 = vmatmul.mubr.f32.gmra.mxu0 %v944
        %v946 = vpop.f32.mrf.mxu0
        %v947 = vadd.f32 %v604, %v946
        %v948 = vpop.f32.mrf.mxu0
        %v949 = vadd.f32 %v606, %v948
        %950 = vmatprep.mubr.f32.mxu0 0.0
        %v951 = vand.u32 %v278, 4294901760
        %952 = vmatmul.mubr.f32.gmra.mxu0 %v951
        %v953 = vpop.f32.mrf.mxu0
        %v954 = vadd.f32 %v615, %v953
        %v955 = vpop.f32.mrf.mxu0
        %v956 = vadd.f32 %v617, %v955
        %957 = vmatprep.mubr.f32.mxu0 0.0
        %v958 = vand.u32 %v281, 4294901760
        %959 = vmatmul.mubr.f32.gmra.mxu0 %v958
        %v960 = vpop.f32.mrf.mxu0
        %v961 = vadd.f32 %v626, %v960
        %v962 = vpop.f32.mrf.mxu0
        %v963 = vadd.f32 %v628, %v962
        %964 = vmatprep.mubr.f32.mxu0 0.0
        %v965 = vand.u32 %v284, 4294901760
        %966 = vmatmul.mubr.f32.gmra.mxu0 %v965
        %v967 = vpop.f32.mrf.mxu0
        %v968 = vadd.f32 %v637, %v967
        %v969 = vpop.f32.mrf.mxu0
        %v970 = vadd.f32 %v639, %v969
        %971 = vmatprep.mubr.f32.mxu0 0.0
        %v972 = vand.u32 %v287, 4294901760
        %973 = vmatmul.mubr.f32.gmra.mxu0 %v972
        %v974 = vpop.f32.mrf.mxu0
        %v975 = vadd.f32 %v648, %v974
        %v976 = vpop.f32.mrf.mxu0
        %v977 = vadd.f32 %v650, %v976
        %978 = vmatprep.mubr.f32.mxu0 0.0
        %v979 = vand.u32 %v290, 4294901760
        %980 = vmatmul.mubr.f32.gmra.mxu0 %v979
        %v981 = vpop.f32.mrf.mxu0
        %v982 = vadd.f32 %v659, %v981
        %v983 = vpop.f32.mrf.mxu0
        %v984 = vadd.f32 %v661, %v983
        %985 = vmatprep.mubr.f32.mxu0 0.0
        %v986 = vand.u32 %v293, 4294901760
        %987 = vmatmul.mubr.f32.gmra.mxu0 %v986
        %v988 = vpop.f32.mrf.mxu0
        %v989 = vadd.f32 %v670, %v988
        %v990 = vpop.f32.mrf.mxu0
        %v991 = vadd.f32 %v672, %v990
        %992 = vmatprep.mubr.f32.mxu0 0.0
        %v993 = vand.u32 %v296, 4294901760
        %994 = vmatmul.mubr.f32.gmra.mxu0 %v993
        %v995 = vpop.f32.mrf.mxu0
        %v996 = vadd.f32 %v681, %v995
        %v997 = vpop.f32.mrf.mxu0
        %v998 = vadd.f32 %v683, %v997
        %999 = vmatprep.mubr.f32.mxu0 0.0
        %v1000 = vand.u32 %v299, 4294901760
        %1001 = vmatmul.mubr.f32.gmra.mxu0 %v1000
        %v1002 = vpop.f32.mrf.mxu0
        %v1003 = vadd.f32 %v692, %v1002
        %v1004 = vpop.f32.mrf.mxu0
        %v1005 = vadd.f32 %v694, %v1004
        %1006 = vmatprep.mubr.f32.mxu0 0.0
        %v1007 = vand.u32 %v302, 4294901760
        %1008 = vmatmul.mubr.f32.gmra.mxu0 %v1007
        %v1009 = vpop.f32.mrf.mxu0
        %v1010 = vadd.f32 %v703, %v1009
        %v1011 = vpop.f32.mrf.mxu0
        %v1012 = vadd.f32 %v705, %v1011
        %1013 = vmatprep.mubr.f32.mxu0 0.0
        %v1014 = vand.u32 %v305, 4294901760
        %1015 = vmatmul.mubr.f32.gmra.mxu0 %v1014
        %v1016 = vpop.f32.mrf.mxu0
        %v1017 = vadd.f32 %v714, %v1016
        %v1018 = vpop.f32.mrf.mxu0
        %v1019 = vadd.f32 %v716, %v1018
        %1020 = vmatprep.mubr.f32.mxu0 0.0
        %v1021 = vand.u32 %v308, 4294901760
        %1022 = vmatmul.mubr.f32.gmra.mxu0 %v1021
        %v1023 = vpop.f32.mrf.mxu0
        %v1024 = vadd.f32 %v725, %v1023
        %v1025 = vpop.f32.mrf.mxu0
        %v1026 = vadd.f32 %v727, %v1025
        %1027 = vdwg.mxu0
        %1028 = vmatprep.subr.mxu0 0.0
        %1029 = vmatpush1.msra.mxu0 0.0
        %1030 = vmatprep.subr.mxu0 0.0
        %1031 = vmatpush1.msra.mxu0 0.0
        %1032 = vmatprep.subr.mxu0 0.0
        %1033 = vmatpush1.msra.mxu0 0.0
        %1034 = vmatprep.subr.mxu0 0.0
        %1035 = vmatpush1.msra.mxu0 0.0
        %1036 = vmatprep.subr.mxu0 0.0
        %1037 = vmatpush1.msra.mxu0 0.0
        %1038 = vmatprep.subr.mxu0 0.0
        %1039 = vmatpush1.msra.mxu0 0.0
        %1040 = vmatprep.subr.mxu0 0.0
        %1041 = vmatpush1.msra.mxu0 0.0
        %1042 = vmatprep.subr.mxu0 0.0
        %1043 = vmatpush1.msra.mxu0 0.0
        %1044 = vmatprep.subr.mxu0 0.0
        %1045 = vmatpush1.msra.mxu0 0.0
        %1046 = vmatprep.subr.mxu0 0.0
        %1047 = vmatpush1.msra.mxu0 0.0
        %1048 = vmatprep.subr.mxu0 0.0
        %1049 = vmatpush1.msra.mxu0 0.0
        %1050 = vmatprep.subr.mxu0 0.0
        %1051 = vmatpush1.msra.mxu0 0.0
        %1052 = vmatprep.subr.mxu0 0.0
        %1053 = vmatpush1.msra.mxu0 0.0
        %1054 = vmatprep.subr.mxu0 0.0
        %1055 = vmatpush1.msra.mxu0 0.0
        %1056 = vmatprep.subr.mxu0 0.0
        %1057 = vmatpush1.msra.mxu0 0.0
        %v1058 = vand.u32 %v206, 4294901760
        %v1059 = vsub.f32 %v206, %v1058
        %1060 = vmatprep.subr.mxu0 %v1059
        %v1061 = vand.u32 %v205, 4294901760
        %v1062 = vsub.f32 %v205, %v1061
        %1063 = vmatpush1.msra.mxu0 %v1062
        %1064 = vmatprep.subr.mxu0 0.0
        %1065 = vmatpush2.msra.mxu0 0.0
        %1066 = vmatprep.subr.mxu0 0.0
        %1067 = vmatpush2.msra.mxu0 0.0
        %1068 = vmatprep.subr.mxu0 0.0
        %1069 = vmatpush2.msra.mxu0 0.0
        %1070 = vmatprep.subr.mxu0 0.0
        %1071 = vmatpush2.msra.mxu0 0.0
        %1072 = vmatprep.subr.mxu0 0.0
        %1073 = vmatpush2.msra.mxu0 0.0
        %1074 = vmatprep.subr.mxu0 0.0
        %1075 = vmatpush2.msra.mxu0 0.0
        %1076 = vmatprep.subr.mxu0 0.0
        %1077 = vmatpush2.msra.mxu0 0.0
        %1078 = vmatprep.subr.mxu0 0.0
        %1079 = vmatpush2.msra.mxu0 0.0
        %1080 = vmatprep.subr.mxu0 0.0
        %1081 = vmatpush2.msra.mxu0 0.0
        %1082 = vmatprep.subr.mxu0 0.0
        %1083 = vmatpush2.msra.mxu0 0.0
        %1084 = vmatprep.subr.mxu0 0.0
        %1085 = vmatpush2.msra.mxu0 0.0
        %1086 = vmatprep.subr.mxu0 0.0
        %1087 = vmatpush2.msra.mxu0 0.0
        %1088 = vmatprep.subr.mxu0 0.0
        %1089 = vmatpush2.msra.mxu0 0.0
        %1090 = vmatprep.subr.mxu0 0.0
        %1091 = vmatpush2.msra.mxu0 0.0
        %1092 = vmatprep.subr.mxu0 0.0
        %1093 = vmatpush2.msra.mxu0 0.0
        %1094 = vmatprep.subr.mxu0 0.0
        %1095 = vmatpush2.msra.mxu0 0.0
        %1096 = vmatprep.mubr.f32.mxu0 0.0
        %v1097 = vand.u32 %v215, 4294901760
        %v1098 = vsub.f32 %v215, %v1097
        %1099 = vmatmul.mubr.f32.gmra.mxu0 %v1098
        %v1100 = vpop.f32.mrf.mxu0
        %v1101 = vadd.f32 %v807, %v1100
        %v1102 = vpop.f32.mrf.mxu0
        %v1103 = vadd.f32 %v809, %v1102
        %1104 = vmatprep.mubr.f32.mxu0 0.0
        %v1105 = vand.u32 %v218, 4294901760
        %v1106 = vsub.f32 %v218, %v1105
        %1107 = vmatmul.mubr.f32.gmra.mxu0 %v1106
        %v1108 = vpop.f32.mrf.mxu0
        %v1109 = vadd.f32 %v814, %v1108
        %v1110 = vpop.f32.mrf.mxu0
        %v1111 = vadd.f32 %v816, %v1110
        %1112 = vmatprep.mubr.f32.mxu0 0.0
        %v1113 = vand.u32 %v221, 4294901760
        %v1114 = vsub.f32 %v221, %v1113
        %1115 = vmatmul.mubr.f32.gmra.mxu0 %v1114
        %v1116 = vpop.f32.mrf.mxu0
        %v1117 = vadd.f32 %v821, %v1116
        %v1118 = vpop.f32.mrf.mxu0
        %v1119 = vadd.f32 %v823, %v1118
        %1120 = vmatprep.mubr.f32.mxu0 0.0
        %v1121 = vand.u32 %v224, 4294901760
        %v1122 = vsub.f32 %v224, %v1121
        %1123 = vmatmul.mubr.f32.gmra.mxu0 %v1122
        %v1124 = vpop.f32.mrf.mxu0
        %v1125 = vadd.f32 %v828, %v1124
        %v1126 = vpop.f32.mrf.mxu0
        %v1127 = vadd.f32 %v830, %v1126
        %1128 = vmatprep.mubr.f32.mxu0 0.0
        %v1129 = vand.u32 %v227, 4294901760
        %v1130 = vsub.f32 %v227, %v1129
        %1131 = vmatmul.mubr.f32.gmra.mxu0 %v1130
        %v1132 = vpop.f32.mrf.mxu0
        %v1133 = vadd.f32 %v835, %v1132
        %v1134 = vpop.f32.mrf.mxu0
        %v1135 = vadd.f32 %v837, %v1134
        %1136 = vmatprep.mubr.f32.mxu0 0.0
        %v1137 = vand.u32 %v230, 4294901760
        %v1138 = vsub.f32 %v230, %v1137
        %1139 = vmatmul.mubr.f32.gmra.mxu0 %v1138
        %v1140 = vpop.f32.mrf.mxu0
        %v1141 = vadd.f32 %v842, %v1140
        %v1142 = vpop.f32.mrf.mxu0
        %v1143 = vadd.f32 %v844, %v1142
        %1144 = vmatprep.mubr.f32.mxu0 0.0
        %v1145 = vand.u32 %v233, 4294901760
        %v1146 = vsub.f32 %v233, %v1145
        %1147 = vmatmul.mubr.f32.gmra.mxu0 %v1146
        %v1148 = vpop.f32.mrf.mxu0
        %v1149 = vadd.f32 %v849, %v1148
        %v1150 = vpop.f32.mrf.mxu0
        %v1151 = vadd.f32 %v851, %v1150
        %1152 = vmatprep.mubr.f32.mxu0 0.0
        %v1153 = vand.u32 %v236, 4294901760
        %v1154 = vsub.f32 %v236, %v1153
        %1155 = vmatmul.mubr.f32.gmra.mxu0 %v1154
        %v1156 = vpop.f32.mrf.mxu0
        %v1157 = vadd.f32 %v856, %v1156
        %v1158 = vpop.f32.mrf.mxu0
        %v1159 = vadd.f32 %v858, %v1158
        %1160 = vmatprep.mubr.f32.mxu0 0.0
        %v1161 = vand.u32 %v239, 4294901760
        %v1162 = vsub.f32 %v239, %v1161
        %1163 = vmatmul.mubr.f32.gmra.mxu0 %v1162
        %v1164 = vpop.f32.mrf.mxu0
        %v1165 = vadd.f32 %v863, %v1164
        %v1166 = vpop.f32.mrf.mxu0
        %v1167 = vadd.f32 %v865, %v1166
        %1168 = vmatprep.mubr.f32.mxu0 0.0
        %v1169 = vand.u32 %v242, 4294901760
        %v1170 = vsub.f32 %v242, %v1169
        %1171 = vmatmul.mubr.f32.gmra.mxu0 %v1170
        %v1172 = vpop.f32.mrf.mxu0
        %v1173 = vadd.f32 %v870, %v1172
        %v1174 = vpop.f32.mrf.mxu0
        %v1175 = vadd.f32 %v872, %v1174
        %1176 = vmatprep.mubr.f32.mxu0 0.0
        %v1177 = vand.u32 %v245, 4294901760
        %v1178 = vsub.f32 %v245, %v1177
        %1179 = vmatmul.mubr.f32.gmra.mxu0 %v1178
        %v1180 = vpop.f32.mrf.mxu0
        %v1181 = vadd.f32 %v877, %v1180
        %v1182 = vpop.f32.mrf.mxu0
        %v1183 = vadd.f32 %v879, %v1182
        %1184 = vmatprep.mubr.f32.mxu0 0.0
        %v1185 = vand.u32 %v248, 4294901760
        %v1186 = vsub.f32 %v248, %v1185
        %1187 = vmatmul.mubr.f32.gmra.mxu0 %v1186
        %v1188 = vpop.f32.mrf.mxu0
        %v1189 = vadd.f32 %v884, %v1188
        %v1190 = vpop.f32.mrf.mxu0
        %v1191 = vadd.f32 %v886, %v1190
        %1192 = vmatprep.mubr.f32.mxu0 0.0
        %v1193 = vand.u32 %v251, 4294901760
        %v1194 = vsub.f32 %v251, %v1193
        %1195 = vmatmul.mubr.f32.gmra.mxu0 %v1194
        %v1196 = vpop.f32.mrf.mxu0
        %v1197 = vadd.f32 %v891, %v1196
        %v1198 = vpop.f32.mrf.mxu0
        %v1199 = vadd.f32 %v893, %v1198
        %1200 = vmatprep.mubr.f32.mxu0 0.0
        %v1201 = vand.u32 %v254, 4294901760
        %v1202 = vsub.f32 %v254, %v1201
        %1203 = vmatmul.mubr.f32.gmra.mxu0 %v1202
        %v1204 = vpop.f32.mrf.mxu0
        %v1205 = vadd.f32 %v898, %v1204
        %v1206 = vpop.f32.mrf.mxu0
        %v1207 = vadd.f32 %v900, %v1206
        %1208 = vmatprep.mubr.f32.mxu0 0.0
        %v1209 = vand.u32 %v257, 4294901760
        %v1210 = vsub.f32 %v257, %v1209
        %1211 = vmatmul.mubr.f32.gmra.mxu0 %v1210
        %v1212 = vpop.f32.mrf.mxu0
        %v1213 = vadd.f32 %v905, %v1212
        %v1214 = vpop.f32.mrf.mxu0
        %v1215 = vadd.f32 %v907, %v1214
        %1216 = vmatprep.mubr.f32.mxu0 0.0
        %v1217 = vand.u32 %v260, 4294901760
        %v1218 = vsub.f32 %v260, %v1217
        %1219 = vmatmul.mubr.f32.gmra.mxu0 %v1218
        %v1220 = vpop.f32.mrf.mxu0
        %v1221 = vadd.f32 %v912, %v1220
        %v1222 = vpop.f32.mrf.mxu0
        %v1223 = vadd.f32 %v914, %v1222
        %1224 = vmatprep.mubr.f32.mxu0 0.0
        %v1225 = vand.u32 %v263, 4294901760
        %v1226 = vsub.f32 %v263, %v1225
        %1227 = vmatmul.mubr.f32.gmra.mxu0 %v1226
        %v1228 = vpop.f32.mrf.mxu0
        %v1229 = vadd.f32 %v919, %v1228
        %v1230 = vpop.f32.mrf.mxu0
        %v1231 = vadd.f32 %v921, %v1230
        %1232 = vmatprep.mubr.f32.mxu0 0.0
        %v1233 = vand.u32 %v266, 4294901760
        %v1234 = vsub.f32 %v266, %v1233
        %1235 = vmatmul.mubr.f32.gmra.mxu0 %v1234
        %v1236 = vpop.f32.mrf.mxu0
        %v1237 = vadd.f32 %v926, %v1236
        %v1238 = vpop.f32.mrf.mxu0
        %v1239 = vadd.f32 %v928, %v1238
        %1240 = vmatprep.mubr.f32.mxu0 0.0
        %v1241 = vand.u32 %v269, 4294901760
        %v1242 = vsub.f32 %v269, %v1241
        %1243 = vmatmul.mubr.f32.gmra.mxu0 %v1242
        %v1244 = vpop.f32.mrf.mxu0
        %v1245 = vadd.f32 %v933, %v1244
        %v1246 = vpop.f32.mrf.mxu0
        %v1247 = vadd.f32 %v935, %v1246
        %1248 = vmatprep.mubr.f32.mxu0 0.0
        %v1249 = vand.u32 %v272, 4294901760
        %v1250 = vsub.f32 %v272, %v1249
        %1251 = vmatmul.mubr.f32.gmra.mxu0 %v1250
        %v1252 = vpop.f32.mrf.mxu0
        %v1253 = vadd.f32 %v940, %v1252
        %v1254 = vpop.f32.mrf.mxu0
        %v1255 = vadd.f32 %v942, %v1254
        %1256 = vmatprep.mubr.f32.mxu0 0.0
        %v1257 = vand.u32 %v275, 4294901760
        %v1258 = vsub.f32 %v275, %v1257
        %1259 = vmatmul.mubr.f32.gmra.mxu0 %v1258
        %v1260 = vpop.f32.mrf.mxu0
        %v1261 = vadd.f32 %v947, %v1260
        %v1262 = vpop.f32.mrf.mxu0
        %v1263 = vadd.f32 %v949, %v1262
        %1264 = vmatprep.mubr.f32.mxu0 0.0
        %v1265 = vand.u32 %v278, 4294901760
        %v1266 = vsub.f32 %v278, %v1265
        %1267 = vmatmul.mubr.f32.gmra.mxu0 %v1266
        %v1268 = vpop.f32.mrf.mxu0
        %v1269 = vadd.f32 %v954, %v1268
        %v1270 = vpop.f32.mrf.mxu0
        %v1271 = vadd.f32 %v956, %v1270
        %1272 = vmatprep.mubr.f32.mxu0 0.0
        %v1273 = vand.u32 %v281, 4294901760
        %v1274 = vsub.f32 %v281, %v1273
        %1275 = vmatmul.mubr.f32.gmra.mxu0 %v1274
        %v1276 = vpop.f32.mrf.mxu0
        %v1277 = vadd.f32 %v961, %v1276
        %v1278 = vpop.f32.mrf.mxu0
        %v1279 = vadd.f32 %v963, %v1278
        %1280 = vmatprep.mubr.f32.mxu0 0.0
        %v1281 = vand.u32 %v284, 4294901760
        %v1282 = vsub.f32 %v284, %v1281
        %1283 = vmatmul.mubr.f32.gmra.mxu0 %v1282
        %v1284 = vpop.f32.mrf.mxu0
        %v1285 = vadd.f32 %v968, %v1284
        %v1286 = vpop.f32.mrf.mxu0
        %v1287 = vadd.f32 %v970, %v1286
        %1288 = vmatprep.mubr.f32.mxu0 0.0
        %v1289 = vand.u32 %v287, 4294901760
        %v1290 = vsub.f32 %v287, %v1289
        %1291 = vmatmul.mubr.f32.gmra.mxu0 %v1290
        %v1292 = vpop.f32.mrf.mxu0
        %v1293 = vadd.f32 %v975, %v1292
        %v1294 = vpop.f32.mrf.mxu0
        %v1295 = vadd.f32 %v977, %v1294
        %1296 = vmatprep.mubr.f32.mxu0 0.0
        %v1297 = vand.u32 %v290, 4294901760
        %v1298 = vsub.f32 %v290, %v1297
        %1299 = vmatmul.mubr.f32.gmra.mxu0 %v1298
        %v1300 = vpop.f32.mrf.mxu0
        %v1301 = vadd.f32 %v982, %v1300
        %v1302 = vpop.f32.mrf.mxu0
        %v1303 = vadd.f32 %v984, %v1302
        %1304 = vmatprep.mubr.f32.mxu0 0.0
        %v1305 = vand.u32 %v293, 4294901760
        %v1306 = vsub.f32 %v293, %v1305
        %1307 = vmatmul.mubr.f32.gmra.mxu0 %v1306
        %v1308 = vpop.f32.mrf.mxu0
        %v1309 = vadd.f32 %v989, %v1308
        %v1310 = vpop.f32.mrf.mxu0
        %v1311 = vadd.f32 %v991, %v1310
        %1312 = vmatprep.mubr.f32.mxu0 0.0
        %v1313 = vand.u32 %v296, 4294901760
        %v1314 = vsub.f32 %v296, %v1313
        %1315 = vmatmul.mubr.f32.gmra.mxu0 %v1314
        %v1316 = vpop.f32.mrf.mxu0
        %v1317 = vadd.f32 %v996, %v1316
        %v1318 = vpop.f32.mrf.mxu0
        %v1319 = vadd.f32 %v998, %v1318
        %1320 = vmatprep.mubr.f32.mxu0 0.0
        %v1321 = vand.u32 %v299, 4294901760
        %v1322 = vsub.f32 %v299, %v1321
        %1323 = vmatmul.mubr.f32.gmra.mxu0 %v1322
        %v1324 = vpop.f32.mrf.mxu0
        %v1325 = vadd.f32 %v1003, %v1324
        %v1326 = vpop.f32.mrf.mxu0
        %v1327 = vadd.f32 %v1005, %v1326
        %1328 = vmatprep.mubr.f32.mxu0 0.0
        %v1329 = vand.u32 %v302, 4294901760
        %v1330 = vsub.f32 %v302, %v1329
        %1331 = vmatmul.mubr.f32.gmra.mxu0 %v1330
        %v1332 = vpop.f32.mrf.mxu0
        %v1333 = vadd.f32 %v1010, %v1332
        %v1334 = vpop.f32.mrf.mxu0
        %v1335 = vadd.f32 %v1012, %v1334
        %1336 = vmatprep.mubr.f32.mxu0 0.0
        %v1337 = vand.u32 %v305, 4294901760
        %v1338 = vsub.f32 %v305, %v1337
        %1339 = vmatmul.mubr.f32.gmra.mxu0 %v1338
        %v1340 = vpop.f32.mrf.mxu0
        %v1341 = vadd.f32 %v1017, %v1340
        %v1342 = vpop.f32.mrf.mxu0
        %v1343 = vadd.f32 %v1019, %v1342
        %1344 = vmatprep.mubr.f32.mxu0 0.0
        %v1345 = vand.u32 %v308, 4294901760
        %v1346 = vsub.f32 %v308, %v1345
        %1347 = vmatmul.mubr.f32.gmra.mxu0 %v1346
        %v1348 = vpop.f32.mrf.mxu0
        %v1349 = vadd.f32 %v1024, %v1348
        %v1350 = vpop.f32.mrf.mxu0
        %v1351 = vadd.f32 %v1026, %v1350
        %1352 = vdwg.mxu0
        %1353 = vmatprep.subr.mxu0 0.0
        %1354 = vmatpush1.msra.mxu0 0.0
        %1355 = vmatprep.subr.mxu0 0.0
        %1356 = vmatpush1.msra.mxu0 0.0
        %1357 = vmatprep.subr.mxu0 0.0
        %1358 = vmatpush1.msra.mxu0 0.0
        %1359 = vmatprep.subr.mxu0 0.0
        %1360 = vmatpush1.msra.mxu0 0.0
        %1361 = vmatprep.subr.mxu0 0.0
        %1362 = vmatpush1.msra.mxu0 0.0
        %1363 = vmatprep.subr.mxu0 0.0
        %1364 = vmatpush1.msra.mxu0 0.0
        %1365 = vmatprep.subr.mxu0 0.0
        %1366 = vmatpush1.msra.mxu0 0.0
        %1367 = vmatprep.subr.mxu0 0.0
        %1368 = vmatpush1.msra.mxu0 0.0
        %1369 = vmatprep.subr.mxu0 0.0
        %1370 = vmatpush1.msra.mxu0 0.0
        %1371 = vmatprep.subr.mxu0 0.0
        %1372 = vmatpush1.msra.mxu0 0.0
        %1373 = vmatprep.subr.mxu0 0.0
        %1374 = vmatpush1.msra.mxu0 0.0
        %1375 = vmatprep.subr.mxu0 0.0
        %1376 = vmatpush1.msra.mxu0 0.0
        %1377 = vmatprep.subr.mxu0 0.0
        %1378 = vmatpush1.msra.mxu0 0.0
        %1379 = vmatprep.subr.mxu0 0.0
        %1380 = vmatpush1.msra.mxu0 0.0
        %1381 = vmatprep.subr.mxu0 0.0
        %1382 = vmatpush1.msra.mxu0 0.0
        %v1383 = vand.u32 %v206, 4294901760
        %1384 = vmatprep.subr.mxu0 %v1383
        %v1385 = vand.u32 %v205, 4294901760
        %1386 = vmatpush1.msra.mxu0 %v1385
        %1387 = vmatprep.subr.mxu0 0.0
        %1388 = vmatpush2.msra.mxu0 0.0
        %1389 = vmatprep.subr.mxu0 0.0
        %1390 = vmatpush2.msra.mxu0 0.0
        %1391 = vmatprep.subr.mxu0 0.0
        %1392 = vmatpush2.msra.mxu0 0.0
        %1393 = vmatprep.subr.mxu0 0.0
        %1394 = vmatpush2.msra.mxu0 0.0
        %1395 = vmatprep.subr.mxu0 0.0
        %1396 = vmatpush2.msra.mxu0 0.0
        %1397 = vmatprep.subr.mxu0 0.0
        %1398 = vmatpush2.msra.mxu0 0.0
        %1399 = vmatprep.subr.mxu0 0.0
        %1400 = vmatpush2.msra.mxu0 0.0
        %1401 = vmatprep.subr.mxu0 0.0
        %1402 = vmatpush2.msra.mxu0 0.0
        %1403 = vmatprep.subr.mxu0 0.0
        %1404 = vmatpush2.msra.mxu0 0.0
        %1405 = vmatprep.subr.mxu0 0.0
        %1406 = vmatpush2.msra.mxu0 0.0
        %1407 = vmatprep.subr.mxu0 0.0
        %1408 = vmatpush2.msra.mxu0 0.0
        %1409 = vmatprep.subr.mxu0 0.0
        %1410 = vmatpush2.msra.mxu0 0.0
        %1411 = vmatprep.subr.mxu0 0.0
        %1412 = vmatpush2.msra.mxu0 0.0
        %1413 = vmatprep.subr.mxu0 0.0
        %1414 = vmatpush2.msra.mxu0 0.0
        %1415 = vmatprep.subr.mxu0 0.0
        %1416 = vmatpush2.msra.mxu0 0.0
        %1417 = vmatprep.subr.mxu0 0.0
        %1418 = vmatpush2.msra.mxu0 0.0
        %1419 = vmatprep.mubr.f32.mxu0 0.0
        %v1420 = vand.u32 %v215, 4294901760
        %v1421 = vsub.f32 %v215, %v1420
        %v1422 = vand.u32 %v1421, 4294901760
        %1423 = vmatmul.mubr.f32.gmra.mxu0 %v1422
        %v1424 = vpop.f32.mrf.mxu0
        %v1425 = vadd.f32 %v1101, %v1424
        %v1426 = vpop.f32.mrf.mxu0
        %v1427 = vadd.f32 %v1103, %v1426
        %1428 = vmatprep.mubr.f32.mxu0 0.0
        %v1429 = vand.u32 %v218, 4294901760
        %v1430 = vsub.f32 %v218, %v1429
        %v1431 = vand.u32 %v1430, 4294901760
        %1432 = vmatmul.mubr.f32.gmra.mxu0 %v1431
        %v1433 = vpop.f32.mrf.mxu0
        %v1434 = vadd.f32 %v1109, %v1433
        %v1435 = vpop.f32.mrf.mxu0
        %v1436 = vadd.f32 %v1111, %v1435
        %1437 = vmatprep.mubr.f32.mxu0 0.0
        %v1438 = vand.u32 %v221, 4294901760
        %v1439 = vsub.f32 %v221, %v1438
        %v1440 = vand.u32 %v1439, 4294901760
        %1441 = vmatmul.mubr.f32.gmra.mxu0 %v1440
        %v1442 = vpop.f32.mrf.mxu0
        %v1443 = vadd.f32 %v1117, %v1442
        %v1444 = vpop.f32.mrf.mxu0
        %v1445 = vadd.f32 %v1119, %v1444
        %1446 = vmatprep.mubr.f32.mxu0 0.0
        %v1447 = vand.u32 %v224, 4294901760
        %v1448 = vsub.f32 %v224, %v1447
        %v1449 = vand.u32 %v1448, 4294901760
        %1450 = vmatmul.mubr.f32.gmra.mxu0 %v1449
        %v1451 = vpop.f32.mrf.mxu0
        %v1452 = vadd.f32 %v1125, %v1451
        %v1453 = vpop.f32.mrf.mxu0
        %v1454 = vadd.f32 %v1127, %v1453
        %1455 = vmatprep.mubr.f32.mxu0 0.0
        %v1456 = vand.u32 %v227, 4294901760
        %v1457 = vsub.f32 %v227, %v1456
        %v1458 = vand.u32 %v1457, 4294901760
        %1459 = vmatmul.mubr.f32.gmra.mxu0 %v1458
        %v1460 = vpop.f32.mrf.mxu0
        %v1461 = vadd.f32 %v1133, %v1460
        %v1462 = vpop.f32.mrf.mxu0
        %v1463 = vadd.f32 %v1135, %v1462
        %1464 = vmatprep.mubr.f32.mxu0 0.0
        %v1465 = vand.u32 %v230, 4294901760
        %v1466 = vsub.f32 %v230, %v1465
        %v1467 = vand.u32 %v1466, 4294901760
        %1468 = vmatmul.mubr.f32.gmra.mxu0 %v1467
        %v1469 = vpop.f32.mrf.mxu0
        %v1470 = vadd.f32 %v1141, %v1469
        %v1471 = vpop.f32.mrf.mxu0
        %v1472 = vadd.f32 %v1143, %v1471
        %1473 = vmatprep.mubr.f32.mxu0 0.0
        %v1474 = vand.u32 %v233, 4294901760
        %v1475 = vsub.f32 %v233, %v1474
        %v1476 = vand.u32 %v1475, 4294901760
        %1477 = vmatmul.mubr.f32.gmra.mxu0 %v1476
        %v1478 = vpop.f32.mrf.mxu0
        %v1479 = vadd.f32 %v1149, %v1478
        %v1480 = vpop.f32.mrf.mxu0
        %v1481 = vadd.f32 %v1151, %v1480
        %1482 = vmatprep.mubr.f32.mxu0 0.0
        %v1483 = vand.u32 %v236, 4294901760
        %v1484 = vsub.f32 %v236, %v1483
        %v1485 = vand.u32 %v1484, 4294901760
        %1486 = vmatmul.mubr.f32.gmra.mxu0 %v1485
        %v1487 = vpop.f32.mrf.mxu0
        %v1488 = vadd.f32 %v1157, %v1487
        %v1489 = vpop.f32.mrf.mxu0
        %v1490 = vadd.f32 %v1159, %v1489
        %1491 = vmatprep.mubr.f32.mxu0 0.0
        %v1492 = vand.u32 %v239, 4294901760
        %v1493 = vsub.f32 %v239, %v1492
        %v1494 = vand.u32 %v1493, 4294901760
        %1495 = vmatmul.mubr.f32.gmra.mxu0 %v1494
        %v1496 = vpop.f32.mrf.mxu0
        %v1497 = vadd.f32 %v1165, %v1496
        %v1498 = vpop.f32.mrf.mxu0
        %v1499 = vadd.f32 %v1167, %v1498
        %1500 = vmatprep.mubr.f32.mxu0 0.0
        %v1501 = vand.u32 %v242, 4294901760
        %v1502 = vsub.f32 %v242, %v1501
        %v1503 = vand.u32 %v1502, 4294901760
        %1504 = vmatmul.mubr.f32.gmra.mxu0 %v1503
        %v1505 = vpop.f32.mrf.mxu0
        %v1506 = vadd.f32 %v1173, %v1505
        %v1507 = vpop.f32.mrf.mxu0
        %v1508 = vadd.f32 %v1175, %v1507
        %1509 = vmatprep.mubr.f32.mxu0 0.0
        %v1510 = vand.u32 %v245, 4294901760
        %v1511 = vsub.f32 %v245, %v1510
        %v1512 = vand.u32 %v1511, 4294901760
        %1513 = vmatmul.mubr.f32.gmra.mxu0 %v1512
        %v1514 = vpop.f32.mrf.mxu0
        %v1515 = vadd.f32 %v1181, %v1514
        %v1516 = vpop.f32.mrf.mxu0
        %v1517 = vadd.f32 %v1183, %v1516
        %1518 = vmatprep.mubr.f32.mxu0 0.0
        %v1519 = vand.u32 %v248, 4294901760
        %v1520 = vsub.f32 %v248, %v1519
        %v1521 = vand.u32 %v1520, 4294901760
        %1522 = vmatmul.mubr.f32.gmra.mxu0 %v1521
        %v1523 = vpop.f32.mrf.mxu0
        %v1524 = vadd.f32 %v1189, %v1523
        %v1525 = vpop.f32.mrf.mxu0
        %v1526 = vadd.f32 %v1191, %v1525
        %1527 = vmatprep.mubr.f32.mxu0 0.0
        %v1528 = vand.u32 %v251, 4294901760
        %v1529 = vsub.f32 %v251, %v1528
        %v1530 = vand.u32 %v1529, 4294901760
        %1531 = vmatmul.mubr.f32.gmra.mxu0 %v1530
        %v1532 = vpop.f32.mrf.mxu0
        %v1533 = vadd.f32 %v1197, %v1532
        %v1534 = vpop.f32.mrf.mxu0
        %v1535 = vadd.f32 %v1199, %v1534
        %1536 = vmatprep.mubr.f32.mxu0 0.0
        %v1537 = vand.u32 %v254, 4294901760
        %v1538 = vsub.f32 %v254, %v1537
        %v1539 = vand.u32 %v1538, 4294901760
        %1540 = vmatmul.mubr.f32.gmra.mxu0 %v1539
        %v1541 = vpop.f32.mrf.mxu0
        %v1542 = vadd.f32 %v1205, %v1541
        %v1543 = vpop.f32.mrf.mxu0
        %v1544 = vadd.f32 %v1207, %v1543
        %1545 = vmatprep.mubr.f32.mxu0 0.0
        %v1546 = vand.u32 %v257, 4294901760
        %v1547 = vsub.f32 %v257, %v1546
        %v1548 = vand.u32 %v1547, 4294901760
        %1549 = vmatmul.mubr.f32.gmra.mxu0 %v1548
        %v1550 = vpop.f32.mrf.mxu0
        %v1551 = vadd.f32 %v1213, %v1550
        %v1552 = vpop.f32.mrf.mxu0
        %v1553 = vadd.f32 %v1215, %v1552
        %1554 = vmatprep.mubr.f32.mxu0 0.0
        %v1555 = vand.u32 %v260, 4294901760
        %v1556 = vsub.f32 %v260, %v1555
        %v1557 = vand.u32 %v1556, 4294901760
        %1558 = vmatmul.mubr.f32.gmra.mxu0 %v1557
        %v1559 = vpop.f32.mrf.mxu0
        %v1560 = vadd.f32 %v1221, %v1559
        %v1561 = vpop.f32.mrf.mxu0
        %v1562 = vadd.f32 %v1223, %v1561
        %1563 = vmatprep.mubr.f32.mxu0 0.0
        %v1564 = vand.u32 %v263, 4294901760
        %v1565 = vsub.f32 %v263, %v1564
        %v1566 = vand.u32 %v1565, 4294901760
        %1567 = vmatmul.mubr.f32.gmra.mxu0 %v1566
        %v1568 = vpop.f32.mrf.mxu0
        %v1569 = vadd.f32 %v1229, %v1568
        %v1570 = vpop.f32.mrf.mxu0
        %v1571 = vadd.f32 %v1231, %v1570
        %1572 = vmatprep.mubr.f32.mxu0 0.0
        %v1573 = vand.u32 %v266, 4294901760
        %v1574 = vsub.f32 %v266, %v1573
        %v1575 = vand.u32 %v1574, 4294901760
        %1576 = vmatmul.mubr.f32.gmra.mxu0 %v1575
        %v1577 = vpop.f32.mrf.mxu0
        %v1578 = vadd.f32 %v1237, %v1577
        %v1579 = vpop.f32.mrf.mxu0
        %v1580 = vadd.f32 %v1239, %v1579
        %1581 = vmatprep.mubr.f32.mxu0 0.0
        %v1582 = vand.u32 %v269, 4294901760
        %v1583 = vsub.f32 %v269, %v1582
        %v1584 = vand.u32 %v1583, 4294901760
        %1585 = vmatmul.mubr.f32.gmra.mxu0 %v1584
        %v1586 = vpop.f32.mrf.mxu0
        %v1587 = vadd.f32 %v1245, %v1586
        %v1588 = vpop.f32.mrf.mxu0
        %v1589 = vadd.f32 %v1247, %v1588
        %1590 = vmatprep.mubr.f32.mxu0 0.0
        %v1591 = vand.u32 %v272, 4294901760
        %v1592 = vsub.f32 %v272, %v1591
        %v1593 = vand.u32 %v1592, 4294901760
        %1594 = vmatmul.mubr.f32.gmra.mxu0 %v1593
        %v1595 = vpop.f32.mrf.mxu0
        %v1596 = vadd.f32 %v1253, %v1595
        %v1597 = vpop.f32.mrf.mxu0
        %v1598 = vadd.f32 %v1255, %v1597
        %1599 = vmatprep.mubr.f32.mxu0 0.0
        %v1600 = vand.u32 %v275, 4294901760
        %v1601 = vsub.f32 %v275, %v1600
        %v1602 = vand.u32 %v1601, 4294901760
        %1603 = vmatmul.mubr.f32.gmra.mxu0 %v1602
        %v1604 = vpop.f32.mrf.mxu0
        %v1605 = vadd.f32 %v1261, %v1604
        %v1606 = vpop.f32.mrf.mxu0
        %v1607 = vadd.f32 %v1263, %v1606
        %1608 = vmatprep.mubr.f32.mxu0 0.0
        %v1609 = vand.u32 %v278, 4294901760
        %v1610 = vsub.f32 %v278, %v1609
        %v1611 = vand.u32 %v1610, 4294901760
        %1612 = vmatmul.mubr.f32.gmra.mxu0 %v1611
        %v1613 = vpop.f32.mrf.mxu0
        %v1614 = vadd.f32 %v1269, %v1613
        %v1615 = vpop.f32.mrf.mxu0
        %v1616 = vadd.f32 %v1271, %v1615
        %1617 = vmatprep.mubr.f32.mxu0 0.0
        %v1618 = vand.u32 %v281, 4294901760
        %v1619 = vsub.f32 %v281, %v1618
        %v1620 = vand.u32 %v1619, 4294901760
        %1621 = vmatmul.mubr.f32.gmra.mxu0 %v1620
        %v1622 = vpop.f32.mrf.mxu0
        %v1623 = vadd.f32 %v1277, %v1622
        %v1624 = vpop.f32.mrf.mxu0
        %v1625 = vadd.f32 %v1279, %v1624
        %1626 = vmatprep.mubr.f32.mxu0 0.0
        %v1627 = vand.u32 %v284, 4294901760
        %v1628 = vsub.f32 %v284, %v1627
        %v1629 = vand.u32 %v1628, 4294901760
        %1630 = vmatmul.mubr.f32.gmra.mxu0 %v1629
        %v1631 = vpop.f32.mrf.mxu0
        %v1632 = vadd.f32 %v1285, %v1631
        %v1633 = vpop.f32.mrf.mxu0
        %v1634 = vadd.f32 %v1287, %v1633
        %1635 = vmatprep.mubr.f32.mxu0 0.0
        %v1636 = vand.u32 %v287, 4294901760
        %v1637 = vsub.f32 %v287, %v1636
        %v1638 = vand.u32 %v1637, 4294901760
        %1639 = vmatmul.mubr.f32.gmra.mxu0 %v1638
        %v1640 = vpop.f32.mrf.mxu0
        %v1641 = vadd.f32 %v1293, %v1640
        %v1642 = vpop.f32.mrf.mxu0
        %v1643 = vadd.f32 %v1295, %v1642
        %1644 = vmatprep.mubr.f32.mxu0 0.0
        %v1645 = vand.u32 %v290, 4294901760
        %v1646 = vsub.f32 %v290, %v1645
        %v1647 = vand.u32 %v1646, 4294901760
        %1648 = vmatmul.mubr.f32.gmra.mxu0 %v1647
        %v1649 = vpop.f32.mrf.mxu0
        %v1650 = vadd.f32 %v1301, %v1649
        %v1651 = vpop.f32.mrf.mxu0
        %v1652 = vadd.f32 %v1303, %v1651
        %1653 = vmatprep.mubr.f32.mxu0 0.0
        %v1654 = vand.u32 %v293, 4294901760
        %v1655 = vsub.f32 %v293, %v1654
        %v1656 = vand.u32 %v1655, 4294901760
        %1657 = vmatmul.mubr.f32.gmra.mxu0 %v1656
        %v1658 = vpop.f32.mrf.mxu0
        %v1659 = vadd.f32 %v1309, %v1658
        %v1660 = vpop.f32.mrf.mxu0
        %v1661 = vadd.f32 %v1311, %v1660
        %1662 = vmatprep.mubr.f32.mxu0 0.0
        %v1663 = vand.u32 %v296, 4294901760
        %v1664 = vsub.f32 %v296, %v1663
        %v1665 = vand.u32 %v1664, 4294901760
        %1666 = vmatmul.mubr.f32.gmra.mxu0 %v1665
        %v1667 = vpop.f32.mrf.mxu0
        %v1668 = vadd.f32 %v1317, %v1667
        %v1669 = vpop.f32.mrf.mxu0
        %v1670 = vadd.f32 %v1319, %v1669
        %1671 = vmatprep.mubr.f32.mxu0 0.0
        %v1672 = vand.u32 %v299, 4294901760
        %v1673 = vsub.f32 %v299, %v1672
        %v1674 = vand.u32 %v1673, 4294901760
        %1675 = vmatmul.mubr.f32.gmra.mxu0 %v1674
        %v1676 = vpop.f32.mrf.mxu0
        %v1677 = vadd.f32 %v1325, %v1676
        %v1678 = vpop.f32.mrf.mxu0
        %v1679 = vadd.f32 %v1327, %v1678
        %1680 = vmatprep.mubr.f32.mxu0 0.0
        %v1681 = vand.u32 %v302, 4294901760
        %v1682 = vsub.f32 %v302, %v1681
        %v1683 = vand.u32 %v1682, 4294901760
        %1684 = vmatmul.mubr.f32.gmra.mxu0 %v1683
        %v1685 = vpop.f32.mrf.mxu0
        %v1686 = vadd.f32 %v1333, %v1685
        %v1687 = vpop.f32.mrf.mxu0
        %v1688 = vadd.f32 %v1335, %v1687
        %1689 = vmatprep.mubr.f32.mxu0 0.0
        %v1690 = vand.u32 %v305, 4294901760
        %v1691 = vsub.f32 %v305, %v1690
        %v1692 = vand.u32 %v1691, 4294901760
        %1693 = vmatmul.mubr.f32.gmra.mxu0 %v1692
        %v1694 = vpop.f32.mrf.mxu0
        %v1695 = vadd.f32 %v1341, %v1694
        %v1696 = vpop.f32.mrf.mxu0
        %v1697 = vadd.f32 %v1343, %v1696
        %1698 = vmatprep.mubr.f32.mxu0 0.0
        %v1699 = vand.u32 %v308, 4294901760
        %v1700 = vsub.f32 %v308, %v1699
        %v1701 = vand.u32 %v1700, 4294901760
        %1702 = vmatmul.mubr.f32.gmra.mxu0 %v1701
        %v1703 = vpop.f32.mrf.mxu0
        %v1704 = vadd.f32 %v1349, %v1703
        %v1705 = vpop.f32.mrf.mxu0
        %v1706 = vadd.f32 %v1351, %v1705
        %1707 = vdwg.mxu0
        %1708 = vmatprep.subr.mxu0 0.0
        %1709 = vmatpush1.msra.mxu0 0.0
        %1710 = vmatprep.subr.mxu0 0.0
        %1711 = vmatpush1.msra.mxu0 0.0
        %1712 = vmatprep.subr.mxu0 0.0
        %1713 = vmatpush1.msra.mxu0 0.0
        %1714 = vmatprep.subr.mxu0 0.0
        %1715 = vmatpush1.msra.mxu0 0.0
        %1716 = vmatprep.subr.mxu0 0.0
        %1717 = vmatpush1.msra.mxu0 0.0
        %1718 = vmatprep.subr.mxu0 0.0
        %1719 = vmatpush1.msra.mxu0 0.0
        %1720 = vmatprep.subr.mxu0 0.0
        %1721 = vmatpush1.msra.mxu0 0.0
        %1722 = vmatprep.subr.mxu0 0.0
        %1723 = vmatpush1.msra.mxu0 0.0
        %1724 = vmatprep.subr.mxu0 0.0
        %1725 = vmatpush1.msra.mxu0 0.0
        %1726 = vmatprep.subr.mxu0 0.0
        %1727 = vmatpush1.msra.mxu0 0.0
        %1728 = vmatprep.subr.mxu0 0.0
        %1729 = vmatpush1.msra.mxu0 0.0
        %1730 = vmatprep.subr.mxu0 0.0
        %1731 = vmatpush1.msra.mxu0 0.0
        %1732 = vmatprep.subr.mxu0 0.0
        %1733 = vmatpush1.msra.mxu0 0.0
        %1734 = vmatprep.subr.mxu0 0.0
        %1735 = vmatpush1.msra.mxu0 0.0
        %1736 = vmatprep.subr.mxu0 0.0
        %1737 = vmatpush1.msra.mxu0 0.0
        %v1738 = vand.u32 %v206, 4294901760
        %v1739 = vsub.f32 %v206, %v1738
        %v1740 = vand.u32 %v1739, 4294901760
        %1741 = vmatprep.subr.mxu0 %v1740
        %v1742 = vand.u32 %v205, 4294901760
        %v1743 = vsub.f32 %v205, %v1742
        %v1744 = vand.u32 %v1743, 4294901760
        %1745 = vmatpush1.msra.mxu0 %v1744
        %1746 = vmatprep.subr.mxu0 0.0
        %1747 = vmatpush2.msra.mxu0 0.0
        %1748 = vmatprep.subr.mxu0 0.0
        %1749 = vmatpush2.msra.mxu0 0.0
        %1750 = vmatprep.subr.mxu0 0.0
        %1751 = vmatpush2.msra.mxu0 0.0
        %1752 = vmatprep.subr.mxu0 0.0
        %1753 = vmatpush2.msra.mxu0 0.0
        %1754 = vmatprep.subr.mxu0 0.0
        %1755 = vmatpush2.msra.mxu0 0.0
        %1756 = vmatprep.subr.mxu0 0.0
        %1757 = vmatpush2.msra.mxu0 0.0
        %1758 = vmatprep.subr.mxu0 0.0
        %1759 = vmatpush2.msra.mxu0 0.0
        %1760 = vmatprep.subr.mxu0 0.0
        %1761 = vmatpush2.msra.mxu0 0.0
        %1762 = vmatprep.subr.mxu0 0.0
        %1763 = vmatpush2.msra.mxu0 0.0
        %1764 = vmatprep.subr.mxu0 0.0
        %1765 = vmatpush2.msra.mxu0 0.0
        %1766 = vmatprep.subr.mxu0 0.0
        %1767 = vmatpush2.msra.mxu0 0.0
        %1768 = vmatprep.subr.mxu0 0.0
        %1769 = vmatpush2.msra.mxu0 0.0
        %1770 = vmatprep.subr.mxu0 0.0
        %1771 = vmatpush2.msra.mxu0 0.0
        %1772 = vmatprep.subr.mxu0 0.0
        %1773 = vmatpush2.msra.mxu0 0.0
        %1774 = vmatprep.subr.mxu0 0.0
        %1775 = vmatpush2.msra.mxu0 0.0
        %1776 = vmatprep.subr.mxu0 0.0
        %1777 = vmatpush2.msra.mxu0 0.0
        %1778 = vmatprep.mubr.f32.mxu0 0.0
        %v1779 = vand.u32 %v215, 4294901760
        %1780 = vmatmul.mubr.f32.gmra.mxu0 %v1779
        %v1781 = vpop.f32.mrf.mxu0
        %v1782 = vadd.f32 %v1425, %v1781
        %v1783 = vpop.f32.mrf.mxu0
        %v1784 = vadd.f32 %v1427, %v1783
        %1785 = vmatprep.mubr.f32.mxu0 0.0
        %v1786 = vand.u32 %v218, 4294901760
        %1787 = vmatmul.mubr.f32.gmra.mxu0 %v1786
        %v1788 = vpop.f32.mrf.mxu0
        %v1789 = vadd.f32 %v1434, %v1788
        %v1790 = vpop.f32.mrf.mxu0
        %v1791 = vadd.f32 %v1436, %v1790
        %1792 = vmatprep.mubr.f32.mxu0 0.0
        %v1793 = vand.u32 %v221, 4294901760
        %1794 = vmatmul.mubr.f32.gmra.mxu0 %v1793
        %v1795 = vpop.f32.mrf.mxu0
        %v1796 = vadd.f32 %v1443, %v1795
        %v1797 = vpop.f32.mrf.mxu0
        %v1798 = vadd.f32 %v1445, %v1797
        %1799 = vmatprep.mubr.f32.mxu0 0.0
        %v1800 = vand.u32 %v224, 4294901760
        %1801 = vmatmul.mubr.f32.gmra.mxu0 %v1800
        %v1802 = vpop.f32.mrf.mxu0
        %v1803 = vadd.f32 %v1452, %v1802
        %v1804 = vpop.f32.mrf.mxu0
        %v1805 = vadd.f32 %v1454, %v1804
        %1806 = vmatprep.mubr.f32.mxu0 0.0
        %v1807 = vand.u32 %v227, 4294901760
        %1808 = vmatmul.mubr.f32.gmra.mxu0 %v1807
        %v1809 = vpop.f32.mrf.mxu0
        %v1810 = vadd.f32 %v1461, %v1809
        %v1811 = vpop.f32.mrf.mxu0
        %v1812 = vadd.f32 %v1463, %v1811
        %1813 = vmatprep.mubr.f32.mxu0 0.0
        %v1814 = vand.u32 %v230, 4294901760
        %1815 = vmatmul.mubr.f32.gmra.mxu0 %v1814
        %v1816 = vpop.f32.mrf.mxu0
        %v1817 = vadd.f32 %v1470, %v1816
        %v1818 = vpop.f32.mrf.mxu0
        %v1819 = vadd.f32 %v1472, %v1818
        %1820 = vmatprep.mubr.f32.mxu0 0.0
        %v1821 = vand.u32 %v233, 4294901760
        %1822 = vmatmul.mubr.f32.gmra.mxu0 %v1821
        %v1823 = vpop.f32.mrf.mxu0
        %v1824 = vadd.f32 %v1479, %v1823
        %v1825 = vpop.f32.mrf.mxu0
        %v1826 = vadd.f32 %v1481, %v1825
        %1827 = vmatprep.mubr.f32.mxu0 0.0
        %v1828 = vand.u32 %v236, 4294901760
        %1829 = vmatmul.mubr.f32.gmra.mxu0 %v1828
        %v1830 = vpop.f32.mrf.mxu0
        %v1831 = vadd.f32 %v1488, %v1830
        %v1832 = vpop.f32.mrf.mxu0
        %v1833 = vadd.f32 %v1490, %v1832
        %1834 = vmatprep.mubr.f32.mxu0 0.0
        %v1835 = vand.u32 %v239, 4294901760
        %1836 = vmatmul.mubr.f32.gmra.mxu0 %v1835
        %v1837 = vpop.f32.mrf.mxu0
        %v1838 = vadd.f32 %v1497, %v1837
        %v1839 = vpop.f32.mrf.mxu0
        %v1840 = vadd.f32 %v1499, %v1839
        %1841 = vmatprep.mubr.f32.mxu0 0.0
        %v1842 = vand.u32 %v242, 4294901760
        %1843 = vmatmul.mubr.f32.gmra.mxu0 %v1842
        %v1844 = vpop.f32.mrf.mxu0
        %v1845 = vadd.f32 %v1506, %v1844
        %v1846 = vpop.f32.mrf.mxu0
        %v1847 = vadd.f32 %v1508, %v1846
        %1848 = vmatprep.mubr.f32.mxu0 0.0
        %v1849 = vand.u32 %v245, 4294901760
        %1850 = vmatmul.mubr.f32.gmra.mxu0 %v1849
        %v1851 = vpop.f32.mrf.mxu0
        %v1852 = vadd.f32 %v1515, %v1851
        %v1853 = vpop.f32.mrf.mxu0
        %v1854 = vadd.f32 %v1517, %v1853
        %1855 = vmatprep.mubr.f32.mxu0 0.0
        %v1856 = vand.u32 %v248, 4294901760
        %1857 = vmatmul.mubr.f32.gmra.mxu0 %v1856
        %v1858 = vpop.f32.mrf.mxu0
        %v1859 = vadd.f32 %v1524, %v1858
        %v1860 = vpop.f32.mrf.mxu0
        %v1861 = vadd.f32 %v1526, %v1860
        %1862 = vmatprep.mubr.f32.mxu0 0.0
        %v1863 = vand.u32 %v251, 4294901760
        %1864 = vmatmul.mubr.f32.gmra.mxu0 %v1863
        %v1865 = vpop.f32.mrf.mxu0
        %v1866 = vadd.f32 %v1533, %v1865
        %v1867 = vpop.f32.mrf.mxu0
        %v1868 = vadd.f32 %v1535, %v1867
        %1869 = vmatprep.mubr.f32.mxu0 0.0
        %v1870 = vand.u32 %v254, 4294901760
        %1871 = vmatmul.mubr.f32.gmra.mxu0 %v1870
        %v1872 = vpop.f32.mrf.mxu0
        %v1873 = vadd.f32 %v1542, %v1872
        %v1874 = vpop.f32.mrf.mxu0
        %v1875 = vadd.f32 %v1544, %v1874
        %1876 = vmatprep.mubr.f32.mxu0 0.0
        %v1877 = vand.u32 %v257, 4294901760
        %1878 = vmatmul.mubr.f32.gmra.mxu0 %v1877
        %v1879 = vpop.f32.mrf.mxu0
        %v1880 = vadd.f32 %v1551, %v1879
        %v1881 = vpop.f32.mrf.mxu0
        %v1882 = vadd.f32 %v1553, %v1881
        %1883 = vmatprep.mubr.f32.mxu0 0.0
        %v1884 = vand.u32 %v260, 4294901760
        %1885 = vmatmul.mubr.f32.gmra.mxu0 %v1884
        %v1886 = vpop.f32.mrf.mxu0
        %v1887 = vadd.f32 %v1560, %v1886
        %v1888 = vpop.f32.mrf.mxu0
        %v1889 = vadd.f32 %v1562, %v1888
        %1890 = vmatprep.mubr.f32.mxu0 0.0
        %v1891 = vand.u32 %v263, 4294901760
        %1892 = vmatmul.mubr.f32.gmra.mxu0 %v1891
        %v1893 = vpop.f32.mrf.mxu0
        %v1894 = vadd.f32 %v1569, %v1893
        %v1895 = vpop.f32.mrf.mxu0
        %v1896 = vadd.f32 %v1571, %v1895
        %1897 = vmatprep.mubr.f32.mxu0 0.0
        %v1898 = vand.u32 %v266, 4294901760
        %1899 = vmatmul.mubr.f32.gmra.mxu0 %v1898
        %v1900 = vpop.f32.mrf.mxu0
        %v1901 = vadd.f32 %v1578, %v1900
        %v1902 = vpop.f32.mrf.mxu0
        %v1903 = vadd.f32 %v1580, %v1902
        %1904 = vmatprep.mubr.f32.mxu0 0.0
        %v1905 = vand.u32 %v269, 4294901760
        %1906 = vmatmul.mubr.f32.gmra.mxu0 %v1905
        %v1907 = vpop.f32.mrf.mxu0
        %v1908 = vadd.f32 %v1587, %v1907
        %v1909 = vpop.f32.mrf.mxu0
        %v1910 = vadd.f32 %v1589, %v1909
        %1911 = vmatprep.mubr.f32.mxu0 0.0
        %v1912 = vand.u32 %v272, 4294901760
        %1913 = vmatmul.mubr.f32.gmra.mxu0 %v1912
        %v1914 = vpop.f32.mrf.mxu0
        %v1915 = vadd.f32 %v1596, %v1914
        %v1916 = vpop.f32.mrf.mxu0
        %v1917 = vadd.f32 %v1598, %v1916
        %1918 = vmatprep.mubr.f32.mxu0 0.0
        %v1919 = vand.u32 %v275, 4294901760
        %1920 = vmatmul.mubr.f32.gmra.mxu0 %v1919
        %v1921 = vpop.f32.mrf.mxu0
        %v1922 = vadd.f32 %v1605, %v1921
        %v1923 = vpop.f32.mrf.mxu0
        %v1924 = vadd.f32 %v1607, %v1923
        %1925 = vmatprep.mubr.f32.mxu0 0.0
        %v1926 = vand.u32 %v278, 4294901760
        %1927 = vmatmul.mubr.f32.gmra.mxu0 %v1926
        %v1928 = vpop.f32.mrf.mxu0
        %v1929 = vadd.f32 %v1614, %v1928
        %v1930 = vpop.f32.mrf.mxu0
        %v1931 = vadd.f32 %v1616, %v1930
        %1932 = vmatprep.mubr.f32.mxu0 0.0
        %v1933 = vand.u32 %v281, 4294901760
        %1934 = vmatmul.mubr.f32.gmra.mxu0 %v1933
        %v1935 = vpop.f32.mrf.mxu0
        %v1936 = vadd.f32 %v1623, %v1935
        %v1937 = vpop.f32.mrf.mxu0
        %v1938 = vadd.f32 %v1625, %v1937
        %1939 = vmatprep.mubr.f32.mxu0 0.0
        %v1940 = vand.u32 %v284, 4294901760
        %1941 = vmatmul.mubr.f32.gmra.mxu0 %v1940
        %v1942 = vpop.f32.mrf.mxu0
        %v1943 = vadd.f32 %v1632, %v1942
        %v1944 = vpop.f32.mrf.mxu0
        %v1945 = vadd.f32 %v1634, %v1944
        %1946 = vmatprep.mubr.f32.mxu0 0.0
        %v1947 = vand.u32 %v287, 4294901760
        %1948 = vmatmul.mubr.f32.gmra.mxu0 %v1947
        %v1949 = vpop.f32.mrf.mxu0
        %v1950 = vadd.f32 %v1641, %v1949
        %v1951 = vpop.f32.mrf.mxu0
        %v1952 = vadd.f32 %v1643, %v1951
        %1953 = vmatprep.mubr.f32.mxu0 0.0
        %v1954 = vand.u32 %v290, 4294901760
        %1955 = vmatmul.mubr.f32.gmra.mxu0 %v1954
        %v1956 = vpop.f32.mrf.mxu0
        %v1957 = vadd.f32 %v1650, %v1956
        %v1958 = vpop.f32.mrf.mxu0
        %v1959 = vadd.f32 %v1652, %v1958
        %1960 = vmatprep.mubr.f32.mxu0 0.0
        %v1961 = vand.u32 %v293, 4294901760
        %1962 = vmatmul.mubr.f32.gmra.mxu0 %v1961
        %v1963 = vpop.f32.mrf.mxu0
        %v1964 = vadd.f32 %v1659, %v1963
        %v1965 = vpop.f32.mrf.mxu0
        %v1966 = vadd.f32 %v1661, %v1965
        %1967 = vmatprep.mubr.f32.mxu0 0.0
        %v1968 = vand.u32 %v296, 4294901760
        %1969 = vmatmul.mubr.f32.gmra.mxu0 %v1968
        %v1970 = vpop.f32.mrf.mxu0
        %v1971 = vadd.f32 %v1668, %v1970
        %v1972 = vpop.f32.mrf.mxu0
        %v1973 = vadd.f32 %v1670, %v1972
        %1974 = vmatprep.mubr.f32.mxu0 0.0
        %v1975 = vand.u32 %v299, 4294901760
        %1976 = vmatmul.mubr.f32.gmra.mxu0 %v1975
        %v1977 = vpop.f32.mrf.mxu0
        %v1978 = vadd.f32 %v1677, %v1977
        %v1979 = vpop.f32.mrf.mxu0
        %v1980 = vadd.f32 %v1679, %v1979
        %1981 = vmatprep.mubr.f32.mxu0 0.0
        %v1982 = vand.u32 %v302, 4294901760
        %1983 = vmatmul.mubr.f32.gmra.mxu0 %v1982
        %v1984 = vpop.f32.mrf.mxu0
        %v1985 = vadd.f32 %v1686, %v1984
        %v1986 = vpop.f32.mrf.mxu0
        %v1987 = vadd.f32 %v1688, %v1986
        %1988 = vmatprep.mubr.f32.mxu0 0.0
        %v1989 = vand.u32 %v305, 4294901760
        %1990 = vmatmul.mubr.f32.gmra.mxu0 %v1989
        %v1991 = vpop.f32.mrf.mxu0
        %v1992 = vadd.f32 %v1695, %v1991
        %v1993 = vpop.f32.mrf.mxu0
        %v1994 = vadd.f32 %v1697, %v1993
        %1995 = vmatprep.mubr.f32.mxu0 0.0
        %v1996 = vand.u32 %v308, 4294901760
        %1997 = vmatmul.mubr.f32.gmra.mxu0 %v1996
        %v1998 = vpop.f32.mrf.mxu0
        %v1999 = vadd.f32 %v1704, %v1998
        %v2000 = vpop.f32.mrf.mxu0
        %v2001 = vadd.f32 %v1706, %v2000
        %2002 = vdwg.mxu0
        %2003 = vmatprep.subr.mxu0 0.0
        %2004 = vmatpush1.msra.mxu0 0.0
        %2005 = vmatprep.subr.mxu0 0.0
        %2006 = vmatpush1.msra.mxu0 0.0
        %2007 = vmatprep.subr.mxu0 0.0
        %2008 = vmatpush1.msra.mxu0 0.0
        %2009 = vmatprep.subr.mxu0 0.0
        %2010 = vmatpush1.msra.mxu0 0.0
        %2011 = vmatprep.subr.mxu0 0.0
        %2012 = vmatpush1.msra.mxu0 0.0
        %2013 = vmatprep.subr.mxu0 0.0
        %2014 = vmatpush1.msra.mxu0 0.0
        %2015 = vmatprep.subr.mxu0 0.0
        %2016 = vmatpush1.msra.mxu0 0.0
        %2017 = vmatprep.subr.mxu0 0.0
        %2018 = vmatpush1.msra.mxu0 0.0
        %2019 = vmatprep.subr.mxu0 0.0
        %2020 = vmatpush1.msra.mxu0 0.0
        %2021 = vmatprep.subr.mxu0 0.0
        %2022 = vmatpush1.msra.mxu0 0.0
        %2023 = vmatprep.subr.mxu0 0.0
        %2024 = vmatpush1.msra.mxu0 0.0
        %2025 = vmatprep.subr.mxu0 0.0
        %2026 = vmatpush1.msra.mxu0 0.0
        %2027 = vmatprep.subr.mxu0 0.0
        %2028 = vmatpush1.msra.mxu0 0.0
        %2029 = vmatprep.subr.mxu0 0.0
        %2030 = vmatpush1.msra.mxu0 0.0
        %2031 = vmatprep.subr.mxu0 0.0
        %2032 = vmatpush1.msra.mxu0 0.0
        %v2033 = vand.u32 %v206, 4294901760
        %2034 = vmatprep.subr.mxu0 %v2033
        %v2035 = vand.u32 %v205, 4294901760
        %2036 = vmatpush1.msra.mxu0 %v2035
        %2037 = vmatprep.subr.mxu0 0.0
        %2038 = vmatpush2.msra.mxu0 0.0
        %2039 = vmatprep.subr.mxu0 0.0
        %2040 = vmatpush2.msra.mxu0 0.0
        %2041 = vmatprep.subr.mxu0 0.0
        %2042 = vmatpush2.msra.mxu0 0.0
        %2043 = vmatprep.subr.mxu0 0.0
        %2044 = vmatpush2.msra.mxu0 0.0
        %2045 = vmatprep.subr.mxu0 0.0
        %2046 = vmatpush2.msra.mxu0 0.0
        %2047 = vmatprep.subr.mxu0 0.0
        %2048 = vmatpush2.msra.mxu0 0.0
        %2049 = vmatprep.subr.mxu0 0.0
        %2050 = vmatpush2.msra.mxu0 0.0
        %2051 = vmatprep.subr.mxu0 0.0
        %2052 = vmatpush2.msra.mxu0 0.0
        %2053 = vmatprep.subr.mxu0 0.0
        %2054 = vmatpush2.msra.mxu0 0.0
        %2055 = vmatprep.subr.mxu0 0.0
        %2056 = vmatpush2.msra.mxu0 0.0
        %2057 = vmatprep.subr.mxu0 0.0
        %2058 = vmatpush2.msra.mxu0 0.0
        %2059 = vmatprep.subr.mxu0 0.0
        %2060 = vmatpush2.msra.mxu0 0.0
        %2061 = vmatprep.subr.mxu0 0.0
        %2062 = vmatpush2.msra.mxu0 0.0
        %2063 = vmatprep.subr.mxu0 0.0
        %2064 = vmatpush2.msra.mxu0 0.0
        %2065 = vmatprep.subr.mxu0 0.0
        %2066 = vmatpush2.msra.mxu0 0.0
        %2067 = vmatprep.subr.mxu0 0.0
        %2068 = vmatpush2.msra.mxu0 0.0
        %2069 = vmatprep.mubr.f32.mxu0 0.0
        %v2070 = vand.u32 %v215, 4294901760
        %2071 = vmatmul.mubr.f32.gmra.mxu0 %v2070
        %v2072 = vpop.f32.mrf.mxu0
        %v2073 = vadd.f32 %v1782, %v2072
        %v2074 = vpop.f32.mrf.mxu0
        %v2075 = vadd.f32 %v1784, %v2074
        %2076 = vmatprep.mubr.f32.mxu0 0.0
        %v2077 = vand.u32 %v218, 4294901760
        %2078 = vmatmul.mubr.f32.gmra.mxu0 %v2077
        %v2079 = vpop.f32.mrf.mxu0
        %v2080 = vadd.f32 %v1789, %v2079
        %v2081 = vpop.f32.mrf.mxu0
        %v2082 = vadd.f32 %v1791, %v2081
        %2083 = vmatprep.mubr.f32.mxu0 0.0
        %v2084 = vand.u32 %v221, 4294901760
        %2085 = vmatmul.mubr.f32.gmra.mxu0 %v2084
        %v2086 = vpop.f32.mrf.mxu0
        %v2087 = vadd.f32 %v1796, %v2086
        %v2088 = vpop.f32.mrf.mxu0
        %v2089 = vadd.f32 %v1798, %v2088
        %2090 = vmatprep.mubr.f32.mxu0 0.0
        %v2091 = vand.u32 %v224, 4294901760
        %2092 = vmatmul.mubr.f32.gmra.mxu0 %v2091
        %v2093 = vpop.f32.mrf.mxu0
        %v2094 = vadd.f32 %v1803, %v2093
        %v2095 = vpop.f32.mrf.mxu0
        %v2096 = vadd.f32 %v1805, %v2095
        %2097 = vmatprep.mubr.f32.mxu0 0.0
        %v2098 = vand.u32 %v227, 4294901760
        %2099 = vmatmul.mubr.f32.gmra.mxu0 %v2098
        %v2100 = vpop.f32.mrf.mxu0
        %v2101 = vadd.f32 %v1810, %v2100
        %v2102 = vpop.f32.mrf.mxu0
        %v2103 = vadd.f32 %v1812, %v2102
        %2104 = vmatprep.mubr.f32.mxu0 0.0
        %v2105 = vand.u32 %v230, 4294901760
        %2106 = vmatmul.mubr.f32.gmra.mxu0 %v2105
        %v2107 = vpop.f32.mrf.mxu0
        %v2108 = vadd.f32 %v1817, %v2107
        %v2109 = vpop.f32.mrf.mxu0
        %v2110 = vadd.f32 %v1819, %v2109
        %2111 = vmatprep.mubr.f32.mxu0 0.0
        %v2112 = vand.u32 %v233, 4294901760
        %2113 = vmatmul.mubr.f32.gmra.mxu0 %v2112
        %v2114 = vpop.f32.mrf.mxu0
        %v2115 = vadd.f32 %v1824, %v2114
        %v2116 = vpop.f32.mrf.mxu0
        %v2117 = vadd.f32 %v1826, %v2116
        %2118 = vmatprep.mubr.f32.mxu0 0.0
        %v2119 = vand.u32 %v236, 4294901760
        %2120 = vmatmul.mubr.f32.gmra.mxu0 %v2119
        %v2121 = vpop.f32.mrf.mxu0
        %v2122 = vadd.f32 %v1831, %v2121
        %v2123 = vpop.f32.mrf.mxu0
        %v2124 = vadd.f32 %v1833, %v2123
        %2125 = vmatprep.mubr.f32.mxu0 0.0
        %v2126 = vand.u32 %v239, 4294901760
        %2127 = vmatmul.mubr.f32.gmra.mxu0 %v2126
        %v2128 = vpop.f32.mrf.mxu0
        %v2129 = vadd.f32 %v1838, %v2128
        %v2130 = vpop.f32.mrf.mxu0
        %v2131 = vadd.f32 %v1840, %v2130
        %2132 = vmatprep.mubr.f32.mxu0 0.0
        %v2133 = vand.u32 %v242, 4294901760
        %2134 = vmatmul.mubr.f32.gmra.mxu0 %v2133
        %v2135 = vpop.f32.mrf.mxu0
        %v2136 = vadd.f32 %v1845, %v2135
        %v2137 = vpop.f32.mrf.mxu0
        %v2138 = vadd.f32 %v1847, %v2137
        %2139 = vmatprep.mubr.f32.mxu0 0.0
        %v2140 = vand.u32 %v245, 4294901760
        %2141 = vmatmul.mubr.f32.gmra.mxu0 %v2140
        %v2142 = vpop.f32.mrf.mxu0
        %v2143 = vadd.f32 %v1852, %v2142
        %v2144 = vpop.f32.mrf.mxu0
        %v2145 = vadd.f32 %v1854, %v2144
        %2146 = vmatprep.mubr.f32.mxu0 0.0
        %v2147 = vand.u32 %v248, 4294901760
        %2148 = vmatmul.mubr.f32.gmra.mxu0 %v2147
        %v2149 = vpop.f32.mrf.mxu0
        %v2150 = vadd.f32 %v1859, %v2149
        %v2151 = vpop.f32.mrf.mxu0
        %v2152 = vadd.f32 %v1861, %v2151
        %2153 = vmatprep.mubr.f32.mxu0 0.0
        %v2154 = vand.u32 %v251, 4294901760
        %2155 = vmatmul.mubr.f32.gmra.mxu0 %v2154
        %v2156 = vpop.f32.mrf.mxu0
        %v2157 = vadd.f32 %v1866, %v2156
        %v2158 = vpop.f32.mrf.mxu0
        %v2159 = vadd.f32 %v1868, %v2158
        %2160 = vmatprep.mubr.f32.mxu0 0.0
        %v2161 = vand.u32 %v254, 4294901760
        %2162 = vmatmul.mubr.f32.gmra.mxu0 %v2161
        %v2163 = vpop.f32.mrf.mxu0
        %v2164 = vadd.f32 %v1873, %v2163
        %v2165 = vpop.f32.mrf.mxu0
        %v2166 = vadd.f32 %v1875, %v2165
        %2167 = vmatprep.mubr.f32.mxu0 0.0
        %v2168 = vand.u32 %v257, 4294901760
        %2169 = vmatmul.mubr.f32.gmra.mxu0 %v2168
        %v2170 = vpop.f32.mrf.mxu0
        %v2171 = vadd.f32 %v1880, %v2170
        %v2172 = vpop.f32.mrf.mxu0
        %v2173 = vadd.f32 %v1882, %v2172
        %2174 = vmatprep.mubr.f32.mxu0 0.0
        %v2175 = vand.u32 %v260, 4294901760
        %2176 = vmatmul.mubr.f32.gmra.mxu0 %v2175
        %v2177 = vpop.f32.mrf.mxu0
        %v2178 = vadd.f32 %v1887, %v2177
        %v2179 = vpop.f32.mrf.mxu0
        %v2180 = vadd.f32 %v1889, %v2179
        %2181 = vmatprep.mubr.f32.mxu0 0.0
        %v2182 = vand.u32 %v263, 4294901760
        %2183 = vmatmul.mubr.f32.gmra.mxu0 %v2182
        %v2184 = vpop.f32.mrf.mxu0
        %v2185 = vadd.f32 %v1894, %v2184
        %v2186 = vpop.f32.mrf.mxu0
        %v2187 = vadd.f32 %v1896, %v2186
        %2188 = vmatprep.mubr.f32.mxu0 0.0
        %v2189 = vand.u32 %v266, 4294901760
        %2190 = vmatmul.mubr.f32.gmra.mxu0 %v2189
        %v2191 = vpop.f32.mrf.mxu0
        %v2192 = vadd.f32 %v1901, %v2191
        %v2193 = vpop.f32.mrf.mxu0
        %v2194 = vadd.f32 %v1903, %v2193
        %2195 = vmatprep.mubr.f32.mxu0 0.0
        %v2196 = vand.u32 %v269, 4294901760
        %2197 = vmatmul.mubr.f32.gmra.mxu0 %v2196
        %v2198 = vpop.f32.mrf.mxu0
        %v2199 = vadd.f32 %v1908, %v2198
        %v2200 = vpop.f32.mrf.mxu0
        %v2201 = vadd.f32 %v1910, %v2200
        %2202 = vmatprep.mubr.f32.mxu0 0.0
        %v2203 = vand.u32 %v272, 4294901760
        %2204 = vmatmul.mubr.f32.gmra.mxu0 %v2203
        %v2205 = vpop.f32.mrf.mxu0
        %v2206 = vadd.f32 %v1915, %v2205
        %v2207 = vpop.f32.mrf.mxu0
        %v2208 = vadd.f32 %v1917, %v2207
        %2209 = vmatprep.mubr.f32.mxu0 0.0
        %v2210 = vand.u32 %v275, 4294901760
        %2211 = vmatmul.mubr.f32.gmra.mxu0 %v2210
        %v2212 = vpop.f32.mrf.mxu0
        %v2213 = vadd.f32 %v1922, %v2212
        %v2214 = vpop.f32.mrf.mxu0
        %v2215 = vadd.f32 %v1924, %v2214
        %2216 = vmatprep.mubr.f32.mxu0 0.0
        %v2217 = vand.u32 %v278, 4294901760
        %2218 = vmatmul.mubr.f32.gmra.mxu0 %v2217
        %v2219 = vpop.f32.mrf.mxu0
        %v2220 = vadd.f32 %v1929, %v2219
        %v2221 = vpop.f32.mrf.mxu0
        %v2222 = vadd.f32 %v1931, %v2221
        %2223 = vmatprep.mubr.f32.mxu0 0.0
        %v2224 = vand.u32 %v281, 4294901760
        %2225 = vmatmul.mubr.f32.gmra.mxu0 %v2224
        %v2226 = vpop.f32.mrf.mxu0
        %v2227 = vadd.f32 %v1936, %v2226
        %v2228 = vpop.f32.mrf.mxu0
        %v2229 = vadd.f32 %v1938, %v2228
        %2230 = vmatprep.mubr.f32.mxu0 0.0
        %v2231 = vand.u32 %v284, 4294901760
        %2232 = vmatmul.mubr.f32.gmra.mxu0 %v2231
        %v2233 = vpop.f32.mrf.mxu0
        %v2234 = vadd.f32 %v1943, %v2233
        %v2235 = vpop.f32.mrf.mxu0
        %v2236 = vadd.f32 %v1945, %v2235
        %2237 = vmatprep.mubr.f32.mxu0 0.0
        %v2238 = vand.u32 %v287, 4294901760
        %2239 = vmatmul.mubr.f32.gmra.mxu0 %v2238
        %v2240 = vpop.f32.mrf.mxu0
        %v2241 = vadd.f32 %v1950, %v2240
        %v2242 = vpop.f32.mrf.mxu0
        %v2243 = vadd.f32 %v1952, %v2242
        %2244 = vmatprep.mubr.f32.mxu0 0.0
        %v2245 = vand.u32 %v290, 4294901760
        %2246 = vmatmul.mubr.f32.gmra.mxu0 %v2245
        %v2247 = vpop.f32.mrf.mxu0
        %v2248 = vadd.f32 %v1957, %v2247
        %v2249 = vpop.f32.mrf.mxu0
        %v2250 = vadd.f32 %v1959, %v2249
        %2251 = vmatprep.mubr.f32.mxu0 0.0
        %v2252 = vand.u32 %v293, 4294901760
        %2253 = vmatmul.mubr.f32.gmra.mxu0 %v2252
        %v2254 = vpop.f32.mrf.mxu0
        %v2255 = vadd.f32 %v1964, %v2254
        %v2256 = vpop.f32.mrf.mxu0
        %v2257 = vadd.f32 %v1966, %v2256
        %2258 = vmatprep.mubr.f32.mxu0 0.0
        %v2259 = vand.u32 %v296, 4294901760
        %2260 = vmatmul.mubr.f32.gmra.mxu0 %v2259
        %v2261 = vpop.f32.mrf.mxu0
        %v2262 = vadd.f32 %v1971, %v2261
        %v2263 = vpop.f32.mrf.mxu0
        %v2264 = vadd.f32 %v1973, %v2263
        %2265 = vmatprep.mubr.f32.mxu0 0.0
        %v2266 = vand.u32 %v299, 4294901760
        %2267 = vmatmul.mubr.f32.gmra.mxu0 %v2266
        %v2268 = vpop.f32.mrf.mxu0
        %v2269 = vadd.f32 %v1978, %v2268
        %v2270 = vpop.f32.mrf.mxu0
        %v2271 = vadd.f32 %v1980, %v2270
        %2272 = vmatprep.mubr.f32.mxu0 0.0
        %v2273 = vand.u32 %v302, 4294901760
        %2274 = vmatmul.mubr.f32.gmra.mxu0 %v2273
        %v2275 = vpop.f32.mrf.mxu0
        %v2276 = vadd.f32 %v1985, %v2275
        %v2277 = vpop.f32.mrf.mxu0
        %v2278 = vadd.f32 %v1987, %v2277
        %2279 = vmatprep.mubr.f32.mxu0 0.0
        %v2280 = vand.u32 %v305, 4294901760
        %2281 = vmatmul.mubr.f32.gmra.mxu0 %v2280
        %v2282 = vpop.f32.mrf.mxu0
        %v2283 = vadd.f32 %v1992, %v2282
        %v2284 = vpop.f32.mrf.mxu0
        %v2285 = vadd.f32 %v1994, %v2284
        %2286 = vmatprep.mubr.f32.mxu0 0.0
        %v2287 = vand.u32 %v308, 4294901760
        %2288 = vmatmul.mubr.f32.gmra.mxu0 %v2287
        %v2289 = vpop.f32.mrf.mxu0
        %v2290 = vadd.f32 %v1999, %v2289
        %v2291 = vpop.f32.mrf.mxu0
        %v2292 = vadd.f32 %v2001, %v2291
        %2293 = vdwg.mxu0
        %2294 = vmatprep.subr.mxu0 0.0
        %2295 = vmatpush1.msra.mxu0 0.0
        %2296 = vmatprep.subr.mxu0 0.0
        %2297 = vmatpush1.msra.mxu0 0.0
        %2298 = vmatprep.subr.mxu0 0.0
        %2299 = vmatpush1.msra.mxu0 0.0
        %2300 = vmatprep.subr.mxu0 0.0
        %2301 = vmatpush1.msra.mxu0 0.0
        %2302 = vmatprep.subr.mxu0 0.0
        %2303 = vmatpush1.msra.mxu0 0.0
        %2304 = vmatprep.subr.mxu0 0.0
        %2305 = vmatpush1.msra.mxu0 0.0
        %2306 = vmatprep.subr.mxu0 0.0
        %2307 = vmatpush1.msra.mxu0 0.0
        %2308 = vmatprep.subr.mxu0 0.0
        %2309 = vmatpush1.msra.mxu0 0.0
        %2310 = vmatprep.subr.mxu0 0.0
        %2311 = vmatpush1.msra.mxu0 0.0
        %2312 = vmatprep.subr.mxu0 0.0
        %2313 = vmatpush1.msra.mxu0 0.0
        %2314 = vmatprep.subr.mxu0 0.0
        %2315 = vmatpush1.msra.mxu0 0.0
        %2316 = vmatprep.subr.mxu0 0.0
        %2317 = vmatpush1.msra.mxu0 0.0
        %2318 = vmatprep.subr.mxu0 0.0
        %2319 = vmatpush1.msra.mxu0 0.0
        %2320 = vmatprep.subr.mxu0 0.0
        %2321 = vmatpush1.msra.mxu0 0.0
        %2322 = vmatprep.subr.mxu0 0.0
        %2323 = vmatpush1.msra.mxu0 0.0
        %v2324 = vand.u32 %v208, 4294901760
        %2325 = vmatprep.subr.mxu0 %v2324
        %v2326 = vand.u32 %v207, 4294901760
        %2327 = vmatpush1.msra.mxu0 %v2326
        %2328 = vmatprep.subr.mxu0 0.0
        %2329 = vmatpush2.msra.mxu0 0.0
        %2330 = vmatprep.subr.mxu0 0.0
        %2331 = vmatpush2.msra.mxu0 0.0
        %2332 = vmatprep.subr.mxu0 0.0
        %2333 = vmatpush2.msra.mxu0 0.0
        %2334 = vmatprep.subr.mxu0 0.0
        %2335 = vmatpush2.msra.mxu0 0.0
        %2336 = vmatprep.subr.mxu0 0.0
        %2337 = vmatpush2.msra.mxu0 0.0
        %2338 = vmatprep.subr.mxu0 0.0
        %2339 = vmatpush2.msra.mxu0 0.0
        %2340 = vmatprep.subr.mxu0 0.0
        %2341 = vmatpush2.msra.mxu0 0.0
        %2342 = vmatprep.subr.mxu0 0.0
        %2343 = vmatpush2.msra.mxu0 0.0
        %2344 = vmatprep.subr.mxu0 0.0
        %2345 = vmatpush2.msra.mxu0 0.0
        %2346 = vmatprep.subr.mxu0 0.0
        %2347 = vmatpush2.msra.mxu0 0.0
        %2348 = vmatprep.subr.mxu0 0.0
        %2349 = vmatpush2.msra.mxu0 0.0
        %2350 = vmatprep.subr.mxu0 0.0
        %2351 = vmatpush2.msra.mxu0 0.0
        %2352 = vmatprep.subr.mxu0 0.0
        %2353 = vmatpush2.msra.mxu0 0.0
        %2354 = vmatprep.subr.mxu0 0.0
        %2355 = vmatpush2.msra.mxu0 0.0
        %2356 = vmatprep.subr.mxu0 0.0
        %2357 = vmatpush2.msra.mxu0 0.0
        %2358 = vmatprep.subr.mxu0 0.0
        %2359 = vmatpush2.msra.mxu0 0.0
        %2360 = vmatprep.mubr.f32.mxu0 0.0
        %v2361 = vand.u32 %v215, 4294901760
        %v2362 = vsub.f32 %v215, %v2361
        %v2363 = vand.u32 %v2362, 4294901760
        %v2364 = vsub.f32 %v2362, %v2363
        %v2365 = vand.u32 %v2364, 4294901760
        %2366 = vmatmul.mubr.f32.gmra.mxu0 %v2365
        %v2367 = vpop.f32.mrf.mxu0
        %v2368 = vadd.f32 0.0, %v2367
        %v2369 = vpop.f32.mrf.mxu0
        %v2370 = vadd.f32 0.0, %v2369
        %2371 = vmatprep.mubr.f32.mxu0 0.0
        %v2372 = vand.u32 %v218, 4294901760
        %v2373 = vsub.f32 %v218, %v2372
        %v2374 = vand.u32 %v2373, 4294901760
        %v2375 = vsub.f32 %v2373, %v2374
        %v2376 = vand.u32 %v2375, 4294901760
        %2377 = vmatmul.mubr.f32.gmra.mxu0 %v2376
        %v2378 = vpop.f32.mrf.mxu0
        %v2379 = vadd.f32 0.0, %v2378
        %v2380 = vpop.f32.mrf.mxu0
        %v2381 = vadd.f32 0.0, %v2380
        %2382 = vmatprep.mubr.f32.mxu0 0.0
        %v2383 = vand.u32 %v221, 4294901760
        %v2384 = vsub.f32 %v221, %v2383
        %v2385 = vand.u32 %v2384, 4294901760
        %v2386 = vsub.f32 %v2384, %v2385
        %v2387 = vand.u32 %v2386, 4294901760
        %2388 = vmatmul.mubr.f32.gmra.mxu0 %v2387
        %v2389 = vpop.f32.mrf.mxu0
        %v2390 = vadd.f32 0.0, %v2389
        %v2391 = vpop.f32.mrf.mxu0
        %v2392 = vadd.f32 0.0, %v2391
        %2393 = vmatprep.mubr.f32.mxu0 0.0
        %v2394 = vand.u32 %v224, 4294901760
        %v2395 = vsub.f32 %v224, %v2394
        %v2396 = vand.u32 %v2395, 4294901760
        %v2397 = vsub.f32 %v2395, %v2396
        %v2398 = vand.u32 %v2397, 4294901760
        %2399 = vmatmul.mubr.f32.gmra.mxu0 %v2398
        %v2400 = vpop.f32.mrf.mxu0
        %v2401 = vadd.f32 0.0, %v2400
        %v2402 = vpop.f32.mrf.mxu0
        %v2403 = vadd.f32 0.0, %v2402
        %2404 = vmatprep.mubr.f32.mxu0 0.0
        %v2405 = vand.u32 %v227, 4294901760
        %v2406 = vsub.f32 %v227, %v2405
        %v2407 = vand.u32 %v2406, 4294901760
        %v2408 = vsub.f32 %v2406, %v2407
        %v2409 = vand.u32 %v2408, 4294901760
        %2410 = vmatmul.mubr.f32.gmra.mxu0 %v2409
        %v2411 = vpop.f32.mrf.mxu0
        %v2412 = vadd.f32 0.0, %v2411
        %v2413 = vpop.f32.mrf.mxu0
        %v2414 = vadd.f32 0.0, %v2413
        %2415 = vmatprep.mubr.f32.mxu0 0.0
        %v2416 = vand.u32 %v230, 4294901760
        %v2417 = vsub.f32 %v230, %v2416
        %v2418 = vand.u32 %v2417, 4294901760
        %v2419 = vsub.f32 %v2417, %v2418
        %v2420 = vand.u32 %v2419, 4294901760
        %2421 = vmatmul.mubr.f32.gmra.mxu0 %v2420
        %v2422 = vpop.f32.mrf.mxu0
        %v2423 = vadd.f32 0.0, %v2422
        %v2424 = vpop.f32.mrf.mxu0
        %v2425 = vadd.f32 0.0, %v2424
        %2426 = vmatprep.mubr.f32.mxu0 0.0
        %v2427 = vand.u32 %v233, 4294901760
        %v2428 = vsub.f32 %v233, %v2427
        %v2429 = vand.u32 %v2428, 4294901760
        %v2430 = vsub.f32 %v2428, %v2429
        %v2431 = vand.u32 %v2430, 4294901760
        %2432 = vmatmul.mubr.f32.gmra.mxu0 %v2431
        %v2433 = vpop.f32.mrf.mxu0
        %v2434 = vadd.f32 0.0, %v2433
        %v2435 = vpop.f32.mrf.mxu0
        %v2436 = vadd.f32 0.0, %v2435
        %2437 = vmatprep.mubr.f32.mxu0 0.0
        %v2438 = vand.u32 %v236, 4294901760
        %v2439 = vsub.f32 %v236, %v2438
        %v2440 = vand.u32 %v2439, 4294901760
        %v2441 = vsub.f32 %v2439, %v2440
        %v2442 = vand.u32 %v2441, 4294901760
        %2443 = vmatmul.mubr.f32.gmra.mxu0 %v2442
        %v2444 = vpop.f32.mrf.mxu0
        %v2445 = vadd.f32 0.0, %v2444
        %v2446 = vpop.f32.mrf.mxu0
        %v2447 = vadd.f32 0.0, %v2446
        %2448 = vmatprep.mubr.f32.mxu0 0.0
        %v2449 = vand.u32 %v239, 4294901760
        %v2450 = vsub.f32 %v239, %v2449
        %v2451 = vand.u32 %v2450, 4294901760
        %v2452 = vsub.f32 %v2450, %v2451
        %v2453 = vand.u32 %v2452, 4294901760
        %2454 = vmatmul.mubr.f32.gmra.mxu0 %v2453
        %v2455 = vpop.f32.mrf.mxu0
        %v2456 = vadd.f32 0.0, %v2455
        %v2457 = vpop.f32.mrf.mxu0
        %v2458 = vadd.f32 0.0, %v2457
        %2459 = vmatprep.mubr.f32.mxu0 0.0
        %v2460 = vand.u32 %v242, 4294901760
        %v2461 = vsub.f32 %v242, %v2460
        %v2462 = vand.u32 %v2461, 4294901760
        %v2463 = vsub.f32 %v2461, %v2462
        %v2464 = vand.u32 %v2463, 4294901760
        %2465 = vmatmul.mubr.f32.gmra.mxu0 %v2464
        %v2466 = vpop.f32.mrf.mxu0
        %v2467 = vadd.f32 0.0, %v2466
        %v2468 = vpop.f32.mrf.mxu0
        %v2469 = vadd.f32 0.0, %v2468
        %2470 = vmatprep.mubr.f32.mxu0 0.0
        %v2471 = vand.u32 %v245, 4294901760
        %v2472 = vsub.f32 %v245, %v2471
        %v2473 = vand.u32 %v2472, 4294901760
        %v2474 = vsub.f32 %v2472, %v2473
        %v2475 = vand.u32 %v2474, 4294901760
        %2476 = vmatmul.mubr.f32.gmra.mxu0 %v2475
        %v2477 = vpop.f32.mrf.mxu0
        %v2478 = vadd.f32 0.0, %v2477
        %v2479 = vpop.f32.mrf.mxu0
        %v2480 = vadd.f32 0.0, %v2479
        %2481 = vmatprep.mubr.f32.mxu0 0.0
        %v2482 = vand.u32 %v248, 4294901760
        %v2483 = vsub.f32 %v248, %v2482
        %v2484 = vand.u32 %v2483, 4294901760
        %v2485 = vsub.f32 %v2483, %v2484
        %v2486 = vand.u32 %v2485, 4294901760
        %2487 = vmatmul.mubr.f32.gmra.mxu0 %v2486
        %v2488 = vpop.f32.mrf.mxu0
        %v2489 = vadd.f32 0.0, %v2488
        %v2490 = vpop.f32.mrf.mxu0
        %v2491 = vadd.f32 0.0, %v2490
        %2492 = vmatprep.mubr.f32.mxu0 0.0
        %v2493 = vand.u32 %v251, 4294901760
        %v2494 = vsub.f32 %v251, %v2493
        %v2495 = vand.u32 %v2494, 4294901760
        %v2496 = vsub.f32 %v2494, %v2495
        %v2497 = vand.u32 %v2496, 4294901760
        %2498 = vmatmul.mubr.f32.gmra.mxu0 %v2497
        %v2499 = vpop.f32.mrf.mxu0
        %v2500 = vadd.f32 0.0, %v2499
        %v2501 = vpop.f32.mrf.mxu0
        %v2502 = vadd.f32 0.0, %v2501
        %2503 = vmatprep.mubr.f32.mxu0 0.0
        %v2504 = vand.u32 %v254, 4294901760
        %v2505 = vsub.f32 %v254, %v2504
        %v2506 = vand.u32 %v2505, 4294901760
        %v2507 = vsub.f32 %v2505, %v2506
        %v2508 = vand.u32 %v2507, 4294901760
        %2509 = vmatmul.mubr.f32.gmra.mxu0 %v2508
        %v2510 = vpop.f32.mrf.mxu0
        %v2511 = vadd.f32 0.0, %v2510
        %v2512 = vpop.f32.mrf.mxu0
        %v2513 = vadd.f32 0.0, %v2512
        %2514 = vmatprep.mubr.f32.mxu0 0.0
        %v2515 = vand.u32 %v257, 4294901760
        %v2516 = vsub.f32 %v257, %v2515
        %v2517 = vand.u32 %v2516, 4294901760
        %v2518 = vsub.f32 %v2516, %v2517
        %v2519 = vand.u32 %v2518, 4294901760
        %2520 = vmatmul.mubr.f32.gmra.mxu0 %v2519
        %v2521 = vpop.f32.mrf.mxu0
        %v2522 = vadd.f32 0.0, %v2521
        %v2523 = vpop.f32.mrf.mxu0
        %v2524 = vadd.f32 0.0, %v2523
        %2525 = vmatprep.mubr.f32.mxu0 0.0
        %v2526 = vand.u32 %v260, 4294901760
        %v2527 = vsub.f32 %v260, %v2526
        %v2528 = vand.u32 %v2527, 4294901760
        %v2529 = vsub.f32 %v2527, %v2528
        %v2530 = vand.u32 %v2529, 4294901760
        %2531 = vmatmul.mubr.f32.gmra.mxu0 %v2530
        %v2532 = vpop.f32.mrf.mxu0
        %v2533 = vadd.f32 0.0, %v2532
        %v2534 = vpop.f32.mrf.mxu0
        %v2535 = vadd.f32 0.0, %v2534
        %2536 = vmatprep.mubr.f32.mxu0 0.0
        %v2537 = vand.u32 %v263, 4294901760
        %v2538 = vsub.f32 %v263, %v2537
        %v2539 = vand.u32 %v2538, 4294901760
        %v2540 = vsub.f32 %v2538, %v2539
        %v2541 = vand.u32 %v2540, 4294901760
        %2542 = vmatmul.mubr.f32.gmra.mxu0 %v2541
        %v2543 = vpop.f32.mrf.mxu0
        %v2544 = vadd.f32 0.0, %v2543
        %v2545 = vpop.f32.mrf.mxu0
        %v2546 = vadd.f32 0.0, %v2545
        %2547 = vmatprep.mubr.f32.mxu0 0.0
        %v2548 = vand.u32 %v266, 4294901760
        %v2549 = vsub.f32 %v266, %v2548
        %v2550 = vand.u32 %v2549, 4294901760
        %v2551 = vsub.f32 %v2549, %v2550
        %v2552 = vand.u32 %v2551, 4294901760
        %2553 = vmatmul.mubr.f32.gmra.mxu0 %v2552
        %v2554 = vpop.f32.mrf.mxu0
        %v2555 = vadd.f32 0.0, %v2554
        %v2556 = vpop.f32.mrf.mxu0
        %v2557 = vadd.f32 0.0, %v2556
        %2558 = vmatprep.mubr.f32.mxu0 0.0
        %v2559 = vand.u32 %v269, 4294901760
        %v2560 = vsub.f32 %v269, %v2559
        %v2561 = vand.u32 %v2560, 4294901760
        %v2562 = vsub.f32 %v2560, %v2561
        %v2563 = vand.u32 %v2562, 4294901760
        %2564 = vmatmul.mubr.f32.gmra.mxu0 %v2563
        %v2565 = vpop.f32.mrf.mxu0
        %v2566 = vadd.f32 0.0, %v2565
        %v2567 = vpop.f32.mrf.mxu0
        %v2568 = vadd.f32 0.0, %v2567
        %2569 = vmatprep.mubr.f32.mxu0 0.0
        %v2570 = vand.u32 %v272, 4294901760
        %v2571 = vsub.f32 %v272, %v2570
        %v2572 = vand.u32 %v2571, 4294901760
        %v2573 = vsub.f32 %v2571, %v2572
        %v2574 = vand.u32 %v2573, 4294901760
        %2575 = vmatmul.mubr.f32.gmra.mxu0 %v2574
        %v2576 = vpop.f32.mrf.mxu0
        %v2577 = vadd.f32 0.0, %v2576
        %v2578 = vpop.f32.mrf.mxu0
        %v2579 = vadd.f32 0.0, %v2578
        %2580 = vmatprep.mubr.f32.mxu0 0.0
        %v2581 = vand.u32 %v275, 4294901760
        %v2582 = vsub.f32 %v275, %v2581
        %v2583 = vand.u32 %v2582, 4294901760
        %v2584 = vsub.f32 %v2582, %v2583
        %v2585 = vand.u32 %v2584, 4294901760
        %2586 = vmatmul.mubr.f32.gmra.mxu0 %v2585
        %v2587 = vpop.f32.mrf.mxu0
        %v2588 = vadd.f32 0.0, %v2587
        %v2589 = vpop.f32.mrf.mxu0
        %v2590 = vadd.f32 0.0, %v2589
        %2591 = vmatprep.mubr.f32.mxu0 0.0
        %v2592 = vand.u32 %v278, 4294901760
        %v2593 = vsub.f32 %v278, %v2592
        %v2594 = vand.u32 %v2593, 4294901760
        %v2595 = vsub.f32 %v2593, %v2594
        %v2596 = vand.u32 %v2595, 4294901760
        %2597 = vmatmul.mubr.f32.gmra.mxu0 %v2596
        %v2598 = vpop.f32.mrf.mxu0
        %v2599 = vadd.f32 0.0, %v2598
        %v2600 = vpop.f32.mrf.mxu0
        %v2601 = vadd.f32 0.0, %v2600
        %2602 = vmatprep.mubr.f32.mxu0 0.0
        %v2603 = vand.u32 %v281, 4294901760
        %v2604 = vsub.f32 %v281, %v2603
        %v2605 = vand.u32 %v2604, 4294901760
        %v2606 = vsub.f32 %v2604, %v2605
        %v2607 = vand.u32 %v2606, 4294901760
        %2608 = vmatmul.mubr.f32.gmra.mxu0 %v2607
        %v2609 = vpop.f32.mrf.mxu0
        %v2610 = vadd.f32 0.0, %v2609
        %v2611 = vpop.f32.mrf.mxu0
        %v2612 = vadd.f32 0.0, %v2611
        %2613 = vmatprep.mubr.f32.mxu0 0.0
        %v2614 = vand.u32 %v284, 4294901760
        %v2615 = vsub.f32 %v284, %v2614
        %v2616 = vand.u32 %v2615, 4294901760
        %v2617 = vsub.f32 %v2615, %v2616
        %v2618 = vand.u32 %v2617, 4294901760
        %2619 = vmatmul.mubr.f32.gmra.mxu0 %v2618
        %v2620 = vpop.f32.mrf.mxu0
        %v2621 = vadd.f32 0.0, %v2620
        %v2622 = vpop.f32.mrf.mxu0
        %v2623 = vadd.f32 0.0, %v2622
        %2624 = vmatprep.mubr.f32.mxu0 0.0
        %v2625 = vand.u32 %v287, 4294901760
        %v2626 = vsub.f32 %v287, %v2625
        %v2627 = vand.u32 %v2626, 4294901760
        %v2628 = vsub.f32 %v2626, %v2627
        %v2629 = vand.u32 %v2628, 4294901760
        %2630 = vmatmul.mubr.f32.gmra.mxu0 %v2629
        %v2631 = vpop.f32.mrf.mxu0
        %v2632 = vadd.f32 0.0, %v2631
        %v2633 = vpop.f32.mrf.mxu0
        %v2634 = vadd.f32 0.0, %v2633
        %2635 = vmatprep.mubr.f32.mxu0 0.0
        %v2636 = vand.u32 %v290, 4294901760
        %v2637 = vsub.f32 %v290, %v2636
        %v2638 = vand.u32 %v2637, 4294901760
        %v2639 = vsub.f32 %v2637, %v2638
        %v2640 = vand.u32 %v2639, 4294901760
        %2641 = vmatmul.mubr.f32.gmra.mxu0 %v2640
        %v2642 = vpop.f32.mrf.mxu0
        %v2643 = vadd.f32 0.0, %v2642
        %v2644 = vpop.f32.mrf.mxu0
        %v2645 = vadd.f32 0.0, %v2644
        %2646 = vmatprep.mubr.f32.mxu0 0.0
        %v2647 = vand.u32 %v293, 4294901760
        %v2648 = vsub.f32 %v293, %v2647
        %v2649 = vand.u32 %v2648, 4294901760
        %v2650 = vsub.f32 %v2648, %v2649
        %v2651 = vand.u32 %v2650, 4294901760
        %2652 = vmatmul.mubr.f32.gmra.mxu0 %v2651
        %v2653 = vpop.f32.mrf.mxu0
        %v2654 = vadd.f32 0.0, %v2653
        %v2655 = vpop.f32.mrf.mxu0
        %v2656 = vadd.f32 0.0, %v2655
        %2657 = vmatprep.mubr.f32.mxu0 0.0
        %v2658 = vand.u32 %v296, 4294901760
        %v2659 = vsub.f32 %v296, %v2658
        %v2660 = vand.u32 %v2659, 4294901760
        %v2661 = vsub.f32 %v2659, %v2660
        %v2662 = vand.u32 %v2661, 4294901760
        %2663 = vmatmul.mubr.f32.gmra.mxu0 %v2662
        %v2664 = vpop.f32.mrf.mxu0
        %v2665 = vadd.f32 0.0, %v2664
        %v2666 = vpop.f32.mrf.mxu0
        %v2667 = vadd.f32 0.0, %v2666
        %2668 = vmatprep.mubr.f32.mxu0 0.0
        %v2669 = vand.u32 %v299, 4294901760
        %v2670 = vsub.f32 %v299, %v2669
        %v2671 = vand.u32 %v2670, 4294901760
        %v2672 = vsub.f32 %v2670, %v2671
        %v2673 = vand.u32 %v2672, 4294901760
        %2674 = vmatmul.mubr.f32.gmra.mxu0 %v2673
        %v2675 = vpop.f32.mrf.mxu0
        %v2676 = vadd.f32 0.0, %v2675
        %v2677 = vpop.f32.mrf.mxu0
        %v2678 = vadd.f32 0.0, %v2677
        %2679 = vmatprep.mubr.f32.mxu0 0.0
        %v2680 = vand.u32 %v302, 4294901760
        %v2681 = vsub.f32 %v302, %v2680
        %v2682 = vand.u32 %v2681, 4294901760
        %v2683 = vsub.f32 %v2681, %v2682
        %v2684 = vand.u32 %v2683, 4294901760
        %2685 = vmatmul.mubr.f32.gmra.mxu0 %v2684
        %v2686 = vpop.f32.mrf.mxu0
        %v2687 = vadd.f32 0.0, %v2686
        %v2688 = vpop.f32.mrf.mxu0
        %v2689 = vadd.f32 0.0, %v2688
        %2690 = vmatprep.mubr.f32.mxu0 0.0
        %v2691 = vand.u32 %v305, 4294901760
        %v2692 = vsub.f32 %v305, %v2691
        %v2693 = vand.u32 %v2692, 4294901760
        %v2694 = vsub.f32 %v2692, %v2693
        %v2695 = vand.u32 %v2694, 4294901760
        %2696 = vmatmul.mubr.f32.gmra.mxu0 %v2695
        %v2697 = vpop.f32.mrf.mxu0
        %v2698 = vadd.f32 0.0, %v2697
        %v2699 = vpop.f32.mrf.mxu0
        %v2700 = vadd.f32 0.0, %v2699
        %2701 = vmatprep.mubr.f32.mxu0 0.0
        %v2702 = vand.u32 %v308, 4294901760
        %v2703 = vsub.f32 %v308, %v2702
        %v2704 = vand.u32 %v2703, 4294901760
        %v2705 = vsub.f32 %v2703, %v2704
        %v2706 = vand.u32 %v2705, 4294901760
        %2707 = vmatmul.mubr.f32.gmra.mxu0 %v2706
        %v2708 = vpop.f32.mrf.mxu0
        %v2709 = vadd.f32 0.0, %v2708
        %v2710 = vpop.f32.mrf.mxu0
        %v2711 = vadd.f32 0.0, %v2710
        %2712 = vdwg.mxu0
        %2713 = vmatprep.subr.mxu0 0.0
        %2714 = vmatpush1.msra.mxu0 0.0
        %2715 = vmatprep.subr.mxu0 0.0
        %2716 = vmatpush1.msra.mxu0 0.0
        %2717 = vmatprep.subr.mxu0 0.0
        %2718 = vmatpush1.msra.mxu0 0.0
        %2719 = vmatprep.subr.mxu0 0.0
        %2720 = vmatpush1.msra.mxu0 0.0
        %2721 = vmatprep.subr.mxu0 0.0
        %2722 = vmatpush1.msra.mxu0 0.0
        %2723 = vmatprep.subr.mxu0 0.0
        %2724 = vmatpush1.msra.mxu0 0.0
        %2725 = vmatprep.subr.mxu0 0.0
        %2726 = vmatpush1.msra.mxu0 0.0
        %2727 = vmatprep.subr.mxu0 0.0
        %2728 = vmatpush1.msra.mxu0 0.0
        %2729 = vmatprep.subr.mxu0 0.0
        %2730 = vmatpush1.msra.mxu0 0.0
        %2731 = vmatprep.subr.mxu0 0.0
        %2732 = vmatpush1.msra.mxu0 0.0
        %2733 = vmatprep.subr.mxu0 0.0
        %2734 = vmatpush1.msra.mxu0 0.0
        %2735 = vmatprep.subr.mxu0 0.0
        %2736 = vmatpush1.msra.mxu0 0.0
        %2737 = vmatprep.subr.mxu0 0.0
        %2738 = vmatpush1.msra.mxu0 0.0
        %2739 = vmatprep.subr.mxu0 0.0
        %2740 = vmatpush1.msra.mxu0 0.0
        %2741 = vmatprep.subr.mxu0 0.0
        %2742 = vmatpush1.msra.mxu0 0.0
        %v2743 = vand.u32 %v208, 4294901760
        %v2744 = vsub.f32 %v208, %v2743
        %v2745 = vand.u32 %v2744, 4294901760
        %v2746 = vsub.f32 %v2744, %v2745
        %v2747 = vand.u32 %v2746, 4294901760
        %2748 = vmatprep.subr.mxu0 %v2747
        %v2749 = vand.u32 %v207, 4294901760
        %v2750 = vsub.f32 %v207, %v2749
        %v2751 = vand.u32 %v2750, 4294901760
        %v2752 = vsub.f32 %v2750, %v2751
        %v2753 = vand.u32 %v2752, 4294901760
        %2754 = vmatpush1.msra.mxu0 %v2753
        %2755 = vmatprep.subr.mxu0 0.0
        %2756 = vmatpush2.msra.mxu0 0.0
        %2757 = vmatprep.subr.mxu0 0.0
        %2758 = vmatpush2.msra.mxu0 0.0
        %2759 = vmatprep.subr.mxu0 0.0
        %2760 = vmatpush2.msra.mxu0 0.0
        %2761 = vmatprep.subr.mxu0 0.0
        %2762 = vmatpush2.msra.mxu0 0.0
        %2763 = vmatprep.subr.mxu0 0.0
        %2764 = vmatpush2.msra.mxu0 0.0
        %2765 = vmatprep.subr.mxu0 0.0
        %2766 = vmatpush2.msra.mxu0 0.0
        %2767 = vmatprep.subr.mxu0 0.0
        %2768 = vmatpush2.msra.mxu0 0.0
        %2769 = vmatprep.subr.mxu0 0.0
        %2770 = vmatpush2.msra.mxu0 0.0
        %2771 = vmatprep.subr.mxu0 0.0
        %2772 = vmatpush2.msra.mxu0 0.0
        %2773 = vmatprep.subr.mxu0 0.0
        %2774 = vmatpush2.msra.mxu0 0.0
        %2775 = vmatprep.subr.mxu0 0.0
        %2776 = vmatpush2.msra.mxu0 0.0
        %2777 = vmatprep.subr.mxu0 0.0
        %2778 = vmatpush2.msra.mxu0 0.0
        %2779 = vmatprep.subr.mxu0 0.0
        %2780 = vmatpush2.msra.mxu0 0.0
        %2781 = vmatprep.subr.mxu0 0.0
        %2782 = vmatpush2.msra.mxu0 0.0
        %2783 = vmatprep.subr.mxu0 0.0
        %2784 = vmatpush2.msra.mxu0 0.0
        %2785 = vmatprep.subr.mxu0 0.0
        %2786 = vmatpush2.msra.mxu0 0.0
        %2787 = vmatprep.mubr.f32.mxu0 0.0
        %v2788 = vand.u32 %v215, 4294901760
        %2789 = vmatmul.mubr.f32.gmra.mxu0 %v2788
        %v2790 = vpop.f32.mrf.mxu0
        %v2791 = vadd.f32 %v2368, %v2790
        %v2792 = vpop.f32.mrf.mxu0
        %v2793 = vadd.f32 %v2370, %v2792
        %2794 = vmatprep.mubr.f32.mxu0 0.0
        %v2795 = vand.u32 %v218, 4294901760
        %2796 = vmatmul.mubr.f32.gmra.mxu0 %v2795
        %v2797 = vpop.f32.mrf.mxu0
        %v2798 = vadd.f32 %v2379, %v2797
        %v2799 = vpop.f32.mrf.mxu0
        %v2800 = vadd.f32 %v2381, %v2799
        %2801 = vmatprep.mubr.f32.mxu0 0.0
        %v2802 = vand.u32 %v221, 4294901760
        %2803 = vmatmul.mubr.f32.gmra.mxu0 %v2802
        %v2804 = vpop.f32.mrf.mxu0
        %v2805 = vadd.f32 %v2390, %v2804
        %v2806 = vpop.f32.mrf.mxu0
        %v2807 = vadd.f32 %v2392, %v2806
        %2808 = vmatprep.mubr.f32.mxu0 0.0
        %v2809 = vand.u32 %v224, 4294901760
        %2810 = vmatmul.mubr.f32.gmra.mxu0 %v2809
        %v2811 = vpop.f32.mrf.mxu0
        %v2812 = vadd.f32 %v2401, %v2811
        %v2813 = vpop.f32.mrf.mxu0
        %v2814 = vadd.f32 %v2403, %v2813
        %2815 = vmatprep.mubr.f32.mxu0 0.0
        %v2816 = vand.u32 %v227, 4294901760
        %2817 = vmatmul.mubr.f32.gmra.mxu0 %v2816
        %v2818 = vpop.f32.mrf.mxu0
        %v2819 = vadd.f32 %v2412, %v2818
        %v2820 = vpop.f32.mrf.mxu0
        %v2821 = vadd.f32 %v2414, %v2820
        %2822 = vmatprep.mubr.f32.mxu0 0.0
        %v2823 = vand.u32 %v230, 4294901760
        %2824 = vmatmul.mubr.f32.gmra.mxu0 %v2823
        %v2825 = vpop.f32.mrf.mxu0
        %v2826 = vadd.f32 %v2423, %v2825
        %v2827 = vpop.f32.mrf.mxu0
        %v2828 = vadd.f32 %v2425, %v2827
        %2829 = vmatprep.mubr.f32.mxu0 0.0
        %v2830 = vand.u32 %v233, 4294901760
        %2831 = vmatmul.mubr.f32.gmra.mxu0 %v2830
        %v2832 = vpop.f32.mrf.mxu0
        %v2833 = vadd.f32 %v2434, %v2832
        %v2834 = vpop.f32.mrf.mxu0
        %v2835 = vadd.f32 %v2436, %v2834
        %2836 = vmatprep.mubr.f32.mxu0 0.0
        %v2837 = vand.u32 %v236, 4294901760
        %2838 = vmatmul.mubr.f32.gmra.mxu0 %v2837
        %v2839 = vpop.f32.mrf.mxu0
        %v2840 = vadd.f32 %v2445, %v2839
        %v2841 = vpop.f32.mrf.mxu0
        %v2842 = vadd.f32 %v2447, %v2841
        %2843 = vmatprep.mubr.f32.mxu0 0.0
        %v2844 = vand.u32 %v239, 4294901760
        %2845 = vmatmul.mubr.f32.gmra.mxu0 %v2844
        %v2846 = vpop.f32.mrf.mxu0
        %v2847 = vadd.f32 %v2456, %v2846
        %v2848 = vpop.f32.mrf.mxu0
        %v2849 = vadd.f32 %v2458, %v2848
        %2850 = vmatprep.mubr.f32.mxu0 0.0
        %v2851 = vand.u32 %v242, 4294901760
        %2852 = vmatmul.mubr.f32.gmra.mxu0 %v2851
        %v2853 = vpop.f32.mrf.mxu0
        %v2854 = vadd.f32 %v2467, %v2853
        %v2855 = vpop.f32.mrf.mxu0
        %v2856 = vadd.f32 %v2469, %v2855
        %2857 = vmatprep.mubr.f32.mxu0 0.0
        %v2858 = vand.u32 %v245, 4294901760
        %2859 = vmatmul.mubr.f32.gmra.mxu0 %v2858
        %v2860 = vpop.f32.mrf.mxu0
        %v2861 = vadd.f32 %v2478, %v2860
        %v2862 = vpop.f32.mrf.mxu0
        %v2863 = vadd.f32 %v2480, %v2862
        %2864 = vmatprep.mubr.f32.mxu0 0.0
        %v2865 = vand.u32 %v248, 4294901760
        %2866 = vmatmul.mubr.f32.gmra.mxu0 %v2865
        %v2867 = vpop.f32.mrf.mxu0
        %v2868 = vadd.f32 %v2489, %v2867
        %v2869 = vpop.f32.mrf.mxu0
        %v2870 = vadd.f32 %v2491, %v2869
        %2871 = vmatprep.mubr.f32.mxu0 0.0
        %v2872 = vand.u32 %v251, 4294901760
        %2873 = vmatmul.mubr.f32.gmra.mxu0 %v2872
        %v2874 = vpop.f32.mrf.mxu0
        %v2875 = vadd.f32 %v2500, %v2874
        %v2876 = vpop.f32.mrf.mxu0
        %v2877 = vadd.f32 %v2502, %v2876
        %2878 = vmatprep.mubr.f32.mxu0 0.0
        %v2879 = vand.u32 %v254, 4294901760
        %2880 = vmatmul.mubr.f32.gmra.mxu0 %v2879
        %v2881 = vpop.f32.mrf.mxu0
        %v2882 = vadd.f32 %v2511, %v2881
        %v2883 = vpop.f32.mrf.mxu0
        %v2884 = vadd.f32 %v2513, %v2883
        %2885 = vmatprep.mubr.f32.mxu0 0.0
        %v2886 = vand.u32 %v257, 4294901760
        %2887 = vmatmul.mubr.f32.gmra.mxu0 %v2886
        %v2888 = vpop.f32.mrf.mxu0
        %v2889 = vadd.f32 %v2522, %v2888
        %v2890 = vpop.f32.mrf.mxu0
        %v2891 = vadd.f32 %v2524, %v2890
        %2892 = vmatprep.mubr.f32.mxu0 0.0
        %v2893 = vand.u32 %v260, 4294901760
        %2894 = vmatmul.mubr.f32.gmra.mxu0 %v2893
        %v2895 = vpop.f32.mrf.mxu0
        %v2896 = vadd.f32 %v2533, %v2895
        %v2897 = vpop.f32.mrf.mxu0
        %v2898 = vadd.f32 %v2535, %v2897
        %2899 = vmatprep.mubr.f32.mxu0 0.0
        %v2900 = vand.u32 %v263, 4294901760
        %2901 = vmatmul.mubr.f32.gmra.mxu0 %v2900
        %v2902 = vpop.f32.mrf.mxu0
        %v2903 = vadd.f32 %v2544, %v2902
        %v2904 = vpop.f32.mrf.mxu0
        %v2905 = vadd.f32 %v2546, %v2904
        %2906 = vmatprep.mubr.f32.mxu0 0.0
        %v2907 = vand.u32 %v266, 4294901760
        %2908 = vmatmul.mubr.f32.gmra.mxu0 %v2907
        %v2909 = vpop.f32.mrf.mxu0
        %v2910 = vadd.f32 %v2555, %v2909
        %v2911 = vpop.f32.mrf.mxu0
        %v2912 = vadd.f32 %v2557, %v2911
        %2913 = vmatprep.mubr.f32.mxu0 0.0
        %v2914 = vand.u32 %v269, 4294901760
        %2915 = vmatmul.mubr.f32.gmra.mxu0 %v2914
        %v2916 = vpop.f32.mrf.mxu0
        %v2917 = vadd.f32 %v2566, %v2916
        %v2918 = vpop.f32.mrf.mxu0
        %v2919 = vadd.f32 %v2568, %v2918
        %2920 = vmatprep.mubr.f32.mxu0 0.0
        %v2921 = vand.u32 %v272, 4294901760
        %2922 = vmatmul.mubr.f32.gmra.mxu0 %v2921
        %v2923 = vpop.f32.mrf.mxu0
        %v2924 = vadd.f32 %v2577, %v2923
        %v2925 = vpop.f32.mrf.mxu0
        %v2926 = vadd.f32 %v2579, %v2925
        %2927 = vmatprep.mubr.f32.mxu0 0.0
        %v2928 = vand.u32 %v275, 4294901760
        %2929 = vmatmul.mubr.f32.gmra.mxu0 %v2928
        %v2930 = vpop.f32.mrf.mxu0
        %v2931 = vadd.f32 %v2588, %v2930
        %v2932 = vpop.f32.mrf.mxu0
        %v2933 = vadd.f32 %v2590, %v2932
        %2934 = vmatprep.mubr.f32.mxu0 0.0
        %v2935 = vand.u32 %v278, 4294901760
        %2936 = vmatmul.mubr.f32.gmra.mxu0 %v2935
        %v2937 = vpop.f32.mrf.mxu0
        %v2938 = vadd.f32 %v2599, %v2937
        %v2939 = vpop.f32.mrf.mxu0
        %v2940 = vadd.f32 %v2601, %v2939
        %2941 = vmatprep.mubr.f32.mxu0 0.0
        %v2942 = vand.u32 %v281, 4294901760
        %2943 = vmatmul.mubr.f32.gmra.mxu0 %v2942
        %v2944 = vpop.f32.mrf.mxu0
        %v2945 = vadd.f32 %v2610, %v2944
        %v2946 = vpop.f32.mrf.mxu0
        %v2947 = vadd.f32 %v2612, %v2946
        %2948 = vmatprep.mubr.f32.mxu0 0.0
        %v2949 = vand.u32 %v284, 4294901760
        %2950 = vmatmul.mubr.f32.gmra.mxu0 %v2949
        %v2951 = vpop.f32.mrf.mxu0
        %v2952 = vadd.f32 %v2621, %v2951
        %v2953 = vpop.f32.mrf.mxu0
        %v2954 = vadd.f32 %v2623, %v2953
        %2955 = vmatprep.mubr.f32.mxu0 0.0
        %v2956 = vand.u32 %v287, 4294901760
        %2957 = vmatmul.mubr.f32.gmra.mxu0 %v2956
        %v2958 = vpop.f32.mrf.mxu0
        %v2959 = vadd.f32 %v2632, %v2958
        %v2960 = vpop.f32.mrf.mxu0
        %v2961 = vadd.f32 %v2634, %v2960
        %2962 = vmatprep.mubr.f32.mxu0 0.0
        %v2963 = vand.u32 %v290, 4294901760
        %2964 = vmatmul.mubr.f32.gmra.mxu0 %v2963
        %v2965 = vpop.f32.mrf.mxu0
        %v2966 = vadd.f32 %v2643, %v2965
        %v2967 = vpop.f32.mrf.mxu0
        %v2968 = vadd.f32 %v2645, %v2967
        %2969 = vmatprep.mubr.f32.mxu0 0.0
        %v2970 = vand.u32 %v293, 4294901760
        %2971 = vmatmul.mubr.f32.gmra.mxu0 %v2970
        %v2972 = vpop.f32.mrf.mxu0
        %v2973 = vadd.f32 %v2654, %v2972
        %v2974 = vpop.f32.mrf.mxu0
        %v2975 = vadd.f32 %v2656, %v2974
        %2976 = vmatprep.mubr.f32.mxu0 0.0
        %v2977 = vand.u32 %v296, 4294901760
        %2978 = vmatmul.mubr.f32.gmra.mxu0 %v2977
        %v2979 = vpop.f32.mrf.mxu0
        %v2980 = vadd.f32 %v2665, %v2979
        %v2981 = vpop.f32.mrf.mxu0
        %v2982 = vadd.f32 %v2667, %v2981
        %2983 = vmatprep.mubr.f32.mxu0 0.0
        %v2984 = vand.u32 %v299, 4294901760
        %2985 = vmatmul.mubr.f32.gmra.mxu0 %v2984
        %v2986 = vpop.f32.mrf.mxu0
        %v2987 = vadd.f32 %v2676, %v2986
        %v2988 = vpop.f32.mrf.mxu0
        %v2989 = vadd.f32 %v2678, %v2988
        %2990 = vmatprep.mubr.f32.mxu0 0.0
        %v2991 = vand.u32 %v302, 4294901760
        %2992 = vmatmul.mubr.f32.gmra.mxu0 %v2991
        %v2993 = vpop.f32.mrf.mxu0
        %v2994 = vadd.f32 %v2687, %v2993
        %v2995 = vpop.f32.mrf.mxu0
        %v2996 = vadd.f32 %v2689, %v2995
        %2997 = vmatprep.mubr.f32.mxu0 0.0
        %v2998 = vand.u32 %v305, 4294901760
        %2999 = vmatmul.mubr.f32.gmra.mxu0 %v2998
        %v3000 = vpop.f32.mrf.mxu0
        %v3001 = vadd.f32 %v2698, %v3000
        %v3002 = vpop.f32.mrf.mxu0
        %v3003 = vadd.f32 %v2700, %v3002
        %3004 = vmatprep.mubr.f32.mxu0 0.0
        %v3005 = vand.u32 %v308, 4294901760
        %3006 = vmatmul.mubr.f32.gmra.mxu0 %v3005
        %v3007 = vpop.f32.mrf.mxu0
        %v3008 = vadd.f32 %v2709, %v3007
        %v3009 = vpop.f32.mrf.mxu0
        %v3010 = vadd.f32 %v2711, %v3009
        %3011 = vdwg.mxu0
        %3012 = vmatprep.subr.mxu0 0.0
        %3013 = vmatpush1.msra.mxu0 0.0
        %3014 = vmatprep.subr.mxu0 0.0
        %3015 = vmatpush1.msra.mxu0 0.0
        %3016 = vmatprep.subr.mxu0 0.0
        %3017 = vmatpush1.msra.mxu0 0.0
        %3018 = vmatprep.subr.mxu0 0.0
        %3019 = vmatpush1.msra.mxu0 0.0
        %3020 = vmatprep.subr.mxu0 0.0
        %3021 = vmatpush1.msra.mxu0 0.0
        %3022 = vmatprep.subr.mxu0 0.0
        %3023 = vmatpush1.msra.mxu0 0.0
        %3024 = vmatprep.subr.mxu0 0.0
        %3025 = vmatpush1.msra.mxu0 0.0
        %3026 = vmatprep.subr.mxu0 0.0
        %3027 = vmatpush1.msra.mxu0 0.0
        %3028 = vmatprep.subr.mxu0 0.0
        %3029 = vmatpush1.msra.mxu0 0.0
        %3030 = vmatprep.subr.mxu0 0.0
        %3031 = vmatpush1.msra.mxu0 0.0
        %3032 = vmatprep.subr.mxu0 0.0
        %3033 = vmatpush1.msra.mxu0 0.0
        %3034 = vmatprep.subr.mxu0 0.0
        %3035 = vmatpush1.msra.mxu0 0.0
        %3036 = vmatprep.subr.mxu0 0.0
        %3037 = vmatpush1.msra.mxu0 0.0
        %3038 = vmatprep.subr.mxu0 0.0
        %3039 = vmatpush1.msra.mxu0 0.0
        %3040 = vmatprep.subr.mxu0 0.0
        %3041 = vmatpush1.msra.mxu0 0.0
        %v3042 = vand.u32 %v208, 4294901760
        %v3043 = vsub.f32 %v208, %v3042
        %3044 = vmatprep.subr.mxu0 %v3043
        %v3045 = vand.u32 %v207, 4294901760
        %v3046 = vsub.f32 %v207, %v3045
        %3047 = vmatpush1.msra.mxu0 %v3046
        %3048 = vmatprep.subr.mxu0 0.0
        %3049 = vmatpush2.msra.mxu0 0.0
        %3050 = vmatprep.subr.mxu0 0.0
        %3051 = vmatpush2.msra.mxu0 0.0
        %3052 = vmatprep.subr.mxu0 0.0
        %3053 = vmatpush2.msra.mxu0 0.0
        %3054 = vmatprep.subr.mxu0 0.0
        %3055 = vmatpush2.msra.mxu0 0.0
        %3056 = vmatprep.subr.mxu0 0.0
        %3057 = vmatpush2.msra.mxu0 0.0
        %3058 = vmatprep.subr.mxu0 0.0
        %3059 = vmatpush2.msra.mxu0 0.0
        %3060 = vmatprep.subr.mxu0 0.0
        %3061 = vmatpush2.msra.mxu0 0.0
        %3062 = vmatprep.subr.mxu0 0.0
        %3063 = vmatpush2.msra.mxu0 0.0
        %3064 = vmatprep.subr.mxu0 0.0
        %3065 = vmatpush2.msra.mxu0 0.0
        %3066 = vmatprep.subr.mxu0 0.0
        %3067 = vmatpush2.msra.mxu0 0.0
        %3068 = vmatprep.subr.mxu0 0.0
        %3069 = vmatpush2.msra.mxu0 0.0
        %3070 = vmatprep.subr.mxu0 0.0
        %3071 = vmatpush2.msra.mxu0 0.0
        %3072 = vmatprep.subr.mxu0 0.0
        %3073 = vmatpush2.msra.mxu0 0.0
        %3074 = vmatprep.subr.mxu0 0.0
        %3075 = vmatpush2.msra.mxu0 0.0
        %3076 = vmatprep.subr.mxu0 0.0
        %3077 = vmatpush2.msra.mxu0 0.0
        %3078 = vmatprep.subr.mxu0 0.0
        %3079 = vmatpush2.msra.mxu0 0.0
        %3080 = vmatprep.mubr.f32.mxu0 0.0
        %v3081 = vand.u32 %v215, 4294901760
        %v3082 = vsub.f32 %v215, %v3081
        %3083 = vmatmul.mubr.f32.gmra.mxu0 %v3082
        %v3084 = vpop.f32.mrf.mxu0
        %v3085 = vadd.f32 %v2791, %v3084
        %v3086 = vpop.f32.mrf.mxu0
        %v3087 = vadd.f32 %v2793, %v3086
        %3088 = vmatprep.mubr.f32.mxu0 0.0
        %v3089 = vand.u32 %v218, 4294901760
        %v3090 = vsub.f32 %v218, %v3089
        %3091 = vmatmul.mubr.f32.gmra.mxu0 %v3090
        %v3092 = vpop.f32.mrf.mxu0
        %v3093 = vadd.f32 %v2798, %v3092
        %v3094 = vpop.f32.mrf.mxu0
        %v3095 = vadd.f32 %v2800, %v3094
        %3096 = vmatprep.mubr.f32.mxu0 0.0
        %v3097 = vand.u32 %v221, 4294901760
        %v3098 = vsub.f32 %v221, %v3097
        %3099 = vmatmul.mubr.f32.gmra.mxu0 %v3098
        %v3100 = vpop.f32.mrf.mxu0
        %v3101 = vadd.f32 %v2805, %v3100
        %v3102 = vpop.f32.mrf.mxu0
        %v3103 = vadd.f32 %v2807, %v3102
        %3104 = vmatprep.mubr.f32.mxu0 0.0
        %v3105 = vand.u32 %v224, 4294901760
        %v3106 = vsub.f32 %v224, %v3105
        %3107 = vmatmul.mubr.f32.gmra.mxu0 %v3106
        %v3108 = vpop.f32.mrf.mxu0
        %v3109 = vadd.f32 %v2812, %v3108
        %v3110 = vpop.f32.mrf.mxu0
        %v3111 = vadd.f32 %v2814, %v3110
        %3112 = vmatprep.mubr.f32.mxu0 0.0
        %v3113 = vand.u32 %v227, 4294901760
        %v3114 = vsub.f32 %v227, %v3113
        %3115 = vmatmul.mubr.f32.gmra.mxu0 %v3114
        %v3116 = vpop.f32.mrf.mxu0
        %v3117 = vadd.f32 %v2819, %v3116
        %v3118 = vpop.f32.mrf.mxu0
        %v3119 = vadd.f32 %v2821, %v3118
        %3120 = vmatprep.mubr.f32.mxu0 0.0
        %v3121 = vand.u32 %v230, 4294901760
        %v3122 = vsub.f32 %v230, %v3121
        %3123 = vmatmul.mubr.f32.gmra.mxu0 %v3122
        %v3124 = vpop.f32.mrf.mxu0
        %v3125 = vadd.f32 %v2826, %v3124
        %v3126 = vpop.f32.mrf.mxu0
        %v3127 = vadd.f32 %v2828, %v3126
        %3128 = vmatprep.mubr.f32.mxu0 0.0
        %v3129 = vand.u32 %v233, 4294901760
        %v3130 = vsub.f32 %v233, %v3129
        %3131 = vmatmul.mubr.f32.gmra.mxu0 %v3130
        %v3132 = vpop.f32.mrf.mxu0
        %v3133 = vadd.f32 %v2833, %v3132
        %v3134 = vpop.f32.mrf.mxu0
        %v3135 = vadd.f32 %v2835, %v3134
        %3136 = vmatprep.mubr.f32.mxu0 0.0
        %v3137 = vand.u32 %v236, 4294901760
        %v3138 = vsub.f32 %v236, %v3137
        %3139 = vmatmul.mubr.f32.gmra.mxu0 %v3138
        %v3140 = vpop.f32.mrf.mxu0
        %v3141 = vadd.f32 %v2840, %v3140
        %v3142 = vpop.f32.mrf.mxu0
        %v3143 = vadd.f32 %v2842, %v3142
        %3144 = vmatprep.mubr.f32.mxu0 0.0
        %v3145 = vand.u32 %v239, 4294901760
        %v3146 = vsub.f32 %v239, %v3145
        %3147 = vmatmul.mubr.f32.gmra.mxu0 %v3146
        %v3148 = vpop.f32.mrf.mxu0
        %v3149 = vadd.f32 %v2847, %v3148
        %v3150 = vpop.f32.mrf.mxu0
        %v3151 = vadd.f32 %v2849, %v3150
        %3152 = vmatprep.mubr.f32.mxu0 0.0
        %v3153 = vand.u32 %v242, 4294901760
        %v3154 = vsub.f32 %v242, %v3153
        %3155 = vmatmul.mubr.f32.gmra.mxu0 %v3154
        %v3156 = vpop.f32.mrf.mxu0
        %v3157 = vadd.f32 %v2854, %v3156
        %v3158 = vpop.f32.mrf.mxu0
        %v3159 = vadd.f32 %v2856, %v3158
        %3160 = vmatprep.mubr.f32.mxu0 0.0
        %v3161 = vand.u32 %v245, 4294901760
        %v3162 = vsub.f32 %v245, %v3161
        %3163 = vmatmul.mubr.f32.gmra.mxu0 %v3162
        %v3164 = vpop.f32.mrf.mxu0
        %v3165 = vadd.f32 %v2861, %v3164
        %v3166 = vpop.f32.mrf.mxu0
        %v3167 = vadd.f32 %v2863, %v3166
        %3168 = vmatprep.mubr.f32.mxu0 0.0
        %v3169 = vand.u32 %v248, 4294901760
        %v3170 = vsub.f32 %v248, %v3169
        %3171 = vmatmul.mubr.f32.gmra.mxu0 %v3170
        %v3172 = vpop.f32.mrf.mxu0
        %v3173 = vadd.f32 %v2868, %v3172
        %v3174 = vpop.f32.mrf.mxu0
        %v3175 = vadd.f32 %v2870, %v3174
        %3176 = vmatprep.mubr.f32.mxu0 0.0
        %v3177 = vand.u32 %v251, 4294901760
        %v3178 = vsub.f32 %v251, %v3177
        %3179 = vmatmul.mubr.f32.gmra.mxu0 %v3178
        %v3180 = vpop.f32.mrf.mxu0
        %v3181 = vadd.f32 %v2875, %v3180
        %v3182 = vpop.f32.mrf.mxu0
        %v3183 = vadd.f32 %v2877, %v3182
        %3184 = vmatprep.mubr.f32.mxu0 0.0
        %v3185 = vand.u32 %v254, 4294901760
        %v3186 = vsub.f32 %v254, %v3185
        %3187 = vmatmul.mubr.f32.gmra.mxu0 %v3186
        %v3188 = vpop.f32.mrf.mxu0
        %v3189 = vadd.f32 %v2882, %v3188
        %v3190 = vpop.f32.mrf.mxu0
        %v3191 = vadd.f32 %v2884, %v3190
        %3192 = vmatprep.mubr.f32.mxu0 0.0
        %v3193 = vand.u32 %v257, 4294901760
        %v3194 = vsub.f32 %v257, %v3193
        %3195 = vmatmul.mubr.f32.gmra.mxu0 %v3194
        %v3196 = vpop.f32.mrf.mxu0
        %v3197 = vadd.f32 %v2889, %v3196
        %v3198 = vpop.f32.mrf.mxu0
        %v3199 = vadd.f32 %v2891, %v3198
        %3200 = vmatprep.mubr.f32.mxu0 0.0
        %v3201 = vand.u32 %v260, 4294901760
        %v3202 = vsub.f32 %v260, %v3201
        %3203 = vmatmul.mubr.f32.gmra.mxu0 %v3202
        %v3204 = vpop.f32.mrf.mxu0
        %v3205 = vadd.f32 %v2896, %v3204
        %v3206 = vpop.f32.mrf.mxu0
        %v3207 = vadd.f32 %v2898, %v3206
        %3208 = vmatprep.mubr.f32.mxu0 0.0
        %v3209 = vand.u32 %v263, 4294901760
        %v3210 = vsub.f32 %v263, %v3209
        %3211 = vmatmul.mubr.f32.gmra.mxu0 %v3210
        %v3212 = vpop.f32.mrf.mxu0
        %v3213 = vadd.f32 %v2903, %v3212
        %v3214 = vpop.f32.mrf.mxu0
        %v3215 = vadd.f32 %v2905, %v3214
        %3216 = vmatprep.mubr.f32.mxu0 0.0
        %v3217 = vand.u32 %v266, 4294901760
        %v3218 = vsub.f32 %v266, %v3217
        %3219 = vmatmul.mubr.f32.gmra.mxu0 %v3218
        %v3220 = vpop.f32.mrf.mxu0
        %v3221 = vadd.f32 %v2910, %v3220
        %v3222 = vpop.f32.mrf.mxu0
        %v3223 = vadd.f32 %v2912, %v3222
        %3224 = vmatprep.mubr.f32.mxu0 0.0
        %v3225 = vand.u32 %v269, 4294901760
        %v3226 = vsub.f32 %v269, %v3225
        %3227 = vmatmul.mubr.f32.gmra.mxu0 %v3226
        %v3228 = vpop.f32.mrf.mxu0
        %v3229 = vadd.f32 %v2917, %v3228
        %v3230 = vpop.f32.mrf.mxu0
        %v3231 = vadd.f32 %v2919, %v3230
        %3232 = vmatprep.mubr.f32.mxu0 0.0
        %v3233 = vand.u32 %v272, 4294901760
        %v3234 = vsub.f32 %v272, %v3233
        %3235 = vmatmul.mubr.f32.gmra.mxu0 %v3234
        %v3236 = vpop.f32.mrf.mxu0
        %v3237 = vadd.f32 %v2924, %v3236
        %v3238 = vpop.f32.mrf.mxu0
        %v3239 = vadd.f32 %v2926, %v3238
        %3240 = vmatprep.mubr.f32.mxu0 0.0
        %v3241 = vand.u32 %v275, 4294901760
        %v3242 = vsub.f32 %v275, %v3241
        %3243 = vmatmul.mubr.f32.gmra.mxu0 %v3242
        %v3244 = vpop.f32.mrf.mxu0
        %v3245 = vadd.f32 %v2931, %v3244
        %v3246 = vpop.f32.mrf.mxu0
        %v3247 = vadd.f32 %v2933, %v3246
        %3248 = vmatprep.mubr.f32.mxu0 0.0
        %v3249 = vand.u32 %v278, 4294901760
        %v3250 = vsub.f32 %v278, %v3249
        %3251 = vmatmul.mubr.f32.gmra.mxu0 %v3250
        %v3252 = vpop.f32.mrf.mxu0
        %v3253 = vadd.f32 %v2938, %v3252
        %v3254 = vpop.f32.mrf.mxu0
        %v3255 = vadd.f32 %v2940, %v3254
        %3256 = vmatprep.mubr.f32.mxu0 0.0
        %v3257 = vand.u32 %v281, 4294901760
        %v3258 = vsub.f32 %v281, %v3257
        %3259 = vmatmul.mubr.f32.gmra.mxu0 %v3258
        %v3260 = vpop.f32.mrf.mxu0
        %v3261 = vadd.f32 %v2945, %v3260
        %v3262 = vpop.f32.mrf.mxu0
        %v3263 = vadd.f32 %v2947, %v3262
        %3264 = vmatprep.mubr.f32.mxu0 0.0
        %v3265 = vand.u32 %v284, 4294901760
        %v3266 = vsub.f32 %v284, %v3265
        %3267 = vmatmul.mubr.f32.gmra.mxu0 %v3266
        %v3268 = vpop.f32.mrf.mxu0
        %v3269 = vadd.f32 %v2952, %v3268
        %v3270 = vpop.f32.mrf.mxu0
        %v3271 = vadd.f32 %v2954, %v3270
        %3272 = vmatprep.mubr.f32.mxu0 0.0
        %v3273 = vand.u32 %v287, 4294901760
        %v3274 = vsub.f32 %v287, %v3273
        %3275 = vmatmul.mubr.f32.gmra.mxu0 %v3274
        %v3276 = vpop.f32.mrf.mxu0
        %v3277 = vadd.f32 %v2959, %v3276
        %v3278 = vpop.f32.mrf.mxu0
        %v3279 = vadd.f32 %v2961, %v3278
        %3280 = vmatprep.mubr.f32.mxu0 0.0
        %v3281 = vand.u32 %v290, 4294901760
        %v3282 = vsub.f32 %v290, %v3281
        %3283 = vmatmul.mubr.f32.gmra.mxu0 %v3282
        %v3284 = vpop.f32.mrf.mxu0
        %v3285 = vadd.f32 %v2966, %v3284
        %v3286 = vpop.f32.mrf.mxu0
        %v3287 = vadd.f32 %v2968, %v3286
        %3288 = vmatprep.mubr.f32.mxu0 0.0
        %v3289 = vand.u32 %v293, 4294901760
        %v3290 = vsub.f32 %v293, %v3289
        %3291 = vmatmul.mubr.f32.gmra.mxu0 %v3290
        %v3292 = vpop.f32.mrf.mxu0
        %v3293 = vadd.f32 %v2973, %v3292
        %v3294 = vpop.f32.mrf.mxu0
        %v3295 = vadd.f32 %v2975, %v3294
        %3296 = vmatprep.mubr.f32.mxu0 0.0
        %v3297 = vand.u32 %v296, 4294901760
        %v3298 = vsub.f32 %v296, %v3297
        %3299 = vmatmul.mubr.f32.gmra.mxu0 %v3298
        %v3300 = vpop.f32.mrf.mxu0
        %v3301 = vadd.f32 %v2980, %v3300
        %v3302 = vpop.f32.mrf.mxu0
        %v3303 = vadd.f32 %v2982, %v3302
        %3304 = vmatprep.mubr.f32.mxu0 0.0
        %v3305 = vand.u32 %v299, 4294901760
        %v3306 = vsub.f32 %v299, %v3305
        %3307 = vmatmul.mubr.f32.gmra.mxu0 %v3306
        %v3308 = vpop.f32.mrf.mxu0
        %v3309 = vadd.f32 %v2987, %v3308
        %v3310 = vpop.f32.mrf.mxu0
        %v3311 = vadd.f32 %v2989, %v3310
        %3312 = vmatprep.mubr.f32.mxu0 0.0
        %v3313 = vand.u32 %v302, 4294901760
        %v3314 = vsub.f32 %v302, %v3313
        %3315 = vmatmul.mubr.f32.gmra.mxu0 %v3314
        %v3316 = vpop.f32.mrf.mxu0
        %v3317 = vadd.f32 %v2994, %v3316
        %v3318 = vpop.f32.mrf.mxu0
        %v3319 = vadd.f32 %v2996, %v3318
        %3320 = vmatprep.mubr.f32.mxu0 0.0
        %v3321 = vand.u32 %v305, 4294901760
        %v3322 = vsub.f32 %v305, %v3321
        %3323 = vmatmul.mubr.f32.gmra.mxu0 %v3322
        %v3324 = vpop.f32.mrf.mxu0
        %v3325 = vadd.f32 %v3001, %v3324
        %v3326 = vpop.f32.mrf.mxu0
        %v3327 = vadd.f32 %v3003, %v3326
        %3328 = vmatprep.mubr.f32.mxu0 0.0
        %v3329 = vand.u32 %v308, 4294901760
        %v3330 = vsub.f32 %v308, %v3329
        %3331 = vmatmul.mubr.f32.gmra.mxu0 %v3330
        %v3332 = vpop.f32.mrf.mxu0
        %v3333 = vadd.f32 %v3008, %v3332
        %v3334 = vpop.f32.mrf.mxu0
        %v3335 = vadd.f32 %v3010, %v3334
        %3336 = vdwg.mxu0
        %3337 = vmatprep.subr.mxu0 0.0
        %3338 = vmatpush1.msra.mxu0 0.0
        %3339 = vmatprep.subr.mxu0 0.0
        %3340 = vmatpush1.msra.mxu0 0.0
        %3341 = vmatprep.subr.mxu0 0.0
        %3342 = vmatpush1.msra.mxu0 0.0
        %3343 = vmatprep.subr.mxu0 0.0
        %3344 = vmatpush1.msra.mxu0 0.0
        %3345 = vmatprep.subr.mxu0 0.0
        %3346 = vmatpush1.msra.mxu0 0.0
        %3347 = vmatprep.subr.mxu0 0.0
        %3348 = vmatpush1.msra.mxu0 0.0
        %3349 = vmatprep.subr.mxu0 0.0
        %3350 = vmatpush1.msra.mxu0 0.0
        %3351 = vmatprep.subr.mxu0 0.0
        %3352 = vmatpush1.msra.mxu0 0.0
        %3353 = vmatprep.subr.mxu0 0.0
        %3354 = vmatpush1.msra.mxu0 0.0
        %3355 = vmatprep.subr.mxu0 0.0
        %3356 = vmatpush1.msra.mxu0 0.0
        %3357 = vmatprep.subr.mxu0 0.0
        %3358 = vmatpush1.msra.mxu0 0.0
        %3359 = vmatprep.subr.mxu0 0.0
        %3360 = vmatpush1.msra.mxu0 0.0
        %3361 = vmatprep.subr.mxu0 0.0
        %3362 = vmatpush1.msra.mxu0 0.0
        %3363 = vmatprep.subr.mxu0 0.0
        %3364 = vmatpush1.msra.mxu0 0.0
        %3365 = vmatprep.subr.mxu0 0.0
        %3366 = vmatpush1.msra.mxu0 0.0
        %v3367 = vand.u32 %v208, 4294901760
        %3368 = vmatprep.subr.mxu0 %v3367
        %v3369 = vand.u32 %v207, 4294901760
        %3370 = vmatpush1.msra.mxu0 %v3369
        %3371 = vmatprep.subr.mxu0 0.0
        %3372 = vmatpush2.msra.mxu0 0.0
        %3373 = vmatprep.subr.mxu0 0.0
        %3374 = vmatpush2.msra.mxu0 0.0
        %3375 = vmatprep.subr.mxu0 0.0
        %3376 = vmatpush2.msra.mxu0 0.0
        %3377 = vmatprep.subr.mxu0 0.0
        %3378 = vmatpush2.msra.mxu0 0.0
        %3379 = vmatprep.subr.mxu0 0.0
        %3380 = vmatpush2.msra.mxu0 0.0
        %3381 = vmatprep.subr.mxu0 0.0
        %3382 = vmatpush2.msra.mxu0 0.0
        %3383 = vmatprep.subr.mxu0 0.0
        %3384 = vmatpush2.msra.mxu0 0.0
        %3385 = vmatprep.subr.mxu0 0.0
        %3386 = vmatpush2.msra.mxu0 0.0
        %3387 = vmatprep.subr.mxu0 0.0
        %3388 = vmatpush2.msra.mxu0 0.0
        %3389 = vmatprep.subr.mxu0 0.0
        %3390 = vmatpush2.msra.mxu0 0.0
        %3391 = vmatprep.subr.mxu0 0.0
        %3392 = vmatpush2.msra.mxu0 0.0
        %3393 = vmatprep.subr.mxu0 0.0
        %3394 = vmatpush2.msra.mxu0 0.0
        %3395 = vmatprep.subr.mxu0 0.0
        %3396 = vmatpush2.msra.mxu0 0.0
        %3397 = vmatprep.subr.mxu0 0.0
        %3398 = vmatpush2.msra.mxu0 0.0
        %3399 = vmatprep.subr.mxu0 0.0
        %3400 = vmatpush2.msra.mxu0 0.0
        %3401 = vmatprep.subr.mxu0 0.0
        %3402 = vmatpush2.msra.mxu0 0.0
        %3403 = vmatprep.mubr.f32.mxu0 0.0
        %v3404 = vand.u32 %v215, 4294901760
        %v3405 = vsub.f32 %v215, %v3404
        %v3406 = vand.u32 %v3405, 4294901760
        %3407 = vmatmul.mubr.f32.gmra.mxu0 %v3406
        %v3408 = vpop.f32.mrf.mxu0
        %v3409 = vadd.f32 %v3085, %v3408
        %v3410 = vpop.f32.mrf.mxu0
        %v3411 = vadd.f32 %v3087, %v3410
        %3412 = vmatprep.mubr.f32.mxu0 0.0
        %v3413 = vand.u32 %v218, 4294901760
        %v3414 = vsub.f32 %v218, %v3413
        %v3415 = vand.u32 %v3414, 4294901760
        %3416 = vmatmul.mubr.f32.gmra.mxu0 %v3415
        %v3417 = vpop.f32.mrf.mxu0
        %v3418 = vadd.f32 %v3093, %v3417
        %v3419 = vpop.f32.mrf.mxu0
        %v3420 = vadd.f32 %v3095, %v3419
        %3421 = vmatprep.mubr.f32.mxu0 0.0
        %v3422 = vand.u32 %v221, 4294901760
        %v3423 = vsub.f32 %v221, %v3422
        %v3424 = vand.u32 %v3423, 4294901760
        %3425 = vmatmul.mubr.f32.gmra.mxu0 %v3424
        %v3426 = vpop.f32.mrf.mxu0
        %v3427 = vadd.f32 %v3101, %v3426
        %v3428 = vpop.f32.mrf.mxu0
        %v3429 = vadd.f32 %v3103, %v3428
        %3430 = vmatprep.mubr.f32.mxu0 0.0
        %v3431 = vand.u32 %v224, 4294901760
        %v3432 = vsub.f32 %v224, %v3431
        %v3433 = vand.u32 %v3432, 4294901760
        %3434 = vmatmul.mubr.f32.gmra.mxu0 %v3433
        %v3435 = vpop.f32.mrf.mxu0
        %v3436 = vadd.f32 %v3109, %v3435
        %v3437 = vpop.f32.mrf.mxu0
        %v3438 = vadd.f32 %v3111, %v3437
        %3439 = vmatprep.mubr.f32.mxu0 0.0
        %v3440 = vand.u32 %v227, 4294901760
        %v3441 = vsub.f32 %v227, %v3440
        %v3442 = vand.u32 %v3441, 4294901760
        %3443 = vmatmul.mubr.f32.gmra.mxu0 %v3442
        %v3444 = vpop.f32.mrf.mxu0
        %v3445 = vadd.f32 %v3117, %v3444
        %v3446 = vpop.f32.mrf.mxu0
        %v3447 = vadd.f32 %v3119, %v3446
        %3448 = vmatprep.mubr.f32.mxu0 0.0
        %v3449 = vand.u32 %v230, 4294901760
        %v3450 = vsub.f32 %v230, %v3449
        %v3451 = vand.u32 %v3450, 4294901760
        %3452 = vmatmul.mubr.f32.gmra.mxu0 %v3451
        %v3453 = vpop.f32.mrf.mxu0
        %v3454 = vadd.f32 %v3125, %v3453
        %v3455 = vpop.f32.mrf.mxu0
        %v3456 = vadd.f32 %v3127, %v3455
        %3457 = vmatprep.mubr.f32.mxu0 0.0
        %v3458 = vand.u32 %v233, 4294901760
        %v3459 = vsub.f32 %v233, %v3458
        %v3460 = vand.u32 %v3459, 4294901760
        %3461 = vmatmul.mubr.f32.gmra.mxu0 %v3460
        %v3462 = vpop.f32.mrf.mxu0
        %v3463 = vadd.f32 %v3133, %v3462
        %v3464 = vpop.f32.mrf.mxu0
        %v3465 = vadd.f32 %v3135, %v3464
        %3466 = vmatprep.mubr.f32.mxu0 0.0
        %v3467 = vand.u32 %v236, 4294901760
        %v3468 = vsub.f32 %v236, %v3467
        %v3469 = vand.u32 %v3468, 4294901760
        %3470 = vmatmul.mubr.f32.gmra.mxu0 %v3469
        %v3471 = vpop.f32.mrf.mxu0
        %v3472 = vadd.f32 %v3141, %v3471
        %v3473 = vpop.f32.mrf.mxu0
        %v3474 = vadd.f32 %v3143, %v3473
        %3475 = vmatprep.mubr.f32.mxu0 0.0
        %v3476 = vand.u32 %v239, 4294901760
        %v3477 = vsub.f32 %v239, %v3476
        %v3478 = vand.u32 %v3477, 4294901760
        %3479 = vmatmul.mubr.f32.gmra.mxu0 %v3478
        %v3480 = vpop.f32.mrf.mxu0
        %v3481 = vadd.f32 %v3149, %v3480
        %v3482 = vpop.f32.mrf.mxu0
        %v3483 = vadd.f32 %v3151, %v3482
        %3484 = vmatprep.mubr.f32.mxu0 0.0
        %v3485 = vand.u32 %v242, 4294901760
        %v3486 = vsub.f32 %v242, %v3485
        %v3487 = vand.u32 %v3486, 4294901760
        %3488 = vmatmul.mubr.f32.gmra.mxu0 %v3487
        %v3489 = vpop.f32.mrf.mxu0
        %v3490 = vadd.f32 %v3157, %v3489
        %v3491 = vpop.f32.mrf.mxu0
        %v3492 = vadd.f32 %v3159, %v3491
        %3493 = vmatprep.mubr.f32.mxu0 0.0
        %v3494 = vand.u32 %v245, 4294901760
        %v3495 = vsub.f32 %v245, %v3494
        %v3496 = vand.u32 %v3495, 4294901760
        %3497 = vmatmul.mubr.f32.gmra.mxu0 %v3496
        %v3498 = vpop.f32.mrf.mxu0
        %v3499 = vadd.f32 %v3165, %v3498
        %v3500 = vpop.f32.mrf.mxu0
        %v3501 = vadd.f32 %v3167, %v3500
        %3502 = vmatprep.mubr.f32.mxu0 0.0
        %v3503 = vand.u32 %v248, 4294901760
        %v3504 = vsub.f32 %v248, %v3503
        %v3505 = vand.u32 %v3504, 4294901760
        %3506 = vmatmul.mubr.f32.gmra.mxu0 %v3505
        %v3507 = vpop.f32.mrf.mxu0
        %v3508 = vadd.f32 %v3173, %v3507
        %v3509 = vpop.f32.mrf.mxu0
        %v3510 = vadd.f32 %v3175, %v3509
        %3511 = vmatprep.mubr.f32.mxu0 0.0
        %v3512 = vand.u32 %v251, 4294901760
        %v3513 = vsub.f32 %v251, %v3512
        %v3514 = vand.u32 %v3513, 4294901760
        %3515 = vmatmul.mubr.f32.gmra.mxu0 %v3514
        %v3516 = vpop.f32.mrf.mxu0
        %v3517 = vadd.f32 %v3181, %v3516
        %v3518 = vpop.f32.mrf.mxu0
        %v3519 = vadd.f32 %v3183, %v3518
        %3520 = vmatprep.mubr.f32.mxu0 0.0
        %v3521 = vand.u32 %v254, 4294901760
        %v3522 = vsub.f32 %v254, %v3521
        %v3523 = vand.u32 %v3522, 4294901760
        %3524 = vmatmul.mubr.f32.gmra.mxu0 %v3523
        %v3525 = vpop.f32.mrf.mxu0
        %v3526 = vadd.f32 %v3189, %v3525
        %v3527 = vpop.f32.mrf.mxu0
        %v3528 = vadd.f32 %v3191, %v3527
        %3529 = vmatprep.mubr.f32.mxu0 0.0
        %v3530 = vand.u32 %v257, 4294901760
        %v3531 = vsub.f32 %v257, %v3530
        %v3532 = vand.u32 %v3531, 4294901760
        %3533 = vmatmul.mubr.f32.gmra.mxu0 %v3532
        %v3534 = vpop.f32.mrf.mxu0
        %v3535 = vadd.f32 %v3197, %v3534
        %v3536 = vpop.f32.mrf.mxu0
        %v3537 = vadd.f32 %v3199, %v3536
        %3538 = vmatprep.mubr.f32.mxu0 0.0
        %v3539 = vand.u32 %v260, 4294901760
        %v3540 = vsub.f32 %v260, %v3539
        %v3541 = vand.u32 %v3540, 4294901760
        %3542 = vmatmul.mubr.f32.gmra.mxu0 %v3541
        %v3543 = vpop.f32.mrf.mxu0
        %v3544 = vadd.f32 %v3205, %v3543
        %v3545 = vpop.f32.mrf.mxu0
        %v3546 = vadd.f32 %v3207, %v3545
        %3547 = vmatprep.mubr.f32.mxu0 0.0
        %v3548 = vand.u32 %v263, 4294901760
        %v3549 = vsub.f32 %v263, %v3548
        %v3550 = vand.u32 %v3549, 4294901760
        %3551 = vmatmul.mubr.f32.gmra.mxu0 %v3550
        %v3552 = vpop.f32.mrf.mxu0
        %v3553 = vadd.f32 %v3213, %v3552
        %v3554 = vpop.f32.mrf.mxu0
        %v3555 = vadd.f32 %v3215, %v3554
        %3556 = vmatprep.mubr.f32.mxu0 0.0
        %v3557 = vand.u32 %v266, 4294901760
        %v3558 = vsub.f32 %v266, %v3557
        %v3559 = vand.u32 %v3558, 4294901760
        %3560 = vmatmul.mubr.f32.gmra.mxu0 %v3559
        %v3561 = vpop.f32.mrf.mxu0
        %v3562 = vadd.f32 %v3221, %v3561
        %v3563 = vpop.f32.mrf.mxu0
        %v3564 = vadd.f32 %v3223, %v3563
        %3565 = vmatprep.mubr.f32.mxu0 0.0
        %v3566 = vand.u32 %v269, 4294901760
        %v3567 = vsub.f32 %v269, %v3566
        %v3568 = vand.u32 %v3567, 4294901760
        %3569 = vmatmul.mubr.f32.gmra.mxu0 %v3568
        %v3570 = vpop.f32.mrf.mxu0
        %v3571 = vadd.f32 %v3229, %v3570
        %v3572 = vpop.f32.mrf.mxu0
        %v3573 = vadd.f32 %v3231, %v3572
        %3574 = vmatprep.mubr.f32.mxu0 0.0
        %v3575 = vand.u32 %v272, 4294901760
        %v3576 = vsub.f32 %v272, %v3575
        %v3577 = vand.u32 %v3576, 4294901760
        %3578 = vmatmul.mubr.f32.gmra.mxu0 %v3577
        %v3579 = vpop.f32.mrf.mxu0
        %v3580 = vadd.f32 %v3237, %v3579
        %v3581 = vpop.f32.mrf.mxu0
        %v3582 = vadd.f32 %v3239, %v3581
        %3583 = vmatprep.mubr.f32.mxu0 0.0
        %v3584 = vand.u32 %v275, 4294901760
        %v3585 = vsub.f32 %v275, %v3584
        %v3586 = vand.u32 %v3585, 4294901760
        %3587 = vmatmul.mubr.f32.gmra.mxu0 %v3586
        %v3588 = vpop.f32.mrf.mxu0
        %v3589 = vadd.f32 %v3245, %v3588
        %v3590 = vpop.f32.mrf.mxu0
        %v3591 = vadd.f32 %v3247, %v3590
        %3592 = vmatprep.mubr.f32.mxu0 0.0
        %v3593 = vand.u32 %v278, 4294901760
        %v3594 = vsub.f32 %v278, %v3593
        %v3595 = vand.u32 %v3594, 4294901760
        %3596 = vmatmul.mubr.f32.gmra.mxu0 %v3595
        %v3597 = vpop.f32.mrf.mxu0
        %v3598 = vadd.f32 %v3253, %v3597
        %v3599 = vpop.f32.mrf.mxu0
        %v3600 = vadd.f32 %v3255, %v3599
        %3601 = vmatprep.mubr.f32.mxu0 0.0
        %v3602 = vand.u32 %v281, 4294901760
        %v3603 = vsub.f32 %v281, %v3602
        %v3604 = vand.u32 %v3603, 4294901760
        %3605 = vmatmul.mubr.f32.gmra.mxu0 %v3604
        %v3606 = vpop.f32.mrf.mxu0
        %v3607 = vadd.f32 %v3261, %v3606
        %v3608 = vpop.f32.mrf.mxu0
        %v3609 = vadd.f32 %v3263, %v3608
        %3610 = vmatprep.mubr.f32.mxu0 0.0
        %v3611 = vand.u32 %v284, 4294901760
        %v3612 = vsub.f32 %v284, %v3611
        %v3613 = vand.u32 %v3612, 4294901760
        %3614 = vmatmul.mubr.f32.gmra.mxu0 %v3613
        %v3615 = vpop.f32.mrf.mxu0
        %v3616 = vadd.f32 %v3269, %v3615
        %v3617 = vpop.f32.mrf.mxu0
        %v3618 = vadd.f32 %v3271, %v3617
        %3619 = vmatprep.mubr.f32.mxu0 0.0
        %v3620 = vand.u32 %v287, 4294901760
        %v3621 = vsub.f32 %v287, %v3620
        %v3622 = vand.u32 %v3621, 4294901760
        %3623 = vmatmul.mubr.f32.gmra.mxu0 %v3622
        %v3624 = vpop.f32.mrf.mxu0
        %v3625 = vadd.f32 %v3277, %v3624
        %v3626 = vpop.f32.mrf.mxu0
        %v3627 = vadd.f32 %v3279, %v3626
        %3628 = vmatprep.mubr.f32.mxu0 0.0
        %v3629 = vand.u32 %v290, 4294901760
        %v3630 = vsub.f32 %v290, %v3629
        %v3631 = vand.u32 %v3630, 4294901760
        %3632 = vmatmul.mubr.f32.gmra.mxu0 %v3631
        %v3633 = vpop.f32.mrf.mxu0
        %v3634 = vadd.f32 %v3285, %v3633
        %v3635 = vpop.f32.mrf.mxu0
        %v3636 = vadd.f32 %v3287, %v3635
        %3637 = vmatprep.mubr.f32.mxu0 0.0
        %v3638 = vand.u32 %v293, 4294901760
        %v3639 = vsub.f32 %v293, %v3638
        %v3640 = vand.u32 %v3639, 4294901760
        %3641 = vmatmul.mubr.f32.gmra.mxu0 %v3640
        %v3642 = vpop.f32.mrf.mxu0
        %v3643 = vadd.f32 %v3293, %v3642
        %v3644 = vpop.f32.mrf.mxu0
        %v3645 = vadd.f32 %v3295, %v3644
        %3646 = vmatprep.mubr.f32.mxu0 0.0
        %v3647 = vand.u32 %v296, 4294901760
        %v3648 = vsub.f32 %v296, %v3647
        %v3649 = vand.u32 %v3648, 4294901760
        %3650 = vmatmul.mubr.f32.gmra.mxu0 %v3649
        %v3651 = vpop.f32.mrf.mxu0
        %v3652 = vadd.f32 %v3301, %v3651
        %v3653 = vpop.f32.mrf.mxu0
        %v3654 = vadd.f32 %v3303, %v3653
        %3655 = vmatprep.mubr.f32.mxu0 0.0
        %v3656 = vand.u32 %v299, 4294901760
        %v3657 = vsub.f32 %v299, %v3656
        %v3658 = vand.u32 %v3657, 4294901760
        %3659 = vmatmul.mubr.f32.gmra.mxu0 %v3658
        %v3660 = vpop.f32.mrf.mxu0
        %v3661 = vadd.f32 %v3309, %v3660
        %v3662 = vpop.f32.mrf.mxu0
        %v3663 = vadd.f32 %v3311, %v3662
        %3664 = vmatprep.mubr.f32.mxu0 0.0
        %v3665 = vand.u32 %v302, 4294901760
        %v3666 = vsub.f32 %v302, %v3665
        %v3667 = vand.u32 %v3666, 4294901760
        %3668 = vmatmul.mubr.f32.gmra.mxu0 %v3667
        %v3669 = vpop.f32.mrf.mxu0
        %v3670 = vadd.f32 %v3317, %v3669
        %v3671 = vpop.f32.mrf.mxu0
        %v3672 = vadd.f32 %v3319, %v3671
        %3673 = vmatprep.mubr.f32.mxu0 0.0
        %v3674 = vand.u32 %v305, 4294901760
        %v3675 = vsub.f32 %v305, %v3674
        %v3676 = vand.u32 %v3675, 4294901760
        %3677 = vmatmul.mubr.f32.gmra.mxu0 %v3676
        %v3678 = vpop.f32.mrf.mxu0
        %v3679 = vadd.f32 %v3325, %v3678
        %v3680 = vpop.f32.mrf.mxu0
        %v3681 = vadd.f32 %v3327, %v3680
        %3682 = vmatprep.mubr.f32.mxu0 0.0
        %v3683 = vand.u32 %v308, 4294901760
        %v3684 = vsub.f32 %v308, %v3683
        %v3685 = vand.u32 %v3684, 4294901760
        %3686 = vmatmul.mubr.f32.gmra.mxu0 %v3685
        %v3687 = vpop.f32.mrf.mxu0
        %v3688 = vadd.f32 %v3333, %v3687
        %v3689 = vpop.f32.mrf.mxu0
        %v3690 = vadd.f32 %v3335, %v3689
        %3691 = vdwg.mxu0
        %3692 = vmatprep.subr.mxu0 0.0
        %3693 = vmatpush1.msra.mxu0 0.0
        %3694 = vmatprep.subr.mxu0 0.0
        %3695 = vmatpush1.msra.mxu0 0.0
        %3696 = vmatprep.subr.mxu0 0.0
        %3697 = vmatpush1.msra.mxu0 0.0
        %3698 = vmatprep.subr.mxu0 0.0
        %3699 = vmatpush1.msra.mxu0 0.0
        %3700 = vmatprep.subr.mxu0 0.0
        %3701 = vmatpush1.msra.mxu0 0.0
        %3702 = vmatprep.subr.mxu0 0.0
        %3703 = vmatpush1.msra.mxu0 0.0
        %3704 = vmatprep.subr.mxu0 0.0
        %3705 = vmatpush1.msra.mxu0 0.0
        %3706 = vmatprep.subr.mxu0 0.0
        %3707 = vmatpush1.msra.mxu0 0.0
        %3708 = vmatprep.subr.mxu0 0.0
        %3709 = vmatpush1.msra.mxu0 0.0
        %3710 = vmatprep.subr.mxu0 0.0
        %3711 = vmatpush1.msra.mxu0 0.0
        %3712 = vmatprep.subr.mxu0 0.0
        %3713 = vmatpush1.msra.mxu0 0.0
        %3714 = vmatprep.subr.mxu0 0.0
        %3715 = vmatpush1.msra.mxu0 0.0
        %3716 = vmatprep.subr.mxu0 0.0
        %3717 = vmatpush1.msra.mxu0 0.0
        %3718 = vmatprep.subr.mxu0 0.0
        %3719 = vmatpush1.msra.mxu0 0.0
        %3720 = vmatprep.subr.mxu0 0.0
        %3721 = vmatpush1.msra.mxu0 0.0
        %v3722 = vand.u32 %v208, 4294901760
        %v3723 = vsub.f32 %v208, %v3722
        %v3724 = vand.u32 %v3723, 4294901760
        %3725 = vmatprep.subr.mxu0 %v3724
        %v3726 = vand.u32 %v207, 4294901760
        %v3727 = vsub.f32 %v207, %v3726
        %v3728 = vand.u32 %v3727, 4294901760
        %3729 = vmatpush1.msra.mxu0 %v3728
        %3730 = vmatprep.subr.mxu0 0.0
        %3731 = vmatpush2.msra.mxu0 0.0
        %3732 = vmatprep.subr.mxu0 0.0
        %3733 = vmatpush2.msra.mxu0 0.0
        %3734 = vmatprep.subr.mxu0 0.0
        %3735 = vmatpush2.msra.mxu0 0.0
        %3736 = vmatprep.subr.mxu0 0.0
        %3737 = vmatpush2.msra.mxu0 0.0
        %3738 = vmatprep.subr.mxu0 0.0
        %3739 = vmatpush2.msra.mxu0 0.0
        %3740 = vmatprep.subr.mxu0 0.0
        %3741 = vmatpush2.msra.mxu0 0.0
        %3742 = vmatprep.subr.mxu0 0.0
        %3743 = vmatpush2.msra.mxu0 0.0
        %3744 = vmatprep.subr.mxu0 0.0
        %3745 = vmatpush2.msra.mxu0 0.0
        %3746 = vmatprep.subr.mxu0 0.0
        %3747 = vmatpush2.msra.mxu0 0.0
        %3748 = vmatprep.subr.mxu0 0.0
        %3749 = vmatpush2.msra.mxu0 0.0
        %3750 = vmatprep.subr.mxu0 0.0
        %3751 = vmatpush2.msra.mxu0 0.0
        %3752 = vmatprep.subr.mxu0 0.0
        %3753 = vmatpush2.msra.mxu0 0.0
        %3754 = vmatprep.subr.mxu0 0.0
        %3755 = vmatpush2.msra.mxu0 0.0
        %3756 = vmatprep.subr.mxu0 0.0
        %3757 = vmatpush2.msra.mxu0 0.0
        %3758 = vmatprep.subr.mxu0 0.0
        %3759 = vmatpush2.msra.mxu0 0.0
        %3760 = vmatprep.subr.mxu0 0.0
        %3761 = vmatpush2.msra.mxu0 0.0
        %3762 = vmatprep.mubr.f32.mxu0 0.0
        %v3763 = vand.u32 %v215, 4294901760
        %3764 = vmatmul.mubr.f32.gmra.mxu0 %v3763
        %v3765 = vpop.f32.mrf.mxu0
        %v3766 = vadd.f32 %v3409, %v3765
        %v3767 = vpop.f32.mrf.mxu0
        %v3768 = vadd.f32 %v3411, %v3767
        %3769 = vmatprep.mubr.f32.mxu0 0.0
        %v3770 = vand.u32 %v218, 4294901760
        %3771 = vmatmul.mubr.f32.gmra.mxu0 %v3770
        %v3772 = vpop.f32.mrf.mxu0
        %v3773 = vadd.f32 %v3418, %v3772
        %v3774 = vpop.f32.mrf.mxu0
        %v3775 = vadd.f32 %v3420, %v3774
        %3776 = vmatprep.mubr.f32.mxu0 0.0
        %v3777 = vand.u32 %v221, 4294901760
        %3778 = vmatmul.mubr.f32.gmra.mxu0 %v3777
        %v3779 = vpop.f32.mrf.mxu0
        %v3780 = vadd.f32 %v3427, %v3779
        %v3781 = vpop.f32.mrf.mxu0
        %v3782 = vadd.f32 %v3429, %v3781
        %3783 = vmatprep.mubr.f32.mxu0 0.0
        %v3784 = vand.u32 %v224, 4294901760
        %3785 = vmatmul.mubr.f32.gmra.mxu0 %v3784
        %v3786 = vpop.f32.mrf.mxu0
        %v3787 = vadd.f32 %v3436, %v3786
        %v3788 = vpop.f32.mrf.mxu0
        %v3789 = vadd.f32 %v3438, %v3788
        %3790 = vmatprep.mubr.f32.mxu0 0.0
        %v3791 = vand.u32 %v227, 4294901760
        %3792 = vmatmul.mubr.f32.gmra.mxu0 %v3791
        %v3793 = vpop.f32.mrf.mxu0
        %v3794 = vadd.f32 %v3445, %v3793
        %v3795 = vpop.f32.mrf.mxu0
        %v3796 = vadd.f32 %v3447, %v3795
        %3797 = vmatprep.mubr.f32.mxu0 0.0
        %v3798 = vand.u32 %v230, 4294901760
        %3799 = vmatmul.mubr.f32.gmra.mxu0 %v3798
        %v3800 = vpop.f32.mrf.mxu0
        %v3801 = vadd.f32 %v3454, %v3800
        %v3802 = vpop.f32.mrf.mxu0
        %v3803 = vadd.f32 %v3456, %v3802
        %3804 = vmatprep.mubr.f32.mxu0 0.0
        %v3805 = vand.u32 %v233, 4294901760
        %3806 = vmatmul.mubr.f32.gmra.mxu0 %v3805
        %v3807 = vpop.f32.mrf.mxu0
        %v3808 = vadd.f32 %v3463, %v3807
        %v3809 = vpop.f32.mrf.mxu0
        %v3810 = vadd.f32 %v3465, %v3809
        %3811 = vmatprep.mubr.f32.mxu0 0.0
        %v3812 = vand.u32 %v236, 4294901760
        %3813 = vmatmul.mubr.f32.gmra.mxu0 %v3812
        %v3814 = vpop.f32.mrf.mxu0
        %v3815 = vadd.f32 %v3472, %v3814
        %v3816 = vpop.f32.mrf.mxu0
        %v3817 = vadd.f32 %v3474, %v3816
        %3818 = vmatprep.mubr.f32.mxu0 0.0
        %v3819 = vand.u32 %v239, 4294901760
        %3820 = vmatmul.mubr.f32.gmra.mxu0 %v3819
        %v3821 = vpop.f32.mrf.mxu0
        %v3822 = vadd.f32 %v3481, %v3821
        %v3823 = vpop.f32.mrf.mxu0
        %v3824 = vadd.f32 %v3483, %v3823
        %3825 = vmatprep.mubr.f32.mxu0 0.0
        %v3826 = vand.u32 %v242, 4294901760
        %3827 = vmatmul.mubr.f32.gmra.mxu0 %v3826
        %v3828 = vpop.f32.mrf.mxu0
        %v3829 = vadd.f32 %v3490, %v3828
        %v3830 = vpop.f32.mrf.mxu0
        %v3831 = vadd.f32 %v3492, %v3830
        %3832 = vmatprep.mubr.f32.mxu0 0.0
        %v3833 = vand.u32 %v245, 4294901760
        %3834 = vmatmul.mubr.f32.gmra.mxu0 %v3833
        %v3835 = vpop.f32.mrf.mxu0
        %v3836 = vadd.f32 %v3499, %v3835
        %v3837 = vpop.f32.mrf.mxu0
        %v3838 = vadd.f32 %v3501, %v3837
        %3839 = vmatprep.mubr.f32.mxu0 0.0
        %v3840 = vand.u32 %v248, 4294901760
        %3841 = vmatmul.mubr.f32.gmra.mxu0 %v3840
        %v3842 = vpop.f32.mrf.mxu0
        %v3843 = vadd.f32 %v3508, %v3842
        %v3844 = vpop.f32.mrf.mxu0
        %v3845 = vadd.f32 %v3510, %v3844
        %3846 = vmatprep.mubr.f32.mxu0 0.0
        %v3847 = vand.u32 %v251, 4294901760
        %3848 = vmatmul.mubr.f32.gmra.mxu0 %v3847
        %v3849 = vpop.f32.mrf.mxu0
        %v3850 = vadd.f32 %v3517, %v3849
        %v3851 = vpop.f32.mrf.mxu0
        %v3852 = vadd.f32 %v3519, %v3851
        %3853 = vmatprep.mubr.f32.mxu0 0.0
        %v3854 = vand.u32 %v254, 4294901760
        %3855 = vmatmul.mubr.f32.gmra.mxu0 %v3854
        %v3856 = vpop.f32.mrf.mxu0
        %v3857 = vadd.f32 %v3526, %v3856
        %v3858 = vpop.f32.mrf.mxu0
        %v3859 = vadd.f32 %v3528, %v3858
        %3860 = vmatprep.mubr.f32.mxu0 0.0
        %v3861 = vand.u32 %v257, 4294901760
        %3862 = vmatmul.mubr.f32.gmra.mxu0 %v3861
        %v3863 = vpop.f32.mrf.mxu0
        %v3864 = vadd.f32 %v3535, %v3863
        %v3865 = vpop.f32.mrf.mxu0
        %v3866 = vadd.f32 %v3537, %v3865
        %3867 = vmatprep.mubr.f32.mxu0 0.0
        %v3868 = vand.u32 %v260, 4294901760
        %3869 = vmatmul.mubr.f32.gmra.mxu0 %v3868
        %v3870 = vpop.f32.mrf.mxu0
        %v3871 = vadd.f32 %v3544, %v3870
        %v3872 = vpop.f32.mrf.mxu0
        %v3873 = vadd.f32 %v3546, %v3872
        %3874 = vmatprep.mubr.f32.mxu0 0.0
        %v3875 = vand.u32 %v263, 4294901760
        %3876 = vmatmul.mubr.f32.gmra.mxu0 %v3875
        %v3877 = vpop.f32.mrf.mxu0
        %v3878 = vadd.f32 %v3553, %v3877
        %v3879 = vpop.f32.mrf.mxu0
        %v3880 = vadd.f32 %v3555, %v3879
        %3881 = vmatprep.mubr.f32.mxu0 0.0
        %v3882 = vand.u32 %v266, 4294901760
        %3883 = vmatmul.mubr.f32.gmra.mxu0 %v3882
        %v3884 = vpop.f32.mrf.mxu0
        %v3885 = vadd.f32 %v3562, %v3884
        %v3886 = vpop.f32.mrf.mxu0
        %v3887 = vadd.f32 %v3564, %v3886
        %3888 = vmatprep.mubr.f32.mxu0 0.0
        %v3889 = vand.u32 %v269, 4294901760
        %3890 = vmatmul.mubr.f32.gmra.mxu0 %v3889
        %v3891 = vpop.f32.mrf.mxu0
        %v3892 = vadd.f32 %v3571, %v3891
        %v3893 = vpop.f32.mrf.mxu0
        %v3894 = vadd.f32 %v3573, %v3893
        %3895 = vmatprep.mubr.f32.mxu0 0.0
        %v3896 = vand.u32 %v272, 4294901760
        %3897 = vmatmul.mubr.f32.gmra.mxu0 %v3896
        %v3898 = vpop.f32.mrf.mxu0
        %v3899 = vadd.f32 %v3580, %v3898
        %v3900 = vpop.f32.mrf.mxu0
        %v3901 = vadd.f32 %v3582, %v3900
        %3902 = vmatprep.mubr.f32.mxu0 0.0
        %v3903 = vand.u32 %v275, 4294901760
        %3904 = vmatmul.mubr.f32.gmra.mxu0 %v3903
        %v3905 = vpop.f32.mrf.mxu0
        %v3906 = vadd.f32 %v3589, %v3905
        %v3907 = vpop.f32.mrf.mxu0
        %v3908 = vadd.f32 %v3591, %v3907
        %3909 = vmatprep.mubr.f32.mxu0 0.0
        %v3910 = vand.u32 %v278, 4294901760
        %3911 = vmatmul.mubr.f32.gmra.mxu0 %v3910
        %v3912 = vpop.f32.mrf.mxu0
        %v3913 = vadd.f32 %v3598, %v3912
        %v3914 = vpop.f32.mrf.mxu0
        %v3915 = vadd.f32 %v3600, %v3914
        %3916 = vmatprep.mubr.f32.mxu0 0.0
        %v3917 = vand.u32 %v281, 4294901760
        %3918 = vmatmul.mubr.f32.gmra.mxu0 %v3917
        %v3919 = vpop.f32.mrf.mxu0
        %v3920 = vadd.f32 %v3607, %v3919
        %v3921 = vpop.f32.mrf.mxu0
        %v3922 = vadd.f32 %v3609, %v3921
        %3923 = vmatprep.mubr.f32.mxu0 0.0
        %v3924 = vand.u32 %v284, 4294901760
        %3925 = vmatmul.mubr.f32.gmra.mxu0 %v3924
        %v3926 = vpop.f32.mrf.mxu0
        %v3927 = vadd.f32 %v3616, %v3926
        %v3928 = vpop.f32.mrf.mxu0
        %v3929 = vadd.f32 %v3618, %v3928
        %3930 = vmatprep.mubr.f32.mxu0 0.0
        %v3931 = vand.u32 %v287, 4294901760
        %3932 = vmatmul.mubr.f32.gmra.mxu0 %v3931
        %v3933 = vpop.f32.mrf.mxu0
        %v3934 = vadd.f32 %v3625, %v3933
        %v3935 = vpop.f32.mrf.mxu0
        %v3936 = vadd.f32 %v3627, %v3935
        %3937 = vmatprep.mubr.f32.mxu0 0.0
        %v3938 = vand.u32 %v290, 4294901760
        %3939 = vmatmul.mubr.f32.gmra.mxu0 %v3938
        %v3940 = vpop.f32.mrf.mxu0
        %v3941 = vadd.f32 %v3634, %v3940
        %v3942 = vpop.f32.mrf.mxu0
        %v3943 = vadd.f32 %v3636, %v3942
        %3944 = vmatprep.mubr.f32.mxu0 0.0
        %v3945 = vand.u32 %v293, 4294901760
        %3946 = vmatmul.mubr.f32.gmra.mxu0 %v3945
        %v3947 = vpop.f32.mrf.mxu0
        %v3948 = vadd.f32 %v3643, %v3947
        %v3949 = vpop.f32.mrf.mxu0
        %v3950 = vadd.f32 %v3645, %v3949
        %3951 = vmatprep.mubr.f32.mxu0 0.0
        %v3952 = vand.u32 %v296, 4294901760
        %3953 = vmatmul.mubr.f32.gmra.mxu0 %v3952
        %v3954 = vpop.f32.mrf.mxu0
        %v3955 = vadd.f32 %v3652, %v3954
        %v3956 = vpop.f32.mrf.mxu0
        %v3957 = vadd.f32 %v3654, %v3956
        %3958 = vmatprep.mubr.f32.mxu0 0.0
        %v3959 = vand.u32 %v299, 4294901760
        %3960 = vmatmul.mubr.f32.gmra.mxu0 %v3959
        %v3961 = vpop.f32.mrf.mxu0
        %v3962 = vadd.f32 %v3661, %v3961
        %v3963 = vpop.f32.mrf.mxu0
        %v3964 = vadd.f32 %v3663, %v3963
        %3965 = vmatprep.mubr.f32.mxu0 0.0
        %v3966 = vand.u32 %v302, 4294901760
        %3967 = vmatmul.mubr.f32.gmra.mxu0 %v3966
        %v3968 = vpop.f32.mrf.mxu0
        %v3969 = vadd.f32 %v3670, %v3968
        %v3970 = vpop.f32.mrf.mxu0
        %v3971 = vadd.f32 %v3672, %v3970
        %3972 = vmatprep.mubr.f32.mxu0 0.0
        %v3973 = vand.u32 %v305, 4294901760
        %3974 = vmatmul.mubr.f32.gmra.mxu0 %v3973
        %v3975 = vpop.f32.mrf.mxu0
        %v3976 = vadd.f32 %v3679, %v3975
        %v3977 = vpop.f32.mrf.mxu0
        %v3978 = vadd.f32 %v3681, %v3977
        %3979 = vmatprep.mubr.f32.mxu0 0.0
        %v3980 = vand.u32 %v308, 4294901760
        %3981 = vmatmul.mubr.f32.gmra.mxu0 %v3980
        %v3982 = vpop.f32.mrf.mxu0
        %v3983 = vadd.f32 %v3688, %v3982
        %v3984 = vpop.f32.mrf.mxu0
        %v3985 = vadd.f32 %v3690, %v3984
        %3986 = vdwg.mxu0
        %3987 = vmatprep.subr.mxu0 0.0
        %3988 = vmatpush1.msra.mxu0 0.0
        %3989 = vmatprep.subr.mxu0 0.0
        %3990 = vmatpush1.msra.mxu0 0.0
        %3991 = vmatprep.subr.mxu0 0.0
        %3992 = vmatpush1.msra.mxu0 0.0
        %3993 = vmatprep.subr.mxu0 0.0
        %3994 = vmatpush1.msra.mxu0 0.0
        %3995 = vmatprep.subr.mxu0 0.0
        %3996 = vmatpush1.msra.mxu0 0.0
        %3997 = vmatprep.subr.mxu0 0.0
        %3998 = vmatpush1.msra.mxu0 0.0
        %3999 = vmatprep.subr.mxu0 0.0
        %4000 = vmatpush1.msra.mxu0 0.0
        %4001 = vmatprep.subr.mxu0 0.0
        %4002 = vmatpush1.msra.mxu0 0.0
        %4003 = vmatprep.subr.mxu0 0.0
        %4004 = vmatpush1.msra.mxu0 0.0
        %4005 = vmatprep.subr.mxu0 0.0
        %4006 = vmatpush1.msra.mxu0 0.0
        %4007 = vmatprep.subr.mxu0 0.0
        %4008 = vmatpush1.msra.mxu0 0.0
        %4009 = vmatprep.subr.mxu0 0.0
        %4010 = vmatpush1.msra.mxu0 0.0
        %4011 = vmatprep.subr.mxu0 0.0
        %4012 = vmatpush1.msra.mxu0 0.0
        %4013 = vmatprep.subr.mxu0 0.0
        %4014 = vmatpush1.msra.mxu0 0.0
        %4015 = vmatprep.subr.mxu0 0.0
        %4016 = vmatpush1.msra.mxu0 0.0
        %v4017 = vand.u32 %v208, 4294901760
        %4018 = vmatprep.subr.mxu0 %v4017
        %v4019 = vand.u32 %v207, 4294901760
        %4020 = vmatpush1.msra.mxu0 %v4019
        %4021 = vmatprep.subr.mxu0 0.0
        %4022 = vmatpush2.msra.mxu0 0.0
        %4023 = vmatprep.subr.mxu0 0.0
        %4024 = vmatpush2.msra.mxu0 0.0
        %4025 = vmatprep.subr.mxu0 0.0
        %4026 = vmatpush2.msra.mxu0 0.0
        %4027 = vmatprep.subr.mxu0 0.0
        %4028 = vmatpush2.msra.mxu0 0.0
        %4029 = vmatprep.subr.mxu0 0.0
        %4030 = vmatpush2.msra.mxu0 0.0
        %4031 = vmatprep.subr.mxu0 0.0
        %4032 = vmatpush2.msra.mxu0 0.0
        %4033 = vmatprep.subr.mxu0 0.0
        %4034 = vmatpush2.msra.mxu0 0.0
        %4035 = vmatprep.subr.mxu0 0.0
        %4036 = vmatpush2.msra.mxu0 0.0
        %4037 = vmatprep.subr.mxu0 0.0
        %4038 = vmatpush2.msra.mxu0 0.0
        %4039 = vmatprep.subr.mxu0 0.0
        %4040 = vmatpush2.msra.mxu0 0.0
        %4041 = vmatprep.subr.mxu0 0.0
        %4042 = vmatpush2.msra.mxu0 0.0
        %4043 = vmatprep.subr.mxu0 0.0
        %4044 = vmatpush2.msra.mxu0 0.0
        %4045 = vmatprep.subr.mxu0 0.0
        %4046 = vmatpush2.msra.mxu0 0.0
        %4047 = vmatprep.subr.mxu0 0.0
        %4048 = vmatpush2.msra.mxu0 0.0
        %4049 = vmatprep.subr.mxu0 0.0
        %4050 = vmatpush2.msra.mxu0 0.0
        %4051 = vmatprep.subr.mxu0 0.0
        %4052 = vmatpush2.msra.mxu0 0.0
        %4053 = vmatprep.mubr.f32.mxu0 0.0
        %v4054 = vand.u32 %v215, 4294901760
        %4055 = vmatmul.mubr.f32.gmra.mxu0 %v4054
        %v4056 = vpop.f32.mrf.mxu0
        %v4057 = vadd.f32 %v3766, %v4056
        %v4058 = vpop.f32.mrf.mxu0
        %v4059 = vadd.f32 %v3768, %v4058
        %4060 = vmatprep.mubr.f32.mxu0 0.0
        %v4061 = vand.u32 %v218, 4294901760
        %4062 = vmatmul.mubr.f32.gmra.mxu0 %v4061
        %v4063 = vpop.f32.mrf.mxu0
        %v4064 = vadd.f32 %v3773, %v4063
        %v4065 = vpop.f32.mrf.mxu0
        %v4066 = vadd.f32 %v3775, %v4065
        %4067 = vmatprep.mubr.f32.mxu0 0.0
        %v4068 = vand.u32 %v221, 4294901760
        %4069 = vmatmul.mubr.f32.gmra.mxu0 %v4068
        %v4070 = vpop.f32.mrf.mxu0
        %v4071 = vadd.f32 %v3780, %v4070
        %v4072 = vpop.f32.mrf.mxu0
        %v4073 = vadd.f32 %v3782, %v4072
        %4074 = vmatprep.mubr.f32.mxu0 0.0
        %v4075 = vand.u32 %v224, 4294901760
        %4076 = vmatmul.mubr.f32.gmra.mxu0 %v4075
        %v4077 = vpop.f32.mrf.mxu0
        %v4078 = vadd.f32 %v3787, %v4077
        %v4079 = vpop.f32.mrf.mxu0
        %v4080 = vadd.f32 %v3789, %v4079
        %4081 = vmatprep.mubr.f32.mxu0 0.0
        %v4082 = vand.u32 %v227, 4294901760
        %4083 = vmatmul.mubr.f32.gmra.mxu0 %v4082
        %v4084 = vpop.f32.mrf.mxu0
        %v4085 = vadd.f32 %v3794, %v4084
        %v4086 = vpop.f32.mrf.mxu0
        %v4087 = vadd.f32 %v3796, %v4086
        %4088 = vmatprep.mubr.f32.mxu0 0.0
        %v4089 = vand.u32 %v230, 4294901760
        %4090 = vmatmul.mubr.f32.gmra.mxu0 %v4089
        %v4091 = vpop.f32.mrf.mxu0
        %v4092 = vadd.f32 %v3801, %v4091
        %v4093 = vpop.f32.mrf.mxu0
        %v4094 = vadd.f32 %v3803, %v4093
        %4095 = vmatprep.mubr.f32.mxu0 0.0
        %v4096 = vand.u32 %v233, 4294901760
        %4097 = vmatmul.mubr.f32.gmra.mxu0 %v4096
        %v4098 = vpop.f32.mrf.mxu0
        %v4099 = vadd.f32 %v3808, %v4098
        %v4100 = vpop.f32.mrf.mxu0
        %v4101 = vadd.f32 %v3810, %v4100
        %4102 = vmatprep.mubr.f32.mxu0 0.0
        %v4103 = vand.u32 %v236, 4294901760
        %4104 = vmatmul.mubr.f32.gmra.mxu0 %v4103
        %v4105 = vpop.f32.mrf.mxu0
        %v4106 = vadd.f32 %v3815, %v4105
        %v4107 = vpop.f32.mrf.mxu0
        %v4108 = vadd.f32 %v3817, %v4107
        %4109 = vmatprep.mubr.f32.mxu0 0.0
        %v4110 = vand.u32 %v239, 4294901760
        %4111 = vmatmul.mubr.f32.gmra.mxu0 %v4110
        %v4112 = vpop.f32.mrf.mxu0
        %v4113 = vadd.f32 %v3822, %v4112
        %v4114 = vpop.f32.mrf.mxu0
        %v4115 = vadd.f32 %v3824, %v4114
        %4116 = vmatprep.mubr.f32.mxu0 0.0
        %v4117 = vand.u32 %v242, 4294901760
        %4118 = vmatmul.mubr.f32.gmra.mxu0 %v4117
        %v4119 = vpop.f32.mrf.mxu0
        %v4120 = vadd.f32 %v3829, %v4119
        %v4121 = vpop.f32.mrf.mxu0
        %v4122 = vadd.f32 %v3831, %v4121
        %4123 = vmatprep.mubr.f32.mxu0 0.0
        %v4124 = vand.u32 %v245, 4294901760
        %4125 = vmatmul.mubr.f32.gmra.mxu0 %v4124
        %v4126 = vpop.f32.mrf.mxu0
        %v4127 = vadd.f32 %v3836, %v4126
        %v4128 = vpop.f32.mrf.mxu0
        %v4129 = vadd.f32 %v3838, %v4128
        %4130 = vmatprep.mubr.f32.mxu0 0.0
        %v4131 = vand.u32 %v248, 4294901760
        %4132 = vmatmul.mubr.f32.gmra.mxu0 %v4131
        %v4133 = vpop.f32.mrf.mxu0
        %v4134 = vadd.f32 %v3843, %v4133
        %v4135 = vpop.f32.mrf.mxu0
        %v4136 = vadd.f32 %v3845, %v4135
        %4137 = vmatprep.mubr.f32.mxu0 0.0
        %v4138 = vand.u32 %v251, 4294901760
        %4139 = vmatmul.mubr.f32.gmra.mxu0 %v4138
        %v4140 = vpop.f32.mrf.mxu0
        %v4141 = vadd.f32 %v3850, %v4140
        %v4142 = vpop.f32.mrf.mxu0
        %v4143 = vadd.f32 %v3852, %v4142
        %4144 = vmatprep.mubr.f32.mxu0 0.0
        %v4145 = vand.u32 %v254, 4294901760
        %4146 = vmatmul.mubr.f32.gmra.mxu0 %v4145
        %v4147 = vpop.f32.mrf.mxu0
        %v4148 = vadd.f32 %v3857, %v4147
        %v4149 = vpop.f32.mrf.mxu0
        %v4150 = vadd.f32 %v3859, %v4149
        %4151 = vmatprep.mubr.f32.mxu0 0.0
        %v4152 = vand.u32 %v257, 4294901760
        %4153 = vmatmul.mubr.f32.gmra.mxu0 %v4152
        %v4154 = vpop.f32.mrf.mxu0
        %v4155 = vadd.f32 %v3864, %v4154
        %v4156 = vpop.f32.mrf.mxu0
        %v4157 = vadd.f32 %v3866, %v4156
        %4158 = vmatprep.mubr.f32.mxu0 0.0
        %v4159 = vand.u32 %v260, 4294901760
        %4160 = vmatmul.mubr.f32.gmra.mxu0 %v4159
        %v4161 = vpop.f32.mrf.mxu0
        %v4162 = vadd.f32 %v3871, %v4161
        %v4163 = vpop.f32.mrf.mxu0
        %v4164 = vadd.f32 %v3873, %v4163
        %4165 = vmatprep.mubr.f32.mxu0 0.0
        %v4166 = vand.u32 %v263, 4294901760
        %4167 = vmatmul.mubr.f32.gmra.mxu0 %v4166
        %v4168 = vpop.f32.mrf.mxu0
        %v4169 = vadd.f32 %v3878, %v4168
        %v4170 = vpop.f32.mrf.mxu0
        %v4171 = vadd.f32 %v3880, %v4170
        %4172 = vmatprep.mubr.f32.mxu0 0.0
        %v4173 = vand.u32 %v266, 4294901760
        %4174 = vmatmul.mubr.f32.gmra.mxu0 %v4173
        %v4175 = vpop.f32.mrf.mxu0
        %v4176 = vadd.f32 %v3885, %v4175
        %v4177 = vpop.f32.mrf.mxu0
        %v4178 = vadd.f32 %v3887, %v4177
        %4179 = vmatprep.mubr.f32.mxu0 0.0
        %v4180 = vand.u32 %v269, 4294901760
        %4181 = vmatmul.mubr.f32.gmra.mxu0 %v4180
        %v4182 = vpop.f32.mrf.mxu0
        %v4183 = vadd.f32 %v3892, %v4182
        %v4184 = vpop.f32.mrf.mxu0
        %v4185 = vadd.f32 %v3894, %v4184
        %4186 = vmatprep.mubr.f32.mxu0 0.0
        %v4187 = vand.u32 %v272, 4294901760
        %4188 = vmatmul.mubr.f32.gmra.mxu0 %v4187
        %v4189 = vpop.f32.mrf.mxu0
        %v4190 = vadd.f32 %v3899, %v4189
        %v4191 = vpop.f32.mrf.mxu0
        %v4192 = vadd.f32 %v3901, %v4191
        %4193 = vmatprep.mubr.f32.mxu0 0.0
        %v4194 = vand.u32 %v275, 4294901760
        %4195 = vmatmul.mubr.f32.gmra.mxu0 %v4194
        %v4196 = vpop.f32.mrf.mxu0
        %v4197 = vadd.f32 %v3906, %v4196
        %v4198 = vpop.f32.mrf.mxu0
        %v4199 = vadd.f32 %v3908, %v4198
        %4200 = vmatprep.mubr.f32.mxu0 0.0
        %v4201 = vand.u32 %v278, 4294901760
        %4202 = vmatmul.mubr.f32.gmra.mxu0 %v4201
        %v4203 = vpop.f32.mrf.mxu0
        %v4204 = vadd.f32 %v3913, %v4203
        %v4205 = vpop.f32.mrf.mxu0
        %v4206 = vadd.f32 %v3915, %v4205
        %4207 = vmatprep.mubr.f32.mxu0 0.0
        %v4208 = vand.u32 %v281, 4294901760
        %4209 = vmatmul.mubr.f32.gmra.mxu0 %v4208
        %v4210 = vpop.f32.mrf.mxu0
        %v4211 = vadd.f32 %v3920, %v4210
        %v4212 = vpop.f32.mrf.mxu0
        %v4213 = vadd.f32 %v3922, %v4212
        %4214 = vmatprep.mubr.f32.mxu0 0.0
        %v4215 = vand.u32 %v284, 4294901760
        %4216 = vmatmul.mubr.f32.gmra.mxu0 %v4215
        %v4217 = vpop.f32.mrf.mxu0
        %v4218 = vadd.f32 %v3927, %v4217
        %v4219 = vpop.f32.mrf.mxu0
        %v4220 = vadd.f32 %v3929, %v4219
        %4221 = vmatprep.mubr.f32.mxu0 0.0
        %v4222 = vand.u32 %v287, 4294901760
        %4223 = vmatmul.mubr.f32.gmra.mxu0 %v4222
        %v4224 = vpop.f32.mrf.mxu0
        %v4225 = vadd.f32 %v3934, %v4224
        %v4226 = vpop.f32.mrf.mxu0
        %v4227 = vadd.f32 %v3936, %v4226
        %4228 = vmatprep.mubr.f32.mxu0 0.0
        %v4229 = vand.u32 %v290, 4294901760
        %4230 = vmatmul.mubr.f32.gmra.mxu0 %v4229
        %v4231 = vpop.f32.mrf.mxu0
        %v4232 = vadd.f32 %v3941, %v4231
        %v4233 = vpop.f32.mrf.mxu0
        %v4234 = vadd.f32 %v3943, %v4233
        %4235 = vmatprep.mubr.f32.mxu0 0.0
        %v4236 = vand.u32 %v293, 4294901760
        %4237 = vmatmul.mubr.f32.gmra.mxu0 %v4236
        %v4238 = vpop.f32.mrf.mxu0
        %v4239 = vadd.f32 %v3948, %v4238
        %v4240 = vpop.f32.mrf.mxu0
        %v4241 = vadd.f32 %v3950, %v4240
        %4242 = vmatprep.mubr.f32.mxu0 0.0
        %v4243 = vand.u32 %v296, 4294901760
        %4244 = vmatmul.mubr.f32.gmra.mxu0 %v4243
        %v4245 = vpop.f32.mrf.mxu0
        %v4246 = vadd.f32 %v3955, %v4245
        %v4247 = vpop.f32.mrf.mxu0
        %v4248 = vadd.f32 %v3957, %v4247
        %4249 = vmatprep.mubr.f32.mxu0 0.0
        %v4250 = vand.u32 %v299, 4294901760
        %4251 = vmatmul.mubr.f32.gmra.mxu0 %v4250
        %v4252 = vpop.f32.mrf.mxu0
        %v4253 = vadd.f32 %v3962, %v4252
        %v4254 = vpop.f32.mrf.mxu0
        %v4255 = vadd.f32 %v3964, %v4254
        %4256 = vmatprep.mubr.f32.mxu0 0.0
        %v4257 = vand.u32 %v302, 4294901760
        %4258 = vmatmul.mubr.f32.gmra.mxu0 %v4257
        %v4259 = vpop.f32.mrf.mxu0
        %v4260 = vadd.f32 %v3969, %v4259
        %v4261 = vpop.f32.mrf.mxu0
        %v4262 = vadd.f32 %v3971, %v4261
        %4263 = vmatprep.mubr.f32.mxu0 0.0
        %v4264 = vand.u32 %v305, 4294901760
        %4265 = vmatmul.mubr.f32.gmra.mxu0 %v4264
        %v4266 = vpop.f32.mrf.mxu0
        %v4267 = vadd.f32 %v3976, %v4266
        %v4268 = vpop.f32.mrf.mxu0
        %v4269 = vadd.f32 %v3978, %v4268
        %4270 = vmatprep.mubr.f32.mxu0 0.0
        %v4271 = vand.u32 %v308, 4294901760
        %4272 = vmatmul.mubr.f32.gmra.mxu0 %v4271
        %v4273 = vpop.f32.mrf.mxu0
        %v4274 = vadd.f32 %v3983, %v4273
        %v4275 = vpop.f32.mrf.mxu0
        %v4276 = vadd.f32 %v3985, %v4275
        %4277 = vdwg.mxu0
        %4278 = vmatprep.subr.mxu0 0.0
        %4279 = vmatpush1.msra.mxu0 0.0
        %4280 = vmatprep.subr.mxu0 0.0
        %4281 = vmatpush1.msra.mxu0 0.0
        %4282 = vmatprep.subr.mxu0 0.0
        %4283 = vmatpush1.msra.mxu0 0.0
        %4284 = vmatprep.subr.mxu0 0.0
        %4285 = vmatpush1.msra.mxu0 0.0
        %4286 = vmatprep.subr.mxu0 0.0
        %4287 = vmatpush1.msra.mxu0 0.0
        %4288 = vmatprep.subr.mxu0 0.0
        %4289 = vmatpush1.msra.mxu0 0.0
        %4290 = vmatprep.subr.mxu0 0.0
        %4291 = vmatpush1.msra.mxu0 0.0
        %4292 = vmatprep.subr.mxu0 0.0
        %4293 = vmatpush1.msra.mxu0 0.0
        %4294 = vmatprep.subr.mxu0 0.0
        %4295 = vmatpush1.msra.mxu0 0.0
        %4296 = vmatprep.subr.mxu0 0.0
        %4297 = vmatpush1.msra.mxu0 0.0
        %4298 = vmatprep.subr.mxu0 0.0
        %4299 = vmatpush1.msra.mxu0 0.0
        %4300 = vmatprep.subr.mxu0 0.0
        %4301 = vmatpush1.msra.mxu0 0.0
        %4302 = vmatprep.subr.mxu0 0.0
        %4303 = vmatpush1.msra.mxu0 0.0
        %4304 = vmatprep.subr.mxu0 0.0
        %4305 = vmatpush1.msra.mxu0 0.0
        %4306 = vmatprep.subr.mxu0 0.0
        %4307 = vmatpush1.msra.mxu0 0.0
        %v4308 = vand.u32 %v210, 4294901760
        %4309 = vmatprep.subr.mxu0 %v4308
        %v4310 = vand.u32 %v209, 4294901760
        %4311 = vmatpush1.msra.mxu0 %v4310
        %4312 = vmatprep.subr.mxu0 0.0
        %4313 = vmatpush2.msra.mxu0 0.0
        %4314 = vmatprep.subr.mxu0 0.0
        %4315 = vmatpush2.msra.mxu0 0.0
        %4316 = vmatprep.subr.mxu0 0.0
        %4317 = vmatpush2.msra.mxu0 0.0
        %4318 = vmatprep.subr.mxu0 0.0
        %4319 = vmatpush2.msra.mxu0 0.0
        %4320 = vmatprep.subr.mxu0 0.0
        %4321 = vmatpush2.msra.mxu0 0.0
        %4322 = vmatprep.subr.mxu0 0.0
        %4323 = vmatpush2.msra.mxu0 0.0
        %4324 = vmatprep.subr.mxu0 0.0
        %4325 = vmatpush2.msra.mxu0 0.0
        %4326 = vmatprep.subr.mxu0 0.0
        %4327 = vmatpush2.msra.mxu0 0.0
        %4328 = vmatprep.subr.mxu0 0.0
        %4329 = vmatpush2.msra.mxu0 0.0
        %4330 = vmatprep.subr.mxu0 0.0
        %4331 = vmatpush2.msra.mxu0 0.0
        %4332 = vmatprep.subr.mxu0 0.0
        %4333 = vmatpush2.msra.mxu0 0.0
        %4334 = vmatprep.subr.mxu0 0.0
        %4335 = vmatpush2.msra.mxu0 0.0
        %4336 = vmatprep.subr.mxu0 0.0
        %4337 = vmatpush2.msra.mxu0 0.0
        %4338 = vmatprep.subr.mxu0 0.0
        %4339 = vmatpush2.msra.mxu0 0.0
        %4340 = vmatprep.subr.mxu0 0.0
        %4341 = vmatpush2.msra.mxu0 0.0
        %4342 = vmatprep.subr.mxu0 0.0
        %4343 = vmatpush2.msra.mxu0 0.0
        %4344 = vmatprep.mubr.f32.mxu0 0.0
        %v4345 = vand.u32 %v215, 4294901760
        %v4346 = vsub.f32 %v215, %v4345
        %v4347 = vand.u32 %v4346, 4294901760
        %v4348 = vsub.f32 %v4346, %v4347
        %v4349 = vand.u32 %v4348, 4294901760
        %4350 = vmatmul.mubr.f32.gmra.mxu0 %v4349
        %v4351 = vpop.f32.mrf.mxu0
        %v4352 = vadd.f32 0.0, %v4351
        %v4353 = vpop.f32.mrf.mxu0
        %v4354 = vadd.f32 0.0, %v4353
        %4355 = vmatprep.mubr.f32.mxu0 0.0
        %v4356 = vand.u32 %v218, 4294901760
        %v4357 = vsub.f32 %v218, %v4356
        %v4358 = vand.u32 %v4357, 4294901760
        %v4359 = vsub.f32 %v4357, %v4358
        %v4360 = vand.u32 %v4359, 4294901760
        %4361 = vmatmul.mubr.f32.gmra.mxu0 %v4360
        %v4362 = vpop.f32.mrf.mxu0
        %v4363 = vadd.f32 0.0, %v4362
        %v4364 = vpop.f32.mrf.mxu0
        %v4365 = vadd.f32 0.0, %v4364
        %4366 = vmatprep.mubr.f32.mxu0 0.0
        %v4367 = vand.u32 %v221, 4294901760
        %v4368 = vsub.f32 %v221, %v4367
        %v4369 = vand.u32 %v4368, 4294901760
        %v4370 = vsub.f32 %v4368, %v4369
        %v4371 = vand.u32 %v4370, 4294901760
        %4372 = vmatmul.mubr.f32.gmra.mxu0 %v4371
        %v4373 = vpop.f32.mrf.mxu0
        %v4374 = vadd.f32 0.0, %v4373
        %v4375 = vpop.f32.mrf.mxu0
        %v4376 = vadd.f32 0.0, %v4375
        %4377 = vmatprep.mubr.f32.mxu0 0.0
        %v4378 = vand.u32 %v224, 4294901760
        %v4379 = vsub.f32 %v224, %v4378
        %v4380 = vand.u32 %v4379, 4294901760
        %v4381 = vsub.f32 %v4379, %v4380
        %v4382 = vand.u32 %v4381, 4294901760
        %4383 = vmatmul.mubr.f32.gmra.mxu0 %v4382
        %v4384 = vpop.f32.mrf.mxu0
        %v4385 = vadd.f32 0.0, %v4384
        %v4386 = vpop.f32.mrf.mxu0
        %v4387 = vadd.f32 0.0, %v4386
        %4388 = vmatprep.mubr.f32.mxu0 0.0
        %v4389 = vand.u32 %v227, 4294901760
        %v4390 = vsub.f32 %v227, %v4389
        %v4391 = vand.u32 %v4390, 4294901760
        %v4392 = vsub.f32 %v4390, %v4391
        %v4393 = vand.u32 %v4392, 4294901760
        %4394 = vmatmul.mubr.f32.gmra.mxu0 %v4393
        %v4395 = vpop.f32.mrf.mxu0
        %v4396 = vadd.f32 0.0, %v4395
        %v4397 = vpop.f32.mrf.mxu0
        %v4398 = vadd.f32 0.0, %v4397
        %4399 = vmatprep.mubr.f32.mxu0 0.0
        %v4400 = vand.u32 %v230, 4294901760
        %v4401 = vsub.f32 %v230, %v4400
        %v4402 = vand.u32 %v4401, 4294901760
        %v4403 = vsub.f32 %v4401, %v4402
        %v4404 = vand.u32 %v4403, 4294901760
        %4405 = vmatmul.mubr.f32.gmra.mxu0 %v4404
        %v4406 = vpop.f32.mrf.mxu0
        %v4407 = vadd.f32 0.0, %v4406
        %v4408 = vpop.f32.mrf.mxu0
        %v4409 = vadd.f32 0.0, %v4408
        %4410 = vmatprep.mubr.f32.mxu0 0.0
        %v4411 = vand.u32 %v233, 4294901760
        %v4412 = vsub.f32 %v233, %v4411
        %v4413 = vand.u32 %v4412, 4294901760
        %v4414 = vsub.f32 %v4412, %v4413
        %v4415 = vand.u32 %v4414, 4294901760
        %4416 = vmatmul.mubr.f32.gmra.mxu0 %v4415
        %v4417 = vpop.f32.mrf.mxu0
        %v4418 = vadd.f32 0.0, %v4417
        %v4419 = vpop.f32.mrf.mxu0
        %v4420 = vadd.f32 0.0, %v4419
        %4421 = vmatprep.mubr.f32.mxu0 0.0
        %v4422 = vand.u32 %v236, 4294901760
        %v4423 = vsub.f32 %v236, %v4422
        %v4424 = vand.u32 %v4423, 4294901760
        %v4425 = vsub.f32 %v4423, %v4424
        %v4426 = vand.u32 %v4425, 4294901760
        %4427 = vmatmul.mubr.f32.gmra.mxu0 %v4426
        %v4428 = vpop.f32.mrf.mxu0
        %v4429 = vadd.f32 0.0, %v4428
        %v4430 = vpop.f32.mrf.mxu0
        %v4431 = vadd.f32 0.0, %v4430
        %4432 = vmatprep.mubr.f32.mxu0 0.0
        %v4433 = vand.u32 %v239, 4294901760
        %v4434 = vsub.f32 %v239, %v4433
        %v4435 = vand.u32 %v4434, 4294901760
        %v4436 = vsub.f32 %v4434, %v4435
        %v4437 = vand.u32 %v4436, 4294901760
        %4438 = vmatmul.mubr.f32.gmra.mxu0 %v4437
        %v4439 = vpop.f32.mrf.mxu0
        %v4440 = vadd.f32 0.0, %v4439
        %v4441 = vpop.f32.mrf.mxu0
        %v4442 = vadd.f32 0.0, %v4441
        %4443 = vmatprep.mubr.f32.mxu0 0.0
        %v4444 = vand.u32 %v242, 4294901760
        %v4445 = vsub.f32 %v242, %v4444
        %v4446 = vand.u32 %v4445, 4294901760
        %v4447 = vsub.f32 %v4445, %v4446
        %v4448 = vand.u32 %v4447, 4294901760
        %4449 = vmatmul.mubr.f32.gmra.mxu0 %v4448
        %v4450 = vpop.f32.mrf.mxu0
        %v4451 = vadd.f32 0.0, %v4450
        %v4452 = vpop.f32.mrf.mxu0
        %v4453 = vadd.f32 0.0, %v4452
        %4454 = vmatprep.mubr.f32.mxu0 0.0
        %v4455 = vand.u32 %v245, 4294901760
        %v4456 = vsub.f32 %v245, %v4455
        %v4457 = vand.u32 %v4456, 4294901760
        %v4458 = vsub.f32 %v4456, %v4457
        %v4459 = vand.u32 %v4458, 4294901760
        %4460 = vmatmul.mubr.f32.gmra.mxu0 %v4459
        %v4461 = vpop.f32.mrf.mxu0
        %v4462 = vadd.f32 0.0, %v4461
        %v4463 = vpop.f32.mrf.mxu0
        %v4464 = vadd.f32 0.0, %v4463
        %4465 = vmatprep.mubr.f32.mxu0 0.0
        %v4466 = vand.u32 %v248, 4294901760
        %v4467 = vsub.f32 %v248, %v4466
        %v4468 = vand.u32 %v4467, 4294901760
        %v4469 = vsub.f32 %v4467, %v4468
        %v4470 = vand.u32 %v4469, 4294901760
        %4471 = vmatmul.mubr.f32.gmra.mxu0 %v4470
        %v4472 = vpop.f32.mrf.mxu0
        %v4473 = vadd.f32 0.0, %v4472
        %v4474 = vpop.f32.mrf.mxu0
        %v4475 = vadd.f32 0.0, %v4474
        %4476 = vmatprep.mubr.f32.mxu0 0.0
        %v4477 = vand.u32 %v251, 4294901760
        %v4478 = vsub.f32 %v251, %v4477
        %v4479 = vand.u32 %v4478, 4294901760
        %v4480 = vsub.f32 %v4478, %v4479
        %v4481 = vand.u32 %v4480, 4294901760
        %4482 = vmatmul.mubr.f32.gmra.mxu0 %v4481
        %v4483 = vpop.f32.mrf.mxu0
        %v4484 = vadd.f32 0.0, %v4483
        %v4485 = vpop.f32.mrf.mxu0
        %v4486 = vadd.f32 0.0, %v4485
        %4487 = vmatprep.mubr.f32.mxu0 0.0
        %v4488 = vand.u32 %v254, 4294901760
        %v4489 = vsub.f32 %v254, %v4488
        %v4490 = vand.u32 %v4489, 4294901760
        %v4491 = vsub.f32 %v4489, %v4490
        %v4492 = vand.u32 %v4491, 4294901760
        %4493 = vmatmul.mubr.f32.gmra.mxu0 %v4492
        %v4494 = vpop.f32.mrf.mxu0
        %v4495 = vadd.f32 0.0, %v4494
        %v4496 = vpop.f32.mrf.mxu0
        %v4497 = vadd.f32 0.0, %v4496
        %4498 = vmatprep.mubr.f32.mxu0 0.0
        %v4499 = vand.u32 %v257, 4294901760
        %v4500 = vsub.f32 %v257, %v4499
        %v4501 = vand.u32 %v4500, 4294901760
        %v4502 = vsub.f32 %v4500, %v4501
        %v4503 = vand.u32 %v4502, 4294901760
        %4504 = vmatmul.mubr.f32.gmra.mxu0 %v4503
        %v4505 = vpop.f32.mrf.mxu0
        %v4506 = vadd.f32 0.0, %v4505
        %v4507 = vpop.f32.mrf.mxu0
        %v4508 = vadd.f32 0.0, %v4507
        %4509 = vmatprep.mubr.f32.mxu0 0.0
        %v4510 = vand.u32 %v260, 4294901760
        %v4511 = vsub.f32 %v260, %v4510
        %v4512 = vand.u32 %v4511, 4294901760
        %v4513 = vsub.f32 %v4511, %v4512
        %v4514 = vand.u32 %v4513, 4294901760
        %4515 = vmatmul.mubr.f32.gmra.mxu0 %v4514
        %v4516 = vpop.f32.mrf.mxu0
        %v4517 = vadd.f32 0.0, %v4516
        %v4518 = vpop.f32.mrf.mxu0
        %v4519 = vadd.f32 0.0, %v4518
        %4520 = vmatprep.mubr.f32.mxu0 0.0
        %v4521 = vand.u32 %v263, 4294901760
        %v4522 = vsub.f32 %v263, %v4521
        %v4523 = vand.u32 %v4522, 4294901760
        %v4524 = vsub.f32 %v4522, %v4523
        %v4525 = vand.u32 %v4524, 4294901760
        %4526 = vmatmul.mubr.f32.gmra.mxu0 %v4525
        %v4527 = vpop.f32.mrf.mxu0
        %v4528 = vadd.f32 0.0, %v4527
        %v4529 = vpop.f32.mrf.mxu0
        %v4530 = vadd.f32 0.0, %v4529
        %4531 = vmatprep.mubr.f32.mxu0 0.0
        %v4532 = vand.u32 %v266, 4294901760
        %v4533 = vsub.f32 %v266, %v4532
        %v4534 = vand.u32 %v4533, 4294901760
        %v4535 = vsub.f32 %v4533, %v4534
        %v4536 = vand.u32 %v4535, 4294901760
        %4537 = vmatmul.mubr.f32.gmra.mxu0 %v4536
        %v4538 = vpop.f32.mrf.mxu0
        %v4539 = vadd.f32 0.0, %v4538
        %v4540 = vpop.f32.mrf.mxu0
        %v4541 = vadd.f32 0.0, %v4540
        %4542 = vmatprep.mubr.f32.mxu0 0.0
        %v4543 = vand.u32 %v269, 4294901760
        %v4544 = vsub.f32 %v269, %v4543
        %v4545 = vand.u32 %v4544, 4294901760
        %v4546 = vsub.f32 %v4544, %v4545
        %v4547 = vand.u32 %v4546, 4294901760
        %4548 = vmatmul.mubr.f32.gmra.mxu0 %v4547
        %v4549 = vpop.f32.mrf.mxu0
        %v4550 = vadd.f32 0.0, %v4549
        %v4551 = vpop.f32.mrf.mxu0
        %v4552 = vadd.f32 0.0, %v4551
        %4553 = vmatprep.mubr.f32.mxu0 0.0
        %v4554 = vand.u32 %v272, 4294901760
        %v4555 = vsub.f32 %v272, %v4554
        %v4556 = vand.u32 %v4555, 4294901760
        %v4557 = vsub.f32 %v4555, %v4556
        %v4558 = vand.u32 %v4557, 4294901760
        %4559 = vmatmul.mubr.f32.gmra.mxu0 %v4558
        %v4560 = vpop.f32.mrf.mxu0
        %v4561 = vadd.f32 0.0, %v4560
        %v4562 = vpop.f32.mrf.mxu0
        %v4563 = vadd.f32 0.0, %v4562
        %4564 = vmatprep.mubr.f32.mxu0 0.0
        %v4565 = vand.u32 %v275, 4294901760
        %v4566 = vsub.f32 %v275, %v4565
        %v4567 = vand.u32 %v4566, 4294901760
        %v4568 = vsub.f32 %v4566, %v4567
        %v4569 = vand.u32 %v4568, 4294901760
        %4570 = vmatmul.mubr.f32.gmra.mxu0 %v4569
        %v4571 = vpop.f32.mrf.mxu0
        %v4572 = vadd.f32 0.0, %v4571
        %v4573 = vpop.f32.mrf.mxu0
        %v4574 = vadd.f32 0.0, %v4573
        %4575 = vmatprep.mubr.f32.mxu0 0.0
        %v4576 = vand.u32 %v278, 4294901760
        %v4577 = vsub.f32 %v278, %v4576
        %v4578 = vand.u32 %v4577, 4294901760
        %v4579 = vsub.f32 %v4577, %v4578
        %v4580 = vand.u32 %v4579, 4294901760
        %4581 = vmatmul.mubr.f32.gmra.mxu0 %v4580
        %v4582 = vpop.f32.mrf.mxu0
        %v4583 = vadd.f32 0.0, %v4582
        %v4584 = vpop.f32.mrf.mxu0
        %v4585 = vadd.f32 0.0, %v4584
        %4586 = vmatprep.mubr.f32.mxu0 0.0
        %v4587 = vand.u32 %v281, 4294901760
        %v4588 = vsub.f32 %v281, %v4587
        %v4589 = vand.u32 %v4588, 4294901760
        %v4590 = vsub.f32 %v4588, %v4589
        %v4591 = vand.u32 %v4590, 4294901760
        %4592 = vmatmul.mubr.f32.gmra.mxu0 %v4591
        %v4593 = vpop.f32.mrf.mxu0
        %v4594 = vadd.f32 0.0, %v4593
        %v4595 = vpop.f32.mrf.mxu0
        %v4596 = vadd.f32 0.0, %v4595
        %4597 = vmatprep.mubr.f32.mxu0 0.0
        %v4598 = vand.u32 %v284, 4294901760
        %v4599 = vsub.f32 %v284, %v4598
        %v4600 = vand.u32 %v4599, 4294901760
        %v4601 = vsub.f32 %v4599, %v4600
        %v4602 = vand.u32 %v4601, 4294901760
        %4603 = vmatmul.mubr.f32.gmra.mxu0 %v4602
        %v4604 = vpop.f32.mrf.mxu0
        %v4605 = vadd.f32 0.0, %v4604
        %v4606 = vpop.f32.mrf.mxu0
        %v4607 = vadd.f32 0.0, %v4606
        %4608 = vmatprep.mubr.f32.mxu0 0.0
        %v4609 = vand.u32 %v287, 4294901760
        %v4610 = vsub.f32 %v287, %v4609
        %v4611 = vand.u32 %v4610, 4294901760
        %v4612 = vsub.f32 %v4610, %v4611
        %v4613 = vand.u32 %v4612, 4294901760
        %4614 = vmatmul.mubr.f32.gmra.mxu0 %v4613
        %v4615 = vpop.f32.mrf.mxu0
        %v4616 = vadd.f32 0.0, %v4615
        %v4617 = vpop.f32.mrf.mxu0
        %v4618 = vadd.f32 0.0, %v4617
        %4619 = vmatprep.mubr.f32.mxu0 0.0
        %v4620 = vand.u32 %v290, 4294901760
        %v4621 = vsub.f32 %v290, %v4620
        %v4622 = vand.u32 %v4621, 4294901760
        %v4623 = vsub.f32 %v4621, %v4622
        %v4624 = vand.u32 %v4623, 4294901760
        %4625 = vmatmul.mubr.f32.gmra.mxu0 %v4624
        %v4626 = vpop.f32.mrf.mxu0
        %v4627 = vadd.f32 0.0, %v4626
        %v4628 = vpop.f32.mrf.mxu0
        %v4629 = vadd.f32 0.0, %v4628
        %4630 = vmatprep.mubr.f32.mxu0 0.0
        %v4631 = vand.u32 %v293, 4294901760
        %v4632 = vsub.f32 %v293, %v4631
        %v4633 = vand.u32 %v4632, 4294901760
        %v4634 = vsub.f32 %v4632, %v4633
        %v4635 = vand.u32 %v4634, 4294901760
        %4636 = vmatmul.mubr.f32.gmra.mxu0 %v4635
        %v4637 = vpop.f32.mrf.mxu0
        %v4638 = vadd.f32 0.0, %v4637
        %v4639 = vpop.f32.mrf.mxu0
        %v4640 = vadd.f32 0.0, %v4639
        %4641 = vmatprep.mubr.f32.mxu0 0.0
        %v4642 = vand.u32 %v296, 4294901760
        %v4643 = vsub.f32 %v296, %v4642
        %v4644 = vand.u32 %v4643, 4294901760
        %v4645 = vsub.f32 %v4643, %v4644
        %v4646 = vand.u32 %v4645, 4294901760
        %4647 = vmatmul.mubr.f32.gmra.mxu0 %v4646
        %v4648 = vpop.f32.mrf.mxu0
        %v4649 = vadd.f32 0.0, %v4648
        %v4650 = vpop.f32.mrf.mxu0
        %v4651 = vadd.f32 0.0, %v4650
        %4652 = vmatprep.mubr.f32.mxu0 0.0
        %v4653 = vand.u32 %v299, 4294901760
        %v4654 = vsub.f32 %v299, %v4653
        %v4655 = vand.u32 %v4654, 4294901760
        %v4656 = vsub.f32 %v4654, %v4655
        %v4657 = vand.u32 %v4656, 4294901760
        %4658 = vmatmul.mubr.f32.gmra.mxu0 %v4657
        %v4659 = vpop.f32.mrf.mxu0
        %v4660 = vadd.f32 0.0, %v4659
        %v4661 = vpop.f32.mrf.mxu0
        %v4662 = vadd.f32 0.0, %v4661
        %4663 = vmatprep.mubr.f32.mxu0 0.0
        %v4664 = vand.u32 %v302, 4294901760
        %v4665 = vsub.f32 %v302, %v4664
        %v4666 = vand.u32 %v4665, 4294901760
        %v4667 = vsub.f32 %v4665, %v4666
        %v4668 = vand.u32 %v4667, 4294901760
        %4669 = vmatmul.mubr.f32.gmra.mxu0 %v4668
        %v4670 = vpop.f32.mrf.mxu0
        %v4671 = vadd.f32 0.0, %v4670
        %v4672 = vpop.f32.mrf.mxu0
        %v4673 = vadd.f32 0.0, %v4672
        %4674 = vmatprep.mubr.f32.mxu0 0.0
        %v4675 = vand.u32 %v305, 4294901760
        %v4676 = vsub.f32 %v305, %v4675
        %v4677 = vand.u32 %v4676, 4294901760
        %v4678 = vsub.f32 %v4676, %v4677
        %v4679 = vand.u32 %v4678, 4294901760
        %4680 = vmatmul.mubr.f32.gmra.mxu0 %v4679
        %v4681 = vpop.f32.mrf.mxu0
        %v4682 = vadd.f32 0.0, %v4681
        %v4683 = vpop.f32.mrf.mxu0
        %v4684 = vadd.f32 0.0, %v4683
        %4685 = vmatprep.mubr.f32.mxu0 0.0
        %v4686 = vand.u32 %v308, 4294901760
        %v4687 = vsub.f32 %v308, %v4686
        %v4688 = vand.u32 %v4687, 4294901760
        %v4689 = vsub.f32 %v4687, %v4688
        %v4690 = vand.u32 %v4689, 4294901760
        %4691 = vmatmul.mubr.f32.gmra.mxu0 %v4690
        %v4692 = vpop.f32.mrf.mxu0
        %v4693 = vadd.f32 0.0, %v4692
        %v4694 = vpop.f32.mrf.mxu0
        %v4695 = vadd.f32 0.0, %v4694
        %4696 = vdwg.mxu0
        %4697 = vmatprep.subr.mxu0 0.0
        %4698 = vmatpush1.msra.mxu0 0.0
        %4699 = vmatprep.subr.mxu0 0.0
        %4700 = vmatpush1.msra.mxu0 0.0
        %4701 = vmatprep.subr.mxu0 0.0
        %4702 = vmatpush1.msra.mxu0 0.0
        %4703 = vmatprep.subr.mxu0 0.0
        %4704 = vmatpush1.msra.mxu0 0.0
        %4705 = vmatprep.subr.mxu0 0.0
        %4706 = vmatpush1.msra.mxu0 0.0
        %4707 = vmatprep.subr.mxu0 0.0
        %4708 = vmatpush1.msra.mxu0 0.0
        %4709 = vmatprep.subr.mxu0 0.0
        %4710 = vmatpush1.msra.mxu0 0.0
        %4711 = vmatprep.subr.mxu0 0.0
        %4712 = vmatpush1.msra.mxu0 0.0
        %4713 = vmatprep.subr.mxu0 0.0
        %4714 = vmatpush1.msra.mxu0 0.0
        %4715 = vmatprep.subr.mxu0 0.0
        %4716 = vmatpush1.msra.mxu0 0.0
        %4717 = vmatprep.subr.mxu0 0.0
        %4718 = vmatpush1.msra.mxu0 0.0
        %4719 = vmatprep.subr.mxu0 0.0
        %4720 = vmatpush1.msra.mxu0 0.0
        %4721 = vmatprep.subr.mxu0 0.0
        %4722 = vmatpush1.msra.mxu0 0.0
        %4723 = vmatprep.subr.mxu0 0.0
        %4724 = vmatpush1.msra.mxu0 0.0
        %4725 = vmatprep.subr.mxu0 0.0
        %4726 = vmatpush1.msra.mxu0 0.0
        %v4727 = vand.u32 %v210, 4294901760
        %v4728 = vsub.f32 %v210, %v4727
        %v4729 = vand.u32 %v4728, 4294901760
        %v4730 = vsub.f32 %v4728, %v4729
        %v4731 = vand.u32 %v4730, 4294901760
        %4732 = vmatprep.subr.mxu0 %v4731
        %v4733 = vand.u32 %v209, 4294901760
        %v4734 = vsub.f32 %v209, %v4733
        %v4735 = vand.u32 %v4734, 4294901760
        %v4736 = vsub.f32 %v4734, %v4735
        %v4737 = vand.u32 %v4736, 4294901760
        %4738 = vmatpush1.msra.mxu0 %v4737
        %4739 = vmatprep.subr.mxu0 0.0
        %4740 = vmatpush2.msra.mxu0 0.0
        %4741 = vmatprep.subr.mxu0 0.0
        %4742 = vmatpush2.msra.mxu0 0.0
        %4743 = vmatprep.subr.mxu0 0.0
        %4744 = vmatpush2.msra.mxu0 0.0
        %4745 = vmatprep.subr.mxu0 0.0
        %4746 = vmatpush2.msra.mxu0 0.0
        %4747 = vmatprep.subr.mxu0 0.0
        %4748 = vmatpush2.msra.mxu0 0.0
        %4749 = vmatprep.subr.mxu0 0.0
        %4750 = vmatpush2.msra.mxu0 0.0
        %4751 = vmatprep.subr.mxu0 0.0
        %4752 = vmatpush2.msra.mxu0 0.0
        %4753 = vmatprep.subr.mxu0 0.0
        %4754 = vmatpush2.msra.mxu0 0.0
        %4755 = vmatprep.subr.mxu0 0.0
        %4756 = vmatpush2.msra.mxu0 0.0
        %4757 = vmatprep.subr.mxu0 0.0
        %4758 = vmatpush2.msra.mxu0 0.0
        %4759 = vmatprep.subr.mxu0 0.0
        %4760 = vmatpush2.msra.mxu0 0.0
        %4761 = vmatprep.subr.mxu0 0.0
        %4762 = vmatpush2.msra.mxu0 0.0
        %4763 = vmatprep.subr.mxu0 0.0
        %4764 = vmatpush2.msra.mxu0 0.0
        %4765 = vmatprep.subr.mxu0 0.0
        %4766 = vmatpush2.msra.mxu0 0.0
        %4767 = vmatprep.subr.mxu0 0.0
        %4768 = vmatpush2.msra.mxu0 0.0
        %4769 = vmatprep.subr.mxu0 0.0
        %4770 = vmatpush2.msra.mxu0 0.0
        %4771 = vmatprep.mubr.f32.mxu0 0.0
        %v4772 = vand.u32 %v215, 4294901760
        %4773 = vmatmul.mubr.f32.gmra.mxu0 %v4772
        %v4774 = vpop.f32.mrf.mxu0
        %v4775 = vadd.f32 %v4352, %v4774
        %v4776 = vpop.f32.mrf.mxu0
        %v4777 = vadd.f32 %v4354, %v4776
        %4778 = vmatprep.mubr.f32.mxu0 0.0
        %v4779 = vand.u32 %v218, 4294901760
        %4780 = vmatmul.mubr.f32.gmra.mxu0 %v4779
        %v4781 = vpop.f32.mrf.mxu0
        %v4782 = vadd.f32 %v4363, %v4781
        %v4783 = vpop.f32.mrf.mxu0
        %v4784 = vadd.f32 %v4365, %v4783
        %4785 = vmatprep.mubr.f32.mxu0 0.0
        %v4786 = vand.u32 %v221, 4294901760
        %4787 = vmatmul.mubr.f32.gmra.mxu0 %v4786
        %v4788 = vpop.f32.mrf.mxu0
        %v4789 = vadd.f32 %v4374, %v4788
        %v4790 = vpop.f32.mrf.mxu0
        %v4791 = vadd.f32 %v4376, %v4790
        %4792 = vmatprep.mubr.f32.mxu0 0.0
        %v4793 = vand.u32 %v224, 4294901760
        %4794 = vmatmul.mubr.f32.gmra.mxu0 %v4793
        %v4795 = vpop.f32.mrf.mxu0
        %v4796 = vadd.f32 %v4385, %v4795
        %v4797 = vpop.f32.mrf.mxu0
        %v4798 = vadd.f32 %v4387, %v4797
        %4799 = vmatprep.mubr.f32.mxu0 0.0
        %v4800 = vand.u32 %v227, 4294901760
        %4801 = vmatmul.mubr.f32.gmra.mxu0 %v4800
        %v4802 = vpop.f32.mrf.mxu0
        %v4803 = vadd.f32 %v4396, %v4802
        %v4804 = vpop.f32.mrf.mxu0
        %v4805 = vadd.f32 %v4398, %v4804
        %4806 = vmatprep.mubr.f32.mxu0 0.0
        %v4807 = vand.u32 %v230, 4294901760
        %4808 = vmatmul.mubr.f32.gmra.mxu0 %v4807
        %v4809 = vpop.f32.mrf.mxu0
        %v4810 = vadd.f32 %v4407, %v4809
        %v4811 = vpop.f32.mrf.mxu0
        %v4812 = vadd.f32 %v4409, %v4811
        %4813 = vmatprep.mubr.f32.mxu0 0.0
        %v4814 = vand.u32 %v233, 4294901760
        %4815 = vmatmul.mubr.f32.gmra.mxu0 %v4814
        %v4816 = vpop.f32.mrf.mxu0
        %v4817 = vadd.f32 %v4418, %v4816
        %v4818 = vpop.f32.mrf.mxu0
        %v4819 = vadd.f32 %v4420, %v4818
        %4820 = vmatprep.mubr.f32.mxu0 0.0
        %v4821 = vand.u32 %v236, 4294901760
        %4822 = vmatmul.mubr.f32.gmra.mxu0 %v4821
        %v4823 = vpop.f32.mrf.mxu0
        %v4824 = vadd.f32 %v4429, %v4823
        %v4825 = vpop.f32.mrf.mxu0
        %v4826 = vadd.f32 %v4431, %v4825
        %4827 = vmatprep.mubr.f32.mxu0 0.0
        %v4828 = vand.u32 %v239, 4294901760
        %4829 = vmatmul.mubr.f32.gmra.mxu0 %v4828
        %v4830 = vpop.f32.mrf.mxu0
        %v4831 = vadd.f32 %v4440, %v4830
        %v4832 = vpop.f32.mrf.mxu0
        %v4833 = vadd.f32 %v4442, %v4832
        %4834 = vmatprep.mubr.f32.mxu0 0.0
        %v4835 = vand.u32 %v242, 4294901760
        %4836 = vmatmul.mubr.f32.gmra.mxu0 %v4835
        %v4837 = vpop.f32.mrf.mxu0
        %v4838 = vadd.f32 %v4451, %v4837
        %v4839 = vpop.f32.mrf.mxu0
        %v4840 = vadd.f32 %v4453, %v4839
        %4841 = vmatprep.mubr.f32.mxu0 0.0
        %v4842 = vand.u32 %v245, 4294901760
        %4843 = vmatmul.mubr.f32.gmra.mxu0 %v4842
        %v4844 = vpop.f32.mrf.mxu0
        %v4845 = vadd.f32 %v4462, %v4844
        %v4846 = vpop.f32.mrf.mxu0
        %v4847 = vadd.f32 %v4464, %v4846
        %4848 = vmatprep.mubr.f32.mxu0 0.0
        %v4849 = vand.u32 %v248, 4294901760
        %4850 = vmatmul.mubr.f32.gmra.mxu0 %v4849
        %v4851 = vpop.f32.mrf.mxu0
        %v4852 = vadd.f32 %v4473, %v4851
        %v4853 = vpop.f32.mrf.mxu0
        %v4854 = vadd.f32 %v4475, %v4853
        %4855 = vmatprep.mubr.f32.mxu0 0.0
        %v4856 = vand.u32 %v251, 4294901760
        %4857 = vmatmul.mubr.f32.gmra.mxu0 %v4856
        %v4858 = vpop.f32.mrf.mxu0
        %v4859 = vadd.f32 %v4484, %v4858
        %v4860 = vpop.f32.mrf.mxu0
        %v4861 = vadd.f32 %v4486, %v4860
        %4862 = vmatprep.mubr.f32.mxu0 0.0
        %v4863 = vand.u32 %v254, 4294901760
        %4864 = vmatmul.mubr.f32.gmra.mxu0 %v4863
        %v4865 = vpop.f32.mrf.mxu0
        %v4866 = vadd.f32 %v4495, %v4865
        %v4867 = vpop.f32.mrf.mxu0
        %v4868 = vadd.f32 %v4497, %v4867
        %4869 = vmatprep.mubr.f32.mxu0 0.0
        %v4870 = vand.u32 %v257, 4294901760
        %4871 = vmatmul.mubr.f32.gmra.mxu0 %v4870
        %v4872 = vpop.f32.mrf.mxu0
        %v4873 = vadd.f32 %v4506, %v4872
        %v4874 = vpop.f32.mrf.mxu0
        %v4875 = vadd.f32 %v4508, %v4874
        %4876 = vmatprep.mubr.f32.mxu0 0.0
        %v4877 = vand.u32 %v260, 4294901760
        %4878 = vmatmul.mubr.f32.gmra.mxu0 %v4877
        %v4879 = vpop.f32.mrf.mxu0
        %v4880 = vadd.f32 %v4517, %v4879
        %v4881 = vpop.f32.mrf.mxu0
        %v4882 = vadd.f32 %v4519, %v4881
        %4883 = vmatprep.mubr.f32.mxu0 0.0
        %v4884 = vand.u32 %v263, 4294901760
        %4885 = vmatmul.mubr.f32.gmra.mxu0 %v4884
        %v4886 = vpop.f32.mrf.mxu0
        %v4887 = vadd.f32 %v4528, %v4886
        %v4888 = vpop.f32.mrf.mxu0
        %v4889 = vadd.f32 %v4530, %v4888
        %4890 = vmatprep.mubr.f32.mxu0 0.0
        %v4891 = vand.u32 %v266, 4294901760
        %4892 = vmatmul.mubr.f32.gmra.mxu0 %v4891
        %v4893 = vpop.f32.mrf.mxu0
        %v4894 = vadd.f32 %v4539, %v4893
        %v4895 = vpop.f32.mrf.mxu0
        %v4896 = vadd.f32 %v4541, %v4895
        %4897 = vmatprep.mubr.f32.mxu0 0.0
        %v4898 = vand.u32 %v269, 4294901760
        %4899 = vmatmul.mubr.f32.gmra.mxu0 %v4898
        %v4900 = vpop.f32.mrf.mxu0
        %v4901 = vadd.f32 %v4550, %v4900
        %v4902 = vpop.f32.mrf.mxu0
        %v4903 = vadd.f32 %v4552, %v4902
        %4904 = vmatprep.mubr.f32.mxu0 0.0
        %v4905 = vand.u32 %v272, 4294901760
        %4906 = vmatmul.mubr.f32.gmra.mxu0 %v4905
        %v4907 = vpop.f32.mrf.mxu0
        %v4908 = vadd.f32 %v4561, %v4907
        %v4909 = vpop.f32.mrf.mxu0
        %v4910 = vadd.f32 %v4563, %v4909
        %4911 = vmatprep.mubr.f32.mxu0 0.0
        %v4912 = vand.u32 %v275, 4294901760
        %4913 = vmatmul.mubr.f32.gmra.mxu0 %v4912
        %v4914 = vpop.f32.mrf.mxu0
        %v4915 = vadd.f32 %v4572, %v4914
        %v4916 = vpop.f32.mrf.mxu0
        %v4917 = vadd.f32 %v4574, %v4916
        %4918 = vmatprep.mubr.f32.mxu0 0.0
        %v4919 = vand.u32 %v278, 4294901760
        %4920 = vmatmul.mubr.f32.gmra.mxu0 %v4919
        %v4921 = vpop.f32.mrf.mxu0
        %v4922 = vadd.f32 %v4583, %v4921
        %v4923 = vpop.f32.mrf.mxu0
        %v4924 = vadd.f32 %v4585, %v4923
        %4925 = vmatprep.mubr.f32.mxu0 0.0
        %v4926 = vand.u32 %v281, 4294901760
        %4927 = vmatmul.mubr.f32.gmra.mxu0 %v4926
        %v4928 = vpop.f32.mrf.mxu0
        %v4929 = vadd.f32 %v4594, %v4928
        %v4930 = vpop.f32.mrf.mxu0
        %v4931 = vadd.f32 %v4596, %v4930
        %4932 = vmatprep.mubr.f32.mxu0 0.0
        %v4933 = vand.u32 %v284, 4294901760
        %4934 = vmatmul.mubr.f32.gmra.mxu0 %v4933
        %v4935 = vpop.f32.mrf.mxu0
        %v4936 = vadd.f32 %v4605, %v4935
        %v4937 = vpop.f32.mrf.mxu0
        %v4938 = vadd.f32 %v4607, %v4937
        %4939 = vmatprep.mubr.f32.mxu0 0.0
        %v4940 = vand.u32 %v287, 4294901760
        %4941 = vmatmul.mubr.f32.gmra.mxu0 %v4940
        %v4942 = vpop.f32.mrf.mxu0
        %v4943 = vadd.f32 %v4616, %v4942
        %v4944 = vpop.f32.mrf.mxu0
        %v4945 = vadd.f32 %v4618, %v4944
        %4946 = vmatprep.mubr.f32.mxu0 0.0
        %v4947 = vand.u32 %v290, 4294901760
        %4948 = vmatmul.mubr.f32.gmra.mxu0 %v4947
        %v4949 = vpop.f32.mrf.mxu0
        %v4950 = vadd.f32 %v4627, %v4949
        %v4951 = vpop.f32.mrf.mxu0
        %v4952 = vadd.f32 %v4629, %v4951
        %4953 = vmatprep.mubr.f32.mxu0 0.0
        %v4954 = vand.u32 %v293, 4294901760
        %4955 = vmatmul.mubr.f32.gmra.mxu0 %v4954
        %v4956 = vpop.f32.mrf.mxu0
        %v4957 = vadd.f32 %v4638, %v4956
        %v4958 = vpop.f32.mrf.mxu0
        %v4959 = vadd.f32 %v4640, %v4958
        %4960 = vmatprep.mubr.f32.mxu0 0.0
        %v4961 = vand.u32 %v296, 4294901760
        %4962 = vmatmul.mubr.f32.gmra.mxu0 %v4961
        %v4963 = vpop.f32.mrf.mxu0
        %v4964 = vadd.f32 %v4649, %v4963
        %v4965 = vpop.f32.mrf.mxu0
        %v4966 = vadd.f32 %v4651, %v4965
        %4967 = vmatprep.mubr.f32.mxu0 0.0
        %v4968 = vand.u32 %v299, 4294901760
        %4969 = vmatmul.mubr.f32.gmra.mxu0 %v4968
        %v4970 = vpop.f32.mrf.mxu0
        %v4971 = vadd.f32 %v4660, %v4970
        %v4972 = vpop.f32.mrf.mxu0
        %v4973 = vadd.f32 %v4662, %v4972
        %4974 = vmatprep.mubr.f32.mxu0 0.0
        %v4975 = vand.u32 %v302, 4294901760
        %4976 = vmatmul.mubr.f32.gmra.mxu0 %v4975
        %v4977 = vpop.f32.mrf.mxu0
        %v4978 = vadd.f32 %v4671, %v4977
        %v4979 = vpop.f32.mrf.mxu0
        %v4980 = vadd.f32 %v4673, %v4979
        %4981 = vmatprep.mubr.f32.mxu0 0.0
        %v4982 = vand.u32 %v305, 4294901760
        %4983 = vmatmul.mubr.f32.gmra.mxu0 %v4982
        %v4984 = vpop.f32.mrf.mxu0
        %v4985 = vadd.f32 %v4682, %v4984
        %v4986 = vpop.f32.mrf.mxu0
        %v4987 = vadd.f32 %v4684, %v4986
        %4988 = vmatprep.mubr.f32.mxu0 0.0
        %v4989 = vand.u32 %v308, 4294901760
        %4990 = vmatmul.mubr.f32.gmra.mxu0 %v4989
        %v4991 = vpop.f32.mrf.mxu0
        %v4992 = vadd.f32 %v4693, %v4991
        %v4993 = vpop.f32.mrf.mxu0
        %v4994 = vadd.f32 %v4695, %v4993
        %4995 = vdwg.mxu0
        %4996 = vmatprep.subr.mxu0 0.0
        %4997 = vmatpush1.msra.mxu0 0.0
        %4998 = vmatprep.subr.mxu0 0.0
        %4999 = vmatpush1.msra.mxu0 0.0
        %5000 = vmatprep.subr.mxu0 0.0
        %5001 = vmatpush1.msra.mxu0 0.0
        %5002 = vmatprep.subr.mxu0 0.0
        %5003 = vmatpush1.msra.mxu0 0.0
        %5004 = vmatprep.subr.mxu0 0.0
        %5005 = vmatpush1.msra.mxu0 0.0
        %5006 = vmatprep.subr.mxu0 0.0
        %5007 = vmatpush1.msra.mxu0 0.0
        %5008 = vmatprep.subr.mxu0 0.0
        %5009 = vmatpush1.msra.mxu0 0.0
        %5010 = vmatprep.subr.mxu0 0.0
        %5011 = vmatpush1.msra.mxu0 0.0
        %5012 = vmatprep.subr.mxu0 0.0
        %5013 = vmatpush1.msra.mxu0 0.0
        %5014 = vmatprep.subr.mxu0 0.0
        %5015 = vmatpush1.msra.mxu0 0.0
        %5016 = vmatprep.subr.mxu0 0.0
        %5017 = vmatpush1.msra.mxu0 0.0
        %5018 = vmatprep.subr.mxu0 0.0
        %5019 = vmatpush1.msra.mxu0 0.0
        %5020 = vmatprep.subr.mxu0 0.0
        %5021 = vmatpush1.msra.mxu0 0.0
        %5022 = vmatprep.subr.mxu0 0.0
        %5023 = vmatpush1.msra.mxu0 0.0
        %5024 = vmatprep.subr.mxu0 0.0
        %5025 = vmatpush1.msra.mxu0 0.0
        %v5026 = vand.u32 %v210, 4294901760
        %v5027 = vsub.f32 %v210, %v5026
        %5028 = vmatprep.subr.mxu0 %v5027
        %v5029 = vand.u32 %v209, 4294901760
        %v5030 = vsub.f32 %v209, %v5029
        %5031 = vmatpush1.msra.mxu0 %v5030
        %5032 = vmatprep.subr.mxu0 0.0
        %5033 = vmatpush2.msra.mxu0 0.0
        %5034 = vmatprep.subr.mxu0 0.0
        %5035 = vmatpush2.msra.mxu0 0.0
        %5036 = vmatprep.subr.mxu0 0.0
        %5037 = vmatpush2.msra.mxu0 0.0
        %5038 = vmatprep.subr.mxu0 0.0
        %5039 = vmatpush2.msra.mxu0 0.0
        %5040 = vmatprep.subr.mxu0 0.0
        %5041 = vmatpush2.msra.mxu0 0.0
        %5042 = vmatprep.subr.mxu0 0.0
        %5043 = vmatpush2.msra.mxu0 0.0
        %5044 = vmatprep.subr.mxu0 0.0
        %5045 = vmatpush2.msra.mxu0 0.0
        %5046 = vmatprep.subr.mxu0 0.0
        %5047 = vmatpush2.msra.mxu0 0.0
        %5048 = vmatprep.subr.mxu0 0.0
        %5049 = vmatpush2.msra.mxu0 0.0
        %5050 = vmatprep.subr.mxu0 0.0
        %5051 = vmatpush2.msra.mxu0 0.0
        %5052 = vmatprep.subr.mxu0 0.0
        %5053 = vmatpush2.msra.mxu0 0.0
        %5054 = vmatprep.subr.mxu0 0.0
        %5055 = vmatpush2.msra.mxu0 0.0
        %5056 = vmatprep.subr.mxu0 0.0
        %5057 = vmatpush2.msra.mxu0 0.0
        %5058 = vmatprep.subr.mxu0 0.0
        %5059 = vmatpush2.msra.mxu0 0.0
        %5060 = vmatprep.subr.mxu0 0.0
        %5061 = vmatpush2.msra.mxu0 0.0
        %5062 = vmatprep.subr.mxu0 0.0
        %5063 = vmatpush2.msra.mxu0 0.0
        %5064 = vmatprep.mubr.f32.mxu0 0.0
        %v5065 = vand.u32 %v215, 4294901760
        %v5066 = vsub.f32 %v215, %v5065
        %5067 = vmatmul.mubr.f32.gmra.mxu0 %v5066
        %v5068 = vpop.f32.mrf.mxu0
        %v5069 = vadd.f32 %v4775, %v5068
        %v5070 = vpop.f32.mrf.mxu0
        %v5071 = vadd.f32 %v4777, %v5070
        %5072 = vmatprep.mubr.f32.mxu0 0.0
        %v5073 = vand.u32 %v218, 4294901760
        %v5074 = vsub.f32 %v218, %v5073
        %5075 = vmatmul.mubr.f32.gmra.mxu0 %v5074
        %v5076 = vpop.f32.mrf.mxu0
        %v5077 = vadd.f32 %v4782, %v5076
        %v5078 = vpop.f32.mrf.mxu0
        %v5079 = vadd.f32 %v4784, %v5078
        %5080 = vmatprep.mubr.f32.mxu0 0.0
        %v5081 = vand.u32 %v221, 4294901760
        %v5082 = vsub.f32 %v221, %v5081
        %5083 = vmatmul.mubr.f32.gmra.mxu0 %v5082
        %v5084 = vpop.f32.mrf.mxu0
        %v5085 = vadd.f32 %v4789, %v5084
        %v5086 = vpop.f32.mrf.mxu0
        %v5087 = vadd.f32 %v4791, %v5086
        %5088 = vmatprep.mubr.f32.mxu0 0.0
        %v5089 = vand.u32 %v224, 4294901760
        %v5090 = vsub.f32 %v224, %v5089
        %5091 = vmatmul.mubr.f32.gmra.mxu0 %v5090
        %v5092 = vpop.f32.mrf.mxu0
        %v5093 = vadd.f32 %v4796, %v5092
        %v5094 = vpop.f32.mrf.mxu0
        %v5095 = vadd.f32 %v4798, %v5094
        %5096 = vmatprep.mubr.f32.mxu0 0.0
        %v5097 = vand.u32 %v227, 4294901760
        %v5098 = vsub.f32 %v227, %v5097
        %5099 = vmatmul.mubr.f32.gmra.mxu0 %v5098
        %v5100 = vpop.f32.mrf.mxu0
        %v5101 = vadd.f32 %v4803, %v5100
        %v5102 = vpop.f32.mrf.mxu0
        %v5103 = vadd.f32 %v4805, %v5102
        %5104 = vmatprep.mubr.f32.mxu0 0.0
        %v5105 = vand.u32 %v230, 4294901760
        %v5106 = vsub.f32 %v230, %v5105
        %5107 = vmatmul.mubr.f32.gmra.mxu0 %v5106
        %v5108 = vpop.f32.mrf.mxu0
        %v5109 = vadd.f32 %v4810, %v5108
        %v5110 = vpop.f32.mrf.mxu0
        %v5111 = vadd.f32 %v4812, %v5110
        %5112 = vmatprep.mubr.f32.mxu0 0.0
        %v5113 = vand.u32 %v233, 4294901760
        %v5114 = vsub.f32 %v233, %v5113
        %5115 = vmatmul.mubr.f32.gmra.mxu0 %v5114
        %v5116 = vpop.f32.mrf.mxu0
        %v5117 = vadd.f32 %v4817, %v5116
        %v5118 = vpop.f32.mrf.mxu0
        %v5119 = vadd.f32 %v4819, %v5118
        %5120 = vmatprep.mubr.f32.mxu0 0.0
        %v5121 = vand.u32 %v236, 4294901760
        %v5122 = vsub.f32 %v236, %v5121
        %5123 = vmatmul.mubr.f32.gmra.mxu0 %v5122
        %v5124 = vpop.f32.mrf.mxu0
        %v5125 = vadd.f32 %v4824, %v5124
        %v5126 = vpop.f32.mrf.mxu0
        %v5127 = vadd.f32 %v4826, %v5126
        %5128 = vmatprep.mubr.f32.mxu0 0.0
        %v5129 = vand.u32 %v239, 4294901760
        %v5130 = vsub.f32 %v239, %v5129
        %5131 = vmatmul.mubr.f32.gmra.mxu0 %v5130
        %v5132 = vpop.f32.mrf.mxu0
        %v5133 = vadd.f32 %v4831, %v5132
        %v5134 = vpop.f32.mrf.mxu0
        %v5135 = vadd.f32 %v4833, %v5134
        %5136 = vmatprep.mubr.f32.mxu0 0.0
        %v5137 = vand.u32 %v242, 4294901760
        %v5138 = vsub.f32 %v242, %v5137
        %5139 = vmatmul.mubr.f32.gmra.mxu0 %v5138
        %v5140 = vpop.f32.mrf.mxu0
        %v5141 = vadd.f32 %v4838, %v5140
        %v5142 = vpop.f32.mrf.mxu0
        %v5143 = vadd.f32 %v4840, %v5142
        %5144 = vmatprep.mubr.f32.mxu0 0.0
        %v5145 = vand.u32 %v245, 4294901760
        %v5146 = vsub.f32 %v245, %v5145
        %5147 = vmatmul.mubr.f32.gmra.mxu0 %v5146
        %v5148 = vpop.f32.mrf.mxu0
        %v5149 = vadd.f32 %v4845, %v5148
        %v5150 = vpop.f32.mrf.mxu0
        %v5151 = vadd.f32 %v4847, %v5150
        %5152 = vmatprep.mubr.f32.mxu0 0.0
        %v5153 = vand.u32 %v248, 4294901760
        %v5154 = vsub.f32 %v248, %v5153
        %5155 = vmatmul.mubr.f32.gmra.mxu0 %v5154
        %v5156 = vpop.f32.mrf.mxu0
        %v5157 = vadd.f32 %v4852, %v5156
        %v5158 = vpop.f32.mrf.mxu0
        %v5159 = vadd.f32 %v4854, %v5158
        %5160 = vmatprep.mubr.f32.mxu0 0.0
        %v5161 = vand.u32 %v251, 4294901760
        %v5162 = vsub.f32 %v251, %v5161
        %5163 = vmatmul.mubr.f32.gmra.mxu0 %v5162
        %v5164 = vpop.f32.mrf.mxu0
        %v5165 = vadd.f32 %v4859, %v5164
        %v5166 = vpop.f32.mrf.mxu0
        %v5167 = vadd.f32 %v4861, %v5166
        %5168 = vmatprep.mubr.f32.mxu0 0.0
        %v5169 = vand.u32 %v254, 4294901760
        %v5170 = vsub.f32 %v254, %v5169
        %5171 = vmatmul.mubr.f32.gmra.mxu0 %v5170
        %v5172 = vpop.f32.mrf.mxu0
        %v5173 = vadd.f32 %v4866, %v5172
        %v5174 = vpop.f32.mrf.mxu0
        %v5175 = vadd.f32 %v4868, %v5174
        %5176 = vmatprep.mubr.f32.mxu0 0.0
        %v5177 = vand.u32 %v257, 4294901760
        %v5178 = vsub.f32 %v257, %v5177
        %5179 = vmatmul.mubr.f32.gmra.mxu0 %v5178
        %v5180 = vpop.f32.mrf.mxu0
        %v5181 = vadd.f32 %v4873, %v5180
        %v5182 = vpop.f32.mrf.mxu0
        %v5183 = vadd.f32 %v4875, %v5182
        %5184 = vmatprep.mubr.f32.mxu0 0.0
        %v5185 = vand.u32 %v260, 4294901760
        %v5186 = vsub.f32 %v260, %v5185
        %5187 = vmatmul.mubr.f32.gmra.mxu0 %v5186
        %v5188 = vpop.f32.mrf.mxu0
        %v5189 = vadd.f32 %v4880, %v5188
        %v5190 = vpop.f32.mrf.mxu0
        %v5191 = vadd.f32 %v4882, %v5190
        %5192 = vmatprep.mubr.f32.mxu0 0.0
        %v5193 = vand.u32 %v263, 4294901760
        %v5194 = vsub.f32 %v263, %v5193
        %5195 = vmatmul.mubr.f32.gmra.mxu0 %v5194
        %v5196 = vpop.f32.mrf.mxu0
        %v5197 = vadd.f32 %v4887, %v5196
        %v5198 = vpop.f32.mrf.mxu0
        %v5199 = vadd.f32 %v4889, %v5198
        %5200 = vmatprep.mubr.f32.mxu0 0.0
        %v5201 = vand.u32 %v266, 4294901760
        %v5202 = vsub.f32 %v266, %v5201
        %5203 = vmatmul.mubr.f32.gmra.mxu0 %v5202
        %v5204 = vpop.f32.mrf.mxu0
        %v5205 = vadd.f32 %v4894, %v5204
        %v5206 = vpop.f32.mrf.mxu0
        %v5207 = vadd.f32 %v4896, %v5206
        %5208 = vmatprep.mubr.f32.mxu0 0.0
        %v5209 = vand.u32 %v269, 4294901760
        %v5210 = vsub.f32 %v269, %v5209
        %5211 = vmatmul.mubr.f32.gmra.mxu0 %v5210
        %v5212 = vpop.f32.mrf.mxu0
        %v5213 = vadd.f32 %v4901, %v5212
        %v5214 = vpop.f32.mrf.mxu0
        %v5215 = vadd.f32 %v4903, %v5214
        %5216 = vmatprep.mubr.f32.mxu0 0.0
        %v5217 = vand.u32 %v272, 4294901760
        %v5218 = vsub.f32 %v272, %v5217
        %5219 = vmatmul.mubr.f32.gmra.mxu0 %v5218
        %v5220 = vpop.f32.mrf.mxu0
        %v5221 = vadd.f32 %v4908, %v5220
        %v5222 = vpop.f32.mrf.mxu0
        %v5223 = vadd.f32 %v4910, %v5222
        %5224 = vmatprep.mubr.f32.mxu0 0.0
        %v5225 = vand.u32 %v275, 4294901760
        %v5226 = vsub.f32 %v275, %v5225
        %5227 = vmatmul.mubr.f32.gmra.mxu0 %v5226
        %v5228 = vpop.f32.mrf.mxu0
        %v5229 = vadd.f32 %v4915, %v5228
        %v5230 = vpop.f32.mrf.mxu0
        %v5231 = vadd.f32 %v4917, %v5230
        %5232 = vmatprep.mubr.f32.mxu0 0.0
        %v5233 = vand.u32 %v278, 4294901760
        %v5234 = vsub.f32 %v278, %v5233
        %5235 = vmatmul.mubr.f32.gmra.mxu0 %v5234
        %v5236 = vpop.f32.mrf.mxu0
        %v5237 = vadd.f32 %v4922, %v5236
        %v5238 = vpop.f32.mrf.mxu0
        %v5239 = vadd.f32 %v4924, %v5238
        %5240 = vmatprep.mubr.f32.mxu0 0.0
        %v5241 = vand.u32 %v281, 4294901760
        %v5242 = vsub.f32 %v281, %v5241
        %5243 = vmatmul.mubr.f32.gmra.mxu0 %v5242
        %v5244 = vpop.f32.mrf.mxu0
        %v5245 = vadd.f32 %v4929, %v5244
        %v5246 = vpop.f32.mrf.mxu0
        %v5247 = vadd.f32 %v4931, %v5246
        %5248 = vmatprep.mubr.f32.mxu0 0.0
        %v5249 = vand.u32 %v284, 4294901760
        %v5250 = vsub.f32 %v284, %v5249
        %5251 = vmatmul.mubr.f32.gmra.mxu0 %v5250
        %v5252 = vpop.f32.mrf.mxu0
        %v5253 = vadd.f32 %v4936, %v5252
        %v5254 = vpop.f32.mrf.mxu0
        %v5255 = vadd.f32 %v4938, %v5254
        %5256 = vmatprep.mubr.f32.mxu0 0.0
        %v5257 = vand.u32 %v287, 4294901760
        %v5258 = vsub.f32 %v287, %v5257
        %5259 = vmatmul.mubr.f32.gmra.mxu0 %v5258
        %v5260 = vpop.f32.mrf.mxu0
        %v5261 = vadd.f32 %v4943, %v5260
        %v5262 = vpop.f32.mrf.mxu0
        %v5263 = vadd.f32 %v4945, %v5262
        %5264 = vmatprep.mubr.f32.mxu0 0.0
        %v5265 = vand.u32 %v290, 4294901760
        %v5266 = vsub.f32 %v290, %v5265
        %5267 = vmatmul.mubr.f32.gmra.mxu0 %v5266
        %v5268 = vpop.f32.mrf.mxu0
        %v5269 = vadd.f32 %v4950, %v5268
        %v5270 = vpop.f32.mrf.mxu0
        %v5271 = vadd.f32 %v4952, %v5270
        %5272 = vmatprep.mubr.f32.mxu0 0.0
        %v5273 = vand.u32 %v293, 4294901760
        %v5274 = vsub.f32 %v293, %v5273
        %5275 = vmatmul.mubr.f32.gmra.mxu0 %v5274
        %v5276 = vpop.f32.mrf.mxu0
        %v5277 = vadd.f32 %v4957, %v5276
        %v5278 = vpop.f32.mrf.mxu0
        %v5279 = vadd.f32 %v4959, %v5278
        %5280 = vmatprep.mubr.f32.mxu0 0.0
        %v5281 = vand.u32 %v296, 4294901760
        %v5282 = vsub.f32 %v296, %v5281
        %5283 = vmatmul.mubr.f32.gmra.mxu0 %v5282
        %v5284 = vpop.f32.mrf.mxu0
        %v5285 = vadd.f32 %v4964, %v5284
        %v5286 = vpop.f32.mrf.mxu0
        %v5287 = vadd.f32 %v4966, %v5286
        %5288 = vmatprep.mubr.f32.mxu0 0.0
        %v5289 = vand.u32 %v299, 4294901760
        %v5290 = vsub.f32 %v299, %v5289
        %5291 = vmatmul.mubr.f32.gmra.mxu0 %v5290
        %v5292 = vpop.f32.mrf.mxu0
        %v5293 = vadd.f32 %v4971, %v5292
        %v5294 = vpop.f32.mrf.mxu0
        %v5295 = vadd.f32 %v4973, %v5294
        %5296 = vmatprep.mubr.f32.mxu0 0.0
        %v5297 = vand.u32 %v302, 4294901760
        %v5298 = vsub.f32 %v302, %v5297
        %5299 = vmatmul.mubr.f32.gmra.mxu0 %v5298
        %v5300 = vpop.f32.mrf.mxu0
        %v5301 = vadd.f32 %v4978, %v5300
        %v5302 = vpop.f32.mrf.mxu0
        %v5303 = vadd.f32 %v4980, %v5302
        %5304 = vmatprep.mubr.f32.mxu0 0.0
        %v5305 = vand.u32 %v305, 4294901760
        %v5306 = vsub.f32 %v305, %v5305
        %5307 = vmatmul.mubr.f32.gmra.mxu0 %v5306
        %v5308 = vpop.f32.mrf.mxu0
        %v5309 = vadd.f32 %v4985, %v5308
        %v5310 = vpop.f32.mrf.mxu0
        %v5311 = vadd.f32 %v4987, %v5310
        %5312 = vmatprep.mubr.f32.mxu0 0.0
        %v5313 = vand.u32 %v308, 4294901760
        %v5314 = vsub.f32 %v308, %v5313
        %5315 = vmatmul.mubr.f32.gmra.mxu0 %v5314
        %v5316 = vpop.f32.mrf.mxu0
        %v5317 = vadd.f32 %v4992, %v5316
        %v5318 = vpop.f32.mrf.mxu0
        %v5319 = vadd.f32 %v4994, %v5318
        %5320 = vdwg.mxu0
        %5321 = vmatprep.subr.mxu0 0.0
        %5322 = vmatpush1.msra.mxu0 0.0
        %5323 = vmatprep.subr.mxu0 0.0
        %5324 = vmatpush1.msra.mxu0 0.0
        %5325 = vmatprep.subr.mxu0 0.0
        %5326 = vmatpush1.msra.mxu0 0.0
        %5327 = vmatprep.subr.mxu0 0.0
        %5328 = vmatpush1.msra.mxu0 0.0
        %5329 = vmatprep.subr.mxu0 0.0
        %5330 = vmatpush1.msra.mxu0 0.0
        %5331 = vmatprep.subr.mxu0 0.0
        %5332 = vmatpush1.msra.mxu0 0.0
        %5333 = vmatprep.subr.mxu0 0.0
        %5334 = vmatpush1.msra.mxu0 0.0
        %5335 = vmatprep.subr.mxu0 0.0
        %5336 = vmatpush1.msra.mxu0 0.0
        %5337 = vmatprep.subr.mxu0 0.0
        %5338 = vmatpush1.msra.mxu0 0.0
        %5339 = vmatprep.subr.mxu0 0.0
        %5340 = vmatpush1.msra.mxu0 0.0
        %5341 = vmatprep.subr.mxu0 0.0
        %5342 = vmatpush1.msra.mxu0 0.0
        %5343 = vmatprep.subr.mxu0 0.0
        %5344 = vmatpush1.msra.mxu0 0.0
        %5345 = vmatprep.subr.mxu0 0.0
        %5346 = vmatpush1.msra.mxu0 0.0
        %5347 = vmatprep.subr.mxu0 0.0
        %5348 = vmatpush1.msra.mxu0 0.0
        %5349 = vmatprep.subr.mxu0 0.0
        %5350 = vmatpush1.msra.mxu0 0.0
        %v5351 = vand.u32 %v210, 4294901760
        %5352 = vmatprep.subr.mxu0 %v5351
        %v5353 = vand.u32 %v209, 4294901760
        %5354 = vmatpush1.msra.mxu0 %v5353
        %5355 = vmatprep.subr.mxu0 0.0
        %5356 = vmatpush2.msra.mxu0 0.0
        %5357 = vmatprep.subr.mxu0 0.0
        %5358 = vmatpush2.msra.mxu0 0.0
        %5359 = vmatprep.subr.mxu0 0.0
        %5360 = vmatpush2.msra.mxu0 0.0
        %5361 = vmatprep.subr.mxu0 0.0
        %5362 = vmatpush2.msra.mxu0 0.0
        %5363 = vmatprep.subr.mxu0 0.0
        %5364 = vmatpush2.msra.mxu0 0.0
        %5365 = vmatprep.subr.mxu0 0.0
        %5366 = vmatpush2.msra.mxu0 0.0
        %5367 = vmatprep.subr.mxu0 0.0
        %5368 = vmatpush2.msra.mxu0 0.0
        %5369 = vmatprep.subr.mxu0 0.0
        %5370 = vmatpush2.msra.mxu0 0.0
        %5371 = vmatprep.subr.mxu0 0.0
        %5372 = vmatpush2.msra.mxu0 0.0
        %5373 = vmatprep.subr.mxu0 0.0
        %5374 = vmatpush2.msra.mxu0 0.0
        %5375 = vmatprep.subr.mxu0 0.0
        %5376 = vmatpush2.msra.mxu0 0.0
        %5377 = vmatprep.subr.mxu0 0.0
        %5378 = vmatpush2.msra.mxu0 0.0
        %5379 = vmatprep.subr.mxu0 0.0
        %5380 = vmatpush2.msra.mxu0 0.0
        %5381 = vmatprep.subr.mxu0 0.0
        %5382 = vmatpush2.msra.mxu0 0.0
        %5383 = vmatprep.subr.mxu0 0.0
        %5384 = vmatpush2.msra.mxu0 0.0
        %5385 = vmatprep.subr.mxu0 0.0
        %5386 = vmatpush2.msra.mxu0 0.0
        %5387 = vmatprep.mubr.f32.mxu0 0.0
        %v5388 = vand.u32 %v215, 4294901760
        %v5389 = vsub.f32 %v215, %v5388
        %v5390 = vand.u32 %v5389, 4294901760
        %5391 = vmatmul.mubr.f32.gmra.mxu0 %v5390
        %v5392 = vpop.f32.mrf.mxu0
        %v5393 = vadd.f32 %v5069, %v5392
        %v5394 = vpop.f32.mrf.mxu0
        %v5395 = vadd.f32 %v5071, %v5394
        %5396 = vmatprep.mubr.f32.mxu0 0.0
        %v5397 = vand.u32 %v218, 4294901760
        %v5398 = vsub.f32 %v218, %v5397
        %v5399 = vand.u32 %v5398, 4294901760
        %5400 = vmatmul.mubr.f32.gmra.mxu0 %v5399
        %v5401 = vpop.f32.mrf.mxu0
        %v5402 = vadd.f32 %v5077, %v5401
        %v5403 = vpop.f32.mrf.mxu0
        %v5404 = vadd.f32 %v5079, %v5403
        %5405 = vmatprep.mubr.f32.mxu0 0.0
        %v5406 = vand.u32 %v221, 4294901760
        %v5407 = vsub.f32 %v221, %v5406
        %v5408 = vand.u32 %v5407, 4294901760
        %5409 = vmatmul.mubr.f32.gmra.mxu0 %v5408
        %v5410 = vpop.f32.mrf.mxu0
        %v5411 = vadd.f32 %v5085, %v5410
        %v5412 = vpop.f32.mrf.mxu0
        %v5413 = vadd.f32 %v5087, %v5412
        %5414 = vmatprep.mubr.f32.mxu0 0.0
        %v5415 = vand.u32 %v224, 4294901760
        %v5416 = vsub.f32 %v224, %v5415
        %v5417 = vand.u32 %v5416, 4294901760
        %5418 = vmatmul.mubr.f32.gmra.mxu0 %v5417
        %v5419 = vpop.f32.mrf.mxu0
        %v5420 = vadd.f32 %v5093, %v5419
        %v5421 = vpop.f32.mrf.mxu0
        %v5422 = vadd.f32 %v5095, %v5421
        %5423 = vmatprep.mubr.f32.mxu0 0.0
        %v5424 = vand.u32 %v227, 4294901760
        %v5425 = vsub.f32 %v227, %v5424
        %v5426 = vand.u32 %v5425, 4294901760
        %5427 = vmatmul.mubr.f32.gmra.mxu0 %v5426
        %v5428 = vpop.f32.mrf.mxu0
        %v5429 = vadd.f32 %v5101, %v5428
        %v5430 = vpop.f32.mrf.mxu0
        %v5431 = vadd.f32 %v5103, %v5430
        %5432 = vmatprep.mubr.f32.mxu0 0.0
        %v5433 = vand.u32 %v230, 4294901760
        %v5434 = vsub.f32 %v230, %v5433
        %v5435 = vand.u32 %v5434, 4294901760
        %5436 = vmatmul.mubr.f32.gmra.mxu0 %v5435
        %v5437 = vpop.f32.mrf.mxu0
        %v5438 = vadd.f32 %v5109, %v5437
        %v5439 = vpop.f32.mrf.mxu0
        %v5440 = vadd.f32 %v5111, %v5439
        %5441 = vmatprep.mubr.f32.mxu0 0.0
        %v5442 = vand.u32 %v233, 4294901760
        %v5443 = vsub.f32 %v233, %v5442
        %v5444 = vand.u32 %v5443, 4294901760
        %5445 = vmatmul.mubr.f32.gmra.mxu0 %v5444
        %v5446 = vpop.f32.mrf.mxu0
        %v5447 = vadd.f32 %v5117, %v5446
        %v5448 = vpop.f32.mrf.mxu0
        %v5449 = vadd.f32 %v5119, %v5448
        %5450 = vmatprep.mubr.f32.mxu0 0.0
        %v5451 = vand.u32 %v236, 4294901760
        %v5452 = vsub.f32 %v236, %v5451
        %v5453 = vand.u32 %v5452, 4294901760
        %5454 = vmatmul.mubr.f32.gmra.mxu0 %v5453
        %v5455 = vpop.f32.mrf.mxu0
        %v5456 = vadd.f32 %v5125, %v5455
        %v5457 = vpop.f32.mrf.mxu0
        %v5458 = vadd.f32 %v5127, %v5457
        %5459 = vmatprep.mubr.f32.mxu0 0.0
        %v5460 = vand.u32 %v239, 4294901760
        %v5461 = vsub.f32 %v239, %v5460
        %v5462 = vand.u32 %v5461, 4294901760
        %5463 = vmatmul.mubr.f32.gmra.mxu0 %v5462
        %v5464 = vpop.f32.mrf.mxu0
        %v5465 = vadd.f32 %v5133, %v5464
        %v5466 = vpop.f32.mrf.mxu0
        %v5467 = vadd.f32 %v5135, %v5466
        %5468 = vmatprep.mubr.f32.mxu0 0.0
        %v5469 = vand.u32 %v242, 4294901760
        %v5470 = vsub.f32 %v242, %v5469
        %v5471 = vand.u32 %v5470, 4294901760
        %5472 = vmatmul.mubr.f32.gmra.mxu0 %v5471
        %v5473 = vpop.f32.mrf.mxu0
        %v5474 = vadd.f32 %v5141, %v5473
        %v5475 = vpop.f32.mrf.mxu0
        %v5476 = vadd.f32 %v5143, %v5475
        %5477 = vmatprep.mubr.f32.mxu0 0.0
        %v5478 = vand.u32 %v245, 4294901760
        %v5479 = vsub.f32 %v245, %v5478
        %v5480 = vand.u32 %v5479, 4294901760
        %5481 = vmatmul.mubr.f32.gmra.mxu0 %v5480
        %v5482 = vpop.f32.mrf.mxu0
        %v5483 = vadd.f32 %v5149, %v5482
        %v5484 = vpop.f32.mrf.mxu0
        %v5485 = vadd.f32 %v5151, %v5484
        %5486 = vmatprep.mubr.f32.mxu0 0.0
        %v5487 = vand.u32 %v248, 4294901760
        %v5488 = vsub.f32 %v248, %v5487
        %v5489 = vand.u32 %v5488, 4294901760
        %5490 = vmatmul.mubr.f32.gmra.mxu0 %v5489
        %v5491 = vpop.f32.mrf.mxu0
        %v5492 = vadd.f32 %v5157, %v5491
        %v5493 = vpop.f32.mrf.mxu0
        %v5494 = vadd.f32 %v5159, %v5493
        %5495 = vmatprep.mubr.f32.mxu0 0.0
        %v5496 = vand.u32 %v251, 4294901760
        %v5497 = vsub.f32 %v251, %v5496
        %v5498 = vand.u32 %v5497, 4294901760
        %5499 = vmatmul.mubr.f32.gmra.mxu0 %v5498
        %v5500 = vpop.f32.mrf.mxu0
        %v5501 = vadd.f32 %v5165, %v5500
        %v5502 = vpop.f32.mrf.mxu0
        %v5503 = vadd.f32 %v5167, %v5502
        %5504 = vmatprep.mubr.f32.mxu0 0.0
        %v5505 = vand.u32 %v254, 4294901760
        %v5506 = vsub.f32 %v254, %v5505
        %v5507 = vand.u32 %v5506, 4294901760
        %5508 = vmatmul.mubr.f32.gmra.mxu0 %v5507
        %v5509 = vpop.f32.mrf.mxu0
        %v5510 = vadd.f32 %v5173, %v5509
        %v5511 = vpop.f32.mrf.mxu0
        %v5512 = vadd.f32 %v5175, %v5511
        %5513 = vmatprep.mubr.f32.mxu0 0.0
        %v5514 = vand.u32 %v257, 4294901760
        %v5515 = vsub.f32 %v257, %v5514
        %v5516 = vand.u32 %v5515, 4294901760
        %5517 = vmatmul.mubr.f32.gmra.mxu0 %v5516
        %v5518 = vpop.f32.mrf.mxu0
        %v5519 = vadd.f32 %v5181, %v5518
        %v5520 = vpop.f32.mrf.mxu0
        %v5521 = vadd.f32 %v5183, %v5520
        %5522 = vmatprep.mubr.f32.mxu0 0.0
        %v5523 = vand.u32 %v260, 4294901760
        %v5524 = vsub.f32 %v260, %v5523
        %v5525 = vand.u32 %v5524, 4294901760
        %5526 = vmatmul.mubr.f32.gmra.mxu0 %v5525
        %v5527 = vpop.f32.mrf.mxu0
        %v5528 = vadd.f32 %v5189, %v5527
        %v5529 = vpop.f32.mrf.mxu0
        %v5530 = vadd.f32 %v5191, %v5529
        %5531 = vmatprep.mubr.f32.mxu0 0.0
        %v5532 = vand.u32 %v263, 4294901760
        %v5533 = vsub.f32 %v263, %v5532
        %v5534 = vand.u32 %v5533, 4294901760
        %5535 = vmatmul.mubr.f32.gmra.mxu0 %v5534
        %v5536 = vpop.f32.mrf.mxu0
        %v5537 = vadd.f32 %v5197, %v5536
        %v5538 = vpop.f32.mrf.mxu0
        %v5539 = vadd.f32 %v5199, %v5538
        %5540 = vmatprep.mubr.f32.mxu0 0.0
        %v5541 = vand.u32 %v266, 4294901760
        %v5542 = vsub.f32 %v266, %v5541
        %v5543 = vand.u32 %v5542, 4294901760
        %5544 = vmatmul.mubr.f32.gmra.mxu0 %v5543
        %v5545 = vpop.f32.mrf.mxu0
        %v5546 = vadd.f32 %v5205, %v5545
        %v5547 = vpop.f32.mrf.mxu0
        %v5548 = vadd.f32 %v5207, %v5547
        %5549 = vmatprep.mubr.f32.mxu0 0.0
        %v5550 = vand.u32 %v269, 4294901760
        %v5551 = vsub.f32 %v269, %v5550
        %v5552 = vand.u32 %v5551, 4294901760
        %5553 = vmatmul.mubr.f32.gmra.mxu0 %v5552
        %v5554 = vpop.f32.mrf.mxu0
        %v5555 = vadd.f32 %v5213, %v5554
        %v5556 = vpop.f32.mrf.mxu0
        %v5557 = vadd.f32 %v5215, %v5556
        %5558 = vmatprep.mubr.f32.mxu0 0.0
        %v5559 = vand.u32 %v272, 4294901760
        %v5560 = vsub.f32 %v272, %v5559
        %v5561 = vand.u32 %v5560, 4294901760
        %5562 = vmatmul.mubr.f32.gmra.mxu0 %v5561
        %v5563 = vpop.f32.mrf.mxu0
        %v5564 = vadd.f32 %v5221, %v5563
        %v5565 = vpop.f32.mrf.mxu0
        %v5566 = vadd.f32 %v5223, %v5565
        %5567 = vmatprep.mubr.f32.mxu0 0.0
        %v5568 = vand.u32 %v275, 4294901760
        %v5569 = vsub.f32 %v275, %v5568
        %v5570 = vand.u32 %v5569, 4294901760
        %5571 = vmatmul.mubr.f32.gmra.mxu0 %v5570
        %v5572 = vpop.f32.mrf.mxu0
        %v5573 = vadd.f32 %v5229, %v5572
        %v5574 = vpop.f32.mrf.mxu0
        %v5575 = vadd.f32 %v5231, %v5574
        %5576 = vmatprep.mubr.f32.mxu0 0.0
        %v5577 = vand.u32 %v278, 4294901760
        %v5578 = vsub.f32 %v278, %v5577
        %v5579 = vand.u32 %v5578, 4294901760
        %5580 = vmatmul.mubr.f32.gmra.mxu0 %v5579
        %v5581 = vpop.f32.mrf.mxu0
        %v5582 = vadd.f32 %v5237, %v5581
        %v5583 = vpop.f32.mrf.mxu0
        %v5584 = vadd.f32 %v5239, %v5583
        %5585 = vmatprep.mubr.f32.mxu0 0.0
        %v5586 = vand.u32 %v281, 4294901760
        %v5587 = vsub.f32 %v281, %v5586
        %v5588 = vand.u32 %v5587, 4294901760
        %5589 = vmatmul.mubr.f32.gmra.mxu0 %v5588
        %v5590 = vpop.f32.mrf.mxu0
        %v5591 = vadd.f32 %v5245, %v5590
        %v5592 = vpop.f32.mrf.mxu0
        %v5593 = vadd.f32 %v5247, %v5592
        %5594 = vmatprep.mubr.f32.mxu0 0.0
        %v5595 = vand.u32 %v284, 4294901760
        %v5596 = vsub.f32 %v284, %v5595
        %v5597 = vand.u32 %v5596, 4294901760
        %5598 = vmatmul.mubr.f32.gmra.mxu0 %v5597
        %v5599 = vpop.f32.mrf.mxu0
        %v5600 = vadd.f32 %v5253, %v5599
        %v5601 = vpop.f32.mrf.mxu0
        %v5602 = vadd.f32 %v5255, %v5601
        %5603 = vmatprep.mubr.f32.mxu0 0.0
        %v5604 = vand.u32 %v287, 4294901760
        %v5605 = vsub.f32 %v287, %v5604
        %v5606 = vand.u32 %v5605, 4294901760
        %5607 = vmatmul.mubr.f32.gmra.mxu0 %v5606
        %v5608 = vpop.f32.mrf.mxu0
        %v5609 = vadd.f32 %v5261, %v5608
        %v5610 = vpop.f32.mrf.mxu0
        %v5611 = vadd.f32 %v5263, %v5610
        %5612 = vmatprep.mubr.f32.mxu0 0.0
        %v5613 = vand.u32 %v290, 4294901760
        %v5614 = vsub.f32 %v290, %v5613
        %v5615 = vand.u32 %v5614, 4294901760
        %5616 = vmatmul.mubr.f32.gmra.mxu0 %v5615
        %v5617 = vpop.f32.mrf.mxu0
        %v5618 = vadd.f32 %v5269, %v5617
        %v5619 = vpop.f32.mrf.mxu0
        %v5620 = vadd.f32 %v5271, %v5619
        %5621 = vmatprep.mubr.f32.mxu0 0.0
        %v5622 = vand.u32 %v293, 4294901760
        %v5623 = vsub.f32 %v293, %v5622
        %v5624 = vand.u32 %v5623, 4294901760
        %5625 = vmatmul.mubr.f32.gmra.mxu0 %v5624
        %v5626 = vpop.f32.mrf.mxu0
        %v5627 = vadd.f32 %v5277, %v5626
        %v5628 = vpop.f32.mrf.mxu0
        %v5629 = vadd.f32 %v5279, %v5628
        %5630 = vmatprep.mubr.f32.mxu0 0.0
        %v5631 = vand.u32 %v296, 4294901760
        %v5632 = vsub.f32 %v296, %v5631
        %v5633 = vand.u32 %v5632, 4294901760
        %5634 = vmatmul.mubr.f32.gmra.mxu0 %v5633
        %v5635 = vpop.f32.mrf.mxu0
        %v5636 = vadd.f32 %v5285, %v5635
        %v5637 = vpop.f32.mrf.mxu0
        %v5638 = vadd.f32 %v5287, %v5637
        %5639 = vmatprep.mubr.f32.mxu0 0.0
        %v5640 = vand.u32 %v299, 4294901760
        %v5641 = vsub.f32 %v299, %v5640
        %v5642 = vand.u32 %v5641, 4294901760
        %5643 = vmatmul.mubr.f32.gmra.mxu0 %v5642
        %v5644 = vpop.f32.mrf.mxu0
        %v5645 = vadd.f32 %v5293, %v5644
        %v5646 = vpop.f32.mrf.mxu0
        %v5647 = vadd.f32 %v5295, %v5646
        %5648 = vmatprep.mubr.f32.mxu0 0.0
        %v5649 = vand.u32 %v302, 4294901760
        %v5650 = vsub.f32 %v302, %v5649
        %v5651 = vand.u32 %v5650, 4294901760
        %5652 = vmatmul.mubr.f32.gmra.mxu0 %v5651
        %v5653 = vpop.f32.mrf.mxu0
        %v5654 = vadd.f32 %v5301, %v5653
        %v5655 = vpop.f32.mrf.mxu0
        %v5656 = vadd.f32 %v5303, %v5655
        %5657 = vmatprep.mubr.f32.mxu0 0.0
        %v5658 = vand.u32 %v305, 4294901760
        %v5659 = vsub.f32 %v305, %v5658
        %v5660 = vand.u32 %v5659, 4294901760
        %5661 = vmatmul.mubr.f32.gmra.mxu0 %v5660
        %v5662 = vpop.f32.mrf.mxu0
        %v5663 = vadd.f32 %v5309, %v5662
        %v5664 = vpop.f32.mrf.mxu0
        %v5665 = vadd.f32 %v5311, %v5664
        %5666 = vmatprep.mubr.f32.mxu0 0.0
        %v5667 = vand.u32 %v308, 4294901760
        %v5668 = vsub.f32 %v308, %v5667
        %v5669 = vand.u32 %v5668, 4294901760
        %5670 = vmatmul.mubr.f32.gmra.mxu0 %v5669
        %v5671 = vpop.f32.mrf.mxu0
        %v5672 = vadd.f32 %v5317, %v5671
        %v5673 = vpop.f32.mrf.mxu0
        %v5674 = vadd.f32 %v5319, %v5673
        %5675 = vdwg.mxu0
        %5676 = vmatprep.subr.mxu0 0.0
        %5677 = vmatpush1.msra.mxu0 0.0
        %5678 = vmatprep.subr.mxu0 0.0
        %5679 = vmatpush1.msra.mxu0 0.0
        %5680 = vmatprep.subr.mxu0 0.0
        %5681 = vmatpush1.msra.mxu0 0.0
        %5682 = vmatprep.subr.mxu0 0.0
        %5683 = vmatpush1.msra.mxu0 0.0
        %5684 = vmatprep.subr.mxu0 0.0
        %5685 = vmatpush1.msra.mxu0 0.0
        %5686 = vmatprep.subr.mxu0 0.0
        %5687 = vmatpush1.msra.mxu0 0.0
        %5688 = vmatprep.subr.mxu0 0.0
        %5689 = vmatpush1.msra.mxu0 0.0
        %5690 = vmatprep.subr.mxu0 0.0
        %5691 = vmatpush1.msra.mxu0 0.0
        %5692 = vmatprep.subr.mxu0 0.0
        %5693 = vmatpush1.msra.mxu0 0.0
        %5694 = vmatprep.subr.mxu0 0.0
        %5695 = vmatpush1.msra.mxu0 0.0
        %5696 = vmatprep.subr.mxu0 0.0
        %5697 = vmatpush1.msra.mxu0 0.0
        %5698 = vmatprep.subr.mxu0 0.0
        %5699 = vmatpush1.msra.mxu0 0.0
        %5700 = vmatprep.subr.mxu0 0.0
        %5701 = vmatpush1.msra.mxu0 0.0
        %5702 = vmatprep.subr.mxu0 0.0
        %5703 = vmatpush1.msra.mxu0 0.0
        %5704 = vmatprep.subr.mxu0 0.0
        %5705 = vmatpush1.msra.mxu0 0.0
        %v5706 = vand.u32 %v210, 4294901760
        %v5707 = vsub.f32 %v210, %v5706
        %v5708 = vand.u32 %v5707, 4294901760
        %5709 = vmatprep.subr.mxu0 %v5708
        %v5710 = vand.u32 %v209, 4294901760
        %v5711 = vsub.f32 %v209, %v5710
        %v5712 = vand.u32 %v5711, 4294901760
        %5713 = vmatpush1.msra.mxu0 %v5712
        %5714 = vmatprep.subr.mxu0 0.0
        %5715 = vmatpush2.msra.mxu0 0.0
        %5716 = vmatprep.subr.mxu0 0.0
        %5717 = vmatpush2.msra.mxu0 0.0
        %5718 = vmatprep.subr.mxu0 0.0
        %5719 = vmatpush2.msra.mxu0 0.0
        %5720 = vmatprep.subr.mxu0 0.0
        %5721 = vmatpush2.msra.mxu0 0.0
        %5722 = vmatprep.subr.mxu0 0.0
        %5723 = vmatpush2.msra.mxu0 0.0
        %5724 = vmatprep.subr.mxu0 0.0
        %5725 = vmatpush2.msra.mxu0 0.0
        %5726 = vmatprep.subr.mxu0 0.0
        %5727 = vmatpush2.msra.mxu0 0.0
        %5728 = vmatprep.subr.mxu0 0.0
        %5729 = vmatpush2.msra.mxu0 0.0
        %5730 = vmatprep.subr.mxu0 0.0
        %5731 = vmatpush2.msra.mxu0 0.0
        %5732 = vmatprep.subr.mxu0 0.0
        %5733 = vmatpush2.msra.mxu0 0.0
        %5734 = vmatprep.subr.mxu0 0.0
        %5735 = vmatpush2.msra.mxu0 0.0
        %5736 = vmatprep.subr.mxu0 0.0
        %5737 = vmatpush2.msra.mxu0 0.0
        %5738 = vmatprep.subr.mxu0 0.0
        %5739 = vmatpush2.msra.mxu0 0.0
        %5740 = vmatprep.subr.mxu0 0.0
        %5741 = vmatpush2.msra.mxu0 0.0
        %5742 = vmatprep.subr.mxu0 0.0
        %5743 = vmatpush2.msra.mxu0 0.0
        %5744 = vmatprep.subr.mxu0 0.0
        %5745 = vmatpush2.msra.mxu0 0.0
        %5746 = vmatprep.mubr.f32.mxu0 0.0
        %v5747 = vand.u32 %v215, 4294901760
        %5748 = vmatmul.mubr.f32.gmra.mxu0 %v5747
        %v5749 = vpop.f32.mrf.mxu0
        %v5750 = vadd.f32 %v5393, %v5749
        %v5751 = vpop.f32.mrf.mxu0
        %v5752 = vadd.f32 %v5395, %v5751
        %5753 = vmatprep.mubr.f32.mxu0 0.0
        %v5754 = vand.u32 %v218, 4294901760
        %5755 = vmatmul.mubr.f32.gmra.mxu0 %v5754
        %v5756 = vpop.f32.mrf.mxu0
        %v5757 = vadd.f32 %v5402, %v5756
        %v5758 = vpop.f32.mrf.mxu0
        %v5759 = vadd.f32 %v5404, %v5758
        %5760 = vmatprep.mubr.f32.mxu0 0.0
        %v5761 = vand.u32 %v221, 4294901760
        %5762 = vmatmul.mubr.f32.gmra.mxu0 %v5761
        %v5763 = vpop.f32.mrf.mxu0
        %v5764 = vadd.f32 %v5411, %v5763
        %v5765 = vpop.f32.mrf.mxu0
        %v5766 = vadd.f32 %v5413, %v5765
        %5767 = vmatprep.mubr.f32.mxu0 0.0
        %v5768 = vand.u32 %v224, 4294901760
        %5769 = vmatmul.mubr.f32.gmra.mxu0 %v5768
        %v5770 = vpop.f32.mrf.mxu0
        %v5771 = vadd.f32 %v5420, %v5770
        %v5772 = vpop.f32.mrf.mxu0
        %v5773 = vadd.f32 %v5422, %v5772
        %5774 = vmatprep.mubr.f32.mxu0 0.0
        %v5775 = vand.u32 %v227, 4294901760
        %5776 = vmatmul.mubr.f32.gmra.mxu0 %v5775
        %v5777 = vpop.f32.mrf.mxu0
        %v5778 = vadd.f32 %v5429, %v5777
        %v5779 = vpop.f32.mrf.mxu0
        %v5780 = vadd.f32 %v5431, %v5779
        %5781 = vmatprep.mubr.f32.mxu0 0.0
        %v5782 = vand.u32 %v230, 4294901760
        %5783 = vmatmul.mubr.f32.gmra.mxu0 %v5782
        %v5784 = vpop.f32.mrf.mxu0
        %v5785 = vadd.f32 %v5438, %v5784
        %v5786 = vpop.f32.mrf.mxu0
        %v5787 = vadd.f32 %v5440, %v5786
        %5788 = vmatprep.mubr.f32.mxu0 0.0
        %v5789 = vand.u32 %v233, 4294901760
        %5790 = vmatmul.mubr.f32.gmra.mxu0 %v5789
        %v5791 = vpop.f32.mrf.mxu0
        %v5792 = vadd.f32 %v5447, %v5791
        %v5793 = vpop.f32.mrf.mxu0
        %v5794 = vadd.f32 %v5449, %v5793
        %5795 = vmatprep.mubr.f32.mxu0 0.0
        %v5796 = vand.u32 %v236, 4294901760
        %5797 = vmatmul.mubr.f32.gmra.mxu0 %v5796
        %v5798 = vpop.f32.mrf.mxu0
        %v5799 = vadd.f32 %v5456, %v5798
        %v5800 = vpop.f32.mrf.mxu0
        %v5801 = vadd.f32 %v5458, %v5800
        %5802 = vmatprep.mubr.f32.mxu0 0.0
        %v5803 = vand.u32 %v239, 4294901760
        %5804 = vmatmul.mubr.f32.gmra.mxu0 %v5803
        %v5805 = vpop.f32.mrf.mxu0
        %v5806 = vadd.f32 %v5465, %v5805
        %v5807 = vpop.f32.mrf.mxu0
        %v5808 = vadd.f32 %v5467, %v5807
        %5809 = vmatprep.mubr.f32.mxu0 0.0
        %v5810 = vand.u32 %v242, 4294901760
        %5811 = vmatmul.mubr.f32.gmra.mxu0 %v5810
        %v5812 = vpop.f32.mrf.mxu0
        %v5813 = vadd.f32 %v5474, %v5812
        %v5814 = vpop.f32.mrf.mxu0
        %v5815 = vadd.f32 %v5476, %v5814
        %5816 = vmatprep.mubr.f32.mxu0 0.0
        %v5817 = vand.u32 %v245, 4294901760
        %5818 = vmatmul.mubr.f32.gmra.mxu0 %v5817
        %v5819 = vpop.f32.mrf.mxu0
        %v5820 = vadd.f32 %v5483, %v5819
        %v5821 = vpop.f32.mrf.mxu0
        %v5822 = vadd.f32 %v5485, %v5821
        %5823 = vmatprep.mubr.f32.mxu0 0.0
        %v5824 = vand.u32 %v248, 4294901760
        %5825 = vmatmul.mubr.f32.gmra.mxu0 %v5824
        %v5826 = vpop.f32.mrf.mxu0
        %v5827 = vadd.f32 %v5492, %v5826
        %v5828 = vpop.f32.mrf.mxu0
        %v5829 = vadd.f32 %v5494, %v5828
        %5830 = vmatprep.mubr.f32.mxu0 0.0
        %v5831 = vand.u32 %v251, 4294901760
        %5832 = vmatmul.mubr.f32.gmra.mxu0 %v5831
        %v5833 = vpop.f32.mrf.mxu0
        %v5834 = vadd.f32 %v5501, %v5833
        %v5835 = vpop.f32.mrf.mxu0
        %v5836 = vadd.f32 %v5503, %v5835
        %5837 = vmatprep.mubr.f32.mxu0 0.0
        %v5838 = vand.u32 %v254, 4294901760
        %5839 = vmatmul.mubr.f32.gmra.mxu0 %v5838
        %v5840 = vpop.f32.mrf.mxu0
        %v5841 = vadd.f32 %v5510, %v5840
        %v5842 = vpop.f32.mrf.mxu0
        %v5843 = vadd.f32 %v5512, %v5842
        %5844 = vmatprep.mubr.f32.mxu0 0.0
        %v5845 = vand.u32 %v257, 4294901760
        %5846 = vmatmul.mubr.f32.gmra.mxu0 %v5845
        %v5847 = vpop.f32.mrf.mxu0
        %v5848 = vadd.f32 %v5519, %v5847
        %v5849 = vpop.f32.mrf.mxu0
        %v5850 = vadd.f32 %v5521, %v5849
        %5851 = vmatprep.mubr.f32.mxu0 0.0
        %v5852 = vand.u32 %v260, 4294901760
        %5853 = vmatmul.mubr.f32.gmra.mxu0 %v5852
        %v5854 = vpop.f32.mrf.mxu0
        %v5855 = vadd.f32 %v5528, %v5854
        %v5856 = vpop.f32.mrf.mxu0
        %v5857 = vadd.f32 %v5530, %v5856
        %5858 = vmatprep.mubr.f32.mxu0 0.0
        %v5859 = vand.u32 %v263, 4294901760
        %5860 = vmatmul.mubr.f32.gmra.mxu0 %v5859
        %v5861 = vpop.f32.mrf.mxu0
        %v5862 = vadd.f32 %v5537, %v5861
        %v5863 = vpop.f32.mrf.mxu0
        %v5864 = vadd.f32 %v5539, %v5863
        %5865 = vmatprep.mubr.f32.mxu0 0.0
        %v5866 = vand.u32 %v266, 4294901760
        %5867 = vmatmul.mubr.f32.gmra.mxu0 %v5866
        %v5868 = vpop.f32.mrf.mxu0
        %v5869 = vadd.f32 %v5546, %v5868
        %v5870 = vpop.f32.mrf.mxu0
        %v5871 = vadd.f32 %v5548, %v5870
        %5872 = vmatprep.mubr.f32.mxu0 0.0
        %v5873 = vand.u32 %v269, 4294901760
        %5874 = vmatmul.mubr.f32.gmra.mxu0 %v5873
        %v5875 = vpop.f32.mrf.mxu0
        %v5876 = vadd.f32 %v5555, %v5875
        %v5877 = vpop.f32.mrf.mxu0
        %v5878 = vadd.f32 %v5557, %v5877
        %5879 = vmatprep.mubr.f32.mxu0 0.0
        %v5880 = vand.u32 %v272, 4294901760
        %5881 = vmatmul.mubr.f32.gmra.mxu0 %v5880
        %v5882 = vpop.f32.mrf.mxu0
        %v5883 = vadd.f32 %v5564, %v5882
        %v5884 = vpop.f32.mrf.mxu0
        %v5885 = vadd.f32 %v5566, %v5884
        %5886 = vmatprep.mubr.f32.mxu0 0.0
        %v5887 = vand.u32 %v275, 4294901760
        %5888 = vmatmul.mubr.f32.gmra.mxu0 %v5887
        %v5889 = vpop.f32.mrf.mxu0
        %v5890 = vadd.f32 %v5573, %v5889
        %v5891 = vpop.f32.mrf.mxu0
        %v5892 = vadd.f32 %v5575, %v5891
        %5893 = vmatprep.mubr.f32.mxu0 0.0
        %v5894 = vand.u32 %v278, 4294901760
        %5895 = vmatmul.mubr.f32.gmra.mxu0 %v5894
        %v5896 = vpop.f32.mrf.mxu0
        %v5897 = vadd.f32 %v5582, %v5896
        %v5898 = vpop.f32.mrf.mxu0
        %v5899 = vadd.f32 %v5584, %v5898
        %5900 = vmatprep.mubr.f32.mxu0 0.0
        %v5901 = vand.u32 %v281, 4294901760
        %5902 = vmatmul.mubr.f32.gmra.mxu0 %v5901
        %v5903 = vpop.f32.mrf.mxu0
        %v5904 = vadd.f32 %v5591, %v5903
        %v5905 = vpop.f32.mrf.mxu0
        %v5906 = vadd.f32 %v5593, %v5905
        %5907 = vmatprep.mubr.f32.mxu0 0.0
        %v5908 = vand.u32 %v284, 4294901760
        %5909 = vmatmul.mubr.f32.gmra.mxu0 %v5908
        %v5910 = vpop.f32.mrf.mxu0
        %v5911 = vadd.f32 %v5600, %v5910
        %v5912 = vpop.f32.mrf.mxu0
        %v5913 = vadd.f32 %v5602, %v5912
        %5914 = vmatprep.mubr.f32.mxu0 0.0
        %v5915 = vand.u32 %v287, 4294901760
        %5916 = vmatmul.mubr.f32.gmra.mxu0 %v5915
        %v5917 = vpop.f32.mrf.mxu0
        %v5918 = vadd.f32 %v5609, %v5917
        %v5919 = vpop.f32.mrf.mxu0
        %v5920 = vadd.f32 %v5611, %v5919
        %5921 = vmatprep.mubr.f32.mxu0 0.0
        %v5922 = vand.u32 %v290, 4294901760
        %5923 = vmatmul.mubr.f32.gmra.mxu0 %v5922
        %v5924 = vpop.f32.mrf.mxu0
        %v5925 = vadd.f32 %v5618, %v5924
        %v5926 = vpop.f32.mrf.mxu0
        %v5927 = vadd.f32 %v5620, %v5926
        %5928 = vmatprep.mubr.f32.mxu0 0.0
        %v5929 = vand.u32 %v293, 4294901760
        %5930 = vmatmul.mubr.f32.gmra.mxu0 %v5929
        %v5931 = vpop.f32.mrf.mxu0
        %v5932 = vadd.f32 %v5627, %v5931
        %v5933 = vpop.f32.mrf.mxu0
        %v5934 = vadd.f32 %v5629, %v5933
        %5935 = vmatprep.mubr.f32.mxu0 0.0
        %v5936 = vand.u32 %v296, 4294901760
        %5937 = vmatmul.mubr.f32.gmra.mxu0 %v5936
        %v5938 = vpop.f32.mrf.mxu0
        %v5939 = vadd.f32 %v5636, %v5938
        %v5940 = vpop.f32.mrf.mxu0
        %v5941 = vadd.f32 %v5638, %v5940
        %5942 = vmatprep.mubr.f32.mxu0 0.0
        %v5943 = vand.u32 %v299, 4294901760
        %5944 = vmatmul.mubr.f32.gmra.mxu0 %v5943
        %v5945 = vpop.f32.mrf.mxu0
        %v5946 = vadd.f32 %v5645, %v5945
        %v5947 = vpop.f32.mrf.mxu0
        %v5948 = vadd.f32 %v5647, %v5947
        %5949 = vmatprep.mubr.f32.mxu0 0.0
        %v5950 = vand.u32 %v302, 4294901760
        %5951 = vmatmul.mubr.f32.gmra.mxu0 %v5950
        %v5952 = vpop.f32.mrf.mxu0
        %v5953 = vadd.f32 %v5654, %v5952
        %v5954 = vpop.f32.mrf.mxu0
        %v5955 = vadd.f32 %v5656, %v5954
        %5956 = vmatprep.mubr.f32.mxu0 0.0
        %v5957 = vand.u32 %v305, 4294901760
        %5958 = vmatmul.mubr.f32.gmra.mxu0 %v5957
        %v5959 = vpop.f32.mrf.mxu0
        %v5960 = vadd.f32 %v5663, %v5959
        %v5961 = vpop.f32.mrf.mxu0
        %v5962 = vadd.f32 %v5665, %v5961
        %5963 = vmatprep.mubr.f32.mxu0 0.0
        %v5964 = vand.u32 %v308, 4294901760
        %5965 = vmatmul.mubr.f32.gmra.mxu0 %v5964
        %v5966 = vpop.f32.mrf.mxu0
        %v5967 = vadd.f32 %v5672, %v5966
        %v5968 = vpop.f32.mrf.mxu0
        %v5969 = vadd.f32 %v5674, %v5968
        %5970 = vdwg.mxu0
        %5971 = vmatprep.subr.mxu0 0.0
        %5972 = vmatpush1.msra.mxu0 0.0
        %5973 = vmatprep.subr.mxu0 0.0
        %5974 = vmatpush1.msra.mxu0 0.0
        %5975 = vmatprep.subr.mxu0 0.0
        %5976 = vmatpush1.msra.mxu0 0.0
        %5977 = vmatprep.subr.mxu0 0.0
        %5978 = vmatpush1.msra.mxu0 0.0
        %5979 = vmatprep.subr.mxu0 0.0
        %5980 = vmatpush1.msra.mxu0 0.0
        %5981 = vmatprep.subr.mxu0 0.0
        %5982 = vmatpush1.msra.mxu0 0.0
        %5983 = vmatprep.subr.mxu0 0.0
        %5984 = vmatpush1.msra.mxu0 0.0
        %5985 = vmatprep.subr.mxu0 0.0
        %5986 = vmatpush1.msra.mxu0 0.0
        %5987 = vmatprep.subr.mxu0 0.0
        %5988 = vmatpush1.msra.mxu0 0.0
        %5989 = vmatprep.subr.mxu0 0.0
        %5990 = vmatpush1.msra.mxu0 0.0
        %5991 = vmatprep.subr.mxu0 0.0
        %5992 = vmatpush1.msra.mxu0 0.0
        %5993 = vmatprep.subr.mxu0 0.0
        %5994 = vmatpush1.msra.mxu0 0.0
        %5995 = vmatprep.subr.mxu0 0.0
        %5996 = vmatpush1.msra.mxu0 0.0
        %5997 = vmatprep.subr.mxu0 0.0
        %5998 = vmatpush1.msra.mxu0 0.0
        %5999 = vmatprep.subr.mxu0 0.0
        %6000 = vmatpush1.msra.mxu0 0.0
        %v6001 = vand.u32 %v210, 4294901760
        %6002 = vmatprep.subr.mxu0 %v6001
        %v6003 = vand.u32 %v209, 4294901760
        %6004 = vmatpush1.msra.mxu0 %v6003
        %6005 = vmatprep.subr.mxu0 0.0
        %6006 = vmatpush2.msra.mxu0 0.0
        %6007 = vmatprep.subr.mxu0 0.0
        %6008 = vmatpush2.msra.mxu0 0.0
        %6009 = vmatprep.subr.mxu0 0.0
        %6010 = vmatpush2.msra.mxu0 0.0
        %6011 = vmatprep.subr.mxu0 0.0
        %6012 = vmatpush2.msra.mxu0 0.0
        %6013 = vmatprep.subr.mxu0 0.0
        %6014 = vmatpush2.msra.mxu0 0.0
        %6015 = vmatprep.subr.mxu0 0.0
        %6016 = vmatpush2.msra.mxu0 0.0
        %6017 = vmatprep.subr.mxu0 0.0
        %6018 = vmatpush2.msra.mxu0 0.0
        %6019 = vmatprep.subr.mxu0 0.0
        %6020 = vmatpush2.msra.mxu0 0.0
        %6021 = vmatprep.subr.mxu0 0.0
        %6022 = vmatpush2.msra.mxu0 0.0
        %6023 = vmatprep.subr.mxu0 0.0
        %6024 = vmatpush2.msra.mxu0 0.0
        %6025 = vmatprep.subr.mxu0 0.0
        %6026 = vmatpush2.msra.mxu0 0.0
        %6027 = vmatprep.subr.mxu0 0.0
        %6028 = vmatpush2.msra.mxu0 0.0
        %6029 = vmatprep.subr.mxu0 0.0
        %6030 = vmatpush2.msra.mxu0 0.0
        %6031 = vmatprep.subr.mxu0 0.0
        %6032 = vmatpush2.msra.mxu0 0.0
        %6033 = vmatprep.subr.mxu0 0.0
        %6034 = vmatpush2.msra.mxu0 0.0
        %6035 = vmatprep.subr.mxu0 0.0
        %6036 = vmatpush2.msra.mxu0 0.0
        %6037 = vmatprep.mubr.f32.mxu0 0.0
        %v6038 = vand.u32 %v215, 4294901760
        %6039 = vmatmul.mubr.f32.gmra.mxu0 %v6038
        %v6040 = vpop.f32.mrf.mxu0
        %v6041 = vadd.f32 %v5750, %v6040
        %v6042 = vpop.f32.mrf.mxu0
        %v6043 = vadd.f32 %v5752, %v6042
        %6044 = vmatprep.mubr.f32.mxu0 0.0
        %v6045 = vand.u32 %v218, 4294901760
        %6046 = vmatmul.mubr.f32.gmra.mxu0 %v6045
        %v6047 = vpop.f32.mrf.mxu0
        %v6048 = vadd.f32 %v5757, %v6047
        %v6049 = vpop.f32.mrf.mxu0
        %v6050 = vadd.f32 %v5759, %v6049
        %6051 = vmatprep.mubr.f32.mxu0 0.0
        %v6052 = vand.u32 %v221, 4294901760
        %6053 = vmatmul.mubr.f32.gmra.mxu0 %v6052
        %v6054 = vpop.f32.mrf.mxu0
        %v6055 = vadd.f32 %v5764, %v6054
        %v6056 = vpop.f32.mrf.mxu0
        %v6057 = vadd.f32 %v5766, %v6056
        %6058 = vmatprep.mubr.f32.mxu0 0.0
        %v6059 = vand.u32 %v224, 4294901760
        %6060 = vmatmul.mubr.f32.gmra.mxu0 %v6059
        %v6061 = vpop.f32.mrf.mxu0
        %v6062 = vadd.f32 %v5771, %v6061
        %v6063 = vpop.f32.mrf.mxu0
        %v6064 = vadd.f32 %v5773, %v6063
        %6065 = vmatprep.mubr.f32.mxu0 0.0
        %v6066 = vand.u32 %v227, 4294901760
        %6067 = vmatmul.mubr.f32.gmra.mxu0 %v6066
        %v6068 = vpop.f32.mrf.mxu0
        %v6069 = vadd.f32 %v5778, %v6068
        %v6070 = vpop.f32.mrf.mxu0
        %v6071 = vadd.f32 %v5780, %v6070
        %6072 = vmatprep.mubr.f32.mxu0 0.0
        %v6073 = vand.u32 %v230, 4294901760
        %6074 = vmatmul.mubr.f32.gmra.mxu0 %v6073
        %v6075 = vpop.f32.mrf.mxu0
        %v6076 = vadd.f32 %v5785, %v6075
        %v6077 = vpop.f32.mrf.mxu0
        %v6078 = vadd.f32 %v5787, %v6077
        %6079 = vmatprep.mubr.f32.mxu0 0.0
        %v6080 = vand.u32 %v233, 4294901760
        %6081 = vmatmul.mubr.f32.gmra.mxu0 %v6080
        %v6082 = vpop.f32.mrf.mxu0
        %v6083 = vadd.f32 %v5792, %v6082
        %v6084 = vpop.f32.mrf.mxu0
        %v6085 = vadd.f32 %v5794, %v6084
        %6086 = vmatprep.mubr.f32.mxu0 0.0
        %v6087 = vand.u32 %v236, 4294901760
        %6088 = vmatmul.mubr.f32.gmra.mxu0 %v6087
        %v6089 = vpop.f32.mrf.mxu0
        %v6090 = vadd.f32 %v5799, %v6089
        %v6091 = vpop.f32.mrf.mxu0
        %v6092 = vadd.f32 %v5801, %v6091
        %6093 = vmatprep.mubr.f32.mxu0 0.0
        %v6094 = vand.u32 %v239, 4294901760
        %6095 = vmatmul.mubr.f32.gmra.mxu0 %v6094
        %v6096 = vpop.f32.mrf.mxu0
        %v6097 = vadd.f32 %v5806, %v6096
        %v6098 = vpop.f32.mrf.mxu0
        %v6099 = vadd.f32 %v5808, %v6098
        %6100 = vmatprep.mubr.f32.mxu0 0.0
        %v6101 = vand.u32 %v242, 4294901760
        %6102 = vmatmul.mubr.f32.gmra.mxu0 %v6101
        %v6103 = vpop.f32.mrf.mxu0
        %v6104 = vadd.f32 %v5813, %v6103
        %v6105 = vpop.f32.mrf.mxu0
        %v6106 = vadd.f32 %v5815, %v6105
        %6107 = vmatprep.mubr.f32.mxu0 0.0
        %v6108 = vand.u32 %v245, 4294901760
        %6109 = vmatmul.mubr.f32.gmra.mxu0 %v6108
        %v6110 = vpop.f32.mrf.mxu0
        %v6111 = vadd.f32 %v5820, %v6110
        %v6112 = vpop.f32.mrf.mxu0
        %v6113 = vadd.f32 %v5822, %v6112
        %6114 = vmatprep.mubr.f32.mxu0 0.0
        %v6115 = vand.u32 %v248, 4294901760
        %6116 = vmatmul.mubr.f32.gmra.mxu0 %v6115
        %v6117 = vpop.f32.mrf.mxu0
        %v6118 = vadd.f32 %v5827, %v6117
        %v6119 = vpop.f32.mrf.mxu0
        %v6120 = vadd.f32 %v5829, %v6119
        %6121 = vmatprep.mubr.f32.mxu0 0.0
        %v6122 = vand.u32 %v251, 4294901760
        %6123 = vmatmul.mubr.f32.gmra.mxu0 %v6122
        %v6124 = vpop.f32.mrf.mxu0
        %v6125 = vadd.f32 %v5834, %v6124
        %v6126 = vpop.f32.mrf.mxu0
        %v6127 = vadd.f32 %v5836, %v6126
        %6128 = vmatprep.mubr.f32.mxu0 0.0
        %v6129 = vand.u32 %v254, 4294901760
        %6130 = vmatmul.mubr.f32.gmra.mxu0 %v6129
        %v6131 = vpop.f32.mrf.mxu0
        %v6132 = vadd.f32 %v5841, %v6131
        %v6133 = vpop.f32.mrf.mxu0
        %v6134 = vadd.f32 %v5843, %v6133
        %6135 = vmatprep.mubr.f32.mxu0 0.0
        %v6136 = vand.u32 %v257, 4294901760
        %6137 = vmatmul.mubr.f32.gmra.mxu0 %v6136
        %v6138 = vpop.f32.mrf.mxu0
        %v6139 = vadd.f32 %v5848, %v6138
        %v6140 = vpop.f32.mrf.mxu0
        %v6141 = vadd.f32 %v5850, %v6140
        %6142 = vmatprep.mubr.f32.mxu0 0.0
        %v6143 = vand.u32 %v260, 4294901760
        %6144 = vmatmul.mubr.f32.gmra.mxu0 %v6143
        %v6145 = vpop.f32.mrf.mxu0
        %v6146 = vadd.f32 %v5855, %v6145
        %v6147 = vpop.f32.mrf.mxu0
        %v6148 = vadd.f32 %v5857, %v6147
        %6149 = vmatprep.mubr.f32.mxu0 0.0
        %v6150 = vand.u32 %v263, 4294901760
        %6151 = vmatmul.mubr.f32.gmra.mxu0 %v6150
        %v6152 = vpop.f32.mrf.mxu0
        %v6153 = vadd.f32 %v5862, %v6152
        %v6154 = vpop.f32.mrf.mxu0
        %v6155 = vadd.f32 %v5864, %v6154
        %6156 = vmatprep.mubr.f32.mxu0 0.0
        %v6157 = vand.u32 %v266, 4294901760
        %6158 = vmatmul.mubr.f32.gmra.mxu0 %v6157
        %v6159 = vpop.f32.mrf.mxu0
        %v6160 = vadd.f32 %v5869, %v6159
        %v6161 = vpop.f32.mrf.mxu0
        %v6162 = vadd.f32 %v5871, %v6161
        %6163 = vmatprep.mubr.f32.mxu0 0.0
        %v6164 = vand.u32 %v269, 4294901760
        %6165 = vmatmul.mubr.f32.gmra.mxu0 %v6164
        %v6166 = vpop.f32.mrf.mxu0
        %v6167 = vadd.f32 %v5876, %v6166
        %v6168 = vpop.f32.mrf.mxu0
        %v6169 = vadd.f32 %v5878, %v6168
        %6170 = vmatprep.mubr.f32.mxu0 0.0
        %v6171 = vand.u32 %v272, 4294901760
        %6172 = vmatmul.mubr.f32.gmra.mxu0 %v6171
        %v6173 = vpop.f32.mrf.mxu0
        %v6174 = vadd.f32 %v5883, %v6173
        %v6175 = vpop.f32.mrf.mxu0
        %v6176 = vadd.f32 %v5885, %v6175
        %6177 = vmatprep.mubr.f32.mxu0 0.0
        %v6178 = vand.u32 %v275, 4294901760
        %6179 = vmatmul.mubr.f32.gmra.mxu0 %v6178
        %v6180 = vpop.f32.mrf.mxu0
        %v6181 = vadd.f32 %v5890, %v6180
        %v6182 = vpop.f32.mrf.mxu0
        %v6183 = vadd.f32 %v5892, %v6182
        %6184 = vmatprep.mubr.f32.mxu0 0.0
        %v6185 = vand.u32 %v278, 4294901760
        %6186 = vmatmul.mubr.f32.gmra.mxu0 %v6185
        %v6187 = vpop.f32.mrf.mxu0
        %v6188 = vadd.f32 %v5897, %v6187
        %v6189 = vpop.f32.mrf.mxu0
        %v6190 = vadd.f32 %v5899, %v6189
        %6191 = vmatprep.mubr.f32.mxu0 0.0
        %v6192 = vand.u32 %v281, 4294901760
        %6193 = vmatmul.mubr.f32.gmra.mxu0 %v6192
        %v6194 = vpop.f32.mrf.mxu0
        %v6195 = vadd.f32 %v5904, %v6194
        %v6196 = vpop.f32.mrf.mxu0
        %v6197 = vadd.f32 %v5906, %v6196
        %6198 = vmatprep.mubr.f32.mxu0 0.0
        %v6199 = vand.u32 %v284, 4294901760
        %6200 = vmatmul.mubr.f32.gmra.mxu0 %v6199
        %v6201 = vpop.f32.mrf.mxu0
        %v6202 = vadd.f32 %v5911, %v6201
        %v6203 = vpop.f32.mrf.mxu0
        %v6204 = vadd.f32 %v5913, %v6203
        %6205 = vmatprep.mubr.f32.mxu0 0.0
        %v6206 = vand.u32 %v287, 4294901760
        %6207 = vmatmul.mubr.f32.gmra.mxu0 %v6206
        %v6208 = vpop.f32.mrf.mxu0
        %v6209 = vadd.f32 %v5918, %v6208
        %v6210 = vpop.f32.mrf.mxu0
        %v6211 = vadd.f32 %v5920, %v6210
        %6212 = vmatprep.mubr.f32.mxu0 0.0
        %v6213 = vand.u32 %v290, 4294901760
        %6214 = vmatmul.mubr.f32.gmra.mxu0 %v6213
        %v6215 = vpop.f32.mrf.mxu0
        %v6216 = vadd.f32 %v5925, %v6215
        %v6217 = vpop.f32.mrf.mxu0
        %v6218 = vadd.f32 %v5927, %v6217
        %6219 = vmatprep.mubr.f32.mxu0 0.0
        %v6220 = vand.u32 %v293, 4294901760
        %6221 = vmatmul.mubr.f32.gmra.mxu0 %v6220
        %v6222 = vpop.f32.mrf.mxu0
        %v6223 = vadd.f32 %v5932, %v6222
        %v6224 = vpop.f32.mrf.mxu0
        %v6225 = vadd.f32 %v5934, %v6224
        %6226 = vmatprep.mubr.f32.mxu0 0.0
        %v6227 = vand.u32 %v296, 4294901760
        %6228 = vmatmul.mubr.f32.gmra.mxu0 %v6227
        %v6229 = vpop.f32.mrf.mxu0
        %v6230 = vadd.f32 %v5939, %v6229
        %v6231 = vpop.f32.mrf.mxu0
        %v6232 = vadd.f32 %v5941, %v6231
        %6233 = vmatprep.mubr.f32.mxu0 0.0
        %v6234 = vand.u32 %v299, 4294901760
        %6235 = vmatmul.mubr.f32.gmra.mxu0 %v6234
        %v6236 = vpop.f32.mrf.mxu0
        %v6237 = vadd.f32 %v5946, %v6236
        %v6238 = vpop.f32.mrf.mxu0
        %v6239 = vadd.f32 %v5948, %v6238
        %6240 = vmatprep.mubr.f32.mxu0 0.0
        %v6241 = vand.u32 %v302, 4294901760
        %6242 = vmatmul.mubr.f32.gmra.mxu0 %v6241
        %v6243 = vpop.f32.mrf.mxu0
        %v6244 = vadd.f32 %v5953, %v6243
        %v6245 = vpop.f32.mrf.mxu0
        %v6246 = vadd.f32 %v5955, %v6245
        %6247 = vmatprep.mubr.f32.mxu0 0.0
        %v6248 = vand.u32 %v305, 4294901760
        %6249 = vmatmul.mubr.f32.gmra.mxu0 %v6248
        %v6250 = vpop.f32.mrf.mxu0
        %v6251 = vadd.f32 %v5960, %v6250
        %v6252 = vpop.f32.mrf.mxu0
        %v6253 = vadd.f32 %v5962, %v6252
        %6254 = vmatprep.mubr.f32.mxu0 0.0
        %v6255 = vand.u32 %v308, 4294901760
        %6256 = vmatmul.mubr.f32.gmra.mxu0 %v6255
        %v6257 = vpop.f32.mrf.mxu0
        %v6258 = vadd.f32 %v5967, %v6257
        %v6259 = vpop.f32.mrf.mxu0
        %v6260 = vadd.f32 %v5969, %v6259
        %6261 = vdwg.mxu0
        %6262 = vmatprep.subr.mxu0 0.0
        %6263 = vmatpush1.msra.mxu0 0.0
        %6264 = vmatprep.subr.mxu0 0.0
        %6265 = vmatpush1.msra.mxu0 0.0
        %6266 = vmatprep.subr.mxu0 0.0
        %6267 = vmatpush1.msra.mxu0 0.0
        %6268 = vmatprep.subr.mxu0 0.0
        %6269 = vmatpush1.msra.mxu0 0.0
        %6270 = vmatprep.subr.mxu0 0.0
        %6271 = vmatpush1.msra.mxu0 0.0
        %6272 = vmatprep.subr.mxu0 0.0
        %6273 = vmatpush1.msra.mxu0 0.0
        %6274 = vmatprep.subr.mxu0 0.0
        %6275 = vmatpush1.msra.mxu0 0.0
        %6276 = vmatprep.subr.mxu0 0.0
        %6277 = vmatpush1.msra.mxu0 0.0
        %6278 = vmatprep.subr.mxu0 0.0
        %6279 = vmatpush1.msra.mxu0 0.0
        %6280 = vmatprep.subr.mxu0 0.0
        %6281 = vmatpush1.msra.mxu0 0.0
        %6282 = vmatprep.subr.mxu0 0.0
        %6283 = vmatpush1.msra.mxu0 0.0
        %6284 = vmatprep.subr.mxu0 0.0
        %6285 = vmatpush1.msra.mxu0 0.0
        %6286 = vmatprep.subr.mxu0 0.0
        %6287 = vmatpush1.msra.mxu0 0.0
        %6288 = vmatprep.subr.mxu0 0.0
        %6289 = vmatpush1.msra.mxu0 0.0
        %6290 = vmatprep.subr.mxu0 0.0
        %6291 = vmatpush1.msra.mxu0 0.0
        %v6292 = vand.u32 %v212, 4294901760
        %6293 = vmatprep.subr.mxu0 %v6292
        %v6294 = vand.u32 %v211, 4294901760
        %6295 = vmatpush1.msra.mxu0 %v6294
        %6296 = vmatprep.subr.mxu0 0.0
        %6297 = vmatpush2.msra.mxu0 0.0
        %6298 = vmatprep.subr.mxu0 0.0
        %6299 = vmatpush2.msra.mxu0 0.0
        %6300 = vmatprep.subr.mxu0 0.0
        %6301 = vmatpush2.msra.mxu0 0.0
        %6302 = vmatprep.subr.mxu0 0.0
        %6303 = vmatpush2.msra.mxu0 0.0
        %6304 = vmatprep.subr.mxu0 0.0
        %6305 = vmatpush2.msra.mxu0 0.0
        %6306 = vmatprep.subr.mxu0 0.0
        %6307 = vmatpush2.msra.mxu0 0.0
        %6308 = vmatprep.subr.mxu0 0.0
        %6309 = vmatpush2.msra.mxu0 0.0
        %6310 = vmatprep.subr.mxu0 0.0
        %6311 = vmatpush2.msra.mxu0 0.0
        %6312 = vmatprep.subr.mxu0 0.0
        %6313 = vmatpush2.msra.mxu0 0.0
        %6314 = vmatprep.subr.mxu0 0.0
        %6315 = vmatpush2.msra.mxu0 0.0
        %6316 = vmatprep.subr.mxu0 0.0
        %6317 = vmatpush2.msra.mxu0 0.0
        %6318 = vmatprep.subr.mxu0 0.0
        %6319 = vmatpush2.msra.mxu0 0.0
        %6320 = vmatprep.subr.mxu0 0.0
        %6321 = vmatpush2.msra.mxu0 0.0
        %6322 = vmatprep.subr.mxu0 0.0
        %6323 = vmatpush2.msra.mxu0 0.0
        %6324 = vmatprep.subr.mxu0 0.0
        %6325 = vmatpush2.msra.mxu0 0.0
        %6326 = vmatprep.subr.mxu0 0.0
        %6327 = vmatpush2.msra.mxu0 0.0
        %6328 = vmatprep.mubr.f32.mxu0 0.0
        %v6329 = vand.u32 %v215, 4294901760
        %v6330 = vsub.f32 %v215, %v6329
        %v6331 = vand.u32 %v6330, 4294901760
        %v6332 = vsub.f32 %v6330, %v6331
        %v6333 = vand.u32 %v6332, 4294901760
        %6334 = vmatmul.mubr.f32.gmra.mxu0 %v6333
        %v6335 = vpop.f32.mrf.mxu0
        %v6336 = vadd.f32 0.0, %v6335
        %v6337 = vpop.f32.mrf.mxu0
        %v6338 = vadd.f32 0.0, %v6337
        %6339 = vmatprep.mubr.f32.mxu0 0.0
        %v6340 = vand.u32 %v218, 4294901760
        %v6341 = vsub.f32 %v218, %v6340
        %v6342 = vand.u32 %v6341, 4294901760
        %v6343 = vsub.f32 %v6341, %v6342
        %v6344 = vand.u32 %v6343, 4294901760
        %6345 = vmatmul.mubr.f32.gmra.mxu0 %v6344
        %v6346 = vpop.f32.mrf.mxu0
        %v6347 = vadd.f32 0.0, %v6346
        %v6348 = vpop.f32.mrf.mxu0
        %v6349 = vadd.f32 0.0, %v6348
        %6350 = vmatprep.mubr.f32.mxu0 0.0
        %v6351 = vand.u32 %v221, 4294901760
        %v6352 = vsub.f32 %v221, %v6351
        %v6353 = vand.u32 %v6352, 4294901760
        %v6354 = vsub.f32 %v6352, %v6353
        %v6355 = vand.u32 %v6354, 4294901760
        %6356 = vmatmul.mubr.f32.gmra.mxu0 %v6355
        %v6357 = vpop.f32.mrf.mxu0
        %v6358 = vadd.f32 0.0, %v6357
        %v6359 = vpop.f32.mrf.mxu0
        %v6360 = vadd.f32 0.0, %v6359
        %6361 = vmatprep.mubr.f32.mxu0 0.0
        %v6362 = vand.u32 %v224, 4294901760
        %v6363 = vsub.f32 %v224, %v6362
        %v6364 = vand.u32 %v6363, 4294901760
        %v6365 = vsub.f32 %v6363, %v6364
        %v6366 = vand.u32 %v6365, 4294901760
        %6367 = vmatmul.mubr.f32.gmra.mxu0 %v6366
        %v6368 = vpop.f32.mrf.mxu0
        %v6369 = vadd.f32 0.0, %v6368
        %v6370 = vpop.f32.mrf.mxu0
        %v6371 = vadd.f32 0.0, %v6370
        %6372 = vmatprep.mubr.f32.mxu0 0.0
        %v6373 = vand.u32 %v227, 4294901760
        %v6374 = vsub.f32 %v227, %v6373
        %v6375 = vand.u32 %v6374, 4294901760
        %v6376 = vsub.f32 %v6374, %v6375
        %v6377 = vand.u32 %v6376, 4294901760
        %6378 = vmatmul.mubr.f32.gmra.mxu0 %v6377
        %v6379 = vpop.f32.mrf.mxu0
        %v6380 = vadd.f32 0.0, %v6379
        %v6381 = vpop.f32.mrf.mxu0
        %v6382 = vadd.f32 0.0, %v6381
        %6383 = vmatprep.mubr.f32.mxu0 0.0
        %v6384 = vand.u32 %v230, 4294901760
        %v6385 = vsub.f32 %v230, %v6384
        %v6386 = vand.u32 %v6385, 4294901760
        %v6387 = vsub.f32 %v6385, %v6386
        %v6388 = vand.u32 %v6387, 4294901760
        %6389 = vmatmul.mubr.f32.gmra.mxu0 %v6388
        %v6390 = vpop.f32.mrf.mxu0
        %v6391 = vadd.f32 0.0, %v6390
        %v6392 = vpop.f32.mrf.mxu0
        %v6393 = vadd.f32 0.0, %v6392
        %6394 = vmatprep.mubr.f32.mxu0 0.0
        %v6395 = vand.u32 %v233, 4294901760
        %v6396 = vsub.f32 %v233, %v6395
        %v6397 = vand.u32 %v6396, 4294901760
        %v6398 = vsub.f32 %v6396, %v6397
        %v6399 = vand.u32 %v6398, 4294901760
        %6400 = vmatmul.mubr.f32.gmra.mxu0 %v6399
        %v6401 = vpop.f32.mrf.mxu0
        %v6402 = vadd.f32 0.0, %v6401
        %v6403 = vpop.f32.mrf.mxu0
        %v6404 = vadd.f32 0.0, %v6403
        %6405 = vmatprep.mubr.f32.mxu0 0.0
        %v6406 = vand.u32 %v236, 4294901760
        %v6407 = vsub.f32 %v236, %v6406
        %v6408 = vand.u32 %v6407, 4294901760
        %v6409 = vsub.f32 %v6407, %v6408
        %v6410 = vand.u32 %v6409, 4294901760
        %6411 = vmatmul.mubr.f32.gmra.mxu0 %v6410
        %v6412 = vpop.f32.mrf.mxu0
        %v6413 = vadd.f32 0.0, %v6412
        %v6414 = vpop.f32.mrf.mxu0
        %v6415 = vadd.f32 0.0, %v6414
        %6416 = vmatprep.mubr.f32.mxu0 0.0
        %v6417 = vand.u32 %v239, 4294901760
        %v6418 = vsub.f32 %v239, %v6417
        %v6419 = vand.u32 %v6418, 4294901760
        %v6420 = vsub.f32 %v6418, %v6419
        %v6421 = vand.u32 %v6420, 4294901760
        %6422 = vmatmul.mubr.f32.gmra.mxu0 %v6421
        %v6423 = vpop.f32.mrf.mxu0
        %v6424 = vadd.f32 0.0, %v6423
        %v6425 = vpop.f32.mrf.mxu0
        %v6426 = vadd.f32 0.0, %v6425
        %6427 = vmatprep.mubr.f32.mxu0 0.0
        %v6428 = vand.u32 %v242, 4294901760
        %v6429 = vsub.f32 %v242, %v6428
        %v6430 = vand.u32 %v6429, 4294901760
        %v6431 = vsub.f32 %v6429, %v6430
        %v6432 = vand.u32 %v6431, 4294901760
        %6433 = vmatmul.mubr.f32.gmra.mxu0 %v6432
        %v6434 = vpop.f32.mrf.mxu0
        %v6435 = vadd.f32 0.0, %v6434
        %v6436 = vpop.f32.mrf.mxu0
        %v6437 = vadd.f32 0.0, %v6436
        %6438 = vmatprep.mubr.f32.mxu0 0.0
        %v6439 = vand.u32 %v245, 4294901760
        %v6440 = vsub.f32 %v245, %v6439
        %v6441 = vand.u32 %v6440, 4294901760
        %v6442 = vsub.f32 %v6440, %v6441
        %v6443 = vand.u32 %v6442, 4294901760
        %6444 = vmatmul.mubr.f32.gmra.mxu0 %v6443
        %v6445 = vpop.f32.mrf.mxu0
        %v6446 = vadd.f32 0.0, %v6445
        %v6447 = vpop.f32.mrf.mxu0
        %v6448 = vadd.f32 0.0, %v6447
        %6449 = vmatprep.mubr.f32.mxu0 0.0
        %v6450 = vand.u32 %v248, 4294901760
        %v6451 = vsub.f32 %v248, %v6450
        %v6452 = vand.u32 %v6451, 4294901760
        %v6453 = vsub.f32 %v6451, %v6452
        %v6454 = vand.u32 %v6453, 4294901760
        %6455 = vmatmul.mubr.f32.gmra.mxu0 %v6454
        %v6456 = vpop.f32.mrf.mxu0
        %v6457 = vadd.f32 0.0, %v6456
        %v6458 = vpop.f32.mrf.mxu0
        %v6459 = vadd.f32 0.0, %v6458
        %6460 = vmatprep.mubr.f32.mxu0 0.0
        %v6461 = vand.u32 %v251, 4294901760
        %v6462 = vsub.f32 %v251, %v6461
        %v6463 = vand.u32 %v6462, 4294901760
        %v6464 = vsub.f32 %v6462, %v6463
        %v6465 = vand.u32 %v6464, 4294901760
        %6466 = vmatmul.mubr.f32.gmra.mxu0 %v6465
        %v6467 = vpop.f32.mrf.mxu0
        %v6468 = vadd.f32 0.0, %v6467
        %v6469 = vpop.f32.mrf.mxu0
        %v6470 = vadd.f32 0.0, %v6469
        %6471 = vmatprep.mubr.f32.mxu0 0.0
        %v6472 = vand.u32 %v254, 4294901760
        %v6473 = vsub.f32 %v254, %v6472
        %v6474 = vand.u32 %v6473, 4294901760
        %v6475 = vsub.f32 %v6473, %v6474
        %v6476 = vand.u32 %v6475, 4294901760
        %6477 = vmatmul.mubr.f32.gmra.mxu0 %v6476
        %v6478 = vpop.f32.mrf.mxu0
        %v6479 = vadd.f32 0.0, %v6478
        %v6480 = vpop.f32.mrf.mxu0
        %v6481 = vadd.f32 0.0, %v6480
        %6482 = vmatprep.mubr.f32.mxu0 0.0
        %v6483 = vand.u32 %v257, 4294901760
        %v6484 = vsub.f32 %v257, %v6483
        %v6485 = vand.u32 %v6484, 4294901760
        %v6486 = vsub.f32 %v6484, %v6485
        %v6487 = vand.u32 %v6486, 4294901760
        %6488 = vmatmul.mubr.f32.gmra.mxu0 %v6487
        %v6489 = vpop.f32.mrf.mxu0
        %v6490 = vadd.f32 0.0, %v6489
        %v6491 = vpop.f32.mrf.mxu0
        %v6492 = vadd.f32 0.0, %v6491
        %6493 = vmatprep.mubr.f32.mxu0 0.0
        %v6494 = vand.u32 %v260, 4294901760
        %v6495 = vsub.f32 %v260, %v6494
        %v6496 = vand.u32 %v6495, 4294901760
        %v6497 = vsub.f32 %v6495, %v6496
        %v6498 = vand.u32 %v6497, 4294901760
        %6499 = vmatmul.mubr.f32.gmra.mxu0 %v6498
        %v6500 = vpop.f32.mrf.mxu0
        %v6501 = vadd.f32 0.0, %v6500
        %v6502 = vpop.f32.mrf.mxu0
        %v6503 = vadd.f32 0.0, %v6502
        %6504 = vmatprep.mubr.f32.mxu0 0.0
        %v6505 = vand.u32 %v263, 4294901760
        %v6506 = vsub.f32 %v263, %v6505
        %v6507 = vand.u32 %v6506, 4294901760
        %v6508 = vsub.f32 %v6506, %v6507
        %v6509 = vand.u32 %v6508, 4294901760
        %6510 = vmatmul.mubr.f32.gmra.mxu0 %v6509
        %v6511 = vpop.f32.mrf.mxu0
        %v6512 = vadd.f32 0.0, %v6511
        %v6513 = vpop.f32.mrf.mxu0
        %v6514 = vadd.f32 0.0, %v6513
        %6515 = vmatprep.mubr.f32.mxu0 0.0
        %v6516 = vand.u32 %v266, 4294901760
        %v6517 = vsub.f32 %v266, %v6516
        %v6518 = vand.u32 %v6517, 4294901760
        %v6519 = vsub.f32 %v6517, %v6518
        %v6520 = vand.u32 %v6519, 4294901760
        %6521 = vmatmul.mubr.f32.gmra.mxu0 %v6520
        %v6522 = vpop.f32.mrf.mxu0
        %v6523 = vadd.f32 0.0, %v6522
        %v6524 = vpop.f32.mrf.mxu0
        %v6525 = vadd.f32 0.0, %v6524
        %6526 = vmatprep.mubr.f32.mxu0 0.0
        %v6527 = vand.u32 %v269, 4294901760
        %v6528 = vsub.f32 %v269, %v6527
        %v6529 = vand.u32 %v6528, 4294901760
        %v6530 = vsub.f32 %v6528, %v6529
        %v6531 = vand.u32 %v6530, 4294901760
        %6532 = vmatmul.mubr.f32.gmra.mxu0 %v6531
        %v6533 = vpop.f32.mrf.mxu0
        %v6534 = vadd.f32 0.0, %v6533
        %v6535 = vpop.f32.mrf.mxu0
        %v6536 = vadd.f32 0.0, %v6535
        %6537 = vmatprep.mubr.f32.mxu0 0.0
        %v6538 = vand.u32 %v272, 4294901760
        %v6539 = vsub.f32 %v272, %v6538
        %v6540 = vand.u32 %v6539, 4294901760
        %v6541 = vsub.f32 %v6539, %v6540
        %v6542 = vand.u32 %v6541, 4294901760
        %6543 = vmatmul.mubr.f32.gmra.mxu0 %v6542
        %v6544 = vpop.f32.mrf.mxu0
        %v6545 = vadd.f32 0.0, %v6544
        %v6546 = vpop.f32.mrf.mxu0
        %v6547 = vadd.f32 0.0, %v6546
        %6548 = vmatprep.mubr.f32.mxu0 0.0
        %v6549 = vand.u32 %v275, 4294901760
        %v6550 = vsub.f32 %v275, %v6549
        %v6551 = vand.u32 %v6550, 4294901760
        %v6552 = vsub.f32 %v6550, %v6551
        %v6553 = vand.u32 %v6552, 4294901760
        %6554 = vmatmul.mubr.f32.gmra.mxu0 %v6553
        %v6555 = vpop.f32.mrf.mxu0
        %v6556 = vadd.f32 0.0, %v6555
        %v6557 = vpop.f32.mrf.mxu0
        %v6558 = vadd.f32 0.0, %v6557
        %6559 = vmatprep.mubr.f32.mxu0 0.0
        %v6560 = vand.u32 %v278, 4294901760
        %v6561 = vsub.f32 %v278, %v6560
        %v6562 = vand.u32 %v6561, 4294901760
        %v6563 = vsub.f32 %v6561, %v6562
        %v6564 = vand.u32 %v6563, 4294901760
        %6565 = vmatmul.mubr.f32.gmra.mxu0 %v6564
        %v6566 = vpop.f32.mrf.mxu0
        %v6567 = vadd.f32 0.0, %v6566
        %v6568 = vpop.f32.mrf.mxu0
        %v6569 = vadd.f32 0.0, %v6568
        %6570 = vmatprep.mubr.f32.mxu0 0.0
        %v6571 = vand.u32 %v281, 4294901760
        %v6572 = vsub.f32 %v281, %v6571
        %v6573 = vand.u32 %v6572, 4294901760
        %v6574 = vsub.f32 %v6572, %v6573
        %v6575 = vand.u32 %v6574, 4294901760
        %6576 = vmatmul.mubr.f32.gmra.mxu0 %v6575
        %v6577 = vpop.f32.mrf.mxu0
        %v6578 = vadd.f32 0.0, %v6577
        %v6579 = vpop.f32.mrf.mxu0
        %v6580 = vadd.f32 0.0, %v6579
        %6581 = vmatprep.mubr.f32.mxu0 0.0
        %v6582 = vand.u32 %v284, 4294901760
        %v6583 = vsub.f32 %v284, %v6582
        %v6584 = vand.u32 %v6583, 4294901760
        %v6585 = vsub.f32 %v6583, %v6584
        %v6586 = vand.u32 %v6585, 4294901760
        %6587 = vmatmul.mubr.f32.gmra.mxu0 %v6586
        %v6588 = vpop.f32.mrf.mxu0
        %v6589 = vadd.f32 0.0, %v6588
        %v6590 = vpop.f32.mrf.mxu0
        %v6591 = vadd.f32 0.0, %v6590
        %6592 = vmatprep.mubr.f32.mxu0 0.0
        %v6593 = vand.u32 %v287, 4294901760
        %v6594 = vsub.f32 %v287, %v6593
        %v6595 = vand.u32 %v6594, 4294901760
        %v6596 = vsub.f32 %v6594, %v6595
        %v6597 = vand.u32 %v6596, 4294901760
        %6598 = vmatmul.mubr.f32.gmra.mxu0 %v6597
        %v6599 = vpop.f32.mrf.mxu0
        %v6600 = vadd.f32 0.0, %v6599
        %v6601 = vpop.f32.mrf.mxu0
        %v6602 = vadd.f32 0.0, %v6601
        %6603 = vmatprep.mubr.f32.mxu0 0.0
        %v6604 = vand.u32 %v290, 4294901760
        %v6605 = vsub.f32 %v290, %v6604
        %v6606 = vand.u32 %v6605, 4294901760
        %v6607 = vsub.f32 %v6605, %v6606
        %v6608 = vand.u32 %v6607, 4294901760
        %6609 = vmatmul.mubr.f32.gmra.mxu0 %v6608
        %v6610 = vpop.f32.mrf.mxu0
        %v6611 = vadd.f32 0.0, %v6610
        %v6612 = vpop.f32.mrf.mxu0
        %v6613 = vadd.f32 0.0, %v6612
        %6614 = vmatprep.mubr.f32.mxu0 0.0
        %v6615 = vand.u32 %v293, 4294901760
        %v6616 = vsub.f32 %v293, %v6615
        %v6617 = vand.u32 %v6616, 4294901760
        %v6618 = vsub.f32 %v6616, %v6617
        %v6619 = vand.u32 %v6618, 4294901760
        %6620 = vmatmul.mubr.f32.gmra.mxu0 %v6619
        %v6621 = vpop.f32.mrf.mxu0
        %v6622 = vadd.f32 0.0, %v6621
        %v6623 = vpop.f32.mrf.mxu0
        %v6624 = vadd.f32 0.0, %v6623
        %6625 = vmatprep.mubr.f32.mxu0 0.0
        %v6626 = vand.u32 %v296, 4294901760
        %v6627 = vsub.f32 %v296, %v6626
        %v6628 = vand.u32 %v6627, 4294901760
        %v6629 = vsub.f32 %v6627, %v6628
        %v6630 = vand.u32 %v6629, 4294901760
        %6631 = vmatmul.mubr.f32.gmra.mxu0 %v6630
        %v6632 = vpop.f32.mrf.mxu0
        %v6633 = vadd.f32 0.0, %v6632
        %v6634 = vpop.f32.mrf.mxu0
        %v6635 = vadd.f32 0.0, %v6634
        %6636 = vmatprep.mubr.f32.mxu0 0.0
        %v6637 = vand.u32 %v299, 4294901760
        %v6638 = vsub.f32 %v299, %v6637
        %v6639 = vand.u32 %v6638, 4294901760
        %v6640 = vsub.f32 %v6638, %v6639
        %v6641 = vand.u32 %v6640, 4294901760
        %6642 = vmatmul.mubr.f32.gmra.mxu0 %v6641
        %v6643 = vpop.f32.mrf.mxu0
        %v6644 = vadd.f32 0.0, %v6643
        %v6645 = vpop.f32.mrf.mxu0
        %v6646 = vadd.f32 0.0, %v6645
        %6647 = vmatprep.mubr.f32.mxu0 0.0
        %v6648 = vand.u32 %v302, 4294901760
        %v6649 = vsub.f32 %v302, %v6648
        %v6650 = vand.u32 %v6649, 4294901760
        %v6651 = vsub.f32 %v6649, %v6650
        %v6652 = vand.u32 %v6651, 4294901760
        %6653 = vmatmul.mubr.f32.gmra.mxu0 %v6652
        %v6654 = vpop.f32.mrf.mxu0
        %v6655 = vadd.f32 0.0, %v6654
        %v6656 = vpop.f32.mrf.mxu0
        %v6657 = vadd.f32 0.0, %v6656
        %6658 = vmatprep.mubr.f32.mxu0 0.0
        %v6659 = vand.u32 %v305, 4294901760
        %v6660 = vsub.f32 %v305, %v6659
        %v6661 = vand.u32 %v6660, 4294901760
        %v6662 = vsub.f32 %v6660, %v6661
        %v6663 = vand.u32 %v6662, 4294901760
        %6664 = vmatmul.mubr.f32.gmra.mxu0 %v6663
        %v6665 = vpop.f32.mrf.mxu0
        %v6666 = vadd.f32 0.0, %v6665
        %v6667 = vpop.f32.mrf.mxu0
        %v6668 = vadd.f32 0.0, %v6667
        %6669 = vmatprep.mubr.f32.mxu0 0.0
        %v6670 = vand.u32 %v308, 4294901760
        %v6671 = vsub.f32 %v308, %v6670
        %v6672 = vand.u32 %v6671, 4294901760
        %v6673 = vsub.f32 %v6671, %v6672
        %v6674 = vand.u32 %v6673, 4294901760
        %6675 = vmatmul.mubr.f32.gmra.mxu0 %v6674
        %v6676 = vpop.f32.mrf.mxu0
        %v6677 = vadd.f32 0.0, %v6676
        %v6678 = vpop.f32.mrf.mxu0
        %v6679 = vadd.f32 0.0, %v6678
        %6680 = vdwg.mxu0
        %6681 = vmatprep.subr.mxu0 0.0
        %6682 = vmatpush1.msra.mxu0 0.0
        %6683 = vmatprep.subr.mxu0 0.0
        %6684 = vmatpush1.msra.mxu0 0.0
        %6685 = vmatprep.subr.mxu0 0.0
        %6686 = vmatpush1.msra.mxu0 0.0
        %6687 = vmatprep.subr.mxu0 0.0
        %6688 = vmatpush1.msra.mxu0 0.0
        %6689 = vmatprep.subr.mxu0 0.0
        %6690 = vmatpush1.msra.mxu0 0.0
        %6691 = vmatprep.subr.mxu0 0.0
        %6692 = vmatpush1.msra.mxu0 0.0
        %6693 = vmatprep.subr.mxu0 0.0
        %6694 = vmatpush1.msra.mxu0 0.0
        %6695 = vmatprep.subr.mxu0 0.0
        %6696 = vmatpush1.msra.mxu0 0.0
        %6697 = vmatprep.subr.mxu0 0.0
        %6698 = vmatpush1.msra.mxu0 0.0
        %6699 = vmatprep.subr.mxu0 0.0
        %6700 = vmatpush1.msra.mxu0 0.0
        %6701 = vmatprep.subr.mxu0 0.0
        %6702 = vmatpush1.msra.mxu0 0.0
        %6703 = vmatprep.subr.mxu0 0.0
        %6704 = vmatpush1.msra.mxu0 0.0
        %6705 = vmatprep.subr.mxu0 0.0
        %6706 = vmatpush1.msra.mxu0 0.0
        %6707 = vmatprep.subr.mxu0 0.0
        %6708 = vmatpush1.msra.mxu0 0.0
        %6709 = vmatprep.subr.mxu0 0.0
        %6710 = vmatpush1.msra.mxu0 0.0
        %v6711 = vand.u32 %v212, 4294901760
        %v6712 = vsub.f32 %v212, %v6711
        %v6713 = vand.u32 %v6712, 4294901760
        %v6714 = vsub.f32 %v6712, %v6713
        %v6715 = vand.u32 %v6714, 4294901760
        %6716 = vmatprep.subr.mxu0 %v6715
        %v6717 = vand.u32 %v211, 4294901760
        %v6718 = vsub.f32 %v211, %v6717
        %v6719 = vand.u32 %v6718, 4294901760
        %v6720 = vsub.f32 %v6718, %v6719
        %v6721 = vand.u32 %v6720, 4294901760
        %6722 = vmatpush1.msra.mxu0 %v6721
        %6723 = vmatprep.subr.mxu0 0.0
        %6724 = vmatpush2.msra.mxu0 0.0
        %6725 = vmatprep.subr.mxu0 0.0
        %6726 = vmatpush2.msra.mxu0 0.0
        %6727 = vmatprep.subr.mxu0 0.0
        %6728 = vmatpush2.msra.mxu0 0.0
        %6729 = vmatprep.subr.mxu0 0.0
        %6730 = vmatpush2.msra.mxu0 0.0
        %6731 = vmatprep.subr.mxu0 0.0
        %6732 = vmatpush2.msra.mxu0 0.0
        %6733 = vmatprep.subr.mxu0 0.0
        %6734 = vmatpush2.msra.mxu0 0.0
        %6735 = vmatprep.subr.mxu0 0.0
        %6736 = vmatpush2.msra.mxu0 0.0
        %6737 = vmatprep.subr.mxu0 0.0
        %6738 = vmatpush2.msra.mxu0 0.0
        %6739 = vmatprep.subr.mxu0 0.0
        %6740 = vmatpush2.msra.mxu0 0.0
        %6741 = vmatprep.subr.mxu0 0.0
        %6742 = vmatpush2.msra.mxu0 0.0
        %6743 = vmatprep.subr.mxu0 0.0
        %6744 = vmatpush2.msra.mxu0 0.0
        %6745 = vmatprep.subr.mxu0 0.0
        %6746 = vmatpush2.msra.mxu0 0.0
        %6747 = vmatprep.subr.mxu0 0.0
        %6748 = vmatpush2.msra.mxu0 0.0
        %6749 = vmatprep.subr.mxu0 0.0
        %6750 = vmatpush2.msra.mxu0 0.0
        %6751 = vmatprep.subr.mxu0 0.0
        %6752 = vmatpush2.msra.mxu0 0.0
        %6753 = vmatprep.subr.mxu0 0.0
        %6754 = vmatpush2.msra.mxu0 0.0
        %6755 = vmatprep.mubr.f32.mxu0 0.0
        %v6756 = vand.u32 %v215, 4294901760
        %6757 = vmatmul.mubr.f32.gmra.mxu0 %v6756
        %v6758 = vpop.f32.mrf.mxu0
        %v6759 = vadd.f32 %v6336, %v6758
        %v6760 = vpop.f32.mrf.mxu0
        %v6761 = vadd.f32 %v6338, %v6760
        %6762 = vmatprep.mubr.f32.mxu0 0.0
        %v6763 = vand.u32 %v218, 4294901760
        %6764 = vmatmul.mubr.f32.gmra.mxu0 %v6763
        %v6765 = vpop.f32.mrf.mxu0
        %v6766 = vadd.f32 %v6347, %v6765
        %v6767 = vpop.f32.mrf.mxu0
        %v6768 = vadd.f32 %v6349, %v6767
        %6769 = vmatprep.mubr.f32.mxu0 0.0
        %v6770 = vand.u32 %v221, 4294901760
        %6771 = vmatmul.mubr.f32.gmra.mxu0 %v6770
        %v6772 = vpop.f32.mrf.mxu0
        %v6773 = vadd.f32 %v6358, %v6772
        %v6774 = vpop.f32.mrf.mxu0
        %v6775 = vadd.f32 %v6360, %v6774
        %6776 = vmatprep.mubr.f32.mxu0 0.0
        %v6777 = vand.u32 %v224, 4294901760
        %6778 = vmatmul.mubr.f32.gmra.mxu0 %v6777
        %v6779 = vpop.f32.mrf.mxu0
        %v6780 = vadd.f32 %v6369, %v6779
        %v6781 = vpop.f32.mrf.mxu0
        %v6782 = vadd.f32 %v6371, %v6781
        %6783 = vmatprep.mubr.f32.mxu0 0.0
        %v6784 = vand.u32 %v227, 4294901760
        %6785 = vmatmul.mubr.f32.gmra.mxu0 %v6784
        %v6786 = vpop.f32.mrf.mxu0
        %v6787 = vadd.f32 %v6380, %v6786
        %v6788 = vpop.f32.mrf.mxu0
        %v6789 = vadd.f32 %v6382, %v6788
        %6790 = vmatprep.mubr.f32.mxu0 0.0
        %v6791 = vand.u32 %v230, 4294901760
        %6792 = vmatmul.mubr.f32.gmra.mxu0 %v6791
        %v6793 = vpop.f32.mrf.mxu0
        %v6794 = vadd.f32 %v6391, %v6793
        %v6795 = vpop.f32.mrf.mxu0
        %v6796 = vadd.f32 %v6393, %v6795
        %6797 = vmatprep.mubr.f32.mxu0 0.0
        %v6798 = vand.u32 %v233, 4294901760
        %6799 = vmatmul.mubr.f32.gmra.mxu0 %v6798
        %v6800 = vpop.f32.mrf.mxu0
        %v6801 = vadd.f32 %v6402, %v6800
        %v6802 = vpop.f32.mrf.mxu0
        %v6803 = vadd.f32 %v6404, %v6802
        %6804 = vmatprep.mubr.f32.mxu0 0.0
        %v6805 = vand.u32 %v236, 4294901760
        %6806 = vmatmul.mubr.f32.gmra.mxu0 %v6805
        %v6807 = vpop.f32.mrf.mxu0
        %v6808 = vadd.f32 %v6413, %v6807
        %v6809 = vpop.f32.mrf.mxu0
        %v6810 = vadd.f32 %v6415, %v6809
        %6811 = vmatprep.mubr.f32.mxu0 0.0
        %v6812 = vand.u32 %v239, 4294901760
        %6813 = vmatmul.mubr.f32.gmra.mxu0 %v6812
        %v6814 = vpop.f32.mrf.mxu0
        %v6815 = vadd.f32 %v6424, %v6814
        %v6816 = vpop.f32.mrf.mxu0
        %v6817 = vadd.f32 %v6426, %v6816
        %6818 = vmatprep.mubr.f32.mxu0 0.0
        %v6819 = vand.u32 %v242, 4294901760
        %6820 = vmatmul.mubr.f32.gmra.mxu0 %v6819
        %v6821 = vpop.f32.mrf.mxu0
        %v6822 = vadd.f32 %v6435, %v6821
        %v6823 = vpop.f32.mrf.mxu0
        %v6824 = vadd.f32 %v6437, %v6823
        %6825 = vmatprep.mubr.f32.mxu0 0.0
        %v6826 = vand.u32 %v245, 4294901760
        %6827 = vmatmul.mubr.f32.gmra.mxu0 %v6826
        %v6828 = vpop.f32.mrf.mxu0
        %v6829 = vadd.f32 %v6446, %v6828
        %v6830 = vpop.f32.mrf.mxu0
        %v6831 = vadd.f32 %v6448, %v6830
        %6832 = vmatprep.mubr.f32.mxu0 0.0
        %v6833 = vand.u32 %v248, 4294901760
        %6834 = vmatmul.mubr.f32.gmra.mxu0 %v6833
        %v6835 = vpop.f32.mrf.mxu0
        %v6836 = vadd.f32 %v6457, %v6835
        %v6837 = vpop.f32.mrf.mxu0
        %v6838 = vadd.f32 %v6459, %v6837
        %6839 = vmatprep.mubr.f32.mxu0 0.0
        %v6840 = vand.u32 %v251, 4294901760
        %6841 = vmatmul.mubr.f32.gmra.mxu0 %v6840
        %v6842 = vpop.f32.mrf.mxu0
        %v6843 = vadd.f32 %v6468, %v6842
        %v6844 = vpop.f32.mrf.mxu0
        %v6845 = vadd.f32 %v6470, %v6844
        %6846 = vmatprep.mubr.f32.mxu0 0.0
        %v6847 = vand.u32 %v254, 4294901760
        %6848 = vmatmul.mubr.f32.gmra.mxu0 %v6847
        %v6849 = vpop.f32.mrf.mxu0
        %v6850 = vadd.f32 %v6479, %v6849
        %v6851 = vpop.f32.mrf.mxu0
        %v6852 = vadd.f32 %v6481, %v6851
        %6853 = vmatprep.mubr.f32.mxu0 0.0
        %v6854 = vand.u32 %v257, 4294901760
        %6855 = vmatmul.mubr.f32.gmra.mxu0 %v6854
        %v6856 = vpop.f32.mrf.mxu0
        %v6857 = vadd.f32 %v6490, %v6856
        %v6858 = vpop.f32.mrf.mxu0
        %v6859 = vadd.f32 %v6492, %v6858
        %6860 = vmatprep.mubr.f32.mxu0 0.0
        %v6861 = vand.u32 %v260, 4294901760
        %6862 = vmatmul.mubr.f32.gmra.mxu0 %v6861
        %v6863 = vpop.f32.mrf.mxu0
        %v6864 = vadd.f32 %v6501, %v6863
        %v6865 = vpop.f32.mrf.mxu0
        %v6866 = vadd.f32 %v6503, %v6865
        %6867 = vmatprep.mubr.f32.mxu0 0.0
        %v6868 = vand.u32 %v263, 4294901760
        %6869 = vmatmul.mubr.f32.gmra.mxu0 %v6868
        %v6870 = vpop.f32.mrf.mxu0
        %v6871 = vadd.f32 %v6512, %v6870
        %v6872 = vpop.f32.mrf.mxu0
        %v6873 = vadd.f32 %v6514, %v6872
        %6874 = vmatprep.mubr.f32.mxu0 0.0
        %v6875 = vand.u32 %v266, 4294901760
        %6876 = vmatmul.mubr.f32.gmra.mxu0 %v6875
        %v6877 = vpop.f32.mrf.mxu0
        %v6878 = vadd.f32 %v6523, %v6877
        %v6879 = vpop.f32.mrf.mxu0
        %v6880 = vadd.f32 %v6525, %v6879
        %6881 = vmatprep.mubr.f32.mxu0 0.0
        %v6882 = vand.u32 %v269, 4294901760
        %6883 = vmatmul.mubr.f32.gmra.mxu0 %v6882
        %v6884 = vpop.f32.mrf.mxu0
        %v6885 = vadd.f32 %v6534, %v6884
        %v6886 = vpop.f32.mrf.mxu0
        %v6887 = vadd.f32 %v6536, %v6886
        %6888 = vmatprep.mubr.f32.mxu0 0.0
        %v6889 = vand.u32 %v272, 4294901760
        %6890 = vmatmul.mubr.f32.gmra.mxu0 %v6889
        %v6891 = vpop.f32.mrf.mxu0
        %v6892 = vadd.f32 %v6545, %v6891
        %v6893 = vpop.f32.mrf.mxu0
        %v6894 = vadd.f32 %v6547, %v6893
        %6895 = vmatprep.mubr.f32.mxu0 0.0
        %v6896 = vand.u32 %v275, 4294901760
        %6897 = vmatmul.mubr.f32.gmra.mxu0 %v6896
        %v6898 = vpop.f32.mrf.mxu0
        %v6899 = vadd.f32 %v6556, %v6898
        %v6900 = vpop.f32.mrf.mxu0
        %v6901 = vadd.f32 %v6558, %v6900
        %6902 = vmatprep.mubr.f32.mxu0 0.0
        %v6903 = vand.u32 %v278, 4294901760
        %6904 = vmatmul.mubr.f32.gmra.mxu0 %v6903
        %v6905 = vpop.f32.mrf.mxu0
        %v6906 = vadd.f32 %v6567, %v6905
        %v6907 = vpop.f32.mrf.mxu0
        %v6908 = vadd.f32 %v6569, %v6907
        %6909 = vmatprep.mubr.f32.mxu0 0.0
        %v6910 = vand.u32 %v281, 4294901760
        %6911 = vmatmul.mubr.f32.gmra.mxu0 %v6910
        %v6912 = vpop.f32.mrf.mxu0
        %v6913 = vadd.f32 %v6578, %v6912
        %v6914 = vpop.f32.mrf.mxu0
        %v6915 = vadd.f32 %v6580, %v6914
        %6916 = vmatprep.mubr.f32.mxu0 0.0
        %v6917 = vand.u32 %v284, 4294901760
        %6918 = vmatmul.mubr.f32.gmra.mxu0 %v6917
        %v6919 = vpop.f32.mrf.mxu0
        %v6920 = vadd.f32 %v6589, %v6919
        %v6921 = vpop.f32.mrf.mxu0
        %v6922 = vadd.f32 %v6591, %v6921
        %6923 = vmatprep.mubr.f32.mxu0 0.0
        %v6924 = vand.u32 %v287, 4294901760
        %6925 = vmatmul.mubr.f32.gmra.mxu0 %v6924
        %v6926 = vpop.f32.mrf.mxu0
        %v6927 = vadd.f32 %v6600, %v6926
        %v6928 = vpop.f32.mrf.mxu0
        %v6929 = vadd.f32 %v6602, %v6928
        %6930 = vmatprep.mubr.f32.mxu0 0.0
        %v6931 = vand.u32 %v290, 4294901760
        %6932 = vmatmul.mubr.f32.gmra.mxu0 %v6931
        %v6933 = vpop.f32.mrf.mxu0
        %v6934 = vadd.f32 %v6611, %v6933
        %v6935 = vpop.f32.mrf.mxu0
        %v6936 = vadd.f32 %v6613, %v6935
        %6937 = vmatprep.mubr.f32.mxu0 0.0
        %v6938 = vand.u32 %v293, 4294901760
        %6939 = vmatmul.mubr.f32.gmra.mxu0 %v6938
        %v6940 = vpop.f32.mrf.mxu0
        %v6941 = vadd.f32 %v6622, %v6940
        %v6942 = vpop.f32.mrf.mxu0
        %v6943 = vadd.f32 %v6624, %v6942
        %6944 = vmatprep.mubr.f32.mxu0 0.0
        %v6945 = vand.u32 %v296, 4294901760
        %6946 = vmatmul.mubr.f32.gmra.mxu0 %v6945
        %v6947 = vpop.f32.mrf.mxu0
        %v6948 = vadd.f32 %v6633, %v6947
        %v6949 = vpop.f32.mrf.mxu0
        %v6950 = vadd.f32 %v6635, %v6949
        %6951 = vmatprep.mubr.f32.mxu0 0.0
        %v6952 = vand.u32 %v299, 4294901760
        %6953 = vmatmul.mubr.f32.gmra.mxu0 %v6952
        %v6954 = vpop.f32.mrf.mxu0
        %v6955 = vadd.f32 %v6644, %v6954
        %v6956 = vpop.f32.mrf.mxu0
        %v6957 = vadd.f32 %v6646, %v6956
        %6958 = vmatprep.mubr.f32.mxu0 0.0
        %v6959 = vand.u32 %v302, 4294901760
        %6960 = vmatmul.mubr.f32.gmra.mxu0 %v6959
        %v6961 = vpop.f32.mrf.mxu0
        %v6962 = vadd.f32 %v6655, %v6961
        %v6963 = vpop.f32.mrf.mxu0
        %v6964 = vadd.f32 %v6657, %v6963
        %6965 = vmatprep.mubr.f32.mxu0 0.0
        %v6966 = vand.u32 %v305, 4294901760
        %6967 = vmatmul.mubr.f32.gmra.mxu0 %v6966
        %v6968 = vpop.f32.mrf.mxu0
        %v6969 = vadd.f32 %v6666, %v6968
        %v6970 = vpop.f32.mrf.mxu0
        %v6971 = vadd.f32 %v6668, %v6970
        %6972 = vmatprep.mubr.f32.mxu0 0.0
        %v6973 = vand.u32 %v308, 4294901760
        %6974 = vmatmul.mubr.f32.gmra.mxu0 %v6973
        %v6975 = vpop.f32.mrf.mxu0
        %v6976 = vadd.f32 %v6677, %v6975
        %v6977 = vpop.f32.mrf.mxu0
        %v6978 = vadd.f32 %v6679, %v6977
        %6979 = vdwg.mxu0
        %6980 = vmatprep.subr.mxu0 0.0
        %6981 = vmatpush1.msra.mxu0 0.0
        %6982 = vmatprep.subr.mxu0 0.0
        %6983 = vmatpush1.msra.mxu0 0.0
        %6984 = vmatprep.subr.mxu0 0.0
        %6985 = vmatpush1.msra.mxu0 0.0
        %6986 = vmatprep.subr.mxu0 0.0
        %6987 = vmatpush1.msra.mxu0 0.0
        %6988 = vmatprep.subr.mxu0 0.0
        %6989 = vmatpush1.msra.mxu0 0.0
        %6990 = vmatprep.subr.mxu0 0.0
        %6991 = vmatpush1.msra.mxu0 0.0
        %6992 = vmatprep.subr.mxu0 0.0
        %6993 = vmatpush1.msra.mxu0 0.0
        %6994 = vmatprep.subr.mxu0 0.0
        %6995 = vmatpush1.msra.mxu0 0.0
        %6996 = vmatprep.subr.mxu0 0.0
        %6997 = vmatpush1.msra.mxu0 0.0
        %6998 = vmatprep.subr.mxu0 0.0
        %6999 = vmatpush1.msra.mxu0 0.0
        %7000 = vmatprep.subr.mxu0 0.0
        %7001 = vmatpush1.msra.mxu0 0.0
        %7002 = vmatprep.subr.mxu0 0.0
        %7003 = vmatpush1.msra.mxu0 0.0
        %7004 = vmatprep.subr.mxu0 0.0
        %7005 = vmatpush1.msra.mxu0 0.0
        %7006 = vmatprep.subr.mxu0 0.0
        %7007 = vmatpush1.msra.mxu0 0.0
        %7008 = vmatprep.subr.mxu0 0.0
        %7009 = vmatpush1.msra.mxu0 0.0
        %v7010 = vand.u32 %v212, 4294901760
        %v7011 = vsub.f32 %v212, %v7010
        %7012 = vmatprep.subr.mxu0 %v7011
        %v7013 = vand.u32 %v211, 4294901760
        %v7014 = vsub.f32 %v211, %v7013
        %7015 = vmatpush1.msra.mxu0 %v7014
        %7016 = vmatprep.subr.mxu0 0.0
        %7017 = vmatpush2.msra.mxu0 0.0
        %7018 = vmatprep.subr.mxu0 0.0
        %7019 = vmatpush2.msra.mxu0 0.0
        %7020 = vmatprep.subr.mxu0 0.0
        %7021 = vmatpush2.msra.mxu0 0.0
        %7022 = vmatprep.subr.mxu0 0.0
        %7023 = vmatpush2.msra.mxu0 0.0
        %7024 = vmatprep.subr.mxu0 0.0
        %7025 = vmatpush2.msra.mxu0 0.0
        %7026 = vmatprep.subr.mxu0 0.0
        %7027 = vmatpush2.msra.mxu0 0.0
        %7028 = vmatprep.subr.mxu0 0.0
        %7029 = vmatpush2.msra.mxu0 0.0
        %7030 = vmatprep.subr.mxu0 0.0
        %7031 = vmatpush2.msra.mxu0 0.0
        %7032 = vmatprep.subr.mxu0 0.0
        %7033 = vmatpush2.msra.mxu0 0.0
        %7034 = vmatprep.subr.mxu0 0.0
        %7035 = vmatpush2.msra.mxu0 0.0
        %7036 = vmatprep.subr.mxu0 0.0
        %7037 = vmatpush2.msra.mxu0 0.0
        %7038 = vmatprep.subr.mxu0 0.0
        %7039 = vmatpush2.msra.mxu0 0.0
        %7040 = vmatprep.subr.mxu0 0.0
        %7041 = vmatpush2.msra.mxu0 0.0
        %7042 = vmatprep.subr.mxu0 0.0
        %7043 = vmatpush2.msra.mxu0 0.0
        %7044 = vmatprep.subr.mxu0 0.0
        %7045 = vmatpush2.msra.mxu0 0.0
        %7046 = vmatprep.subr.mxu0 0.0
        %7047 = vmatpush2.msra.mxu0 0.0
        %7048 = vmatprep.mubr.f32.mxu0 0.0
        %v7049 = vand.u32 %v215, 4294901760
        %v7050 = vsub.f32 %v215, %v7049
        %7051 = vmatmul.mubr.f32.gmra.mxu0 %v7050
        %v7052 = vpop.f32.mrf.mxu0
        %v7053 = vadd.f32 %v6759, %v7052
        %v7054 = vpop.f32.mrf.mxu0
        %v7055 = vadd.f32 %v6761, %v7054
        %7056 = vmatprep.mubr.f32.mxu0 0.0
        %v7057 = vand.u32 %v218, 4294901760
        %v7058 = vsub.f32 %v218, %v7057
        %7059 = vmatmul.mubr.f32.gmra.mxu0 %v7058
        %v7060 = vpop.f32.mrf.mxu0
        %v7061 = vadd.f32 %v6766, %v7060
        %v7062 = vpop.f32.mrf.mxu0
        %v7063 = vadd.f32 %v6768, %v7062
        %7064 = vmatprep.mubr.f32.mxu0 0.0
        %v7065 = vand.u32 %v221, 4294901760
        %v7066 = vsub.f32 %v221, %v7065
        %7067 = vmatmul.mubr.f32.gmra.mxu0 %v7066
        %v7068 = vpop.f32.mrf.mxu0
        %v7069 = vadd.f32 %v6773, %v7068
        %v7070 = vpop.f32.mrf.mxu0
        %v7071 = vadd.f32 %v6775, %v7070
        %7072 = vmatprep.mubr.f32.mxu0 0.0
        %v7073 = vand.u32 %v224, 4294901760
        %v7074 = vsub.f32 %v224, %v7073
        %7075 = vmatmul.mubr.f32.gmra.mxu0 %v7074
        %v7076 = vpop.f32.mrf.mxu0
        %v7077 = vadd.f32 %v6780, %v7076
        %v7078 = vpop.f32.mrf.mxu0
        %v7079 = vadd.f32 %v6782, %v7078
        %7080 = vmatprep.mubr.f32.mxu0 0.0
        %v7081 = vand.u32 %v227, 4294901760
        %v7082 = vsub.f32 %v227, %v7081
        %7083 = vmatmul.mubr.f32.gmra.mxu0 %v7082
        %v7084 = vpop.f32.mrf.mxu0
        %v7085 = vadd.f32 %v6787, %v7084
        %v7086 = vpop.f32.mrf.mxu0
        %v7087 = vadd.f32 %v6789, %v7086
        %7088 = vmatprep.mubr.f32.mxu0 0.0
        %v7089 = vand.u32 %v230, 4294901760
        %v7090 = vsub.f32 %v230, %v7089
        %7091 = vmatmul.mubr.f32.gmra.mxu0 %v7090
        %v7092 = vpop.f32.mrf.mxu0
        %v7093 = vadd.f32 %v6794, %v7092
        %v7094 = vpop.f32.mrf.mxu0
        %v7095 = vadd.f32 %v6796, %v7094
        %7096 = vmatprep.mubr.f32.mxu0 0.0
        %v7097 = vand.u32 %v233, 4294901760
        %v7098 = vsub.f32 %v233, %v7097
        %7099 = vmatmul.mubr.f32.gmra.mxu0 %v7098
        %v7100 = vpop.f32.mrf.mxu0
        %v7101 = vadd.f32 %v6801, %v7100
        %v7102 = vpop.f32.mrf.mxu0
        %v7103 = vadd.f32 %v6803, %v7102
        %7104 = vmatprep.mubr.f32.mxu0 0.0
        %v7105 = vand.u32 %v236, 4294901760
        %v7106 = vsub.f32 %v236, %v7105
        %7107 = vmatmul.mubr.f32.gmra.mxu0 %v7106
        %v7108 = vpop.f32.mrf.mxu0
        %v7109 = vadd.f32 %v6808, %v7108
        %v7110 = vpop.f32.mrf.mxu0
        %v7111 = vadd.f32 %v6810, %v7110
        %7112 = vmatprep.mubr.f32.mxu0 0.0
        %v7113 = vand.u32 %v239, 4294901760
        %v7114 = vsub.f32 %v239, %v7113
        %7115 = vmatmul.mubr.f32.gmra.mxu0 %v7114
        %v7116 = vpop.f32.mrf.mxu0
        %v7117 = vadd.f32 %v6815, %v7116
        %v7118 = vpop.f32.mrf.mxu0
        %v7119 = vadd.f32 %v6817, %v7118
        %7120 = vmatprep.mubr.f32.mxu0 0.0
        %v7121 = vand.u32 %v242, 4294901760
        %v7122 = vsub.f32 %v242, %v7121
        %7123 = vmatmul.mubr.f32.gmra.mxu0 %v7122
        %v7124 = vpop.f32.mrf.mxu0
        %v7125 = vadd.f32 %v6822, %v7124
        %v7126 = vpop.f32.mrf.mxu0
        %v7127 = vadd.f32 %v6824, %v7126
        %7128 = vmatprep.mubr.f32.mxu0 0.0
        %v7129 = vand.u32 %v245, 4294901760
        %v7130 = vsub.f32 %v245, %v7129
        %7131 = vmatmul.mubr.f32.gmra.mxu0 %v7130
        %v7132 = vpop.f32.mrf.mxu0
        %v7133 = vadd.f32 %v6829, %v7132
        %v7134 = vpop.f32.mrf.mxu0
        %v7135 = vadd.f32 %v6831, %v7134
        %7136 = vmatprep.mubr.f32.mxu0 0.0
        %v7137 = vand.u32 %v248, 4294901760
        %v7138 = vsub.f32 %v248, %v7137
        %7139 = vmatmul.mubr.f32.gmra.mxu0 %v7138
        %v7140 = vpop.f32.mrf.mxu0
        %v7141 = vadd.f32 %v6836, %v7140
        %v7142 = vpop.f32.mrf.mxu0
        %v7143 = vadd.f32 %v6838, %v7142
        %7144 = vmatprep.mubr.f32.mxu0 0.0
        %v7145 = vand.u32 %v251, 4294901760
        %v7146 = vsub.f32 %v251, %v7145
        %7147 = vmatmul.mubr.f32.gmra.mxu0 %v7146
        %v7148 = vpop.f32.mrf.mxu0
        %v7149 = vadd.f32 %v6843, %v7148
        %v7150 = vpop.f32.mrf.mxu0
        %v7151 = vadd.f32 %v6845, %v7150
        %7152 = vmatprep.mubr.f32.mxu0 0.0
        %v7153 = vand.u32 %v254, 4294901760
        %v7154 = vsub.f32 %v254, %v7153
        %7155 = vmatmul.mubr.f32.gmra.mxu0 %v7154
        %v7156 = vpop.f32.mrf.mxu0
        %v7157 = vadd.f32 %v6850, %v7156
        %v7158 = vpop.f32.mrf.mxu0
        %v7159 = vadd.f32 %v6852, %v7158
        %7160 = vmatprep.mubr.f32.mxu0 0.0
        %v7161 = vand.u32 %v257, 4294901760
        %v7162 = vsub.f32 %v257, %v7161
        %7163 = vmatmul.mubr.f32.gmra.mxu0 %v7162
        %v7164 = vpop.f32.mrf.mxu0
        %v7165 = vadd.f32 %v6857, %v7164
        %v7166 = vpop.f32.mrf.mxu0
        %v7167 = vadd.f32 %v6859, %v7166
        %7168 = vmatprep.mubr.f32.mxu0 0.0
        %v7169 = vand.u32 %v260, 4294901760
        %v7170 = vsub.f32 %v260, %v7169
        %7171 = vmatmul.mubr.f32.gmra.mxu0 %v7170
        %v7172 = vpop.f32.mrf.mxu0
        %v7173 = vadd.f32 %v6864, %v7172
        %v7174 = vpop.f32.mrf.mxu0
        %v7175 = vadd.f32 %v6866, %v7174
        %7176 = vmatprep.mubr.f32.mxu0 0.0
        %v7177 = vand.u32 %v263, 4294901760
        %v7178 = vsub.f32 %v263, %v7177
        %7179 = vmatmul.mubr.f32.gmra.mxu0 %v7178
        %v7180 = vpop.f32.mrf.mxu0
        %v7181 = vadd.f32 %v6871, %v7180
        %v7182 = vpop.f32.mrf.mxu0
        %v7183 = vadd.f32 %v6873, %v7182
        %7184 = vmatprep.mubr.f32.mxu0 0.0
        %v7185 = vand.u32 %v266, 4294901760
        %v7186 = vsub.f32 %v266, %v7185
        %7187 = vmatmul.mubr.f32.gmra.mxu0 %v7186
        %v7188 = vpop.f32.mrf.mxu0
        %v7189 = vadd.f32 %v6878, %v7188
        %v7190 = vpop.f32.mrf.mxu0
        %v7191 = vadd.f32 %v6880, %v7190
        %7192 = vmatprep.mubr.f32.mxu0 0.0
        %v7193 = vand.u32 %v269, 4294901760
        %v7194 = vsub.f32 %v269, %v7193
        %7195 = vmatmul.mubr.f32.gmra.mxu0 %v7194
        %v7196 = vpop.f32.mrf.mxu0
        %v7197 = vadd.f32 %v6885, %v7196
        %v7198 = vpop.f32.mrf.mxu0
        %v7199 = vadd.f32 %v6887, %v7198
        %7200 = vmatprep.mubr.f32.mxu0 0.0
        %v7201 = vand.u32 %v272, 4294901760
        %v7202 = vsub.f32 %v272, %v7201
        %7203 = vmatmul.mubr.f32.gmra.mxu0 %v7202
        %v7204 = vpop.f32.mrf.mxu0
        %v7205 = vadd.f32 %v6892, %v7204
        %v7206 = vpop.f32.mrf.mxu0
        %v7207 = vadd.f32 %v6894, %v7206
        %7208 = vmatprep.mubr.f32.mxu0 0.0
        %v7209 = vand.u32 %v275, 4294901760
        %v7210 = vsub.f32 %v275, %v7209
        %7211 = vmatmul.mubr.f32.gmra.mxu0 %v7210
        %v7212 = vpop.f32.mrf.mxu0
        %v7213 = vadd.f32 %v6899, %v7212
        %v7214 = vpop.f32.mrf.mxu0
        %v7215 = vadd.f32 %v6901, %v7214
        %7216 = vmatprep.mubr.f32.mxu0 0.0
        %v7217 = vand.u32 %v278, 4294901760
        %v7218 = vsub.f32 %v278, %v7217
        %7219 = vmatmul.mubr.f32.gmra.mxu0 %v7218
        %v7220 = vpop.f32.mrf.mxu0
        %v7221 = vadd.f32 %v6906, %v7220
        %v7222 = vpop.f32.mrf.mxu0
        %v7223 = vadd.f32 %v6908, %v7222
        %7224 = vmatprep.mubr.f32.mxu0 0.0
        %v7225 = vand.u32 %v281, 4294901760
        %v7226 = vsub.f32 %v281, %v7225
        %7227 = vmatmul.mubr.f32.gmra.mxu0 %v7226
        %v7228 = vpop.f32.mrf.mxu0
        %v7229 = vadd.f32 %v6913, %v7228
        %v7230 = vpop.f32.mrf.mxu0
        %v7231 = vadd.f32 %v6915, %v7230
        %7232 = vmatprep.mubr.f32.mxu0 0.0
        %v7233 = vand.u32 %v284, 4294901760
        %v7234 = vsub.f32 %v284, %v7233
        %7235 = vmatmul.mubr.f32.gmra.mxu0 %v7234
        %v7236 = vpop.f32.mrf.mxu0
        %v7237 = vadd.f32 %v6920, %v7236
        %v7238 = vpop.f32.mrf.mxu0
        %v7239 = vadd.f32 %v6922, %v7238
        %7240 = vmatprep.mubr.f32.mxu0 0.0
        %v7241 = vand.u32 %v287, 4294901760
        %v7242 = vsub.f32 %v287, %v7241
        %7243 = vmatmul.mubr.f32.gmra.mxu0 %v7242
        %v7244 = vpop.f32.mrf.mxu0
        %v7245 = vadd.f32 %v6927, %v7244
        %v7246 = vpop.f32.mrf.mxu0
        %v7247 = vadd.f32 %v6929, %v7246
        %7248 = vmatprep.mubr.f32.mxu0 0.0
        %v7249 = vand.u32 %v290, 4294901760
        %v7250 = vsub.f32 %v290, %v7249
        %7251 = vmatmul.mubr.f32.gmra.mxu0 %v7250
        %v7252 = vpop.f32.mrf.mxu0
        %v7253 = vadd.f32 %v6934, %v7252
        %v7254 = vpop.f32.mrf.mxu0
        %v7255 = vadd.f32 %v6936, %v7254
        %7256 = vmatprep.mubr.f32.mxu0 0.0
        %v7257 = vand.u32 %v293, 4294901760
        %v7258 = vsub.f32 %v293, %v7257
        %7259 = vmatmul.mubr.f32.gmra.mxu0 %v7258
        %v7260 = vpop.f32.mrf.mxu0
        %v7261 = vadd.f32 %v6941, %v7260
        %v7262 = vpop.f32.mrf.mxu0
        %v7263 = vadd.f32 %v6943, %v7262
        %7264 = vmatprep.mubr.f32.mxu0 0.0
        %v7265 = vand.u32 %v296, 4294901760
        %v7266 = vsub.f32 %v296, %v7265
        %7267 = vmatmul.mubr.f32.gmra.mxu0 %v7266
        %v7268 = vpop.f32.mrf.mxu0
        %v7269 = vadd.f32 %v6948, %v7268
        %v7270 = vpop.f32.mrf.mxu0
        %v7271 = vadd.f32 %v6950, %v7270
        %7272 = vmatprep.mubr.f32.mxu0 0.0
        %v7273 = vand.u32 %v299, 4294901760
        %v7274 = vsub.f32 %v299, %v7273
        %7275 = vmatmul.mubr.f32.gmra.mxu0 %v7274
        %v7276 = vpop.f32.mrf.mxu0
        %v7277 = vadd.f32 %v6955, %v7276
        %v7278 = vpop.f32.mrf.mxu0
        %v7279 = vadd.f32 %v6957, %v7278
        %7280 = vmatprep.mubr.f32.mxu0 0.0
        %v7281 = vand.u32 %v302, 4294901760
        %v7282 = vsub.f32 %v302, %v7281
        %7283 = vmatmul.mubr.f32.gmra.mxu0 %v7282
        %v7284 = vpop.f32.mrf.mxu0
        %v7285 = vadd.f32 %v6962, %v7284
        %v7286 = vpop.f32.mrf.mxu0
        %v7287 = vadd.f32 %v6964, %v7286
        %7288 = vmatprep.mubr.f32.mxu0 0.0
        %v7289 = vand.u32 %v305, 4294901760
        %v7290 = vsub.f32 %v305, %v7289
        %7291 = vmatmul.mubr.f32.gmra.mxu0 %v7290
        %v7292 = vpop.f32.mrf.mxu0
        %v7293 = vadd.f32 %v6969, %v7292
        %v7294 = vpop.f32.mrf.mxu0
        %v7295 = vadd.f32 %v6971, %v7294
        %7296 = vmatprep.mubr.f32.mxu0 0.0
        %v7297 = vand.u32 %v308, 4294901760
        %v7298 = vsub.f32 %v308, %v7297
        %7299 = vmatmul.mubr.f32.gmra.mxu0 %v7298
        %v7300 = vpop.f32.mrf.mxu0
        %v7301 = vadd.f32 %v6976, %v7300
        %v7302 = vpop.f32.mrf.mxu0
        %v7303 = vadd.f32 %v6978, %v7302
        %7304 = vdwg.mxu0
        %7305 = vmatprep.subr.mxu0 0.0
        %7306 = vmatpush1.msra.mxu0 0.0
        %7307 = vmatprep.subr.mxu0 0.0
        %7308 = vmatpush1.msra.mxu0 0.0
        %7309 = vmatprep.subr.mxu0 0.0
        %7310 = vmatpush1.msra.mxu0 0.0
        %7311 = vmatprep.subr.mxu0 0.0
        %7312 = vmatpush1.msra.mxu0 0.0
        %7313 = vmatprep.subr.mxu0 0.0
        %7314 = vmatpush1.msra.mxu0 0.0
        %7315 = vmatprep.subr.mxu0 0.0
        %7316 = vmatpush1.msra.mxu0 0.0
        %7317 = vmatprep.subr.mxu0 0.0
        %7318 = vmatpush1.msra.mxu0 0.0
        %7319 = vmatprep.subr.mxu0 0.0
        %7320 = vmatpush1.msra.mxu0 0.0
        %7321 = vmatprep.subr.mxu0 0.0
        %7322 = vmatpush1.msra.mxu0 0.0
        %7323 = vmatprep.subr.mxu0 0.0
        %7324 = vmatpush1.msra.mxu0 0.0
        %7325 = vmatprep.subr.mxu0 0.0
        %7326 = vmatpush1.msra.mxu0 0.0
        %7327 = vmatprep.subr.mxu0 0.0
        %7328 = vmatpush1.msra.mxu0 0.0
        %7329 = vmatprep.subr.mxu0 0.0
        %7330 = vmatpush1.msra.mxu0 0.0
        %7331 = vmatprep.subr.mxu0 0.0
        %7332 = vmatpush1.msra.mxu0 0.0
        %7333 = vmatprep.subr.mxu0 0.0
        %7334 = vmatpush1.msra.mxu0 0.0
        %v7335 = vand.u32 %v212, 4294901760
        %7336 = vmatprep.subr.mxu0 %v7335
        %v7337 = vand.u32 %v211, 4294901760
        %7338 = vmatpush1.msra.mxu0 %v7337
        %7339 = vmatprep.subr.mxu0 0.0
        %7340 = vmatpush2.msra.mxu0 0.0
        %7341 = vmatprep.subr.mxu0 0.0
        %7342 = vmatpush2.msra.mxu0 0.0
        %7343 = vmatprep.subr.mxu0 0.0
        %7344 = vmatpush2.msra.mxu0 0.0
        %7345 = vmatprep.subr.mxu0 0.0
        %7346 = vmatpush2.msra.mxu0 0.0
        %7347 = vmatprep.subr.mxu0 0.0
        %7348 = vmatpush2.msra.mxu0 0.0
        %7349 = vmatprep.subr.mxu0 0.0
        %7350 = vmatpush2.msra.mxu0 0.0
        %7351 = vmatprep.subr.mxu0 0.0
        %7352 = vmatpush2.msra.mxu0 0.0
        %7353 = vmatprep.subr.mxu0 0.0
        %7354 = vmatpush2.msra.mxu0 0.0
        %7355 = vmatprep.subr.mxu0 0.0
        %7356 = vmatpush2.msra.mxu0 0.0
        %7357 = vmatprep.subr.mxu0 0.0
        %7358 = vmatpush2.msra.mxu0 0.0
        %7359 = vmatprep.subr.mxu0 0.0
        %7360 = vmatpush2.msra.mxu0 0.0
        %7361 = vmatprep.subr.mxu0 0.0
        %7362 = vmatpush2.msra.mxu0 0.0
        %7363 = vmatprep.subr.mxu0 0.0
        %7364 = vmatpush2.msra.mxu0 0.0
        %7365 = vmatprep.subr.mxu0 0.0
        %7366 = vmatpush2.msra.mxu0 0.0
        %7367 = vmatprep.subr.mxu0 0.0
        %7368 = vmatpush2.msra.mxu0 0.0
        %7369 = vmatprep.subr.mxu0 0.0
        %7370 = vmatpush2.msra.mxu0 0.0
        %7371 = vmatprep.mubr.f32.mxu0 0.0
        %v7372 = vand.u32 %v215, 4294901760
        %v7373 = vsub.f32 %v215, %v7372
        %v7374 = vand.u32 %v7373, 4294901760
        %7375 = vmatmul.mubr.f32.gmra.mxu0 %v7374
        %v7376 = vpop.f32.mrf.mxu0
        %v7377 = vadd.f32 %v7053, %v7376
        %v7378 = vpop.f32.mrf.mxu0
        %v7379 = vadd.f32 %v7055, %v7378
        %7380 = vmatprep.mubr.f32.mxu0 0.0
        %v7381 = vand.u32 %v218, 4294901760
        %v7382 = vsub.f32 %v218, %v7381
        %v7383 = vand.u32 %v7382, 4294901760
        %7384 = vmatmul.mubr.f32.gmra.mxu0 %v7383
        %v7385 = vpop.f32.mrf.mxu0
        %v7386 = vadd.f32 %v7061, %v7385
        %v7387 = vpop.f32.mrf.mxu0
        %v7388 = vadd.f32 %v7063, %v7387
        %7389 = vmatprep.mubr.f32.mxu0 0.0
        %v7390 = vand.u32 %v221, 4294901760
        %v7391 = vsub.f32 %v221, %v7390
        %v7392 = vand.u32 %v7391, 4294901760
        %7393 = vmatmul.mubr.f32.gmra.mxu0 %v7392
        %v7394 = vpop.f32.mrf.mxu0
        %v7395 = vadd.f32 %v7069, %v7394
        %v7396 = vpop.f32.mrf.mxu0
        %v7397 = vadd.f32 %v7071, %v7396
        %7398 = vmatprep.mubr.f32.mxu0 0.0
        %v7399 = vand.u32 %v224, 4294901760
        %v7400 = vsub.f32 %v224, %v7399
        %v7401 = vand.u32 %v7400, 4294901760
        %7402 = vmatmul.mubr.f32.gmra.mxu0 %v7401
        %v7403 = vpop.f32.mrf.mxu0
        %v7404 = vadd.f32 %v7077, %v7403
        %v7405 = vpop.f32.mrf.mxu0
        %v7406 = vadd.f32 %v7079, %v7405
        %7407 = vmatprep.mubr.f32.mxu0 0.0
        %v7408 = vand.u32 %v227, 4294901760
        %v7409 = vsub.f32 %v227, %v7408
        %v7410 = vand.u32 %v7409, 4294901760
        %7411 = vmatmul.mubr.f32.gmra.mxu0 %v7410
        %v7412 = vpop.f32.mrf.mxu0
        %v7413 = vadd.f32 %v7085, %v7412
        %v7414 = vpop.f32.mrf.mxu0
        %v7415 = vadd.f32 %v7087, %v7414
        %7416 = vmatprep.mubr.f32.mxu0 0.0
        %v7417 = vand.u32 %v230, 4294901760
        %v7418 = vsub.f32 %v230, %v7417
        %v7419 = vand.u32 %v7418, 4294901760
        %7420 = vmatmul.mubr.f32.gmra.mxu0 %v7419
        %v7421 = vpop.f32.mrf.mxu0
        %v7422 = vadd.f32 %v7093, %v7421
        %v7423 = vpop.f32.mrf.mxu0
        %v7424 = vadd.f32 %v7095, %v7423
        %7425 = vmatprep.mubr.f32.mxu0 0.0
        %v7426 = vand.u32 %v233, 4294901760
        %v7427 = vsub.f32 %v233, %v7426
        %v7428 = vand.u32 %v7427, 4294901760
        %7429 = vmatmul.mubr.f32.gmra.mxu0 %v7428
        %v7430 = vpop.f32.mrf.mxu0
        %v7431 = vadd.f32 %v7101, %v7430
        %v7432 = vpop.f32.mrf.mxu0
        %v7433 = vadd.f32 %v7103, %v7432
        %7434 = vmatprep.mubr.f32.mxu0 0.0
        %v7435 = vand.u32 %v236, 4294901760
        %v7436 = vsub.f32 %v236, %v7435
        %v7437 = vand.u32 %v7436, 4294901760
        %7438 = vmatmul.mubr.f32.gmra.mxu0 %v7437
        %v7439 = vpop.f32.mrf.mxu0
        %v7440 = vadd.f32 %v7109, %v7439
        %v7441 = vpop.f32.mrf.mxu0
        %v7442 = vadd.f32 %v7111, %v7441
        %7443 = vmatprep.mubr.f32.mxu0 0.0
        %v7444 = vand.u32 %v239, 4294901760
        %v7445 = vsub.f32 %v239, %v7444
        %v7446 = vand.u32 %v7445, 4294901760
        %7447 = vmatmul.mubr.f32.gmra.mxu0 %v7446
        %v7448 = vpop.f32.mrf.mxu0
        %v7449 = vadd.f32 %v7117, %v7448
        %v7450 = vpop.f32.mrf.mxu0
        %v7451 = vadd.f32 %v7119, %v7450
        %7452 = vmatprep.mubr.f32.mxu0 0.0
        %v7453 = vand.u32 %v242, 4294901760
        %v7454 = vsub.f32 %v242, %v7453
        %v7455 = vand.u32 %v7454, 4294901760
        %7456 = vmatmul.mubr.f32.gmra.mxu0 %v7455
        %v7457 = vpop.f32.mrf.mxu0
        %v7458 = vadd.f32 %v7125, %v7457
        %v7459 = vpop.f32.mrf.mxu0
        %v7460 = vadd.f32 %v7127, %v7459
        %7461 = vmatprep.mubr.f32.mxu0 0.0
        %v7462 = vand.u32 %v245, 4294901760
        %v7463 = vsub.f32 %v245, %v7462
        %v7464 = vand.u32 %v7463, 4294901760
        %7465 = vmatmul.mubr.f32.gmra.mxu0 %v7464
        %v7466 = vpop.f32.mrf.mxu0
        %v7467 = vadd.f32 %v7133, %v7466
        %v7468 = vpop.f32.mrf.mxu0
        %v7469 = vadd.f32 %v7135, %v7468
        %7470 = vmatprep.mubr.f32.mxu0 0.0
        %v7471 = vand.u32 %v248, 4294901760
        %v7472 = vsub.f32 %v248, %v7471
        %v7473 = vand.u32 %v7472, 4294901760
        %7474 = vmatmul.mubr.f32.gmra.mxu0 %v7473
        %v7475 = vpop.f32.mrf.mxu0
        %v7476 = vadd.f32 %v7141, %v7475
        %v7477 = vpop.f32.mrf.mxu0
        %v7478 = vadd.f32 %v7143, %v7477
        %7479 = vmatprep.mubr.f32.mxu0 0.0
        %v7480 = vand.u32 %v251, 4294901760
        %v7481 = vsub.f32 %v251, %v7480
        %v7482 = vand.u32 %v7481, 4294901760
        %7483 = vmatmul.mubr.f32.gmra.mxu0 %v7482
        %v7484 = vpop.f32.mrf.mxu0
        %v7485 = vadd.f32 %v7149, %v7484
        %v7486 = vpop.f32.mrf.mxu0
        %v7487 = vadd.f32 %v7151, %v7486
        %7488 = vmatprep.mubr.f32.mxu0 0.0
        %v7489 = vand.u32 %v254, 4294901760
        %v7490 = vsub.f32 %v254, %v7489
        %v7491 = vand.u32 %v7490, 4294901760
        %7492 = vmatmul.mubr.f32.gmra.mxu0 %v7491
        %v7493 = vpop.f32.mrf.mxu0
        %v7494 = vadd.f32 %v7157, %v7493
        %v7495 = vpop.f32.mrf.mxu0
        %v7496 = vadd.f32 %v7159, %v7495
        %7497 = vmatprep.mubr.f32.mxu0 0.0
        %v7498 = vand.u32 %v257, 4294901760
        %v7499 = vsub.f32 %v257, %v7498
        %v7500 = vand.u32 %v7499, 4294901760
        %7501 = vmatmul.mubr.f32.gmra.mxu0 %v7500
        %v7502 = vpop.f32.mrf.mxu0
        %v7503 = vadd.f32 %v7165, %v7502
        %v7504 = vpop.f32.mrf.mxu0
        %v7505 = vadd.f32 %v7167, %v7504
        %7506 = vmatprep.mubr.f32.mxu0 0.0
        %v7507 = vand.u32 %v260, 4294901760
        %v7508 = vsub.f32 %v260, %v7507
        %v7509 = vand.u32 %v7508, 4294901760
        %7510 = vmatmul.mubr.f32.gmra.mxu0 %v7509
        %v7511 = vpop.f32.mrf.mxu0
        %v7512 = vadd.f32 %v7173, %v7511
        %v7513 = vpop.f32.mrf.mxu0
        %v7514 = vadd.f32 %v7175, %v7513
        %7515 = vmatprep.mubr.f32.mxu0 0.0
        %v7516 = vand.u32 %v263, 4294901760
        %v7517 = vsub.f32 %v263, %v7516
        %v7518 = vand.u32 %v7517, 4294901760
        %7519 = vmatmul.mubr.f32.gmra.mxu0 %v7518
        %v7520 = vpop.f32.mrf.mxu0
        %v7521 = vadd.f32 %v7181, %v7520
        %v7522 = vpop.f32.mrf.mxu0
        %v7523 = vadd.f32 %v7183, %v7522
        %7524 = vmatprep.mubr.f32.mxu0 0.0
        %v7525 = vand.u32 %v266, 4294901760
        %v7526 = vsub.f32 %v266, %v7525
        %v7527 = vand.u32 %v7526, 4294901760
        %7528 = vmatmul.mubr.f32.gmra.mxu0 %v7527
        %v7529 = vpop.f32.mrf.mxu0
        %v7530 = vadd.f32 %v7189, %v7529
        %v7531 = vpop.f32.mrf.mxu0
        %v7532 = vadd.f32 %v7191, %v7531
        %7533 = vmatprep.mubr.f32.mxu0 0.0
        %v7534 = vand.u32 %v269, 4294901760
        %v7535 = vsub.f32 %v269, %v7534
        %v7536 = vand.u32 %v7535, 4294901760
        %7537 = vmatmul.mubr.f32.gmra.mxu0 %v7536
        %v7538 = vpop.f32.mrf.mxu0
        %v7539 = vadd.f32 %v7197, %v7538
        %v7540 = vpop.f32.mrf.mxu0
        %v7541 = vadd.f32 %v7199, %v7540
        %7542 = vmatprep.mubr.f32.mxu0 0.0
        %v7543 = vand.u32 %v272, 4294901760
        %v7544 = vsub.f32 %v272, %v7543
        %v7545 = vand.u32 %v7544, 4294901760
        %7546 = vmatmul.mubr.f32.gmra.mxu0 %v7545
        %v7547 = vpop.f32.mrf.mxu0
        %v7548 = vadd.f32 %v7205, %v7547
        %v7549 = vpop.f32.mrf.mxu0
        %v7550 = vadd.f32 %v7207, %v7549
        %7551 = vmatprep.mubr.f32.mxu0 0.0
        %v7552 = vand.u32 %v275, 4294901760
        %v7553 = vsub.f32 %v275, %v7552
        %v7554 = vand.u32 %v7553, 4294901760
        %7555 = vmatmul.mubr.f32.gmra.mxu0 %v7554
        %v7556 = vpop.f32.mrf.mxu0
        %v7557 = vadd.f32 %v7213, %v7556
        %v7558 = vpop.f32.mrf.mxu0
        %v7559 = vadd.f32 %v7215, %v7558
        %7560 = vmatprep.mubr.f32.mxu0 0.0
        %v7561 = vand.u32 %v278, 4294901760
        %v7562 = vsub.f32 %v278, %v7561
        %v7563 = vand.u32 %v7562, 4294901760
        %7564 = vmatmul.mubr.f32.gmra.mxu0 %v7563
        %v7565 = vpop.f32.mrf.mxu0
        %v7566 = vadd.f32 %v7221, %v7565
        %v7567 = vpop.f32.mrf.mxu0
        %v7568 = vadd.f32 %v7223, %v7567
        %7569 = vmatprep.mubr.f32.mxu0 0.0
        %v7570 = vand.u32 %v281, 4294901760
        %v7571 = vsub.f32 %v281, %v7570
        %v7572 = vand.u32 %v7571, 4294901760
        %7573 = vmatmul.mubr.f32.gmra.mxu0 %v7572
        %v7574 = vpop.f32.mrf.mxu0
        %v7575 = vadd.f32 %v7229, %v7574
        %v7576 = vpop.f32.mrf.mxu0
        %v7577 = vadd.f32 %v7231, %v7576
        %7578 = vmatprep.mubr.f32.mxu0 0.0
        %v7579 = vand.u32 %v284, 4294901760
        %v7580 = vsub.f32 %v284, %v7579
        %v7581 = vand.u32 %v7580, 4294901760
        %7582 = vmatmul.mubr.f32.gmra.mxu0 %v7581
        %v7583 = vpop.f32.mrf.mxu0
        %v7584 = vadd.f32 %v7237, %v7583
        %v7585 = vpop.f32.mrf.mxu0
        %v7586 = vadd.f32 %v7239, %v7585
        %7587 = vmatprep.mubr.f32.mxu0 0.0
        %v7588 = vand.u32 %v287, 4294901760
        %v7589 = vsub.f32 %v287, %v7588
        %v7590 = vand.u32 %v7589, 4294901760
        %7591 = vmatmul.mubr.f32.gmra.mxu0 %v7590
        %v7592 = vpop.f32.mrf.mxu0
        %v7593 = vadd.f32 %v7245, %v7592
        %v7594 = vpop.f32.mrf.mxu0
        %v7595 = vadd.f32 %v7247, %v7594
        %7596 = vmatprep.mubr.f32.mxu0 0.0
        %v7597 = vand.u32 %v290, 4294901760
        %v7598 = vsub.f32 %v290, %v7597
        %v7599 = vand.u32 %v7598, 4294901760
        %7600 = vmatmul.mubr.f32.gmra.mxu0 %v7599
        %v7601 = vpop.f32.mrf.mxu0
        %v7602 = vadd.f32 %v7253, %v7601
        %v7603 = vpop.f32.mrf.mxu0
        %v7604 = vadd.f32 %v7255, %v7603
        %7605 = vmatprep.mubr.f32.mxu0 0.0
        %v7606 = vand.u32 %v293, 4294901760
        %v7607 = vsub.f32 %v293, %v7606
        %v7608 = vand.u32 %v7607, 4294901760
        %7609 = vmatmul.mubr.f32.gmra.mxu0 %v7608
        %v7610 = vpop.f32.mrf.mxu0
        %v7611 = vadd.f32 %v7261, %v7610
        %v7612 = vpop.f32.mrf.mxu0
        %v7613 = vadd.f32 %v7263, %v7612
        %7614 = vmatprep.mubr.f32.mxu0 0.0
        %v7615 = vand.u32 %v296, 4294901760
        %v7616 = vsub.f32 %v296, %v7615
        %v7617 = vand.u32 %v7616, 4294901760
        %7618 = vmatmul.mubr.f32.gmra.mxu0 %v7617
        %v7619 = vpop.f32.mrf.mxu0
        %v7620 = vadd.f32 %v7269, %v7619
        %v7621 = vpop.f32.mrf.mxu0
        %v7622 = vadd.f32 %v7271, %v7621
        %7623 = vmatprep.mubr.f32.mxu0 0.0
        %v7624 = vand.u32 %v299, 4294901760
        %v7625 = vsub.f32 %v299, %v7624
        %v7626 = vand.u32 %v7625, 4294901760
        %7627 = vmatmul.mubr.f32.gmra.mxu0 %v7626
        %v7628 = vpop.f32.mrf.mxu0
        %v7629 = vadd.f32 %v7277, %v7628
        %v7630 = vpop.f32.mrf.mxu0
        %v7631 = vadd.f32 %v7279, %v7630
        %7632 = vmatprep.mubr.f32.mxu0 0.0
        %v7633 = vand.u32 %v302, 4294901760
        %v7634 = vsub.f32 %v302, %v7633
        %v7635 = vand.u32 %v7634, 4294901760
        %7636 = vmatmul.mubr.f32.gmra.mxu0 %v7635
        %v7637 = vpop.f32.mrf.mxu0
        %v7638 = vadd.f32 %v7285, %v7637
        %v7639 = vpop.f32.mrf.mxu0
        %v7640 = vadd.f32 %v7287, %v7639
        %7641 = vmatprep.mubr.f32.mxu0 0.0
        %v7642 = vand.u32 %v305, 4294901760
        %v7643 = vsub.f32 %v305, %v7642
        %v7644 = vand.u32 %v7643, 4294901760
        %7645 = vmatmul.mubr.f32.gmra.mxu0 %v7644
        %v7646 = vpop.f32.mrf.mxu0
        %v7647 = vadd.f32 %v7293, %v7646
        %v7648 = vpop.f32.mrf.mxu0
        %v7649 = vadd.f32 %v7295, %v7648
        %7650 = vmatprep.mubr.f32.mxu0 0.0
        %v7651 = vand.u32 %v308, 4294901760
        %v7652 = vsub.f32 %v308, %v7651
        %v7653 = vand.u32 %v7652, 4294901760
        %7654 = vmatmul.mubr.f32.gmra.mxu0 %v7653
        %v7655 = vpop.f32.mrf.mxu0
        %v7656 = vadd.f32 %v7301, %v7655
        %v7657 = vpop.f32.mrf.mxu0
        %v7658 = vadd.f32 %v7303, %v7657
        %7659 = vdwg.mxu0
        %7660 = vmatprep.subr.mxu0 0.0
        %7661 = vmatpush1.msra.mxu0 0.0
        %7662 = vmatprep.subr.mxu0 0.0
        %7663 = vmatpush1.msra.mxu0 0.0
        %7664 = vmatprep.subr.mxu0 0.0
        %7665 = vmatpush1.msra.mxu0 0.0
        %7666 = vmatprep.subr.mxu0 0.0
        %7667 = vmatpush1.msra.mxu0 0.0
        %7668 = vmatprep.subr.mxu0 0.0
        %7669 = vmatpush1.msra.mxu0 0.0
        %7670 = vmatprep.subr.mxu0 0.0
        %7671 = vmatpush1.msra.mxu0 0.0
        %7672 = vmatprep.subr.mxu0 0.0
        %7673 = vmatpush1.msra.mxu0 0.0
        %7674 = vmatprep.subr.mxu0 0.0
        %7675 = vmatpush1.msra.mxu0 0.0
        %7676 = vmatprep.subr.mxu0 0.0
        %7677 = vmatpush1.msra.mxu0 0.0
        %7678 = vmatprep.subr.mxu0 0.0
        %7679 = vmatpush1.msra.mxu0 0.0
        %7680 = vmatprep.subr.mxu0 0.0
        %7681 = vmatpush1.msra.mxu0 0.0
        %7682 = vmatprep.subr.mxu0 0.0
        %7683 = vmatpush1.msra.mxu0 0.0
        %7684 = vmatprep.subr.mxu0 0.0
        %7685 = vmatpush1.msra.mxu0 0.0
        %7686 = vmatprep.subr.mxu0 0.0
        %7687 = vmatpush1.msra.mxu0 0.0
        %7688 = vmatprep.subr.mxu0 0.0
        %7689 = vmatpush1.msra.mxu0 0.0
        %v7690 = vand.u32 %v212, 4294901760
        %v7691 = vsub.f32 %v212, %v7690
        %v7692 = vand.u32 %v7691, 4294901760
        %7693 = vmatprep.subr.mxu0 %v7692
        %v7694 = vand.u32 %v211, 4294901760
        %v7695 = vsub.f32 %v211, %v7694
        %v7696 = vand.u32 %v7695, 4294901760
        %7697 = vmatpush1.msra.mxu0 %v7696
        %7698 = vmatprep.subr.mxu0 0.0
        %7699 = vmatpush2.msra.mxu0 0.0
        %7700 = vmatprep.subr.mxu0 0.0
        %7701 = vmatpush2.msra.mxu0 0.0
        %7702 = vmatprep.subr.mxu0 0.0
        %7703 = vmatpush2.msra.mxu0 0.0
        %7704 = vmatprep.subr.mxu0 0.0
        %7705 = vmatpush2.msra.mxu0 0.0
        %7706 = vmatprep.subr.mxu0 0.0
        %7707 = vmatpush2.msra.mxu0 0.0
        %7708 = vmatprep.subr.mxu0 0.0
        %7709 = vmatpush2.msra.mxu0 0.0
        %7710 = vmatprep.subr.mxu0 0.0
        %7711 = vmatpush2.msra.mxu0 0.0
        %7712 = vmatprep.subr.mxu0 0.0
        %7713 = vmatpush2.msra.mxu0 0.0
        %7714 = vmatprep.subr.mxu0 0.0
        %7715 = vmatpush2.msra.mxu0 0.0
        %7716 = vmatprep.subr.mxu0 0.0
        %7717 = vmatpush2.msra.mxu0 0.0
        %7718 = vmatprep.subr.mxu0 0.0
        %7719 = vmatpush2.msra.mxu0 0.0
        %7720 = vmatprep.subr.mxu0 0.0
        %7721 = vmatpush2.msra.mxu0 0.0
        %7722 = vmatprep.subr.mxu0 0.0
        %7723 = vmatpush2.msra.mxu0 0.0
        %7724 = vmatprep.subr.mxu0 0.0
        %7725 = vmatpush2.msra.mxu0 0.0
        %7726 = vmatprep.subr.mxu0 0.0
        %7727 = vmatpush2.msra.mxu0 0.0
        %7728 = vmatprep.subr.mxu0 0.0
        %7729 = vmatpush2.msra.mxu0 0.0
        %7730 = vmatprep.mubr.f32.mxu0 0.0
        %v7731 = vand.u32 %v215, 4294901760
        %7732 = vmatmul.mubr.f32.gmra.mxu0 %v7731
        %v7733 = vpop.f32.mrf.mxu0
        %v7734 = vadd.f32 %v7377, %v7733
        %v7735 = vpop.f32.mrf.mxu0
        %v7736 = vadd.f32 %v7379, %v7735
        %7737 = vmatprep.mubr.f32.mxu0 0.0
        %v7738 = vand.u32 %v218, 4294901760
        %7739 = vmatmul.mubr.f32.gmra.mxu0 %v7738
        %v7740 = vpop.f32.mrf.mxu0
        %v7741 = vadd.f32 %v7386, %v7740
        %v7742 = vpop.f32.mrf.mxu0
        %v7743 = vadd.f32 %v7388, %v7742
        %7744 = vmatprep.mubr.f32.mxu0 0.0
        %v7745 = vand.u32 %v221, 4294901760
        %7746 = vmatmul.mubr.f32.gmra.mxu0 %v7745
        %v7747 = vpop.f32.mrf.mxu0
        %v7748 = vadd.f32 %v7395, %v7747
        %v7749 = vpop.f32.mrf.mxu0
        %v7750 = vadd.f32 %v7397, %v7749
        %7751 = vmatprep.mubr.f32.mxu0 0.0
        %v7752 = vand.u32 %v224, 4294901760
        %7753 = vmatmul.mubr.f32.gmra.mxu0 %v7752
        %v7754 = vpop.f32.mrf.mxu0
        %v7755 = vadd.f32 %v7404, %v7754
        %v7756 = vpop.f32.mrf.mxu0
        %v7757 = vadd.f32 %v7406, %v7756
        %7758 = vmatprep.mubr.f32.mxu0 0.0
        %v7759 = vand.u32 %v227, 4294901760
        %7760 = vmatmul.mubr.f32.gmra.mxu0 %v7759
        %v7761 = vpop.f32.mrf.mxu0
        %v7762 = vadd.f32 %v7413, %v7761
        %v7763 = vpop.f32.mrf.mxu0
        %v7764 = vadd.f32 %v7415, %v7763
        %7765 = vmatprep.mubr.f32.mxu0 0.0
        %v7766 = vand.u32 %v230, 4294901760
        %7767 = vmatmul.mubr.f32.gmra.mxu0 %v7766
        %v7768 = vpop.f32.mrf.mxu0
        %v7769 = vadd.f32 %v7422, %v7768
        %v7770 = vpop.f32.mrf.mxu0
        %v7771 = vadd.f32 %v7424, %v7770
        %7772 = vmatprep.mubr.f32.mxu0 0.0
        %v7773 = vand.u32 %v233, 4294901760
        %7774 = vmatmul.mubr.f32.gmra.mxu0 %v7773
        %v7775 = vpop.f32.mrf.mxu0
        %v7776 = vadd.f32 %v7431, %v7775
        %v7777 = vpop.f32.mrf.mxu0
        %v7778 = vadd.f32 %v7433, %v7777
        %7779 = vmatprep.mubr.f32.mxu0 0.0
        %v7780 = vand.u32 %v236, 4294901760
        %7781 = vmatmul.mubr.f32.gmra.mxu0 %v7780
        %v7782 = vpop.f32.mrf.mxu0
        %v7783 = vadd.f32 %v7440, %v7782
        %v7784 = vpop.f32.mrf.mxu0
        %v7785 = vadd.f32 %v7442, %v7784
        %7786 = vmatprep.mubr.f32.mxu0 0.0
        %v7787 = vand.u32 %v239, 4294901760
        %7788 = vmatmul.mubr.f32.gmra.mxu0 %v7787
        %v7789 = vpop.f32.mrf.mxu0
        %v7790 = vadd.f32 %v7449, %v7789
        %v7791 = vpop.f32.mrf.mxu0
        %v7792 = vadd.f32 %v7451, %v7791
        %7793 = vmatprep.mubr.f32.mxu0 0.0
        %v7794 = vand.u32 %v242, 4294901760
        %7795 = vmatmul.mubr.f32.gmra.mxu0 %v7794
        %v7796 = vpop.f32.mrf.mxu0
        %v7797 = vadd.f32 %v7458, %v7796
        %v7798 = vpop.f32.mrf.mxu0
        %v7799 = vadd.f32 %v7460, %v7798
        %7800 = vmatprep.mubr.f32.mxu0 0.0
        %v7801 = vand.u32 %v245, 4294901760
        %7802 = vmatmul.mubr.f32.gmra.mxu0 %v7801
        %v7803 = vpop.f32.mrf.mxu0
        %v7804 = vadd.f32 %v7467, %v7803
        %v7805 = vpop.f32.mrf.mxu0
        %v7806 = vadd.f32 %v7469, %v7805
        %7807 = vmatprep.mubr.f32.mxu0 0.0
        %v7808 = vand.u32 %v248, 4294901760
        %7809 = vmatmul.mubr.f32.gmra.mxu0 %v7808
        %v7810 = vpop.f32.mrf.mxu0
        %v7811 = vadd.f32 %v7476, %v7810
        %v7812 = vpop.f32.mrf.mxu0
        %v7813 = vadd.f32 %v7478, %v7812
        %7814 = vmatprep.mubr.f32.mxu0 0.0
        %v7815 = vand.u32 %v251, 4294901760
        %7816 = vmatmul.mubr.f32.gmra.mxu0 %v7815
        %v7817 = vpop.f32.mrf.mxu0
        %v7818 = vadd.f32 %v7485, %v7817
        %v7819 = vpop.f32.mrf.mxu0
        %v7820 = vadd.f32 %v7487, %v7819
        %7821 = vmatprep.mubr.f32.mxu0 0.0
        %v7822 = vand.u32 %v254, 4294901760
        %7823 = vmatmul.mubr.f32.gmra.mxu0 %v7822
        %v7824 = vpop.f32.mrf.mxu0
        %v7825 = vadd.f32 %v7494, %v7824
        %v7826 = vpop.f32.mrf.mxu0
        %v7827 = vadd.f32 %v7496, %v7826
        %7828 = vmatprep.mubr.f32.mxu0 0.0
        %v7829 = vand.u32 %v257, 4294901760
        %7830 = vmatmul.mubr.f32.gmra.mxu0 %v7829
        %v7831 = vpop.f32.mrf.mxu0
        %v7832 = vadd.f32 %v7503, %v7831
        %v7833 = vpop.f32.mrf.mxu0
        %v7834 = vadd.f32 %v7505, %v7833
        %7835 = vmatprep.mubr.f32.mxu0 0.0
        %v7836 = vand.u32 %v260, 4294901760
        %7837 = vmatmul.mubr.f32.gmra.mxu0 %v7836
        %v7838 = vpop.f32.mrf.mxu0
        %v7839 = vadd.f32 %v7512, %v7838
        %v7840 = vpop.f32.mrf.mxu0
        %v7841 = vadd.f32 %v7514, %v7840
        %7842 = vmatprep.mubr.f32.mxu0 0.0
        %v7843 = vand.u32 %v263, 4294901760
        %7844 = vmatmul.mubr.f32.gmra.mxu0 %v7843
        %v7845 = vpop.f32.mrf.mxu0
        %v7846 = vadd.f32 %v7521, %v7845
        %v7847 = vpop.f32.mrf.mxu0
        %v7848 = vadd.f32 %v7523, %v7847
        %7849 = vmatprep.mubr.f32.mxu0 0.0
        %v7850 = vand.u32 %v266, 4294901760
        %7851 = vmatmul.mubr.f32.gmra.mxu0 %v7850
        %v7852 = vpop.f32.mrf.mxu0
        %v7853 = vadd.f32 %v7530, %v7852
        %v7854 = vpop.f32.mrf.mxu0
        %v7855 = vadd.f32 %v7532, %v7854
        %7856 = vmatprep.mubr.f32.mxu0 0.0
        %v7857 = vand.u32 %v269, 4294901760
        %7858 = vmatmul.mubr.f32.gmra.mxu0 %v7857
        %v7859 = vpop.f32.mrf.mxu0
        %v7860 = vadd.f32 %v7539, %v7859
        %v7861 = vpop.f32.mrf.mxu0
        %v7862 = vadd.f32 %v7541, %v7861
        %7863 = vmatprep.mubr.f32.mxu0 0.0
        %v7864 = vand.u32 %v272, 4294901760
        %7865 = vmatmul.mubr.f32.gmra.mxu0 %v7864
        %v7866 = vpop.f32.mrf.mxu0
        %v7867 = vadd.f32 %v7548, %v7866
        %v7868 = vpop.f32.mrf.mxu0
        %v7869 = vadd.f32 %v7550, %v7868
        %7870 = vmatprep.mubr.f32.mxu0 0.0
        %v7871 = vand.u32 %v275, 4294901760
        %7872 = vmatmul.mubr.f32.gmra.mxu0 %v7871
        %v7873 = vpop.f32.mrf.mxu0
        %v7874 = vadd.f32 %v7557, %v7873
        %v7875 = vpop.f32.mrf.mxu0
        %v7876 = vadd.f32 %v7559, %v7875
        %7877 = vmatprep.mubr.f32.mxu0 0.0
        %v7878 = vand.u32 %v278, 4294901760
        %7879 = vmatmul.mubr.f32.gmra.mxu0 %v7878
        %v7880 = vpop.f32.mrf.mxu0
        %v7881 = vadd.f32 %v7566, %v7880
        %v7882 = vpop.f32.mrf.mxu0
        %v7883 = vadd.f32 %v7568, %v7882
        %7884 = vmatprep.mubr.f32.mxu0 0.0
        %v7885 = vand.u32 %v281, 4294901760
        %7886 = vmatmul.mubr.f32.gmra.mxu0 %v7885
        %v7887 = vpop.f32.mrf.mxu0
        %v7888 = vadd.f32 %v7575, %v7887
        %v7889 = vpop.f32.mrf.mxu0
        %v7890 = vadd.f32 %v7577, %v7889
        %7891 = vmatprep.mubr.f32.mxu0 0.0
        %v7892 = vand.u32 %v284, 4294901760
        %7893 = vmatmul.mubr.f32.gmra.mxu0 %v7892
        %v7894 = vpop.f32.mrf.mxu0
        %v7895 = vadd.f32 %v7584, %v7894
        %v7896 = vpop.f32.mrf.mxu0
        %v7897 = vadd.f32 %v7586, %v7896
        %7898 = vmatprep.mubr.f32.mxu0 0.0
        %v7899 = vand.u32 %v287, 4294901760
        %7900 = vmatmul.mubr.f32.gmra.mxu0 %v7899
        %v7901 = vpop.f32.mrf.mxu0
        %v7902 = vadd.f32 %v7593, %v7901
        %v7903 = vpop.f32.mrf.mxu0
        %v7904 = vadd.f32 %v7595, %v7903
        %7905 = vmatprep.mubr.f32.mxu0 0.0
        %v7906 = vand.u32 %v290, 4294901760
        %7907 = vmatmul.mubr.f32.gmra.mxu0 %v7906
        %v7908 = vpop.f32.mrf.mxu0
        %v7909 = vadd.f32 %v7602, %v7908
        %v7910 = vpop.f32.mrf.mxu0
        %v7911 = vadd.f32 %v7604, %v7910
        %7912 = vmatprep.mubr.f32.mxu0 0.0
        %v7913 = vand.u32 %v293, 4294901760
        %7914 = vmatmul.mubr.f32.gmra.mxu0 %v7913
        %v7915 = vpop.f32.mrf.mxu0
        %v7916 = vadd.f32 %v7611, %v7915
        %v7917 = vpop.f32.mrf.mxu0
        %v7918 = vadd.f32 %v7613, %v7917
        %7919 = vmatprep.mubr.f32.mxu0 0.0
        %v7920 = vand.u32 %v296, 4294901760
        %7921 = vmatmul.mubr.f32.gmra.mxu0 %v7920
        %v7922 = vpop.f32.mrf.mxu0
        %v7923 = vadd.f32 %v7620, %v7922
        %v7924 = vpop.f32.mrf.mxu0
        %v7925 = vadd.f32 %v7622, %v7924
        %7926 = vmatprep.mubr.f32.mxu0 0.0
        %v7927 = vand.u32 %v299, 4294901760
        %7928 = vmatmul.mubr.f32.gmra.mxu0 %v7927
        %v7929 = vpop.f32.mrf.mxu0
        %v7930 = vadd.f32 %v7629, %v7929
        %v7931 = vpop.f32.mrf.mxu0
        %v7932 = vadd.f32 %v7631, %v7931
        %7933 = vmatprep.mubr.f32.mxu0 0.0
        %v7934 = vand.u32 %v302, 4294901760
        %7935 = vmatmul.mubr.f32.gmra.mxu0 %v7934
        %v7936 = vpop.f32.mrf.mxu0
        %v7937 = vadd.f32 %v7638, %v7936
        %v7938 = vpop.f32.mrf.mxu0
        %v7939 = vadd.f32 %v7640, %v7938
        %7940 = vmatprep.mubr.f32.mxu0 0.0
        %v7941 = vand.u32 %v305, 4294901760
        %7942 = vmatmul.mubr.f32.gmra.mxu0 %v7941
        %v7943 = vpop.f32.mrf.mxu0
        %v7944 = vadd.f32 %v7647, %v7943
        %v7945 = vpop.f32.mrf.mxu0
        %v7946 = vadd.f32 %v7649, %v7945
        %7947 = vmatprep.mubr.f32.mxu0 0.0
        %v7948 = vand.u32 %v308, 4294901760
        %7949 = vmatmul.mubr.f32.gmra.mxu0 %v7948
        %v7950 = vpop.f32.mrf.mxu0
        %v7951 = vadd.f32 %v7656, %v7950
        %v7952 = vpop.f32.mrf.mxu0
        %v7953 = vadd.f32 %v7658, %v7952
        %7954 = vdwg.mxu0
        %7955 = vmatprep.subr.mxu0 0.0
        %7956 = vmatpush1.msra.mxu0 0.0
        %7957 = vmatprep.subr.mxu0 0.0
        %7958 = vmatpush1.msra.mxu0 0.0
        %7959 = vmatprep.subr.mxu0 0.0
        %7960 = vmatpush1.msra.mxu0 0.0
        %7961 = vmatprep.subr.mxu0 0.0
        %7962 = vmatpush1.msra.mxu0 0.0
        %7963 = vmatprep.subr.mxu0 0.0
        %7964 = vmatpush1.msra.mxu0 0.0
        %7965 = vmatprep.subr.mxu0 0.0
        %7966 = vmatpush1.msra.mxu0 0.0
        %7967 = vmatprep.subr.mxu0 0.0
        %7968 = vmatpush1.msra.mxu0 0.0
        %7969 = vmatprep.subr.mxu0 0.0
        %7970 = vmatpush1.msra.mxu0 0.0
        %7971 = vmatprep.subr.mxu0 0.0
        %7972 = vmatpush1.msra.mxu0 0.0
        %7973 = vmatprep.subr.mxu0 0.0
        %7974 = vmatpush1.msra.mxu0 0.0
        %7975 = vmatprep.subr.mxu0 0.0
        %7976 = vmatpush1.msra.mxu0 0.0
        %7977 = vmatprep.subr.mxu0 0.0
        %7978 = vmatpush1.msra.mxu0 0.0
        %7979 = vmatprep.subr.mxu0 0.0
        %7980 = vmatpush1.msra.mxu0 0.0
        %7981 = vmatprep.subr.mxu0 0.0
        %7982 = vmatpush1.msra.mxu0 0.0
        %7983 = vmatprep.subr.mxu0 0.0
        %7984 = vmatpush1.msra.mxu0 0.0
        %v7985 = vand.u32 %v212, 4294901760
        %7986 = vmatprep.subr.mxu0 %v7985
        %v7987 = vand.u32 %v211, 4294901760
        %7988 = vmatpush1.msra.mxu0 %v7987
        %7989 = vmatprep.subr.mxu0 0.0
        %7990 = vmatpush2.msra.mxu0 0.0
        %7991 = vmatprep.subr.mxu0 0.0
        %7992 = vmatpush2.msra.mxu0 0.0
        %7993 = vmatprep.subr.mxu0 0.0
        %7994 = vmatpush2.msra.mxu0 0.0
        %7995 = vmatprep.subr.mxu0 0.0
        %7996 = vmatpush2.msra.mxu0 0.0
        %7997 = vmatprep.subr.mxu0 0.0
        %7998 = vmatpush2.msra.mxu0 0.0
        %7999 = vmatprep.subr.mxu0 0.0
        %8000 = vmatpush2.msra.mxu0 0.0
        %8001 = vmatprep.subr.mxu0 0.0
        %8002 = vmatpush2.msra.mxu0 0.0
        %8003 = vmatprep.subr.mxu0 0.0
        %8004 = vmatpush2.msra.mxu0 0.0
        %8005 = vmatprep.subr.mxu0 0.0
        %8006 = vmatpush2.msra.mxu0 0.0
        %8007 = vmatprep.subr.mxu0 0.0
        %8008 = vmatpush2.msra.mxu0 0.0
        %8009 = vmatprep.subr.mxu0 0.0
        %8010 = vmatpush2.msra.mxu0 0.0
        %8011 = vmatprep.subr.mxu0 0.0
        %8012 = vmatpush2.msra.mxu0 0.0
        %8013 = vmatprep.subr.mxu0 0.0
        %8014 = vmatpush2.msra.mxu0 0.0
        %8015 = vmatprep.subr.mxu0 0.0
        %8016 = vmatpush2.msra.mxu0 0.0
        %8017 = vmatprep.subr.mxu0 0.0
        %8018 = vmatpush2.msra.mxu0 0.0
        %8019 = vmatprep.subr.mxu0 0.0
        %8020 = vmatpush2.msra.mxu0 0.0
        %8021 = vmatprep.mubr.f32.mxu0 0.0
        %v8022 = vand.u32 %v215, 4294901760
        %8023 = vmatmul.mubr.f32.gmra.mxu0 %v8022
        %v8024 = vpop.f32.mrf.mxu0
        %v8025 = vadd.f32 %v7734, %v8024
        %v8026 = vpop.f32.mrf.mxu0
        %v8027 = vadd.f32 %v7736, %v8026
        %8028 = vmatprep.mubr.f32.mxu0 0.0
        %v8029 = vand.u32 %v218, 4294901760
        %8030 = vmatmul.mubr.f32.gmra.mxu0 %v8029
        %v8031 = vpop.f32.mrf.mxu0
        %v8032 = vadd.f32 %v7741, %v8031
        %v8033 = vpop.f32.mrf.mxu0
        %v8034 = vadd.f32 %v7743, %v8033
        %8035 = vmatprep.mubr.f32.mxu0 0.0
        %v8036 = vand.u32 %v221, 4294901760
        %8037 = vmatmul.mubr.f32.gmra.mxu0 %v8036
        %v8038 = vpop.f32.mrf.mxu0
        %v8039 = vadd.f32 %v7748, %v8038
        %v8040 = vpop.f32.mrf.mxu0
        %v8041 = vadd.f32 %v7750, %v8040
        %8042 = vmatprep.mubr.f32.mxu0 0.0
        %v8043 = vand.u32 %v224, 4294901760
        %8044 = vmatmul.mubr.f32.gmra.mxu0 %v8043
        %v8045 = vpop.f32.mrf.mxu0
        %v8046 = vadd.f32 %v7755, %v8045
        %v8047 = vpop.f32.mrf.mxu0
        %v8048 = vadd.f32 %v7757, %v8047
        %8049 = vmatprep.mubr.f32.mxu0 0.0
        %v8050 = vand.u32 %v227, 4294901760
        %8051 = vmatmul.mubr.f32.gmra.mxu0 %v8050
        %v8052 = vpop.f32.mrf.mxu0
        %v8053 = vadd.f32 %v7762, %v8052
        %v8054 = vpop.f32.mrf.mxu0
        %v8055 = vadd.f32 %v7764, %v8054
        %8056 = vmatprep.mubr.f32.mxu0 0.0
        %v8057 = vand.u32 %v230, 4294901760
        %8058 = vmatmul.mubr.f32.gmra.mxu0 %v8057
        %v8059 = vpop.f32.mrf.mxu0
        %v8060 = vadd.f32 %v7769, %v8059
        %v8061 = vpop.f32.mrf.mxu0
        %v8062 = vadd.f32 %v7771, %v8061
        %8063 = vmatprep.mubr.f32.mxu0 0.0
        %v8064 = vand.u32 %v233, 4294901760
        %8065 = vmatmul.mubr.f32.gmra.mxu0 %v8064
        %v8066 = vpop.f32.mrf.mxu0
        %v8067 = vadd.f32 %v7776, %v8066
        %v8068 = vpop.f32.mrf.mxu0
        %v8069 = vadd.f32 %v7778, %v8068
        %8070 = vmatprep.mubr.f32.mxu0 0.0
        %v8071 = vand.u32 %v236, 4294901760
        %8072 = vmatmul.mubr.f32.gmra.mxu0 %v8071
        %v8073 = vpop.f32.mrf.mxu0
        %v8074 = vadd.f32 %v7783, %v8073
        %v8075 = vpop.f32.mrf.mxu0
        %v8076 = vadd.f32 %v7785, %v8075
        %8077 = vmatprep.mubr.f32.mxu0 0.0
        %v8078 = vand.u32 %v239, 4294901760
        %8079 = vmatmul.mubr.f32.gmra.mxu0 %v8078
        %v8080 = vpop.f32.mrf.mxu0
        %v8081 = vadd.f32 %v7790, %v8080
        %v8082 = vpop.f32.mrf.mxu0
        %v8083 = vadd.f32 %v7792, %v8082
        %8084 = vmatprep.mubr.f32.mxu0 0.0
        %v8085 = vand.u32 %v242, 4294901760
        %8086 = vmatmul.mubr.f32.gmra.mxu0 %v8085
        %v8087 = vpop.f32.mrf.mxu0
        %v8088 = vadd.f32 %v7797, %v8087
        %v8089 = vpop.f32.mrf.mxu0
        %v8090 = vadd.f32 %v7799, %v8089
        %8091 = vmatprep.mubr.f32.mxu0 0.0
        %v8092 = vand.u32 %v245, 4294901760
        %8093 = vmatmul.mubr.f32.gmra.mxu0 %v8092
        %v8094 = vpop.f32.mrf.mxu0
        %v8095 = vadd.f32 %v7804, %v8094
        %v8096 = vpop.f32.mrf.mxu0
        %v8097 = vadd.f32 %v7806, %v8096
        %8098 = vmatprep.mubr.f32.mxu0 0.0
        %v8099 = vand.u32 %v248, 4294901760
        %8100 = vmatmul.mubr.f32.gmra.mxu0 %v8099
        %v8101 = vpop.f32.mrf.mxu0
        %v8102 = vadd.f32 %v7811, %v8101
        %v8103 = vpop.f32.mrf.mxu0
        %v8104 = vadd.f32 %v7813, %v8103
        %8105 = vmatprep.mubr.f32.mxu0 0.0
        %v8106 = vand.u32 %v251, 4294901760
        %8107 = vmatmul.mubr.f32.gmra.mxu0 %v8106
        %v8108 = vpop.f32.mrf.mxu0
        %v8109 = vadd.f32 %v7818, %v8108
        %v8110 = vpop.f32.mrf.mxu0
        %v8111 = vadd.f32 %v7820, %v8110
        %8112 = vmatprep.mubr.f32.mxu0 0.0
        %v8113 = vand.u32 %v254, 4294901760
        %8114 = vmatmul.mubr.f32.gmra.mxu0 %v8113
        %v8115 = vpop.f32.mrf.mxu0
        %v8116 = vadd.f32 %v7825, %v8115
        %v8117 = vpop.f32.mrf.mxu0
        %v8118 = vadd.f32 %v7827, %v8117
        %8119 = vmatprep.mubr.f32.mxu0 0.0
        %v8120 = vand.u32 %v257, 4294901760
        %8121 = vmatmul.mubr.f32.gmra.mxu0 %v8120
        %v8122 = vpop.f32.mrf.mxu0
        %v8123 = vadd.f32 %v7832, %v8122
        %v8124 = vpop.f32.mrf.mxu0
        %v8125 = vadd.f32 %v7834, %v8124
        %8126 = vmatprep.mubr.f32.mxu0 0.0
        %v8127 = vand.u32 %v260, 4294901760
        %8128 = vmatmul.mubr.f32.gmra.mxu0 %v8127
        %v8129 = vpop.f32.mrf.mxu0
        %v8130 = vadd.f32 %v7839, %v8129
        %v8131 = vpop.f32.mrf.mxu0
        %v8132 = vadd.f32 %v7841, %v8131
        %8133 = vmatprep.mubr.f32.mxu0 0.0
        %v8134 = vand.u32 %v263, 4294901760
        %8135 = vmatmul.mubr.f32.gmra.mxu0 %v8134
        %v8136 = vpop.f32.mrf.mxu0
        %v8137 = vadd.f32 %v7846, %v8136
        %v8138 = vpop.f32.mrf.mxu0
        %v8139 = vadd.f32 %v7848, %v8138
        %8140 = vmatprep.mubr.f32.mxu0 0.0
        %v8141 = vand.u32 %v266, 4294901760
        %8142 = vmatmul.mubr.f32.gmra.mxu0 %v8141
        %v8143 = vpop.f32.mrf.mxu0
        %v8144 = vadd.f32 %v7853, %v8143
        %v8145 = vpop.f32.mrf.mxu0
        %v8146 = vadd.f32 %v7855, %v8145
        %8147 = vmatprep.mubr.f32.mxu0 0.0
        %v8148 = vand.u32 %v269, 4294901760
        %8149 = vmatmul.mubr.f32.gmra.mxu0 %v8148
        %v8150 = vpop.f32.mrf.mxu0
        %v8151 = vadd.f32 %v7860, %v8150
        %v8152 = vpop.f32.mrf.mxu0
        %v8153 = vadd.f32 %v7862, %v8152
        %8154 = vmatprep.mubr.f32.mxu0 0.0
        %v8155 = vand.u32 %v272, 4294901760
        %8156 = vmatmul.mubr.f32.gmra.mxu0 %v8155
        %v8157 = vpop.f32.mrf.mxu0
        %v8158 = vadd.f32 %v7867, %v8157
        %v8159 = vpop.f32.mrf.mxu0
        %v8160 = vadd.f32 %v7869, %v8159
        %8161 = vmatprep.mubr.f32.mxu0 0.0
        %v8162 = vand.u32 %v275, 4294901760
        %8163 = vmatmul.mubr.f32.gmra.mxu0 %v8162
        %v8164 = vpop.f32.mrf.mxu0
        %v8165 = vadd.f32 %v7874, %v8164
        %v8166 = vpop.f32.mrf.mxu0
        %v8167 = vadd.f32 %v7876, %v8166
        %8168 = vmatprep.mubr.f32.mxu0 0.0
        %v8169 = vand.u32 %v278, 4294901760
        %8170 = vmatmul.mubr.f32.gmra.mxu0 %v8169
        %v8171 = vpop.f32.mrf.mxu0
        %v8172 = vadd.f32 %v7881, %v8171
        %v8173 = vpop.f32.mrf.mxu0
        %v8174 = vadd.f32 %v7883, %v8173
        %8175 = vmatprep.mubr.f32.mxu0 0.0
        %v8176 = vand.u32 %v281, 4294901760
        %8177 = vmatmul.mubr.f32.gmra.mxu0 %v8176
        %v8178 = vpop.f32.mrf.mxu0
        %v8179 = vadd.f32 %v7888, %v8178
        %v8180 = vpop.f32.mrf.mxu0
        %v8181 = vadd.f32 %v7890, %v8180
        %8182 = vmatprep.mubr.f32.mxu0 0.0
        %v8183 = vand.u32 %v284, 4294901760
        %8184 = vmatmul.mubr.f32.gmra.mxu0 %v8183
        %v8185 = vpop.f32.mrf.mxu0
        %v8186 = vadd.f32 %v7895, %v8185
        %v8187 = vpop.f32.mrf.mxu0
        %v8188 = vadd.f32 %v7897, %v8187
        %8189 = vmatprep.mubr.f32.mxu0 0.0
        %v8190 = vand.u32 %v287, 4294901760
        %8191 = vmatmul.mubr.f32.gmra.mxu0 %v8190
        %v8192 = vpop.f32.mrf.mxu0
        %v8193 = vadd.f32 %v7902, %v8192
        %v8194 = vpop.f32.mrf.mxu0
        %v8195 = vadd.f32 %v7904, %v8194
        %8196 = vmatprep.mubr.f32.mxu0 0.0
        %v8197 = vand.u32 %v290, 4294901760
        %8198 = vmatmul.mubr.f32.gmra.mxu0 %v8197
        %v8199 = vpop.f32.mrf.mxu0
        %v8200 = vadd.f32 %v7909, %v8199
        %v8201 = vpop.f32.mrf.mxu0
        %v8202 = vadd.f32 %v7911, %v8201
        %8203 = vmatprep.mubr.f32.mxu0 0.0
        %v8204 = vand.u32 %v293, 4294901760
        %8205 = vmatmul.mubr.f32.gmra.mxu0 %v8204
        %v8206 = vpop.f32.mrf.mxu0
        %v8207 = vadd.f32 %v7916, %v8206
        %v8208 = vpop.f32.mrf.mxu0
        %v8209 = vadd.f32 %v7918, %v8208
        %8210 = vmatprep.mubr.f32.mxu0 0.0
        %v8211 = vand.u32 %v296, 4294901760
        %8212 = vmatmul.mubr.f32.gmra.mxu0 %v8211
        %v8213 = vpop.f32.mrf.mxu0
        %v8214 = vadd.f32 %v7923, %v8213
        %v8215 = vpop.f32.mrf.mxu0
        %v8216 = vadd.f32 %v7925, %v8215
        %8217 = vmatprep.mubr.f32.mxu0 0.0
        %v8218 = vand.u32 %v299, 4294901760
        %8219 = vmatmul.mubr.f32.gmra.mxu0 %v8218
        %v8220 = vpop.f32.mrf.mxu0
        %v8221 = vadd.f32 %v7930, %v8220
        %v8222 = vpop.f32.mrf.mxu0
        %v8223 = vadd.f32 %v7932, %v8222
        %8224 = vmatprep.mubr.f32.mxu0 0.0
        %v8225 = vand.u32 %v302, 4294901760
        %8226 = vmatmul.mubr.f32.gmra.mxu0 %v8225
        %v8227 = vpop.f32.mrf.mxu0
        %v8228 = vadd.f32 %v7937, %v8227
        %v8229 = vpop.f32.mrf.mxu0
        %v8230 = vadd.f32 %v7939, %v8229
        %8231 = vmatprep.mubr.f32.mxu0 0.0
        %v8232 = vand.u32 %v305, 4294901760
        %8233 = vmatmul.mubr.f32.gmra.mxu0 %v8232
        %v8234 = vpop.f32.mrf.mxu0
        %v8235 = vadd.f32 %v7944, %v8234
        %v8236 = vpop.f32.mrf.mxu0
        %v8237 = vadd.f32 %v7946, %v8236
        %8238 = vmatprep.mubr.f32.mxu0 0.0
        %v8239 = vand.u32 %v308, 4294901760
        %8240 = vmatmul.mubr.f32.gmra.mxu0 %v8239
        %v8241 = vpop.f32.mrf.mxu0
        %v8242 = vadd.f32 %v7951, %v8241
        %v8243 = vpop.f32.mrf.mxu0
        %v8244 = vadd.f32 %v7953, %v8243
        %8245 = vdwg.mxu0
        %v8246 = vmax.f32 %v2073, 0.0
        %v8247 = vmax.f32 %v2075, 0.0
        %v8248 = vmax.f32 %v4057, 0.0
        %v8249 = vmax.f32 %v4059, 0.0
        %v8250 = vmax.f32 %v6041, 0.0
        %v8251 = vmax.f32 %v6043, 0.0
        %v8252 = vmax.f32 %v8025, 0.0
        %v8253 = vmax.f32 %v8027, 0.0
        %v8254 = vmax.f32 %v2080, 0.0
        %v8255 = vmax.f32 %v2082, 0.0
        %v8256 = vmax.f32 %v4064, 0.0
        %v8257 = vmax.f32 %v4066, 0.0
        %v8258 = vmax.f32 %v6048, 0.0
        %v8259 = vmax.f32 %v6050, 0.0
        %v8260 = vmax.f32 %v8032, 0.0
        %v8261 = vmax.f32 %v8034, 0.0
        %v8262 = vmax.f32 %v2087, 0.0
        %v8263 = vmax.f32 %v2089, 0.0
        %v8264 = vmax.f32 %v4071, 0.0
        %v8265 = vmax.f32 %v4073, 0.0
        %v8266 = vmax.f32 %v6055, 0.0
        %v8267 = vmax.f32 %v6057, 0.0
        %v8268 = vmax.f32 %v8039, 0.0
        %v8269 = vmax.f32 %v8041, 0.0
        %v8270 = vmax.f32 %v2094, 0.0
        %v8271 = vmax.f32 %v2096, 0.0
        %v8272 = vmax.f32 %v4078, 0.0
        %v8273 = vmax.f32 %v4080, 0.0
        %v8274 = vmax.f32 %v6062, 0.0
        %v8275 = vmax.f32 %v6064, 0.0
        %v8276 = vmax.f32 %v8046, 0.0
        %v8277 = vmax.f32 %v8048, 0.0
        %v8278 = vmax.f32 %v2101, 0.0
        %v8279 = vmax.f32 %v2103, 0.0
        %v8280 = vmax.f32 %v4085, 0.0
        %v8281 = vmax.f32 %v4087, 0.0
        %v8282 = vmax.f32 %v6069, 0.0
        %v8283 = vmax.f32 %v6071, 0.0
        %v8284 = vmax.f32 %v8053, 0.0
        %v8285 = vmax.f32 %v8055, 0.0
        %v8286 = vmax.f32 %v2108, 0.0
        %v8287 = vmax.f32 %v2110, 0.0
        %v8288 = vmax.f32 %v4092, 0.0
        %v8289 = vmax.f32 %v4094, 0.0
        %v8290 = vmax.f32 %v6076, 0.0
        %v8291 = vmax.f32 %v6078, 0.0
        %v8292 = vmax.f32 %v8060, 0.0
        %v8293 = vmax.f32 %v8062, 0.0
        %v8294 = vmax.f32 %v2115, 0.0
        %v8295 = vmax.f32 %v2117, 0.0
        %v8296 = vmax.f32 %v4099, 0.0
        %v8297 = vmax.f32 %v4101, 0.0
        %v8298 = vmax.f32 %v6083, 0.0
        %v8299 = vmax.f32 %v6085, 0.0
        %v8300 = vmax.f32 %v8067, 0.0
        %v8301 = vmax.f32 %v8069, 0.0
        %v8302 = vmax.f32 %v2122, 0.0
        %v8303 = vmax.f32 %v2124, 0.0
        %v8304 = vmax.f32 %v4106, 0.0
        %v8305 = vmax.f32 %v4108, 0.0
        %v8306 = vmax.f32 %v6090, 0.0
        %v8307 = vmax.f32 %v6092, 0.0
        %v8308 = vmax.f32 %v8074, 0.0
        %v8309 = vmax.f32 %v8076, 0.0
        %v8310 = vmax.f32 %v2129, 0.0
        %v8311 = vmax.f32 %v2131, 0.0
        %v8312 = vmax.f32 %v4113, 0.0
        %v8313 = vmax.f32 %v4115, 0.0
        %v8314 = vmax.f32 %v6097, 0.0
        %v8315 = vmax.f32 %v6099, 0.0
        %v8316 = vmax.f32 %v8081, 0.0
        %v8317 = vmax.f32 %v8083, 0.0
        %v8318 = vmax.f32 %v2136, 0.0
        %v8319 = vmax.f32 %v2138, 0.0
        %v8320 = vmax.f32 %v4120, 0.0
        %v8321 = vmax.f32 %v4122, 0.0
        %v8322 = vmax.f32 %v6104, 0.0
        %v8323 = vmax.f32 %v6106, 0.0
        %v8324 = vmax.f32 %v8088, 0.0
        %v8325 = vmax.f32 %v8090, 0.0
        %v8326 = vmax.f32 %v2143, 0.0
        %v8327 = vmax.f32 %v2145, 0.0
        %v8328 = vmax.f32 %v4127, 0.0
        %v8329 = vmax.f32 %v4129, 0.0
        %v8330 = vmax.f32 %v6111, 0.0
        %v8331 = vmax.f32 %v6113, 0.0
        %v8332 = vmax.f32 %v8095, 0.0
        %v8333 = vmax.f32 %v8097, 0.0
        %v8334 = vmax.f32 %v2150, 0.0
        %v8335 = vmax.f32 %v2152, 0.0
        %v8336 = vmax.f32 %v4134, 0.0
        %v8337 = vmax.f32 %v4136, 0.0
        %v8338 = vmax.f32 %v6118, 0.0
        %v8339 = vmax.f32 %v6120, 0.0
        %v8340 = vmax.f32 %v8102, 0.0
        %v8341 = vmax.f32 %v8104, 0.0
        %v8342 = vmax.f32 %v2157, 0.0
        %v8343 = vmax.f32 %v2159, 0.0
        %v8344 = vmax.f32 %v4141, 0.0
        %v8345 = vmax.f32 %v4143, 0.0
        %v8346 = vmax.f32 %v6125, 0.0
        %v8347 = vmax.f32 %v6127, 0.0
        %v8348 = vmax.f32 %v8109, 0.0
        %v8349 = vmax.f32 %v8111, 0.0
        %v8350 = vmax.f32 %v2164, 0.0
        %v8351 = vmax.f32 %v2166, 0.0
        %v8352 = vmax.f32 %v4148, 0.0
        %v8353 = vmax.f32 %v4150, 0.0
        %v8354 = vmax.f32 %v6132, 0.0
        %v8355 = vmax.f32 %v6134, 0.0
        %v8356 = vmax.f32 %v8116, 0.0
        %v8357 = vmax.f32 %v8118, 0.0
        %v8358 = vmax.f32 %v2171, 0.0
        %v8359 = vmax.f32 %v2173, 0.0
        %v8360 = vmax.f32 %v4155, 0.0
        %v8361 = vmax.f32 %v4157, 0.0
        %v8362 = vmax.f32 %v6139, 0.0
        %v8363 = vmax.f32 %v6141, 0.0
        %v8364 = vmax.f32 %v8123, 0.0
        %v8365 = vmax.f32 %v8125, 0.0
        %v8366 = vmax.f32 %v2178, 0.0
        %v8367 = vmax.f32 %v2180, 0.0
        %v8368 = vmax.f32 %v4162, 0.0
        %v8369 = vmax.f32 %v4164, 0.0
        %v8370 = vmax.f32 %v6146, 0.0
        %v8371 = vmax.f32 %v6148, 0.0
        %v8372 = vmax.f32 %v8130, 0.0
        %v8373 = vmax.f32 %v8132, 0.0
        %v8374 = vmax.f32 %v2185, 0.0
        %v8375 = vmax.f32 %v2187, 0.0
        %v8376 = vmax.f32 %v4169, 0.0
        %v8377 = vmax.f32 %v4171, 0.0
        %v8378 = vmax.f32 %v6153, 0.0
        %v8379 = vmax.f32 %v6155, 0.0
        %v8380 = vmax.f32 %v8137, 0.0
        %v8381 = vmax.f32 %v8139, 0.0
        %v8382 = vmax.f32 %v2192, 0.0
        %v8383 = vmax.f32 %v2194, 0.0
        %v8384 = vmax.f32 %v4176, 0.0
        %v8385 = vmax.f32 %v4178, 0.0
        %v8386 = vmax.f32 %v6160, 0.0
        %v8387 = vmax.f32 %v6162, 0.0
        %v8388 = vmax.f32 %v8144, 0.0
        %v8389 = vmax.f32 %v8146, 0.0
        %v8390 = vmax.f32 %v2199, 0.0
        %v8391 = vmax.f32 %v2201, 0.0
        %v8392 = vmax.f32 %v4183, 0.0
        %v8393 = vmax.f32 %v4185, 0.0
        %v8394 = vmax.f32 %v6167, 0.0
        %v8395 = vmax.f32 %v6169, 0.0
        %v8396 = vmax.f32 %v8151, 0.0
        %v8397 = vmax.f32 %v8153, 0.0
        %v8398 = vmax.f32 %v2206, 0.0
        %v8399 = vmax.f32 %v2208, 0.0
        %v8400 = vmax.f32 %v4190, 0.0
        %v8401 = vmax.f32 %v4192, 0.0
        %v8402 = vmax.f32 %v6174, 0.0
        %v8403 = vmax.f32 %v6176, 0.0
        %v8404 = vmax.f32 %v8158, 0.0
        %v8405 = vmax.f32 %v8160, 0.0
        %v8406 = vmax.f32 %v2213, 0.0
        %v8407 = vmax.f32 %v2215, 0.0
        %v8408 = vmax.f32 %v4197, 0.0
        %v8409 = vmax.f32 %v4199, 0.0
        %v8410 = vmax.f32 %v6181, 0.0
        %v8411 = vmax.f32 %v6183, 0.0
        %v8412 = vmax.f32 %v8165, 0.0
        %v8413 = vmax.f32 %v8167, 0.0
        %v8414 = vmax.f32 %v2220, 0.0
        %v8415 = vmax.f32 %v2222, 0.0
        %v8416 = vmax.f32 %v4204, 0.0
        %v8417 = vmax.f32 %v4206, 0.0
        %v8418 = vmax.f32 %v6188, 0.0
        %v8419 = vmax.f32 %v6190, 0.0
        %v8420 = vmax.f32 %v8172, 0.0
        %v8421 = vmax.f32 %v8174, 0.0
        %v8422 = vmax.f32 %v2227, 0.0
        %v8423 = vmax.f32 %v2229, 0.0
        %v8424 = vmax.f32 %v4211, 0.0
        %v8425 = vmax.f32 %v4213, 0.0
        %v8426 = vmax.f32 %v6195, 0.0
        %v8427 = vmax.f32 %v6197, 0.0
        %v8428 = vmax.f32 %v8179, 0.0
        %v8429 = vmax.f32 %v8181, 0.0
        %v8430 = vmax.f32 %v2234, 0.0
        %v8431 = vmax.f32 %v2236, 0.0
        %v8432 = vmax.f32 %v4218, 0.0
        %v8433 = vmax.f32 %v4220, 0.0
        %v8434 = vmax.f32 %v6202, 0.0
        %v8435 = vmax.f32 %v6204, 0.0
        %v8436 = vmax.f32 %v8186, 0.0
        %v8437 = vmax.f32 %v8188, 0.0
        %v8438 = vmax.f32 %v2241, 0.0
        %v8439 = vmax.f32 %v2243, 0.0
        %v8440 = vmax.f32 %v4225, 0.0
        %v8441 = vmax.f32 %v4227, 0.0
        %v8442 = vmax.f32 %v6209, 0.0
        %v8443 = vmax.f32 %v6211, 0.0
        %v8444 = vmax.f32 %v8193, 0.0
        %v8445 = vmax.f32 %v8195, 0.0
        %v8446 = vmax.f32 %v2248, 0.0
        %v8447 = vmax.f32 %v2250, 0.0
        %v8448 = vmax.f32 %v4232, 0.0
        %v8449 = vmax.f32 %v4234, 0.0
        %v8450 = vmax.f32 %v6216, 0.0
        %v8451 = vmax.f32 %v6218, 0.0
        %v8452 = vmax.f32 %v8200, 0.0
        %v8453 = vmax.f32 %v8202, 0.0
        %v8454 = vmax.f32 %v2255, 0.0
        %v8455 = vmax.f32 %v2257, 0.0
        %v8456 = vmax.f32 %v4239, 0.0
        %v8457 = vmax.f32 %v4241, 0.0
        %v8458 = vmax.f32 %v6223, 0.0
        %v8459 = vmax.f32 %v6225, 0.0
        %v8460 = vmax.f32 %v8207, 0.0
        %v8461 = vmax.f32 %v8209, 0.0
        %v8462 = vmax.f32 %v2262, 0.0
        %v8463 = vmax.f32 %v2264, 0.0
        %v8464 = vmax.f32 %v4246, 0.0
        %v8465 = vmax.f32 %v4248, 0.0
        %v8466 = vmax.f32 %v6230, 0.0
        %v8467 = vmax.f32 %v6232, 0.0
        %v8468 = vmax.f32 %v8214, 0.0
        %v8469 = vmax.f32 %v8216, 0.0
        %v8470 = vmax.f32 %v2269, 0.0
        %v8471 = vmax.f32 %v2271, 0.0
        %v8472 = vmax.f32 %v4253, 0.0
        %v8473 = vmax.f32 %v4255, 0.0
        %v8474 = vmax.f32 %v6237, 0.0
        %v8475 = vmax.f32 %v6239, 0.0
        %v8476 = vmax.f32 %v8221, 0.0
        %v8477 = vmax.f32 %v8223, 0.0
        %v8478 = vmax.f32 %v2276, 0.0
        %v8479 = vmax.f32 %v2278, 0.0
        %v8480 = vmax.f32 %v4260, 0.0
        %v8481 = vmax.f32 %v4262, 0.0
        %v8482 = vmax.f32 %v6244, 0.0
        %v8483 = vmax.f32 %v6246, 0.0
        %v8484 = vmax.f32 %v8228, 0.0
        %v8485 = vmax.f32 %v8230, 0.0
        %v8486 = vmax.f32 %v2283, 0.0
        %v8487 = vmax.f32 %v2285, 0.0
        %v8488 = vmax.f32 %v4267, 0.0
        %v8489 = vmax.f32 %v4269, 0.0
        %v8490 = vmax.f32 %v6251, 0.0
        %v8491 = vmax.f32 %v6253, 0.0
        %v8492 = vmax.f32 %v8235, 0.0
        %v8493 = vmax.f32 %v8237, 0.0
        %v8494 = vmax.f32 %v2290, 0.0
        %v8495 = vmax.f32 %v2292, 0.0
        %v8496 = vmax.f32 %v4274, 0.0
        %v8497 = vmax.f32 %v4276, 0.0
        %v8498 = vmax.f32 %v6258, 0.0
        %v8499 = vmax.f32 %v6260, 0.0
        %v8500 = vmax.f32 %v8242, 0.0
        %v8501 = vmax.f32 %v8244, 0.0
        %8502 = vst [vmem:[%s161] sm:$0xff] %v8246
        %8503 = vst [vmem:[%s161 + $0x8] sm:$0xff] %v8247
        %8504 = vst [vmem:[%s161 + $0x10] sm:$0xff] %v8248
        %8505 = vst [vmem:[%s161 + $0x18] sm:$0xff] %v8249
        %8506 = vst [vmem:[%s161 + $0x20] sm:$0xff] %v8250
        %8507 = vst [vmem:[%s161 + $0x28] sm:$0xff] %v8251
        %8508 = vst [vmem:[%s161 + $0x30] sm:$0xff] %v8252
        %8509 = vst [vmem:[%s161 + $0x38] sm:$0xff] %v8253
        %8510 = vst [vmem:[%s161 + $0x40] sm:$0xff] %v8254
        %8511 = vst [vmem:[%s161 + $0x48] sm:$0xff] %v8255
        %8512 = vst [vmem:[%s161 + $0x50] sm:$0xff] %v8256
        %8513 = vst [vmem:[%s161 + $0x58] sm:$0xff] %v8257
        %8514 = vst [vmem:[%s161 + $0x60] sm:$0xff] %v8258
        %8515 = vst [vmem:[%s161 + $0x68] sm:$0xff] %v8259
        %8516 = vst [vmem:[%s161 + $0x70] sm:$0xff] %v8260
        %8517 = vst [vmem:[%s161 + $0x78] sm:$0xff] %v8261
        %8518 = vst [vmem:[%s161 + $0x80] sm:$0xff] %v8262
        %8519 = vst [vmem:[%s161 + $0x88] sm:$0xff] %v8263
        %8520 = vst [vmem:[%s161 + $0x90] sm:$0xff] %v8264
        %8521 = vst [vmem:[%s161 + $0x98] sm:$0xff] %v8265
        %8522 = vst [vmem:[%s161 + $0xa0] sm:$0xff] %v8266
        %8523 = vst [vmem:[%s161 + $0xa8] sm:$0xff] %v8267
        %8524 = vst [vmem:[%s161 + $0xb0] sm:$0xff] %v8268
        %8525 = vst [vmem:[%s161 + $0xb8] sm:$0xff] %v8269
        %8526 = vst [vmem:[%s161 + $0xc0] sm:$0xff] %v8270
        %8527 = vst [vmem:[%s161 + $0xc8] sm:$0xff] %v8271
        %8528 = vst [vmem:[%s161 + $0xd0] sm:$0xff] %v8272
        %8529 = vst [vmem:[%s161 + $0xd8] sm:$0xff] %v8273
        %8530 = vst [vmem:[%s161 + $0xe0] sm:$0xff] %v8274
        %8531 = vst [vmem:[%s161 + $0xe8] sm:$0xff] %v8275
        %8532 = vst [vmem:[%s161 + $0xf0] sm:$0xff] %v8276
        %8533 = vst [vmem:[%s161 + $0xf8] sm:$0xff] %v8277
        %8534 = vst [vmem:[%s161 + $0x100] sm:$0xff] %v8278
        %8535 = vst [vmem:[%s161 + $0x108] sm:$0xff] %v8279
        %8536 = vst [vmem:[%s161 + $0x110] sm:$0xff] %v8280
        %8537 = vst [vmem:[%s161 + $0x118] sm:$0xff] %v8281
        %8538 = vst [vmem:[%s161 + $0x120] sm:$0xff] %v8282
        %8539 = vst [vmem:[%s161 + $0x128] sm:$0xff] %v8283
        %8540 = vst [vmem:[%s161 + $0x130] sm:$0xff] %v8284
        %8541 = vst [vmem:[%s161 + $0x138] sm:$0xff] %v8285
        %8542 = vst [vmem:[%s161 + $0x140] sm:$0xff] %v8286
        %8543 = vst [vmem:[%s161 + $0x148] sm:$0xff] %v8287
        %8544 = vst [vmem:[%s161 + $0x150] sm:$0xff] %v8288
        %8545 = vst [vmem:[%s161 + $0x158] sm:$0xff] %v8289
        %8546 = vst [vmem:[%s161 + $0x160] sm:$0xff] %v8290
        %8547 = vst [vmem:[%s161 + $0x168] sm:$0xff] %v8291
        %8548 = vst [vmem:[%s161 + $0x170] sm:$0xff] %v8292
        %8549 = vst [vmem:[%s161 + $0x178] sm:$0xff] %v8293
        %8550 = vst [vmem:[%s161 + $0x180] sm:$0xff] %v8294
        %8551 = vst [vmem:[%s161 + $0x188] sm:$0xff] %v8295
        %8552 = vst [vmem:[%s161 + $0x190] sm:$0xff] %v8296
        %8553 = vst [vmem:[%s161 + $0x198] sm:$0xff] %v8297
        %8554 = vst [vmem:[%s161 + $0x1a0] sm:$0xff] %v8298
        %8555 = vst [vmem:[%s161 + $0x1a8] sm:$0xff] %v8299
        %8556 = vst [vmem:[%s161 + $0x1b0] sm:$0xff] %v8300
        %8557 = vst [vmem:[%s161 + $0x1b8] sm:$0xff] %v8301
        %8558 = vst [vmem:[%s161 + $0x1c0] sm:$0xff] %v8302
        %8559 = vst [vmem:[%s161 + $0x1c8] sm:$0xff] %v8303
        %8560 = vst [vmem:[%s161 + $0x1d0] sm:$0xff] %v8304
        %8561 = vst [vmem:[%s161 + $0x1d8] sm:$0xff] %v8305
        %8562 = vst [vmem:[%s161 + $0x1e0] sm:$0xff] %v8306
        %8563 = vst [vmem:[%s161 + $0x1e8] sm:$0xff] %v8307
        %8564 = vst [vmem:[%s161 + $0x1f0] sm:$0xff] %v8308
        %8565 = vst [vmem:[%s161 + $0x1f8] sm:$0xff] %v8309
        %8566 = vst [vmem:[%s161 + $0x200] sm:$0xff] %v8310
        %8567 = vst [vmem:[%s161 + $0x208] sm:$0xff] %v8311
        %8568 = vst [vmem:[%s161 + $0x210] sm:$0xff] %v8312
        %8569 = vst [vmem:[%s161 + $0x218] sm:$0xff] %v8313
        %8570 = vst [vmem:[%s161 + $0x220] sm:$0xff] %v8314
        %8571 = vst [vmem:[%s161 + $0x228] sm:$0xff] %v8315
        %8572 = vst [vmem:[%s161 + $0x230] sm:$0xff] %v8316
        %8573 = vst [vmem:[%s161 + $0x238] sm:$0xff] %v8317
        %8574 = vst [vmem:[%s161 + $0x240] sm:$0xff] %v8318
        %8575 = vst [vmem:[%s161 + $0x248] sm:$0xff] %v8319
        %8576 = vst [vmem:[%s161 + $0x250] sm:$0xff] %v8320
        %8577 = vst [vmem:[%s161 + $0x258] sm:$0xff] %v8321
        %8578 = vst [vmem:[%s161 + $0x260] sm:$0xff] %v8322
        %8579 = vst [vmem:[%s161 + $0x268] sm:$0xff] %v8323
        %8580 = vst [vmem:[%s161 + $0x270] sm:$0xff] %v8324
        %8581 = vst [vmem:[%s161 + $0x278] sm:$0xff] %v8325
        %8582 = vst [vmem:[%s161 + $0x280] sm:$0xff] %v8326
        %8583 = vst [vmem:[%s161 + $0x288] sm:$0xff] %v8327
        %8584 = vst [vmem:[%s161 + $0x290] sm:$0xff] %v8328
        %8585 = vst [vmem:[%s161 + $0x298] sm:$0xff] %v8329
        %8586 = vst [vmem:[%s161 + $0x2a0] sm:$0xff] %v8330
        %8587 = vst [vmem:[%s161 + $0x2a8] sm:$0xff] %v8331
        %8588 = vst [vmem:[%s161 + $0x2b0] sm:$0xff] %v8332
        %8589 = vst [vmem:[%s161 + $0x2b8] sm:$0xff] %v8333
        %8590 = vst [vmem:[%s161 + $0x2c0] sm:$0xff] %v8334
        %8591 = vst [vmem:[%s161 + $0x2c8] sm:$0xff] %v8335
        %8592 = vst [vmem:[%s161 + $0x2d0] sm:$0xff] %v8336
        %8593 = vst [vmem:[%s161 + $0x2d8] sm:$0xff] %v8337
        %8594 = vst [vmem:[%s161 + $0x2e0] sm:$0xff] %v8338
        %8595 = vst [vmem:[%s161 + $0x2e8] sm:$0xff] %v8339
        %8596 = vst [vmem:[%s161 + $0x2f0] sm:$0xff] %v8340
        %8597 = vst [vmem:[%s161 + $0x2f8] sm:$0xff] %v8341
        %8598 = vst [vmem:[%s161 + $0x300] sm:$0xff] %v8342
        %8599 = vst [vmem:[%s161 + $0x308] sm:$0xff] %v8343
        %8600 = vst [vmem:[%s161 + $0x310] sm:$0xff] %v8344
        %8601 = vst [vmem:[%s161 + $0x318] sm:$0xff] %v8345
        %8602 = vst [vmem:[%s161 + $0x320] sm:$0xff] %v8346
        %8603 = vst [vmem:[%s161 + $0x328] sm:$0xff] %v8347
        %8604 = vst [vmem:[%s161 + $0x330] sm:$0xff] %v8348
        %8605 = vst [vmem:[%s161 + $0x338] sm:$0xff] %v8349
        %8606 = vst [vmem:[%s161 + $0x340] sm:$0xff] %v8350
        %8607 = vst [vmem:[%s161 + $0x348] sm:$0xff] %v8351
        %8608 = vst [vmem:[%s161 + $0x350] sm:$0xff] %v8352
        %8609 = vst [vmem:[%s161 + $0x358] sm:$0xff] %v8353
        %8610 = vst [vmem:[%s161 + $0x360] sm:$0xff] %v8354
        %8611 = vst [vmem:[%s161 + $0x368] sm:$0xff] %v8355
        %8612 = vst [vmem:[%s161 + $0x370] sm:$0xff] %v8356
        %8613 = vst [vmem:[%s161 + $0x378] sm:$0xff] %v8357
        %8614 = vst [vmem:[%s161 + $0x380] sm:$0xff] %v8358
        %8615 = vst [vmem:[%s161 + $0x388] sm:$0xff] %v8359
        %8616 = vst [vmem:[%s161 + $0x390] sm:$0xff] %v8360
        %8617 = vst [vmem:[%s161 + $0x398] sm:$0xff] %v8361
        %8618 = vst [vmem:[%s161 + $0x3a0] sm:$0xff] %v8362
        %8619 = vst [vmem:[%s161 + $0x3a8] sm:$0xff] %v8363
        %8620 = vst [vmem:[%s161 + $0x3b0] sm:$0xff] %v8364
        %8621 = vst [vmem:[%s161 + $0x3b8] sm:$0xff] %v8365
        %8622 = vst [vmem:[%s161 + $0x3c0] sm:$0xff] %v8366
        %8623 = vst [vmem:[%s161 + $0x3c8] sm:$0xff] %v8367
        %8624 = vst [vmem:[%s161 + $0x3d0] sm:$0xff] %v8368
        %8625 = vst [vmem:[%s161 + $0x3d8] sm:$0xff] %v8369
        %8626 = vst [vmem:[%s161 + $0x3e0] sm:$0xff] %v8370
        %8627 = vst [vmem:[%s161 + $0x3e8] sm:$0xff] %v8371
        %8628 = vst [vmem:[%s161 + $0x3f0] sm:$0xff] %v8372
        %8629 = vst [vmem:[%s161 + $0x3f8] sm:$0xff] %v8373
        %8630 = vst [vmem:[%s161 + $0x400] sm:$0xff] %v8374
        %8631 = vst [vmem:[%s161 + $0x408] sm:$0xff] %v8375
        %8632 = vst [vmem:[%s161 + $0x410] sm:$0xff] %v8376
        %8633 = vst [vmem:[%s161 + $0x418] sm:$0xff] %v8377
        %8634 = vst [vmem:[%s161 + $0x420] sm:$0xff] %v8378
        %8635 = vst [vmem:[%s161 + $0x428] sm:$0xff] %v8379
        %8636 = vst [vmem:[%s161 + $0x430] sm:$0xff] %v8380
        %8637 = vst [vmem:[%s161 + $0x438] sm:$0xff] %v8381
        %8638 = vst [vmem:[%s161 + $0x440] sm:$0xff] %v8382
        %8639 = vst [vmem:[%s161 + $0x448] sm:$0xff] %v8383
        %8640 = vst [vmem:[%s161 + $0x450] sm:$0xff] %v8384
        %8641 = vst [vmem:[%s161 + $0x458] sm:$0xff] %v8385
        %8642 = vst [vmem:[%s161 + $0x460] sm:$0xff] %v8386
        %8643 = vst [vmem:[%s161 + $0x468] sm:$0xff] %v8387
        %8644 = vst [vmem:[%s161 + $0x470] sm:$0xff] %v8388
        %8645 = vst [vmem:[%s161 + $0x478] sm:$0xff] %v8389
        %8646 = vst [vmem:[%s161 + $0x480] sm:$0xff] %v8390
        %8647 = vst [vmem:[%s161 + $0x488] sm:$0xff] %v8391
        %8648 = vst [vmem:[%s161 + $0x490] sm:$0xff] %v8392
        %8649 = vst [vmem:[%s161 + $0x498] sm:$0xff] %v8393
        %8650 = vst [vmem:[%s161 + $0x4a0] sm:$0xff] %v8394
        %8651 = vst [vmem:[%s161 + $0x4a8] sm:$0xff] %v8395
        %8652 = vst [vmem:[%s161 + $0x4b0] sm:$0xff] %v8396
        %8653 = vst [vmem:[%s161 + $0x4b8] sm:$0xff] %v8397
        %8654 = vst [vmem:[%s161 + $0x4c0] sm:$0xff] %v8398
        %8655 = vst [vmem:[%s161 + $0x4c8] sm:$0xff] %v8399
        %8656 = vst [vmem:[%s161 + $0x4d0] sm:$0xff] %v8400
        %8657 = vst [vmem:[%s161 + $0x4d8] sm:$0xff] %v8401
        %8658 = vst [vmem:[%s161 + $0x4e0] sm:$0xff] %v8402
        %8659 = vst [vmem:[%s161 + $0x4e8] sm:$0xff] %v8403
        %8660 = vst [vmem:[%s161 + $0x4f0] sm:$0xff] %v8404
        %8661 = vst [vmem:[%s161 + $0x4f8] sm:$0xff] %v8405
        %8662 = vst [vmem:[%s161 + $0x500] sm:$0xff] %v8406
        %8663 = vst [vmem:[%s161 + $0x508] sm:$0xff] %v8407
        %8664 = vst [vmem:[%s161 + $0x510] sm:$0xff] %v8408
        %8665 = vst [vmem:[%s161 + $0x518] sm:$0xff] %v8409
        %8666 = vst [vmem:[%s161 + $0x520] sm:$0xff] %v8410
        %8667 = vst [vmem:[%s161 + $0x528] sm:$0xff] %v8411
        %8668 = vst [vmem:[%s161 + $0x530] sm:$0xff] %v8412
        %8669 = vst [vmem:[%s161 + $0x538] sm:$0xff] %v8413
        %8670 = vst [vmem:[%s161 + $0x540] sm:$0xff] %v8414
        %8671 = vst [vmem:[%s161 + $0x548] sm:$0xff] %v8415
        %8672 = vst [vmem:[%s161 + $0x550] sm:$0xff] %v8416
        %8673 = vst [vmem:[%s161 + $0x558] sm:$0xff] %v8417
        %8674 = vst [vmem:[%s161 + $0x560] sm:$0xff] %v8418
        %8675 = vst [vmem:[%s161 + $0x568] sm:$0xff] %v8419
        %8676 = vst [vmem:[%s161 + $0x570] sm:$0xff] %v8420
        %8677 = vst [vmem:[%s161 + $0x578] sm:$0xff] %v8421
        %8678 = vst [vmem:[%s161 + $0x580] sm:$0xff] %v8422
        %8679 = vst [vmem:[%s161 + $0x588] sm:$0xff] %v8423
        %8680 = vst [vmem:[%s161 + $0x590] sm:$0xff] %v8424
        %8681 = vst [vmem:[%s161 + $0x598] sm:$0xff] %v8425
        %8682 = vst [vmem:[%s161 + $0x5a0] sm:$0xff] %v8426
        %8683 = vst [vmem:[%s161 + $0x5a8] sm:$0xff] %v8427
        %8684 = vst [vmem:[%s161 + $0x5b0] sm:$0xff] %v8428
        %8685 = vst [vmem:[%s161 + $0x5b8] sm:$0xff] %v8429
        %8686 = vst [vmem:[%s161 + $0x5c0] sm:$0xff] %v8430
        %8687 = vst [vmem:[%s161 + $0x5c8] sm:$0xff] %v8431
        %8688 = vst [vmem:[%s161 + $0x5d0] sm:$0xff] %v8432
        %8689 = vst [vmem:[%s161 + $0x5d8] sm:$0xff] %v8433
        %8690 = vst [vmem:[%s161 + $0x5e0] sm:$0xff] %v8434
        %8691 = vst [vmem:[%s161 + $0x5e8] sm:$0xff] %v8435
        %8692 = vst [vmem:[%s161 + $0x5f0] sm:$0xff] %v8436
        %8693 = vst [vmem:[%s161 + $0x5f8] sm:$0xff] %v8437
        %8694 = vst [vmem:[%s161 + $0x600] sm:$0xff] %v8438
        %8695 = vst [vmem:[%s161 + $0x608] sm:$0xff] %v8439
        %8696 = vst [vmem:[%s161 + $0x610] sm:$0xff] %v8440
        %8697 = vst [vmem:[%s161 + $0x618] sm:$0xff] %v8441
        %8698 = vst [vmem:[%s161 + $0x620] sm:$0xff] %v8442
        %8699 = vst [vmem:[%s161 + $0x628] sm:$0xff] %v8443
        %8700 = vst [vmem:[%s161 + $0x630] sm:$0xff] %v8444
        %8701 = vst [vmem:[%s161 + $0x638] sm:$0xff] %v8445
        %8702 = vst [vmem:[%s161 + $0x640] sm:$0xff] %v8446
        %8703 = vst [vmem:[%s161 + $0x648] sm:$0xff] %v8447
        %8704 = vst [vmem:[%s161 + $0x650] sm:$0xff] %v8448
        %8705 = vst [vmem:[%s161 + $0x658] sm:$0xff] %v8449
        %8706 = vst [vmem:[%s161 + $0x660] sm:$0xff] %v8450
        %8707 = vst [vmem:[%s161 + $0x668] sm:$0xff] %v8451
        %8708 = vst [vmem:[%s161 + $0x670] sm:$0xff] %v8452
        %8709 = vst [vmem:[%s161 + $0x678] sm:$0xff] %v8453
        %8710 = vst [vmem:[%s161 + $0x680] sm:$0xff] %v8454
        %8711 = vst [vmem:[%s161 + $0x688] sm:$0xff] %v8455
        %8712 = vst [vmem:[%s161 + $0x690] sm:$0xff] %v8456
        %8713 = vst [vmem:[%s161 + $0x698] sm:$0xff] %v8457
        %8714 = vst [vmem:[%s161 + $0x6a0] sm:$0xff] %v8458
        %8715 = vst [vmem:[%s161 + $0x6a8] sm:$0xff] %v8459
        %8716 = vst [vmem:[%s161 + $0x6b0] sm:$0xff] %v8460
        %8717 = vst [vmem:[%s161 + $0x6b8] sm:$0xff] %v8461
        %8718 = vst [vmem:[%s161 + $0x6c0] sm:$0xff] %v8462
        %8719 = vst [vmem:[%s161 + $0x6c8] sm:$0xff] %v8463
        %8720 = vst [vmem:[%s161 + $0x6d0] sm:$0xff] %v8464
        %8721 = vst [vmem:[%s161 + $0x6d8] sm:$0xff] %v8465
        %8722 = vst [vmem:[%s161 + $0x6e0] sm:$0xff] %v8466
        %8723 = vst [vmem:[%s161 + $0x6e8] sm:$0xff] %v8467
        %8724 = vst [vmem:[%s161 + $0x6f0] sm:$0xff] %v8468
        %8725 = vst [vmem:[%s161 + $0x6f8] sm:$0xff] %v8469
        %8726 = vst [vmem:[%s161 + $0x700] sm:$0xff] %v8470
        %8727 = vst [vmem:[%s161 + $0x708] sm:$0xff] %v8471
        %8728 = vst [vmem:[%s161 + $0x710] sm:$0xff] %v8472
        %8729 = vst [vmem:[%s161 + $0x718] sm:$0xff] %v8473
        %8730 = vst [vmem:[%s161 + $0x720] sm:$0xff] %v8474
        %8731 = vst [vmem:[%s161 + $0x728] sm:$0xff] %v8475
        %8732 = vst [vmem:[%s161 + $0x730] sm:$0xff] %v8476
        %8733 = vst [vmem:[%s161 + $0x738] sm:$0xff] %v8477
        %8734 = vst [vmem:[%s161 + $0x740] sm:$0xff] %v8478
        %8735 = vst [vmem:[%s161 + $0x748] sm:$0xff] %v8479
        %8736 = vst [vmem:[%s161 + $0x750] sm:$0xff] %v8480
        %8737 = vst [vmem:[%s161 + $0x758] sm:$0xff] %v8481
        %8738 = vst [vmem:[%s161 + $0x760] sm:$0xff] %v8482
        %8739 = vst [vmem:[%s161 + $0x768] sm:$0xff] %v8483
        %8740 = vst [vmem:[%s161 + $0x770] sm:$0xff] %v8484
        %8741 = vst [vmem:[%s161 + $0x778] sm:$0xff] %v8485
        %8742 = vst [vmem:[%s161 + $0x780] sm:$0xff] %v8486
        %8743 = vst [vmem:[%s161 + $0x788] sm:$0xff] %v8487
        %8744 = vst [vmem:[%s161 + $0x790] sm:$0xff] %v8488
        %8745 = vst [vmem:[%s161 + $0x798] sm:$0xff] %v8489
        %8746 = vst [vmem:[%s161 + $0x7a0] sm:$0xff] %v8490
        %8747 = vst [vmem:[%s161 + $0x7a8] sm:$0xff] %v8491
        %8748 = vst [vmem:[%s161 + $0x7b0] sm:$0xff] %v8492
        %8749 = vst [vmem:[%s161 + $0x7b8] sm:$0xff] %v8493
        %8750 = vst [vmem:[%s161 + $0x7c0] sm:$0xff] %v8494
        %8751 = vst [vmem:[%s161 + $0x7c8] sm:$0xff] %v8495
        %8752 = vst [vmem:[%s161 + $0x7d0] sm:$0xff] %v8496
        %8753 = vst [vmem:[%s161 + $0x7d8] sm:$0xff] %v8497
        %8754 = vst [vmem:[%s161 + $0x7e0] sm:$0xff] %v8498
        %8755 = vst [vmem:[%s161 + $0x7e8] sm:$0xff] %v8499
        %8756 = vst [vmem:[%s161 + $0x7f0] sm:$0xff] %v8500
        %8757 = vst [vmem:[%s161 + $0x7f8] sm:$0xff] %v8501
        %s8758 = sand.u32 %s87, 1
        %s8759 = scalar_lea.sflag [#allocation3], %s8758
        %s8760 = sand.u32 %s87, 1
        %s8761 = smul.addr %s8760, 2048
        %s8762 = scalar_lea.vmem [#allocation2], %s8761
        // Predicated region
        $region29: #{encoder_forward.1} parent=27 // pred_check
          %p8763 = pneg %p97
        $region30: #{encoder_forward.1} parent=27 // pred_check_branch
          %8765 = sbr.rel (%p8763) target = $region32
        $region31: #{encoder_forward.1} parent=27 // pred_region
          %s8766 = smul.u32 8, %s20
          %s8768 = ssub.s32 32768, 32768
          %8769 = vsyncadd %s8759, %s8768
          %s8770 = smul.addr %s21, 256
          %s8771 = sadd.s32 %s8766, %s8770
          %s8772 = smul.addr %s8771, 128
          %s8773 = scalar_lea.hbm %s2, %s8772
          %s8774 = sshll.u32 %s8762, 4
          %s8775 = int_to_ptr.vmem [resolvable:$true] %s8774
          %8780 = dma.vmem_to_hbm [thread:$0]  %s8775, 32768, %s8773, %s8759, 1024, 1024, 64
        $region32: #{encoder_forward.1} parent=27 // pred_fallthru
          _
      $region28: #{encoder_forward.1} parent=5 // pred_fallthru
        _
      %p8781 = scmp.le.s32.totalorder 2, %s11
      // Predicated region
      $region33: #{encoder_forward.1} parent=5 // pred_check
        %p8782 = pneg %p8781
      $region34: #{encoder_forward.1} parent=5 // pred_check_branch
        %8784 = sbr.rel (%p8782) target = $region36
      $region35: #{encoder_forward.1} parent=5 // pred_region
        %s8785 = ssub.s32 %s11, 2
        // Predicated region
        $region37: #{encoder_forward.1} parent=35 // pred_check
          %p8786 = pneg %p103
        $region38: #{encoder_forward.1} parent=35 // pred_check_branch
          %8788 = sbr.rel (%p8786) target = $region40
        $region39: #{encoder_forward.1} parent=35 // pred_region
          %s8789 = sand.u32 %s88, 1
          %s8790 = scalar_lea.sflag [#allocation3], %s8789
          %s8791 = sand.u32 %s88, 1
          %s8792 = smul.addr %s8791, 2048
          %s8793 = scalar_lea.vmem [#allocation2], %s8792
          %8794 = dma.done %s8790, 32768
        $region40: #{encoder_forward.1} parent=35 // pred_fallthru
          _
      $region36: #{encoder_forward.1} parent=5 // pred_fallthru
        _
    $region6: #{encoder_forward.1} parent=1 // loop_footer
      %s15 = sadd.s32 1, %s11
    $region7: #{encoder_forward.1} parent=1 // loop_footer_branch
      %10 = sbr.rel target = $region3
    $region8: #{encoder_forward.1} parent=1 // loop_exit
      _
    %8795 = vsyncpa [#allocation3], 1
    %s8796 = scalar_lea.sflag [#allocation3], 1
    %8797 = vsyncpa %s8796, 1

</llo_original>
